<compile_context>
chip_gen: v7x
topology: tpu7x:2x2x1
jax: 0.10.0
libtpu: 0.0.40
codegen_flags: <defaults>
</compile_context>

<pallas_src>
import functools

import jax
import jax.numpy as jnp
from jax import lax
from jax.experimental import pallas as pl
from jax.experimental.pallas import tpu as pltpu

BERT_DIM = 768
CNN_OUT = 256
LSTM_HIDDEN = 128
DENSE_HIDDEN = 64
NUM_CLASSES = 2
NUM_LSTM_LAYERS = 2
CONV_BATCH_TILE = 16          # batch rows per conv grid step (multiple of 16)


def _tpu_vmem_capacity_bytes():
    try:
        return int(pltpu.get_tpu_info().vmem_capacity_bytes)
    except Exception:
        return 128 * 1024 * 1024                  # v5e / v6e physical VMEM


_VMEM_CAP = _tpu_vmem_capacity_bytes()
# ~102 MiB on v5e/v6e (128 MiB physical), ~51 MiB on v7x (64 MiB per TC).
_VMEM_LIMIT = int(min(_VMEM_CAP * 0.8, _VMEM_CAP - 8 * 2 ** 20))
# Heuristic: v7x exposes 64 MiB VMEM per TensorCore and has 2 TCs per chip;
# v5e/v6e expose 128 MiB and have a single TC.
_TWO_TENSORCORES = _VMEM_CAP <= 96 * 2 ** 20


def _vmem_specs(n):
    return [pl.BlockSpec(memory_space=pltpu.MemorySpace.VMEM) for _ in range(n)]


# --------------------------------------------------------------------------
# Conv1d(in=768, out=256, kernel=3, padding=1) + ReLU  (time-major layout)
# --------------------------------------------------------------------------
def conv_relu_kernel(x_ref, w_ref, b_ref, out_ref):
    # x_ref: (S, TB, Din) bf16 ; w_ref: (3, Din, Dout) bf16 ; b_ref: (1,1,Dout)
    # f32 ; out_ref: (S, TB, Dout) bf16.  Accumulate in a local fp32 value,
    # store once; pad=1 handled by shifting per-tap outputs inside VMEM.
    S = x_ref.shape[0]
    x = x_ref[...]
    dn = (((2,), (0,)), ((), ()))                          # contract over Din

    acc = lax.dot_general(x, w_ref[1], dn, preferred_element_type=jnp.float32)
    acc = acc + b_ref[...]

    zero_row = jnp.zeros((1,) + acc.shape[1:], jnp.float32)
    # tap 0: out[t] += x[t-1] @ w0   (zero contribution at t = 0)
    y0 = lax.dot_general(x, w_ref[0], dn, preferred_element_type=jnp.float32)
    acc = acc + jnp.concatenate([zero_row, y0[:S - 1]], axis=0)
    # tap 2: out[t] += x[t+1] @ w2   (zero contribution at t = S-1)
    y2 = lax.dot_general(x, w_ref[2], dn, preferred_element_type=jnp.float32)
    acc = acc + jnp.concatenate([y2[1:], zero_row], axis=0)

    out_ref[...] = jnp.maximum(acc, 0.0).astype(out_ref.dtype)


def conv1d_relu(x_tm, w, b):
    # x_tm: (S, BP, Din) bf16 time-major; output (S, BP, Dout) bf16 time-major.
    S, BP, Din = x_tm.shape
    Dout = w.shape[-1]
    TB = min(CONV_BATCH_TILE, BP)
    # TODO(synk): for very long S additionally tile the sequence axis with a
    # one-row halo so per-buffer tiles stay small on v7x's 64 MiB VMEM.
    return pl.pallas_call(
        conv_relu_kernel,
        out_shape=jax.ShapeDtypeStruct((S, BP, Dout), jnp.bfloat16),
        grid=(BP // TB,),
        in_specs=[
            pl.BlockSpec((S, TB, Din), lambda i: (0, i, 0)),
            pl.BlockSpec((3, Din, Dout), lambda i: (0, 0, 0)),
            pl.BlockSpec((1, 1, Dout), lambda i: (0, 0, 0)),
        ],
        out_specs=pl.BlockSpec((S, TB, Dout), lambda i: (0, i, 0)),
        compiler_params=pltpu.CompilerParams(
            dimension_semantics=("parallel",),
            vmem_limit_bytes=_VMEM_LIMIT),
    )(x_tm, w, b)


# --------------------------------------------------------------------------
# LSTM cell math (PyTorch gate order i, f, g, o), fp32 elementwise
# --------------------------------------------------------------------------
def _lstm_cell(z, c_prev, hidden):
    i_g = jax.nn.sigmoid(z[:, 0 * hidden:1 * hidden])
    f_g = jax.nn.sigmoid(z[:, 1 * hidden:2 * hidden])
    g_g = jnp.tanh(z[:, 2 * hidden:3 * hidden])
    o_g = jax.nn.sigmoid(z[:, 3 * hidden:4 * hidden])
    c = f_g * c_prev + i_g * g_g
    h = o_g * jnp.tanh(c)
    return h, c


# --------------------------------------------------------------------------
# Bidirectional LSTM layer 1 (full sequence output); x is time-major-flat:
# row = t*batch + b.
# --------------------------------------------------------------------------
def bilstm_seq_interleaved_kernel(x_ref, wih_f_ref, whh_f_ref, b_f_ref,
                                  wih_b_ref, whh_b_ref, b_b_ref,
                                  out_ref, zf_scr, zb_scr, *, seq_len, batch):
    """Single-TensorCore variant: fwd & bwd recurrences interleaved per step."""
    H = whh_f_ref.shape[0]
    x = x_ref[...]                                          # bf16 (S*B, In)
    # Hoisted input projections: one large MXU matmul per direction; (x@Wih+b)
    # stored as bf16 to halve scratch VMEM.
    zf_scr[...] = (jnp.dot(x, wih_f_ref[...], preferred_element_type=jnp.float32)
                   + b_f_ref[...]).astype(zf_scr.dtype)
    zb_scr[...] = (jnp.dot(x, wih_b_ref[...], preferred_element_type=jnp.float32)
                   + b_b_ref[...]).astype(zb_scr.dtype)
    zeros = jnp.zeros((batch, H), jnp.float32)

    def step(t, carry):
        h_f, c_f, h_b, c_b = carry
        row_f = pl.multiple_of(t * batch, batch)
        row_b = pl.multiple_of((seq_len - 1 - t) * batch, batch)
        # Two independent MXU pushes issued back-to-back: they hide each
        # other's result-FIFO / EUP latency on the serial critical path.
        rec_f = jnp.dot(h_f.astype(jnp.bfloat16), whh_f_ref[...],
                        preferred_element_type=jnp.float32)
        rec_b = jnp.dot(h_b.astype(jnp.bfloat16), whh_b_ref[...],
                        preferred_element_type=jnp.float32)
        z_f = zf_scr[pl.ds(row_f, batch), :].astype(jnp.float32) + rec_f
        z_b = zb_scr[pl.ds(row_b, batch), :].astype(jnp.float32) + rec_b
        h_f, c_f = _lstm_cell(z_f, c_f, H)
        h_b, c_b = _lstm_cell(z_b, c_b, H)
        out_ref[pl.ds(row_f, batch), pl.ds(0, H)] = h_f.astype(out_ref.dtype)
        out_ref[pl.ds(row_b, batch), pl.ds(H, H)] = h_b.astype(out_ref.dtype)
        return (h_f, c_f, h_b, c_b)

    lax.fori_loop(0, seq_len, step, (zeros, zeros, zeros, zeros))


def bilstm_seq_direction_kernel(x_ref, wih_ref, whh_ref, b_ref, out_ref, z_scr,
                                *, seq_len, batch):
    """Megacore variant: grid=(2,) 'parallel' over direction (one TC each)."""
    d = pl.program_id(0)                                    # 0 = fwd, 1 = bwd
    H = whh_ref.shape[0]
    x = x_ref[...]
    z_scr[...] = (jnp.dot(x, wih_ref[...], preferred_element_type=jnp.float32)
                  + b_ref[...]).astype(z_scr.dtype)
    zeros = jnp.zeros((batch, H), jnp.float32)

    def step(i, carry):
        h, c = carry
        t = jnp.where(d == 0, i, seq_len - 1 - i)
        row = pl.multiple_of(t * batch, batch)
        z = z_scr[pl.ds(row, batch), :].astype(jnp.float32) + jnp.dot(
            h.astype(jnp.bfloat16), whh_ref[...],
            preferred_element_type=jnp.float32)
        h, c = _lstm_cell(z, c, H)
        out_ref[pl.ds(row, batch), :] = h.astype(out_ref.dtype)
        return (h, c)

    lax.fori_loop(0, seq_len, step, (zeros, zeros))


def bilstm_sequence_layer(x_flat, p_fwd, p_bwd, *, seq_len, batch):
    H = LSTM_HIDDEN
    rows = seq_len * batch
    in_dim = p_fwd[0].shape[0]
    # TODO(synk): for very long sequences chunk the hoisted z projection into a
    # 2-deep ring of (chunk*batch, 4H) scratch instead of one full-sequence slab.
    if _TWO_TENSORCORES:
        wih = jnp.stack([p_fwd[0], p_bwd[0]])               # (2, In, 4H) bf16
        whh = jnp.stack([p_fwd[1], p_bwd[1]])               # (2, H, 4H) bf16
        bias = jnp.stack([p_fwd[2], p_bwd[2]])              # (2, 1, 4H) f32
        return pl.pallas_call(
            functools.partial(bilstm_seq_direction_kernel,
                              seq_len=seq_len, batch=batch),
            out_shape=jax.ShapeDtypeStruct((rows, 2 * H), jnp.bfloat16),
            grid=(2,),
            in_specs=[
                pl.BlockSpec((rows, in_dim), lambda d: (0, 0)),
                pl.BlockSpec((None, in_dim, 4 * H), lambda d: (d, 0, 0)),
                pl.BlockSpec((None, H, 4 * H), lambda d: (d, 0, 0)),
                pl.BlockSpec((None, 1, 4 * H), lambda d: (d, 0, 0)),
            ],
            out_specs=pl.BlockSpec((rows, H), lambda d: (0, d)),
            scratch_shapes=[pltpu.VMEM((rows, 4 * H), jnp.bfloat16)],
            compiler_params=pltpu.CompilerParams(
                dimension_semantics=("parallel",),
                vmem_limit_bytes=_VMEM_LIMIT),
        )(x_flat, wih, whh, bias)

    return pl.pallas_call(
        functools.partial(bilstm_seq_interleaved_kernel,
                          seq_len=seq_len, batch=batch),
        out_shape=jax.ShapeDtypeStruct((rows, 2 * H), jnp.bfloat16),
        in_specs=_vmem_specs(7),
        out_specs=pl.BlockSpec(memory_space=pltpu.MemorySpace.VMEM),
        scratch_shapes=[pltpu.VMEM((rows, 4 * H), jnp.bfloat16),
                        pltpu.VMEM((rows, 4 * H), jnp.bfloat16)],
        compiler_params=pltpu.CompilerParams(vmem_limit_bytes=_VMEM_LIMIT),
    )(x_flat, *p_fwd, *p_bwd)


# --------------------------------------------------------------------------
# Fused bidirectional LSTM layer 2 + dense head + softmax
# --------------------------------------------------------------------------
def bilstm_head_kernel(x_ref, wih_f_ref, whh_f_ref, b_f_ref,
                       wih_b_ref, b_b_ref,
                       w1_ref, b1_ref, w2_ref, b2_ref,
                       out_ref, zf_scr, *, seq_len, batch):
    H = whh_f_ref.shape[0]
    x = x_ref[...]                                          # bf16 (S*B, 2H)
    # TODO(synk): for very long sequences replace this full-sequence z slab with
    # a 2-chunk ring overlapping "project chunk k+1" with "recur over chunk k".
    zf_scr[...] = (jnp.dot(x, wih_f_ref[...], preferred_element_type=jnp.float32)
                   + b_f_ref[...]).astype(zf_scr.dtype)
    zeros = jnp.zeros((batch, H), jnp.float32)

    def fwd_step(t, carry):
        h, c = carry
        row = pl.multiple_of(t * batch, batch)
        z = zf_scr[pl.ds(row, batch), :].astype(jnp.float32) + jnp.dot(
            h.astype(jnp.bfloat16), whh_f_ref[...],
            preferred_element_type=jnp.float32)
        return _lstm_cell(z, c, H)

    h_f, _ = lax.fori_loop(0, seq_len, fwd_step, (zeros, zeros))

    # Backward direction: only lstm_out[:, -1, H:] is consumed (the spec takes
    # lstm_out[:, -1, :]), and that equals the *first* step of the reversed
    # recurrence from a zero state -> the h @ W_hh term vanishes and only
    # x[S-1] @ W_ih is needed.  Mathematically identical to PyTorch.
    x_last = x_ref[pl.ds((seq_len - 1) * batch, batch), :]
    z_b = (jnp.dot(x_last, wih_b_ref[...], preferred_element_type=jnp.float32)
           + b_b_ref[...])
    h_b, _ = _lstm_cell(z_b, zeros, H)

    final_hidden = jnp.concatenate([h_f, h_b], axis=-1)     # (B, 2H) f32
    x1 = jnp.maximum(
        jnp.dot(final_hidden, w1_ref[...], preferred_element_type=jnp.float32)
        + b1_ref[...], 0.0)
    # nn.Dropout is an inference-mode identity.
    logits = (jnp.dot(x1, w2_ref[...], preferred_element_type=jnp.float32)
              + b2_ref[...])
    m = jnp.max(logits, axis=1, keepdims=True)
    e = jnp.exp(logits - m)
    out_ref[...] = e / jnp.sum(e, axis=1, keepdims=True)


def bilstm_head(x_flat, p_fwd, p_bwd, w1, b1, w2, b2, *, seq_len, batch):
    H = LSTM_HIDDEN
    rows = seq_len * batch
    wih_b, _whh_b_unused, b_b = p_bwd                       # W_hh_bwd not needed
    return pl.pallas_call(
        functools.partial(bilstm_head_kernel, seq_len=seq_len, batch=batch),
        out_shape=jax.ShapeDtypeStruct((batch, NUM_CLASSES), jnp.float32),
        in_specs=_vmem_specs(10),
        out_specs=pl.BlockSpec(memory_space=pltpu.MemorySpace.VMEM),
        scratch_shapes=[pltpu.VMEM((rows, 4 * H), jnp.bfloat16)],
        compiler_params=pltpu.CompilerParams(vmem_limit_bytes=_VMEM_LIMIT),
    )(x_flat, *p_fwd, wih_b, b_b, w1, b1, w2, b2)


# --------------------------------------------------------------------------
# Parameter init (deterministic, synthetic) and full forward
# --------------------------------------------------------------------------
def init_params(key, vocab):
    ks = iter(jax.random.split(key, 32))

    def nrm(shape, scale=0.02):
        return (scale * jax.random.normal(next(ks), shape)).astype(jnp.float32)

    params = {
        # bf16 embedding table -> bf16 conv input (halves HBM->VMEM DMA bytes).
        "emb_table": nrm((vocab, BERT_DIM), scale=0.1).astype(jnp.bfloat16),
        # PyTorch Conv1d weight is (Cout, Cin, K); stored here as (K, Cin, Cout)
        # in bf16 (MXU operand).
        "conv_w": nrm((3, BERT_DIM, CNN_OUT)).astype(jnp.bfloat16),
        "conv_b": nrm((1, 1, CNN_OUT)),
        # PyTorch Linear weight is (out, in); stored transposed (in, out), f32.
        "dense1_w": nrm((2 * LSTM_HIDDEN, DENSE_HIDDEN)),
        "dense1_b": nrm((1, DENSE_HIDDEN)),
        "dense2_w": nrm((DENSE_HIDDEN, NUM_CLASSES)),
        "dense2_b": nrm((1, NUM_CLASSES)),
    }
    for layer in range(NUM_LSTM_LAYERS):
        in_dim = CNN_OUT if layer == 0 else 2 * LSTM_HIDDEN
        for direction in ("fwd", "bwd"):
            # PyTorch: weight_ih (4H, in), weight_hh (4H, H); stored transposed
            # in bf16 (MXU operands).  Biases folded (b_ih + b_hh), f32.
            params[f"lstm_l{layer}_{direction}"] = (
                nrm((in_dim, 4 * LSTM_HIDDEN)).astype(jnp.bfloat16),       # W_ih^T
                nrm((LSTM_HIDDEN, 4 * LSTM_HIDDEN)).astype(jnp.bfloat16),  # W_hh^T
                nrm((1, 4 * LSTM_HIDDEN)),                                 # bias
            )
    return params


def sarcasm_forward(params, input_ids, attention_mask):
    B, S = input_ids.shape
    # Pad batch to a multiple of 16 BEFORE the conv: every per-timestep bf16
    # LSTM store becomes a full unmasked (16,128) tile and no activation
    # pad/transpose round-trips HBM between pallas_calls.
    BP = ((B + 15) // 16) * 16
    if BP != B:
        input_ids = jnp.pad(input_ids, ((0, BP - B), (0, 0)))
        attention_mask = jnp.pad(attention_mask, ((0, BP - B), (0, 0)))

    # TODO(synk): frozen pretrained bert-base-uncased has no in-script
    # equivalent; its last_hidden_state is modeled as a deterministic bf16
    # embedding lookup (masked by attention_mask).
    ids_tm = input_ids.T                                     # (S, BP) time-major
    mask_tm = attention_mask.T.astype(jnp.bfloat16)[..., None]
    emb = jnp.take(params["emb_table"], ids_tm, axis=0) * mask_tm  # (S,BP,768)

    # Conv1d over sequence (torch permute(0,2,1) == feature-last here) + ReLU,
    # produced directly in the time-major layout the LSTM recurrence wants.
    cnn = conv1d_relu(emb, params["conv_w"], params["conv_b"])   # (S, BP, 256)
    x = cnn.reshape(S * BP, CNN_OUT)      # row = t*BP + b; metadata-only reshape

    # Layer 1: fused bidirectional LSTM producing the full sequence.
    l1 = bilstm_sequence_layer(x, params["lstm_l0_fwd"], params["lstm_l0_bwd"],
                               seq_len=S, batch=BP)              # (S*BP, 256)

    # Inter-layer dropout of nn.LSTM: inference identity.
    # Layer 2 + dense head + softmax fused into one kernel.
    probs = bilstm_head(l1, params["lstm_l1_fwd"], params["lstm_l1_bwd"],
                        params["dense1_w"], params["dense1_b"],
                        params["dense2_w"], params["dense2_b"],
                        seq_len=S, batch=BP)                      # (BP, 2)
    return probs[:B]


if __name__ == "__main__":
    B, S, VOCAB = 2, 8, 64

    key = jax.random.PRNGKey(0)
    k_ids, _ = jax.random.split(key)
    input_ids = jax.random.randint(k_ids, (B, S), 0, VOCAB, dtype=jnp.int32)
    attention_mask = jnp.ones((B, S), dtype=jnp.int32)

    params = init_params(jax.random.PRNGKey(42), vocab=VOCAB)

    preds = jax.jit(sarcasm_forward)(params, input_ids, attention_mask)
    preds = jax.block_until_ready(preds)

    assert preds.shape == (B, NUM_CLASSES), preds.shape
    assert preds.dtype == jnp.float32
    row_sums = jnp.sum(preds, axis=1)
    assert bool(jnp.all(jnp.abs(row_sums - 1.0) < 1e-4)), row_sums
    print("KERNEL_OK")
</pallas_src>

<mosaic_0001>
module attributes {stable_mosaic.version = 11 : i64} {
  func.func @conv_relu_kernel(%arg0: i32, %arg1: memref<8x16x768xbf16, #tpu.memory_space<vmem>>, %arg2: memref<3x768x256xbf16, #tpu.memory_space<vmem>>, %arg3: memref<1x1x256xf32, #tpu.memory_space<vmem>>, %arg4: memref<8x16x256xbf16, #tpu.memory_space<vmem>>) attributes {dimension_semantics = [#tpu.dimension_semantics<parallel>], iteration_bounds = array<i64: 1>, scalar_prefetch = 0 : i64, scratch_operands = 0 : i64, tpu.core_type = #tpu.core_type<tc>, window_params = [{transform_indices = @transform_0, window_bounds = array<i64: 8, 16, 768>}, {pipeline_mode = #tpu.pipeline_mode<synchronous>, transform_indices = @transform_1, window_bounds = array<i64: 3, 768, 256>}, {pipeline_mode = #tpu.pipeline_mode<synchronous>, transform_indices = @transform_2, window_bounds = array<i64: 1, 1, 256>}, {transform_indices = @transform_3, window_bounds = array<i64: 8, 16, 256>}]} {
    %c0 = arith.constant 0 : index
    %c0_0 = arith.constant 0 : index
    %c0_1 = arith.constant 0 : index
    %0 = vector.load %arg1[%c0, %c0_0, %c0_1] : memref<8x16x768xbf16, #tpu.memory_space<vmem>>, vector<8x16x768xbf16>
    %c1 = arith.constant 1 : index
    %c0_2 = arith.constant 0 : index
    %c0_3 = arith.constant 0 : index
    %1 = vector.load %arg2[%c1, %c0_2, %c0_3] : memref<3x768x256xbf16, #tpu.memory_space<vmem>>, vector<1x768x256xbf16>
    %2 = vector.shape_cast %1 : vector<1x768x256xbf16> to vector<768x256xbf16>
    %cst = arith.constant dense<0.000000e+00> : vector<8x16x256xf32>
    %3 = tpu.matmul %0, %2, %cst {dimension_numbers = #tpu.dot_dimension_numbers<[2], [0], [0, 1], [1], [0, 0, 0, 1, 1, 1], [], []>} : vector<8x16x768xbf16>, vector<768x256xbf16>, vector<8x16x256xf32> -> vector<8x16x256xf32>
    %c0_4 = arith.constant 0 : index
    %c0_5 = arith.constant 0 : index
    %c0_6 = arith.constant 0 : index
    %4 = vector.load %arg3[%c0_4, %c0_5, %c0_6] : memref<1x1x256xf32, #tpu.memory_space<vmem>>, vector<1x1x256xf32>
    %5 = vector.broadcast %4 : vector<1x1x256xf32> to vector<8x16x256xf32>
    %6 = arith.addf %3, %5 : vector<8x16x256xf32>
    %cst_7 = arith.constant 0.000000e+00 : f32
    %7 = vector.broadcast %cst_7 : f32 to vector<1x16x256xf32>
    %c0_8 = arith.constant 0 : index
    %c0_9 = arith.constant 0 : index
    %c0_10 = arith.constant 0 : index
    %8 = vector.load %arg2[%c0_8, %c0_9, %c0_10] : memref<3x768x256xbf16, #tpu.memory_space<vmem>>, vector<1x768x256xbf16>
    %9 = vector.shape_cast %8 : vector<1x768x256xbf16> to vector<768x256xbf16>
    %cst_11 = arith.constant dense<0.000000e+00> : vector<8x16x256xf32>
    %10 = tpu.matmul %0, %9, %cst_11 {dimension_numbers = #tpu.dot_dimension_numbers<[2], [0], [0, 1], [1], [0, 0, 0, 1, 1, 1], [], []>} : vector<8x16x768xbf16>, vector<768x256xbf16>, vector<8x16x256xf32> -> vector<8x16x256xf32>
    %11 = vector.extract_strided_slice %10 {offsets = [0, 0, 0], sizes = [7, 16, 256], strides = [1, 1, 1]} : vector<8x16x256xf32> to vector<7x16x256xf32>
    %12 = tpu.concatenate %7, %11 in 0 : vector<1x16x256xf32>, vector<7x16x256xf32> -> vector<8x16x256xf32>
    %13 = arith.addf %6, %12 : vector<8x16x256xf32>
    %c2 = arith.constant 2 : index
    %c0_12 = arith.constant 0 : index
    %c0_13 = arith.constant 0 : index
    %14 = vector.load %arg2[%c2, %c0_12, %c0_13] : memref<3x768x256xbf16, #tpu.memory_space<vmem>>, vector<1x768x256xbf16>
    %15 = vector.shape_cast %14 : vector<1x768x256xbf16> to vector<768x256xbf16>
    %cst_14 = arith.constant dense<0.000000e+00> : vector<8x16x256xf32>
    %16 = tpu.matmul %0, %15, %cst_14 {dimension_numbers = #tpu.dot_dimension_numbers<[2], [0], [0, 1], [1], [0, 0, 0, 1, 1, 1], [], []>} : vector<8x16x768xbf16>, vector<768x256xbf16>, vector<8x16x256xf32> -> vector<8x16x256xf32>
    %17 = vector.extract_strided_slice %16 {offsets = [1, 0, 0], sizes = [7, 16, 256], strides = [1, 1, 1]} : vector<8x16x256xf32> to vector<7x16x256xf32>
    %18 = tpu.concatenate %17, %7 in 0 : vector<7x16x256xf32>, vector<1x16x256xf32> -> vector<8x16x256xf32>
    %19 = arith.addf %13, %18 : vector<8x16x256xf32>
    %cst_15 = arith.constant 0.000000e+00 : f32
    %20 = vector.broadcast %cst_15 : f32 to vector<8x16x256xf32>
    %21 = arith.maximumf %19, %20 : vector<8x16x256xf32>
    %22 = arith.truncf %21 : vector<8x16x256xf32> to vector<8x16x256xbf16>
    %c0_16 = arith.constant 0 : index
    %c0_17 = arith.constant 0 : index
    %c0_18 = arith.constant 0 : index
    %23 = vector.load %arg4[%c0_16, %c0_17, %c0_18] : memref<8x16x256xbf16, #tpu.memory_space<vmem>>, vector<8x16x256xbf16>
    tpu.vector_store %arg4[%c0_16, %c0_17, %c0_18], %22 {strides = array<i32>} : memref<8x16x256xbf16, #tpu.memory_space<vmem>>, vector<8x16x256xbf16>,
    return
  }
  func.func @transform_0(%arg0: i32) -> (i32, i32, i32) {
    %c0_i32 = arith.constant 0 : i32
    %c0_i32_0 = arith.constant 0 : i32
    %c0_i32_1 = arith.constant 0 : i32
    return %c0_i32, %arg0, %c0_i32_0 : i32, i32, i32
  }
  func.func @transform_1(%arg0: i32) -> (i32, i32, i32) {
    %c0_i32 = arith.constant 0 : i32
    %c0_i32_0 = arith.constant 0 : i32
    %c0_i32_1 = arith.constant 0 : i32
    %c0_i32_2 = arith.constant 0 : i32
    return %c0_i32, %c0_i32_0, %c0_i32_1 : i32, i32, i32
  }
  func.func @transform_2(%arg0: i32) -> (i32, i32, i32) {
    %c0_i32 = arith.constant 0 : i32
    %c0_i32_0 = arith.constant 0 : i32
    %c0_i32_1 = arith.constant 0 : i32
    %c0_i32_2 = arith.constant 0 : i32
    return %c0_i32, %c0_i32_0, %c0_i32_1 : i32, i32, i32
  }
  func.func @transform_3(%arg0: i32) -> (i32, i32, i32) {
    %c0_i32 = arith.constant 0 : i32
    %c0_i32_0 = arith.constant 0 : i32
    %c0_i32_1 = arith.constant 0 : i32
    return %c0_i32, %arg0, %c0_i32_0 : i32, i32, i32
  }
}

module attributes {stable_mosaic.version = 11 : i64} {
  func.func @bilstm_seq_interleaved_kernel(%arg0: memref<128x256xbf16, #tpu.memory_space<vmem>>, %arg1: memref<256x512xbf16, #tpu.memory_space<vmem>>, %arg2: memref<128x512xbf16, #tpu.memory_space<vmem>>, %arg3: memref<1x512xf32, #tpu.memory_space<vmem>>, %arg4: memref<256x512xbf16, #tpu.memory_space<vmem>>, %arg5: memref<128x512xbf16, #tpu.memory_space<vmem>>, %arg6: memref<1x512xf32, #tpu.memory_space<vmem>>, %arg7: memref<128x256xbf16, #tpu.memory_space<vmem>>, %arg8: memref<128x512xbf16, #tpu.memory_space<vmem>>, %arg9: memref<128x512xbf16, #tpu.memory_space<vmem>>) attributes {dimension_semantics = [], scalar_prefetch = 0 : i64, scratch_operands = 2 : i64, tpu.core_type = #tpu.core_type<tc>} {
    %c0 = arith.constant 0 : index
    %c0_0 = arith.constant 0 : index
    %0 = vector.load %arg0[%c0, %c0_0] : memref<128x256xbf16, #tpu.memory_space<vmem>>, vector<128x256xbf16>
    %c0_1 = arith.constant 0 : index
    %c0_2 = arith.constant 0 : index
    %1 = vector.load %arg1[%c0_1, %c0_2] : memref<256x512xbf16, #tpu.memory_space<vmem>>, vector<256x512xbf16>
    %cst = arith.constant dense<0.000000e+00> : vector<128x512xf32>
    %2 = tpu.matmul %0, %1, %cst {dimension_numbers = #tpu.dot_dimension_numbers<[1], [0], [0], [1], [0, 0, 1, 1], [], []>} : vector<128x256xbf16>, vector<256x512xbf16>, vector<128x512xf32> -> vector<128x512xf32>
    %c0_3 = arith.constant 0 : index
    %c0_4 = arith.constant 0 : index
    %3 = vector.load %arg3[%c0_3, %c0_4] : memref<1x512xf32, #tpu.memory_space<vmem>>, vector<1x512xf32>
    %4 = vector.broadcast %3 : vector<1x512xf32> to vector<128x512xf32>
    %5 = arith.addf %2, %4 : vector<128x512xf32>
    %6 = arith.truncf %5 : vector<128x512xf32> to vector<128x512xbf16>
    %c0_5 = arith.constant 0 : index
    %c0_6 = arith.constant 0 : index
    %7 = vector.load %arg8[%c0_5, %c0_6] : memref<128x512xbf16, #tpu.memory_space<vmem>>, vector<128x512xbf16>
    tpu.vector_store %arg8[%c0_5, %c0_6], %6 {strides = array<i32>} : memref<128x512xbf16, #tpu.memory_space<vmem>>, vector<128x512xbf16>,
    %c0_7 = arith.constant 0 : index
    %c0_8 = arith.constant 0 : index
    %8 = vector.load %arg4[%c0_7, %c0_8] : memref<256x512xbf16, #tpu.memory_space<vmem>>, vector<256x512xbf16>
    %cst_9 = arith.constant dense<0.000000e+00> : vector<128x512xf32>
    %9 = tpu.matmul %0, %8, %cst_9 {dimension_numbers = #tpu.dot_dimension_numbers<[1], [0], [0], [1], [0, 0, 1, 1], [], []>} : vector<128x256xbf16>, vector<256x512xbf16>, vector<128x512xf32> -> vector<128x512xf32>
    %c0_10 = arith.constant 0 : index
    %c0_11 = arith.constant 0 : index
    %10 = vector.load %arg6[%c0_10, %c0_11] : memref<1x512xf32, #tpu.memory_space<vmem>>, vector<1x512xf32>
    %11 = vector.broadcast %10 : vector<1x512xf32> to vector<128x512xf32>
    %12 = arith.addf %9, %11 : vector<128x512xf32>
    %13 = arith.truncf %12 : vector<128x512xf32> to vector<128x512xbf16>
    %c0_12 = arith.constant 0 : index
    %c0_13 = arith.constant 0 : index
    %14 = vector.load %arg9[%c0_12, %c0_13] : memref<128x512xbf16, #tpu.memory_space<vmem>>, vector<128x512xbf16>
    tpu.vector_store %arg9[%c0_12, %c0_13], %13 {strides = array<i32>} : memref<128x512xbf16, #tpu.memory_space<vmem>>, vector<128x512xbf16>,
    %cst_14 = arith.constant 0.000000e+00 : f32
    %15 = vector.broadcast %cst_14 : f32 to vector<16x128xf32>
    %c0_i32 = arith.constant 0 : i32
    %c8_i32 = arith.constant 8 : i32
    %16 = arith.addi %c0_i32, %c8_i32 : i32
    %c1_i32 = arith.constant 1 : i32
    %17:4 = scf.for %arg10 = %c0_i32 to %16 step %c1_i32 iter_args(%arg11 = %15, %arg12 = %15, %arg13 = %15, %arg14 = %15) -> (vector<16x128xf32>, vector<16x128xf32>, vector<16x128xf32>, vector<16x128xf32>)  : i32 {
      %c16_i32 = arith.constant 16 : i32
      %18 = arith.muli %arg10, %c16_i32 : i32
      %19 = tpu.assume_multiple %18, 16 : i32
      %c7_i32 = arith.constant 7 : i32
      %20 = arith.subi %c7_i32, %arg10 : i32
      %c16_i32_16 = arith.constant 16 : i32
      %21 = arith.muli %20, %c16_i32_16 : i32
      %22 = tpu.assume_multiple %21, 16 : i32
      %23 = arith.truncf %arg11 : vector<16x128xf32> to vector<16x128xbf16>
      %c0_17 = arith.constant 0 : index
      %c0_18 = arith.constant 0 : index
      %24 = vector.load %arg2[%c0_17, %c0_18] : memref<128x512xbf16, #tpu.memory_space<vmem>>, vector<128x512xbf16>
      %cst_19 = arith.constant dense<0.000000e+00> : vector<16x512xf32>
      %25 = tpu.matmul %23, %24, %cst_19 {dimension_numbers = #tpu.dot_dimension_numbers<[1], [0], [0], [1], [0, 0, 1, 1], [], []>} : vector<16x128xbf16>, vector<128x512xbf16>, vector<16x512xf32> -> vector<16x512xf32>
      %26 = arith.truncf %arg13 : vector<16x128xf32> to vector<16x128xbf16>
      %c0_20 = arith.constant 0 : index
      %c0_21 = arith.constant 0 : index
      %27 = vector.load %arg5[%c0_20, %c0_21] : memref<128x512xbf16, #tpu.memory_space<vmem>>, vector<128x512xbf16>
      %cst_22 = arith.constant dense<0.000000e+00> : vector<16x512xf32>
      %28 = tpu.matmul %26, %27, %cst_22 {dimension_numbers = #tpu.dot_dimension_numbers<[1], [0], [0], [1], [0, 0, 1, 1], [], []>} : vector<16x128xbf16>, vector<128x512xbf16>, vector<16x512xf32> -> vector<16x512xf32>
      %29 = arith.index_cast %19 : i32 to index
      %c0_23 = arith.constant 0 : index
      %30 = vector.load %arg8[%29, %c0_23] : memref<128x512xbf16, #tpu.memory_space<vmem>>, vector<16x512xbf16>
      %31 = arith.extf %30 : vector<16x512xbf16> to vector<16x512xf32>
      %32 = arith.addf %31, %25 : vector<16x512xf32>
      %33 = arith.index_cast %22 : i32 to index
      %c0_24 = arith.constant 0 : index
      %34 = vector.load %arg9[%33, %c0_24] : memref<128x512xbf16, #tpu.memory_space<vmem>>, vector<16x512xbf16>
      %35 = arith.extf %34 : vector<16x512xbf16> to vector<16x512xf32>
      %36 = arith.addf %35, %28 : vector<16x512xf32>
      %37 = vector.extract_strided_slice %32 {offsets = [0, 0], sizes = [16, 128], strides = [1, 1]} : vector<16x512xf32> to vector<16x128xf32>
      %38 = arith.negf %37 : vector<16x128xf32>
      %39 = math.exp %38 : vector<16x128xf32>
      %cst_25 = arith.constant 1.000000e+00 : f32
      %40 = vector.broadcast %cst_25 : f32 to vector<16x128xf32>
      %41 = arith.addf %40, %39 : vector<16x128xf32>
      %42 = arith.divf %40, %41 : vector<16x128xf32>
      %43 = vector.extract_strided_slice %32 {offsets = [0, 128], sizes = [16, 128], strides = [1, 1]} : vector<16x512xf32> to vector<16x128xf32>
      %44 = arith.negf %43 : vector<16x128xf32>
      %45 = math.exp %44 : vector<16x128xf32>
      %cst_26 = arith.constant 1.000000e+00 : f32
      %46 = vector.broadcast %cst_26 : f32 to vector<16x128xf32>
      %47 = arith.addf %46, %45 : vector<16x128xf32>
      %48 = arith.divf %46, %47 : vector<16x128xf32>
      %49 = vector.extract_strided_slice %32 {offsets = [0, 256], sizes = [16, 128], strides = [1, 1]} : vector<16x512xf32> to vector<16x128xf32>
      %50 = math.tanh %49 : vector<16x128xf32>
      %51 = vector.extract_strided_slice %32 {offsets = [0, 384], sizes = [16, 128], strides = [1, 1]} : vector<16x512xf32> to vector<16x128xf32>
      %52 = arith.negf %51 : vector<16x128xf32>
      %53 = math.exp %52 : vector<16x128xf32>
      %cst_27 = arith.constant 1.000000e+00 : f32
      %54 = vector.broadcast %cst_27 : f32 to vector<16x128xf32>
      %55 = arith.addf %54, %53 : vector<16x128xf32>
      %56 = arith.divf %54, %55 : vector<16x128xf32>
      %57 = arith.mulf %48, %arg12 : vector<16x128xf32>
      %58 = arith.mulf %42, %50 : vector<16x128xf32>
      %59 = arith.addf %57, %58 : vector<16x128xf32>
      %60 = math.tanh %59 : vector<16x128xf32>
      %61 = arith.mulf %56, %60 : vector<16x128xf32>
      %62 = vector.extract_strided_slice %36 {offsets = [0, 0], sizes = [16, 128], strides = [1, 1]} : vector<16x512xf32> to vector<16x128xf32>
      %63 = arith.negf %62 : vector<16x128xf32>
      %64 = math.exp %63 : vector<16x128xf32>
      %cst_28 = arith.constant 1.000000e+00 : f32
      %65 = vector.broadcast %cst_28 : f32 to vector<16x128xf32>
      %66 = arith.addf %65, %64 : vector<16x128xf32>
      %67 = arith.divf %65, %66 : vector<16x128xf32>
      %68 = vector.extract_strided_slice %36 {offsets = [0, 128], sizes = [16, 128], strides = [1, 1]} : vector<16x512xf32> to vector<16x128xf32>
      %69 = arith.negf %68 : vector<16x128xf32>
      %70 = math.exp %69 : vector<16x128xf32>
      %cst_29 = arith.constant 1.000000e+00 : f32
      %71 = vector.broadcast %cst_29 : f32 to vector<16x128xf32>
      %72 = arith.addf %71, %70 : vector<16x128xf32>
      %73 = arith.divf %71, %72 : vector<16x128xf32>
      %74 = vector.extract_strided_slice %36 {offsets = [0, 256], sizes = [16, 128], strides = [1, 1]} : vector<16x512xf32> to vector<16x128xf32>
      %75 = math.tanh %74 : vector<16x128xf32>
      %76 = vector.extract_strided_slice %36 {offsets = [0, 384], sizes = [16, 128], strides = [1, 1]} : vector<16x512xf32> to vector<16x128xf32>
      %77 = arith.negf %76 : vector<16x128xf32>
      %78 = math.exp %77 : vector<16x128xf32>
      %cst_30 = arith.constant 1.000000e+00 : f32
      %79 = vector.broadcast %cst_30 : f32 to vector<16x128xf32>
      %80 = arith.addf %79, %78 : vector<16x128xf32>
      %81 = arith.divf %79, %80 : vector<16x128xf32>
      %82 = arith.mulf %73, %arg14 : vector<16x128xf32>
      %83 = arith.mulf %67, %75 : vector<16x128xf32>
      %84 = arith.addf %82, %83 : vector<16x128xf32>
      %85 = math.tanh %84 : vector<16x128xf32>
      %86 = arith.mulf %81, %85 : vector<16x128xf32>
      %87 = arith.truncf %61 : vector<16x128xf32> to vector<16x128xbf16>
      %88 = arith.index_cast %19 : i32 to index
      %c0_31 = arith.constant 0 : index
      %89 = vector.load %arg7[%88, %c0_31] : memref<128x256xbf16, #tpu.memory_space<vmem>>, vector<16x128xbf16>
      tpu.vector_store %arg7[%88, %c0_31], %87 {strides = array<i32>} : memref<128x256xbf16, #tpu.memory_space<vmem>>, vector<16x128xbf16>,
      %90 = arith.truncf %86 : vector<16x128xf32> to vector<16x128xbf16>
      %91 = arith.index_cast %22 : i32 to index
      %c128 = arith.constant 128 : index
      %92 = vector.load %arg7[%91, %c128] : memref<128x256xbf16, #tpu.memory_space<vmem>>, vector<16x128xbf16>
      tpu.vector_store %arg7[%91, %c128], %90 {strides = array<i32>} : memref<128x256xbf16, #tpu.memory_space<vmem>>, vector<16x128xbf16>,
      scf.yield %61, %59, %86, %84 : vector<16x128xf32>, vector<16x128xf32>, vector<16x128xf32>, vector<16x128xf32>
    }
    %c8_i32_15 = arith.constant 8 : i32
    return
  }
}

module attributes {stable_mosaic.version = 11 : i64} {
  func.func @bilstm_head_kernel(%arg0: memref<128x256xbf16, #tpu.memory_space<vmem>>, %arg1: memref<256x512xbf16, #tpu.memory_space<vmem>>, %arg2: memref<128x512xbf16, #tpu.memory_space<vmem>>, %arg3: memref<1x512xf32, #tpu.memory_space<vmem>>, %arg4: memref<256x512xbf16, #tpu.memory_space<vmem>>, %arg5: memref<1x512xf32, #tpu.memory_space<vmem>>, %arg6: memref<256x64xf32, #tpu.memory_space<vmem>>, %arg7: memref<1x64xf32, #tpu.memory_space<vmem>>, %arg8: memref<64x2xf32, #tpu.memory_space<vmem>>, %arg9: memref<1x2xf32, #tpu.memory_space<vmem>>, %arg10: memref<16x2xf32, #tpu.memory_space<vmem>>, %arg11: memref<128x512xbf16, #tpu.memory_space<vmem>>) attributes {dimension_semantics = [], scalar_prefetch = 0 : i64, scratch_operands = 1 : i64, tpu.core_type = #tpu.core_type<tc>} {
    %c0 = arith.constant 0 : index
    %c0_0 = arith.constant 0 : index
    %0 = vector.load %arg0[%c0, %c0_0] : memref<128x256xbf16, #tpu.memory_space<vmem>>, vector<128x256xbf16>
    %c0_1 = arith.constant 0 : index
    %c0_2 = arith.constant 0 : index
    %1 = vector.load %arg1[%c0_1, %c0_2] : memref<256x512xbf16, #tpu.memory_space<vmem>>, vector<256x512xbf16>
    %cst = arith.constant dense<0.000000e+00> : vector<128x512xf32>
    %2 = tpu.matmul %0, %1, %cst {dimension_numbers = #tpu.dot_dimension_numbers<[1], [0], [0], [1], [0, 0, 1, 1], [], []>} : vector<128x256xbf16>, vector<256x512xbf16>, vector<128x512xf32> -> vector<128x512xf32>
    %c0_3 = arith.constant 0 : index
    %c0_4 = arith.constant 0 : index
    %3 = vector.load %arg3[%c0_3, %c0_4] : memref<1x512xf32, #tpu.memory_space<vmem>>, vector<1x512xf32>
    %4 = vector.broadcast %3 : vector<1x512xf32> to vector<128x512xf32>
    %5 = arith.addf %2, %4 : vector<128x512xf32>
    %6 = arith.truncf %5 : vector<128x512xf32> to vector<128x512xbf16>
    %c0_5 = arith.constant 0 : index
    %c0_6 = arith.constant 0 : index
    %7 = vector.load %arg11[%c0_5, %c0_6] : memref<128x512xbf16, #tpu.memory_space<vmem>>, vector<128x512xbf16>
    tpu.vector_store %arg11[%c0_5, %c0_6], %6 {strides = array<i32>} : memref<128x512xbf16, #tpu.memory_space<vmem>>, vector<128x512xbf16>,
    %cst_7 = arith.constant 0.000000e+00 : f32
    %8 = vector.broadcast %cst_7 : f32 to vector<16x128xf32>
    %c0_i32 = arith.constant 0 : i32
    %c8_i32 = arith.constant 8 : i32
    %9 = arith.addi %c0_i32, %c8_i32 : i32
    %c1_i32 = arith.constant 1 : i32
    %10:2 = scf.for %arg12 = %c0_i32 to %9 step %c1_i32 iter_args(%arg13 = %8, %arg14 = %8) -> (vector<16x128xf32>, vector<16x128xf32>)  : i32 {
      %c16_i32 = arith.constant 16 : i32
      %65 = arith.muli %arg12, %c16_i32 : i32
      %66 = tpu.assume_multiple %65, 16 : i32
      %67 = arith.index_cast %66 : i32 to index
      %c0_33 = arith.constant 0 : index
      %68 = vector.load %arg11[%67, %c0_33] : memref<128x512xbf16, #tpu.memory_space<vmem>>, vector<16x512xbf16>
      %69 = arith.extf %68 : vector<16x512xbf16> to vector<16x512xf32>
      %70 = arith.truncf %arg13 : vector<16x128xf32> to vector<16x128xbf16>
      %c0_34 = arith.constant 0 : index
      %c0_35 = arith.constant 0 : index
      %71 = vector.load %arg2[%c0_34, %c0_35] : memref<128x512xbf16, #tpu.memory_space<vmem>>, vector<128x512xbf16>
      %cst_36 = arith.constant dense<0.000000e+00> : vector<16x512xf32>
      %72 = tpu.matmul %70, %71, %cst_36 {dimension_numbers = #tpu.dot_dimension_numbers<[1], [0], [0], [1], [0, 0, 1, 1], [], []>} : vector<16x128xbf16>, vector<128x512xbf16>, vector<16x512xf32> -> vector<16x512xf32>
      %73 = arith.addf %69, %72 : vector<16x512xf32>
      %74 = vector.extract_strided_slice %73 {offsets = [0, 0], sizes = [16, 128], strides = [1, 1]} : vector<16x512xf32> to vector<16x128xf32>
      %75 = arith.negf %74 : vector<16x128xf32>
      %76 = math.exp %75 : vector<16x128xf32>
      %cst_37 = arith.constant 1.000000e+00 : f32
      %77 = vector.broadcast %cst_37 : f32 to vector<16x128xf32>
      %78 = arith.addf %77, %76 : vector<16x128xf32>
      %79 = arith.divf %77, %78 : vector<16x128xf32>
      %80 = vector.extract_strided_slice %73 {offsets = [0, 128], sizes = [16, 128], strides = [1, 1]} : vector<16x512xf32> to vector<16x128xf32>
      %81 = arith.negf %80 : vector<16x128xf32>
      %82 = math.exp %81 : vector<16x128xf32>
      %cst_38 = arith.constant 1.000000e+00 : f32
      %83 = vector.broadcast %cst_38 : f32 to vector<16x128xf32>
      %84 = arith.addf %83, %82 : vector<16x128xf32>
      %85 = arith.divf %83, %84 : vector<16x128xf32>
      %86 = vector.extract_strided_slice %73 {offsets = [0, 256], sizes = [16, 128], strides = [1, 1]} : vector<16x512xf32> to vector<16x128xf32>
      %87 = math.tanh %86 : vector<16x128xf32>
      %88 = vector.extract_strided_slice %73 {offsets = [0, 384], sizes = [16, 128], strides = [1, 1]} : vector<16x512xf32> to vector<16x128xf32>
      %89 = arith.negf %88 : vector<16x128xf32>
      %90 = math.exp %89 : vector<16x128xf32>
      %cst_39 = arith.constant 1.000000e+00 : f32
      %91 = vector.broadcast %cst_39 : f32 to vector<16x128xf32>
      %92 = arith.addf %91, %90 : vector<16x128xf32>
      %93 = arith.divf %91, %92 : vector<16x128xf32>
      %94 = arith.mulf %85, %arg14 : vector<16x128xf32>
      %95 = arith.mulf %79, %87 : vector<16x128xf32>
      %96 = arith.addf %94, %95 : vector<16x128xf32>
      %97 = math.tanh %96 : vector<16x128xf32>
      %98 = arith.mulf %93, %97 : vector<16x128xf32>
      scf.yield %98, %96 : vector<16x128xf32>, vector<16x128xf32>
    }
    %c8_i32_8 = arith.constant 8 : i32
    %c112 = arith.constant 112 : index
    %c0_9 = arith.constant 0 : index
    %11 = vector.load %arg0[%c112, %c0_9] : memref<128x256xbf16, #tpu.memory_space<vmem>>, vector<16x256xbf16>
    %c0_10 = arith.constant 0 : index
    %c0_11 = arith.constant 0 : index
    %12 = vector.load %arg4[%c0_10, %c0_11] : memref<256x512xbf16, #tpu.memory_space<vmem>>, vector<256x512xbf16>
    %cst_12 = arith.constant dense<0.000000e+00> : vector<16x512xf32>
    %13 = tpu.matmul %11, %12, %cst_12 {dimension_numbers = #tpu.dot_dimension_numbers<[1], [0], [0], [1], [0, 0, 1, 1], [], []>} : vector<16x256xbf16>, vector<256x512xbf16>, vector<16x512xf32> -> vector<16x512xf32>
    %c0_13 = arith.constant 0 : index
    %c0_14 = arith.constant 0 : index
    %14 = vector.load %arg5[%c0_13, %c0_14] : memref<1x512xf32, #tpu.memory_space<vmem>>, vector<1x512xf32>
    %15 = vector.broadcast %14 : vector<1x512xf32> to vector<16x512xf32>
    %16 = arith.addf %13, %15 : vector<16x512xf32>
    %17 = vector.extract_strided_slice %16 {offsets = [0, 0], sizes = [16, 128], strides = [1, 1]} : vector<16x512xf32> to vector<16x128xf32>
    %18 = arith.negf %17 : vector<16x128xf32>
    %19 = math.exp %18 : vector<16x128xf32>
    %cst_15 = arith.constant 1.000000e+00 : f32
    %20 = vector.broadcast %cst_15 : f32 to vector<16x128xf32>
    %21 = arith.addf %20, %19 : vector<16x128xf32>
    %22 = arith.divf %20, %21 : vector<16x128xf32>
    %23 = vector.extract_strided_slice %16 {offsets = [0, 128], sizes = [16, 128], strides = [1, 1]} : vector<16x512xf32> to vector<16x128xf32>
    %24 = arith.negf %23 : vector<16x128xf32>
    %25 = math.exp %24 : vector<16x128xf32>
    %cst_16 = arith.constant 1.000000e+00 : f32
    %26 = vector.broadcast %cst_16 : f32 to vector<16x128xf32>
    %27 = arith.addf %26, %25 : vector<16x128xf32>
    %28 = arith.divf %26, %27 : vector<16x128xf32>
    %29 = vector.extract_strided_slice %16 {offsets = [0, 256], sizes = [16, 128], strides = [1, 1]} : vector<16x512xf32> to vector<16x128xf32>
    %30 = math.tanh %29 : vector<16x128xf32>
    %31 = vector.extract_strided_slice %16 {offsets = [0, 384], sizes = [16, 128], strides = [1, 1]} : vector<16x512xf32> to vector<16x128xf32>
    %32 = arith.negf %31 : vector<16x128xf32>
    %33 = math.exp %32 : vector<16x128xf32>
    %cst_17 = arith.constant 1.000000e+00 : f32
    %34 = vector.broadcast %cst_17 : f32 to vector<16x128xf32>
    %35 = arith.addf %34, %33 : vector<16x128xf32>
    %36 = arith.divf %34, %35 : vector<16x128xf32>
    %37 = arith.mulf %28, %8 : vector<16x128xf32>
    %38 = arith.mulf %22, %30 : vector<16x128xf32>
    %39 = arith.addf %37, %38 : vector<16x128xf32>
    %40 = math.tanh %39 : vector<16x128xf32>
    %41 = arith.mulf %36, %40 : vector<16x128xf32>
    %42 = tpu.concatenate %10#0, %41 in 1 : vector<16x128xf32>, vector<16x128xf32> -> vector<16x256xf32>
    %c0_18 = arith.constant 0 : index
    %c0_19 = arith.constant 0 : index
    %43 = vector.load %arg6[%c0_18, %c0_19] : memref<256x64xf32, #tpu.memory_space<vmem>>, vector<256x64xf32>
    %cst_20 = arith.constant dense<0.000000e+00> : vector<16x64xf32>
    %44 = tpu.matmul %42, %43, %cst_20 {dimension_numbers = #tpu.dot_dimension_numbers<[1], [0], [0], [1], [0, 0, 1, 1], [], []>} : vector<16x256xf32>, vector<256x64xf32>, vector<16x64xf32> -> vector<16x64xf32>
    %c0_21 = arith.constant 0 : index
    %c0_22 = arith.constant 0 : index
    %45 = vector.load %arg7[%c0_21, %c0_22] : memref<1x64xf32, #tpu.memory_space<vmem>>, vector<1x64xf32>
    %46 = vector.broadcast %45 : vector<1x64xf32> to vector<16x64xf32>
    %47 = arith.addf %44, %46 : vector<16x64xf32>
    %cst_23 = arith.constant 0.000000e+00 : f32
    %48 = vector.broadcast %cst_23 : f32 to vector<16x64xf32>
    %49 = arith.maximumf %47, %48 : vector<16x64xf32>
    %c0_24 = arith.constant 0 : index
    %c0_25 = arith.constant 0 : index
    %50 = vector.load %arg8[%c0_24, %c0_25] : memref<64x2xf32, #tpu.memory_space<vmem>>, vector<64x2xf32>
    %cst_26 = arith.constant dense<0.000000e+00> : vector<16x2xf32>
    %51 = tpu.matmul %49, %50, %cst_26 {dimension_numbers = #tpu.dot_dimension_numbers<[1], [0], [0], [1], [0, 0, 1, 1], [], []>} : vector<16x64xf32>, vector<64x2xf32>, vector<16x2xf32> -> vector<16x2xf32>
    %c0_27 = arith.constant 0 : index
    %c0_28 = arith.constant 0 : index
    %52 = vector.load %arg9[%c0_27, %c0_28] : memref<1x2xf32, #tpu.memory_space<vmem>>, vector<1x2xf32>
    %53 = vector.broadcast %52 : vector<1x2xf32> to vector<16x2xf32>
    %54 = arith.addf %51, %53 : vector<16x2xf32>
    %cst_29 = arith.constant dense<0xFF800000> : vector<16xf32>
    %55 = vector.multi_reduction <maximumf>, %54, %cst_29 [1] : vector<16x2xf32> to vector<16xf32>
    %56 = vector.shape_cast %55 : vector<16xf32> to vector<16x1xf32>
    %57 = vector.broadcast %56 : vector<16x1xf32> to vector<16x2xf32>
    %58 = arith.subf %54, %57 : vector<16x2xf32>
    %59 = math.exp %58 : vector<16x2xf32>
    %cst_30 = arith.constant dense<0.000000e+00> : vector<16xf32>
    %60 = vector.multi_reduction <add>, %59, %cst_30 [1] : vector<16x2xf32> to vector<16xf32>
    %61 = vector.shape_cast %60 : vector<16xf32> to vector<16x1xf32>
    %62 = vector.broadcast %61 : vector<16x1xf32> to vector<16x2xf32>
    %63 = arith.divf %59, %62 : vector<16x2xf32>
    %c0_31 = arith.constant 0 : index
    %c0_32 = arith.constant 0 : index
    %64 = vector.load %arg10[%c0_31, %c0_32] : memref<16x2xf32, #tpu.memory_space<vmem>>, vector<16x2xf32>
    tpu.vector_store %arg10[%c0_31, %c0_32], %63 {strides = array<i32>} : memref<16x2xf32, #tpu.memory_space<vmem>>, vector<16x2xf32>,
    return
  }
}

</mosaic_0001>

<llo_original>
// kernel: sarcasm_forward.4
$region0: #{sarcasm_forward.4}
  #allocation0 [shape = 'u32[]', space=smem, size = 0x4, offset = 0x4, fixed_abs, tag = 'smem constant byte address 0x4 - core index']
  #allocation1 [shape = 'u32[144,128]{1,0:T(1,128)}', space=vmem, size = 0x12000, scoped, tag = 'internal scratch']
  #allocation2 [shape = 'bf16[128,512]{1,0:T(16,128)(2,1)}', space=vmem, size = 0x20000, scoped, tag = 'scratch operand']
  #allocation3 [shape = 'bf16[128,512]{1,0:T(16,128)(2,1)}', space=vmem, size = 0x20000, scoped, tag = 'scratch operand']
  %s0 = inlined_call_operand.hbm [shape: bf16[128,256], index: 0, kind: input, shape index: {}]
  %s1 = inlined_call_operand.hbm [shape: bf16[256,512], index: 1, kind: input, shape index: {}]
  %s2 = inlined_call_operand.hbm [shape: bf16[128,512], index: 2, kind: input, shape index: {}]
  %s3 = inlined_call_operand.hbm [shape: f32[1,512], index: 3, kind: input, shape index: {}]
  %s4 = inlined_call_operand.hbm [shape: bf16[256,512], index: 4, kind: input, shape index: {}]
  %s5 = inlined_call_operand.hbm [shape: bf16[128,512], index: 5, kind: input, shape index: {}]
  %s6 = inlined_call_operand.hbm [shape: f32[1,512], index: 6, kind: input, shape index: {}]
  %s7 = inlined_call_operand.hbm [shape: bf16[128,256], index: 7, kind: output, shape index: {}]
  %s8 = sld [smem:[#allocation0]]
  $region73: #{sarcasm_forward.4} parent=0
    _
  %s10 = ssub.s32 1, %s8
  %s11 = scalar_select 0, %s10, %s8
  $region1: #{sarcasm_forward.4} parent=0
    #allocation4 [shape = 'u8[65536]{0}', space=vmem, size = 0x10000, scoped, tag = 'input window, operand 0, single buffered']
    #allocation5 [shape = 's32[1]{0}', space=sflag, size = 0x4, scoped, tag = 'scoped memory for sarcasm_forward.4']
    #allocation6 [shape = 's32[1]{0}', space=sflag, size = 0x4, scoped, tag = 'scoped memory for sarcasm_forward.4']
    #allocation7 [shape = 'u8[262144]{0}', space=vmem, size = 0x40000, scoped, tag = 'input window, operand 1, single buffered']
    #allocation8 [shape = 's32[1]{0}', space=sflag, size = 0x4, scoped, tag = 'scoped memory for sarcasm_forward.4']
    #allocation9 [shape = 'u8[131072]{0}', space=vmem, size = 0x20000, scoped, tag = 'input window, operand 2, single buffered']
    #allocation10 [shape = 'u8[2048]{0}', space=vmem, size = 0x800, scoped, tag = 'input window, operand 3, single buffered']
    #allocation11 [shape = 's32[1]{0}', space=sflag, size = 0x4, scoped, tag = 'scoped memory for sarcasm_forward.4']
    #allocation12 [shape = 'u8[262144]{0}', space=vmem, size = 0x40000, scoped, tag = 'input window, operand 4, single buffered']
    #allocation13 [shape = 'u8[131072]{0}', space=vmem, size = 0x20000, scoped, tag = 'input window, operand 5, single buffered']
    #allocation14 [shape = 's32[1]{0}', space=sflag, size = 0x4, scoped, tag = 'scoped memory for sarcasm_forward.4']
    #allocation15 [shape = 'u8[2048]{0}', space=vmem, size = 0x800, scoped, tag = 'input window, operand 6, single buffered']
    #allocation16 [shape = 'u8[65536]{0}', space=vmem, size = 0x10000, scoped, tag = 'output window, operand 0, single buffered']
    %12 = vsyncpa [#allocation5], 0
    %13 = vsyncpa [#allocation8], 0
    %14 = vsyncpa [#allocation11], 0
    %15 = vsyncpa [#allocation14], 0
    %16 = vsyncpa [#allocation6], 0
    // Predicated region
    $region2: #{sarcasm_forward.4} parent=1 // pred_check
      _
    $region3: #{sarcasm_forward.4} parent=1 // pred_check_branch
      %18 = sbr.rel (0) target = $region5
    $region4: #{sarcasm_forward.4} parent=1 // pred_region
      %s20 = ssub.s32 2048, 2048
      %21 = vsyncadd [#allocation5], %s20
      %s22 = sshll.u32 [#allocation4], 4
      %s23 = int_to_ptr.vmem [resolvable:$true] %s22
      %28 = dma.hbm_to_vmem [thread:$0]  %s0, 2048, %s23, [#allocation5], 128, 128, 8
    $region5: #{sarcasm_forward.4} parent=1 // pred_fallthru
      _
    // Predicated region
    $region6: #{sarcasm_forward.4} parent=1 // pred_check
      _
    $region7: #{sarcasm_forward.4} parent=1 // pred_check_branch
      %30 = sbr.rel (0) target = $region9
    $region8: #{sarcasm_forward.4} parent=1 // pred_region
      %s32 = ssub.s32 8192, 8192
      %33 = vsyncadd [#allocation8], %s32
      %s34 = sshll.u32 [#allocation7], 4
      %s35 = int_to_ptr.vmem [resolvable:$true] %s34
      %40 = dma.hbm_to_vmem [thread:$0]  %s1, 8192, %s35, [#allocation8], 256, 256, 16
    $region9: #{sarcasm_forward.4} parent=1 // pred_fallthru
      _
    // Predicated region
    $region10: #{sarcasm_forward.4} parent=1 // pred_check
      _
    $region11: #{sarcasm_forward.4} parent=1 // pred_check_branch
      %42 = sbr.rel (0) target = $region13
    $region12: #{sarcasm_forward.4} parent=1 // pred_region
      %s44 = ssub.s32 4096, 4096
      %45 = vsyncadd [#allocation8], %s44
      %s46 = sshll.u32 [#allocation9], 4
      %s47 = int_to_ptr.vmem [resolvable:$true] %s46
      %52 = dma.hbm_to_vmem [thread:$0]  %s2, 4096, %s47, [#allocation8], 256, 256, 16
    $region13: #{sarcasm_forward.4} parent=1 // pred_fallthru
      _
    // Predicated region
    $region14: #{sarcasm_forward.4} parent=1 // pred_check
      _
    $region15: #{sarcasm_forward.4} parent=1 // pred_check_branch
      %54 = sbr.rel (0) target = $region17
    $region16: #{sarcasm_forward.4} parent=1 // pred_region
      %s56 = ssub.s32 64, 64
      %57 = vsyncadd [#allocation11], %s56
      %s59 = sshll.u32 [#allocation10], 4
      %s60 = int_to_ptr.vmem [resolvable:$true] %s59
      %62 = dma.hbm_to_vmem [thread:$0]  %s3, 64, %s60, [#allocation11]
    $region17: #{sarcasm_forward.4} parent=1 // pred_fallthru
      _
    // Predicated region
    $region18: #{sarcasm_forward.4} parent=1 // pred_check
      _
    $region19: #{sarcasm_forward.4} parent=1 // pred_check_branch
      %64 = sbr.rel (0) target = $region21
    $region20: #{sarcasm_forward.4} parent=1 // pred_region
      %s66 = ssub.s32 8192, 8192
      %67 = vsyncadd [#allocation11], %s66
      %s68 = sshll.u32 [#allocation12], 4
      %s69 = int_to_ptr.vmem [resolvable:$true] %s68
      %74 = dma.hbm_to_vmem [thread:$0]  %s4, 8192, %s69, [#allocation11], 256, 256, 16
    $region21: #{sarcasm_forward.4} parent=1 // pred_fallthru
      _
    // Predicated region
    $region22: #{sarcasm_forward.4} parent=1 // pred_check
      _
    $region23: #{sarcasm_forward.4} parent=1 // pred_check_branch
      %76 = sbr.rel (0) target = $region25
    $region24: #{sarcasm_forward.4} parent=1 // pred_region
      %s78 = ssub.s32 4096, 4096
      %79 = vsyncadd [#allocation14], %s78
      %s80 = sshll.u32 [#allocation13], 4
      %s81 = int_to_ptr.vmem [resolvable:$true] %s80
      %86 = dma.hbm_to_vmem [thread:$0]  %s5, 4096, %s81, [#allocation14], 256, 256, 16
    $region25: #{sarcasm_forward.4} parent=1 // pred_fallthru
      _
    // Predicated region
    $region26: #{sarcasm_forward.4} parent=1 // pred_check
      _
    $region27: #{sarcasm_forward.4} parent=1 // pred_check_branch
      %88 = sbr.rel (0) target = $region29
    $region28: #{sarcasm_forward.4} parent=1 // pred_region
      %s90 = ssub.s32 64, 64
      %91 = vsyncadd [#allocation14], %s90
      %s93 = sshll.u32 [#allocation15], 4
      %s94 = int_to_ptr.vmem [resolvable:$true] %s93
      %96 = dma.hbm_to_vmem [thread:$0]  %s6, 64, %s94, [#allocation14]
    $region29: #{sarcasm_forward.4} parent=1 // pred_fallthru
      _
    // Predicated region
    $region30: #{sarcasm_forward.4} parent=1 // pred_check
      _
    $region31: #{sarcasm_forward.4} parent=1 // pred_check_branch
      %98 = sbr.rel (0) target = $region33
    $region32: #{sarcasm_forward.4} parent=1 // pred_region
      %99 = dma.done [#allocation5], 2048
    $region33: #{sarcasm_forward.4} parent=1 // pred_fallthru
      _
    // Predicated region
    $region34: #{sarcasm_forward.4} parent=1 // pred_check
      _
    $region35: #{sarcasm_forward.4} parent=1 // pred_check_branch
      %101 = sbr.rel (0) target = $region37
    $region36: #{sarcasm_forward.4} parent=1 // pred_region
      %102 = dma.done [#allocation8], 8192
    $region37: #{sarcasm_forward.4} parent=1 // pred_fallthru
      _
    // Predicated region
    $region38: #{sarcasm_forward.4} parent=1 // pred_check
      _
    $region39: #{sarcasm_forward.4} parent=1 // pred_check_branch
      %104 = sbr.rel (0) target = $region41
    $region40: #{sarcasm_forward.4} parent=1 // pred_region
      %105 = dma.done [#allocation8], 4096
    $region41: #{sarcasm_forward.4} parent=1 // pred_fallthru
      _
    // Predicated region
    $region42: #{sarcasm_forward.4} parent=1 // pred_check
      _
    $region43: #{sarcasm_forward.4} parent=1 // pred_check_branch
      %107 = sbr.rel (0) target = $region45
    $region44: #{sarcasm_forward.4} parent=1 // pred_region
      %108 = dma.done [#allocation11], 64
    $region45: #{sarcasm_forward.4} parent=1 // pred_fallthru
      _
    // Predicated region
    $region46: #{sarcasm_forward.4} parent=1 // pred_check
      _
    $region47: #{sarcasm_forward.4} parent=1 // pred_check_branch
      %110 = sbr.rel (0) target = $region49
    $region48: #{sarcasm_forward.4} parent=1 // pred_region
      %111 = dma.done [#allocation11], 8192
    $region49: #{sarcasm_forward.4} parent=1 // pred_fallthru
      _
    // Predicated region
    $region50: #{sarcasm_forward.4} parent=1 // pred_check
      _
    $region51: #{sarcasm_forward.4} parent=1 // pred_check_branch
      %113 = sbr.rel (0) target = $region53
    $region52: #{sarcasm_forward.4} parent=1 // pred_region
      %114 = dma.done [#allocation14], 4096
    $region53: #{sarcasm_forward.4} parent=1 // pred_fallthru
      _
    // Predicated region
    $region54: #{sarcasm_forward.4} parent=1 // pred_check
      _
    $region55: #{sarcasm_forward.4} parent=1 // pred_check_branch
      %116 = sbr.rel (0) target = $region57
    $region56: #{sarcasm_forward.4} parent=1 // pred_region
      %117 = dma.done [#allocation14], 64
    $region57: #{sarcasm_forward.4} parent=1 // pred_fallthru
      _
    %v119 = vld [vmem:[#allocation4] sm:$0xff]
    %v120 = vld [vmem:[#allocation4 + $0x8] sm:$0xff]
    %v121 = vld [vmem:[#allocation4 + $0x10] sm:$0xff]
    %v122 = vld [vmem:[#allocation4 + $0x18] sm:$0xff]
    %v123 = vld [vmem:[#allocation4 + $0x20] sm:$0xff]
    %v124 = vld [vmem:[#allocation4 + $0x28] sm:$0xff]
    %v125 = vld [vmem:[#allocation4 + $0x30] sm:$0xff]
    %v126 = vld [vmem:[#allocation4 + $0x38] sm:$0xff]
    %v127 = vld [vmem:[#allocation4 + $0x40] sm:$0xff]
    %v128 = vld [vmem:[#allocation4 + $0x48] sm:$0xff]
    %v129 = vld [vmem:[#allocation4 + $0x50] sm:$0xff]
    %v130 = vld [vmem:[#allocation4 + $0x58] sm:$0xff]
    %v131 = vld [vmem:[#allocation4 + $0x60] sm:$0xff]
    %v132 = vld [vmem:[#allocation4 + $0x68] sm:$0xff]
    %v133 = vld [vmem:[#allocation4 + $0x70] sm:$0xff]
    %v134 = vld [vmem:[#allocation4 + $0x78] sm:$0xff]
    %v135 = vld [vmem:[#allocation7] sm:$0xff]
    %v136 = vld [vmem:[#allocation7 + $0x8] sm:$0xff]
    %v137 = vld [vmem:[#allocation7 + $0x10] sm:$0xff]
    %v138 = vld [vmem:[#allocation7 + $0x18] sm:$0xff]
    %v139 = vld [vmem:[#allocation7 + $0x20] sm:$0xff]
    %v140 = vld [vmem:[#allocation7 + $0x28] sm:$0xff]
    %v141 = vld [vmem:[#allocation7 + $0x30] sm:$0xff]
    %v142 = vld [vmem:[#allocation7 + $0x38] sm:$0xff]
    %v143 = vld [vmem:[#allocation7 + $0x40] sm:$0xff]
    %v144 = vld [vmem:[#allocation7 + $0x48] sm:$0xff]
    %v145 = vld [vmem:[#allocation7 + $0x50] sm:$0xff]
    %v146 = vld [vmem:[#allocation7 + $0x58] sm:$0xff]
    %v147 = vld [vmem:[#allocation7 + $0x60] sm:$0xff]
    %v148 = vld [vmem:[#allocation7 + $0x68] sm:$0xff]
    %v149 = vld [vmem:[#allocation7 + $0x70] sm:$0xff]
    %v150 = vld [vmem:[#allocation7 + $0x78] sm:$0xff]
    %v151 = vld [vmem:[#allocation7 + $0x80] sm:$0xff]
    %v152 = vld [vmem:[#allocation7 + $0x88] sm:$0xff]
    %v153 = vld [vmem:[#allocation7 + $0x90] sm:$0xff]
    %v154 = vld [vmem:[#allocation7 + $0x98] sm:$0xff]
    %v155 = vld [vmem:[#allocation7 + $0xa0] sm:$0xff]
    %v156 = vld [vmem:[#allocation7 + $0xa8] sm:$0xff]
    %v157 = vld [vmem:[#allocation7 + $0xb0] sm:$0xff]
    %v158 = vld [vmem:[#allocation7 + $0xb8] sm:$0xff]
    %v159 = vld [vmem:[#allocation7 + $0xc0] sm:$0xff]
    %v160 = vld [vmem:[#allocation7 + $0xc8] sm:$0xff]
    %v161 = vld [vmem:[#allocation7 + $0xd0] sm:$0xff]
    %v162 = vld [vmem:[#allocation7 + $0xd8] sm:$0xff]
    %v163 = vld [vmem:[#allocation7 + $0xe0] sm:$0xff]
    %v164 = vld [vmem:[#allocation7 + $0xe8] sm:$0xff]
    %v165 = vld [vmem:[#allocation7 + $0xf0] sm:$0xff]
    %v166 = vld [vmem:[#allocation7 + $0xf8] sm:$0xff]
    %v167 = vld [vmem:[#allocation7 + $0x100] sm:$0xff]
    %v168 = vld [vmem:[#allocation7 + $0x108] sm:$0xff]
    %v169 = vld [vmem:[#allocation7 + $0x110] sm:$0xff]
    %v170 = vld [vmem:[#allocation7 + $0x118] sm:$0xff]
    %v171 = vld [vmem:[#allocation7 + $0x120] sm:$0xff]
    %v172 = vld [vmem:[#allocation7 + $0x128] sm:$0xff]
    %v173 = vld [vmem:[#allocation7 + $0x130] sm:$0xff]
    %v174 = vld [vmem:[#allocation7 + $0x138] sm:$0xff]
    %v175 = vld [vmem:[#allocation7 + $0x140] sm:$0xff]
    %v176 = vld [vmem:[#allocation7 + $0x148] sm:$0xff]
    %v177 = vld [vmem:[#allocation7 + $0x150] sm:$0xff]
    %v178 = vld [vmem:[#allocation7 + $0x158] sm:$0xff]
    %v179 = vld [vmem:[#allocation7 + $0x160] sm:$0xff]
    %v180 = vld [vmem:[#allocation7 + $0x168] sm:$0xff]
    %v181 = vld [vmem:[#allocation7 + $0x170] sm:$0xff]
    %v182 = vld [vmem:[#allocation7 + $0x178] sm:$0xff]
    %v183 = vld [vmem:[#allocation7 + $0x180] sm:$0xff]
    %v184 = vld [vmem:[#allocation7 + $0x188] sm:$0xff]
    %v185 = vld [vmem:[#allocation7 + $0x190] sm:$0xff]
    %v186 = vld [vmem:[#allocation7 + $0x198] sm:$0xff]
    %v187 = vld [vmem:[#allocation7 + $0x1a0] sm:$0xff]
    %v188 = vld [vmem:[#allocation7 + $0x1a8] sm:$0xff]
    %v189 = vld [vmem:[#allocation7 + $0x1b0] sm:$0xff]
    %v190 = vld [vmem:[#allocation7 + $0x1b8] sm:$0xff]
    %v191 = vld [vmem:[#allocation7 + $0x1c0] sm:$0xff]
    %v192 = vld [vmem:[#allocation7 + $0x1c8] sm:$0xff]
    %v193 = vld [vmem:[#allocation7 + $0x1d0] sm:$0xff]
    %v194 = vld [vmem:[#allocation7 + $0x1d8] sm:$0xff]
    %v195 = vld [vmem:[#allocation7 + $0x1e0] sm:$0xff]
    %v196 = vld [vmem:[#allocation7 + $0x1e8] sm:$0xff]
    %v197 = vld [vmem:[#allocation7 + $0x1f0] sm:$0xff]
    %v198 = vld [vmem:[#allocation7 + $0x1f8] sm:$0xff]
    %v199 = vld [vmem:[#allocation10] sm:$0xf]
    %v201 = vlaneseq
    %v202 = vshrl.u32 %v201, 7
    %v203 = vsub.s32 0, %v202
    %v204 = vrot.slane %v199, %v203
    %v205 = vlaneseq
    %v206 = vshrl.u32 %v205, 7
    %v207 = vsub.s32 1, %v206
    %v208 = vrot.slane %v199, %v207
    %v209 = vlaneseq
    %v210 = vshrl.u32 %v209, 7
    %v211 = vsub.s32 2, %v210
    %v212 = vrot.slane %v199, %v211
    %v213 = vlaneseq
    %v214 = vshrl.u32 %v213, 7
    %v215 = vsub.s32 3, %v214
    %v216 = vrot.slane %v199, %v215
    %v237 = vunpack.c.l.b16 %v119
    %v238 = vunpack.c.h.b16 %v119
    %v239 = vunpack.c.l.b16 %v120
    %v240 = vunpack.c.h.b16 %v120
    %v241 = vunpack.c.l.b16 %v121
    %v242 = vunpack.c.h.b16 %v121
    %v243 = vunpack.c.l.b16 %v122
    %v244 = vunpack.c.h.b16 %v122
    %v245 = vunpack.c.l.b16 %v123
    %v246 = vunpack.c.h.b16 %v123
    %v247 = vunpack.c.l.b16 %v124
    %v248 = vunpack.c.h.b16 %v124
    %v249 = vunpack.c.l.b16 %v125
    %v250 = vunpack.c.h.b16 %v125
    %v251 = vunpack.c.l.b16 %v126
    %v252 = vunpack.c.h.b16 %v126
    %v253 = vunpack.c.l.b16 %v127
    %v254 = vunpack.c.h.b16 %v127
    %v255 = vunpack.c.l.b16 %v128
    %v256 = vunpack.c.h.b16 %v128
    %v257 = vunpack.c.l.b16 %v129
    %v258 = vunpack.c.h.b16 %v129
    %v259 = vunpack.c.l.b16 %v130
    %v260 = vunpack.c.h.b16 %v130
    %v261 = vunpack.c.l.b16 %v131
    %v262 = vunpack.c.h.b16 %v131
    %v263 = vunpack.c.l.b16 %v132
    %v264 = vunpack.c.h.b16 %v132
    %v265 = vunpack.c.l.b16 %v133
    %v266 = vunpack.c.h.b16 %v133
    %v267 = vunpack.c.l.b16 %v134
    %v268 = vunpack.c.h.b16 %v134
    %v269 = vpack.c.b16 %v239, %v237
    %v270 = vpack.c.b16 %v240, %v238
    %v271 = vpack.c.b16 %v243, %v241
    %v272 = vpack.c.b16 %v244, %v242
    %v273 = vpack.c.b16 %v247, %v245
    %v274 = vpack.c.b16 %v248, %v246
    %v275 = vpack.c.b16 %v251, %v249
    %v276 = vpack.c.b16 %v252, %v250
    %v277 = vpack.c.b16 %v255, %v253
    %v278 = vpack.c.b16 %v256, %v254
    %v279 = vpack.c.b16 %v259, %v257
    %v280 = vpack.c.b16 %v260, %v258
    %v281 = vpack.c.b16 %v263, %v261
    %v282 = vpack.c.b16 %v264, %v262
    %v283 = vpack.c.b16 %v267, %v265
    %v284 = vpack.c.b16 %v268, %v266
    %v365 = vunpack.c.l.b16 %v135
    %v366 = vunpack.c.h.b16 %v135
    %v367 = vunpack.c.l.b16 %v136
    %v368 = vunpack.c.h.b16 %v136
    %v369 = vunpack.c.l.b16 %v137
    %v370 = vunpack.c.h.b16 %v137
    %v371 = vunpack.c.l.b16 %v138
    %v372 = vunpack.c.h.b16 %v138
    %v373 = vunpack.c.l.b16 %v139
    %v374 = vunpack.c.h.b16 %v139
    %v375 = vunpack.c.l.b16 %v140
    %v376 = vunpack.c.h.b16 %v140
    %v377 = vunpack.c.l.b16 %v141
    %v378 = vunpack.c.h.b16 %v141
    %v379 = vunpack.c.l.b16 %v142
    %v380 = vunpack.c.h.b16 %v142
    %v381 = vunpack.c.l.b16 %v143
    %v382 = vunpack.c.h.b16 %v143
    %v383 = vunpack.c.l.b16 %v144
    %v384 = vunpack.c.h.b16 %v144
    %v385 = vunpack.c.l.b16 %v145
    %v386 = vunpack.c.h.b16 %v145
    %v387 = vunpack.c.l.b16 %v146
    %v388 = vunpack.c.h.b16 %v146
    %v389 = vunpack.c.l.b16 %v147
    %v390 = vunpack.c.h.b16 %v147
    %v391 = vunpack.c.l.b16 %v148
    %v392 = vunpack.c.h.b16 %v148
    %v393 = vunpack.c.l.b16 %v149
    %v394 = vunpack.c.h.b16 %v149
    %v395 = vunpack.c.l.b16 %v150
    %v396 = vunpack.c.h.b16 %v150
    %v397 = vunpack.c.l.b16 %v151
    %v398 = vunpack.c.h.b16 %v151
    %v399 = vunpack.c.l.b16 %v152
    %v400 = vunpack.c.h.b16 %v152
    %v401 = vunpack.c.l.b16 %v153
    %v402 = vunpack.c.h.b16 %v153
    %v403 = vunpack.c.l.b16 %v154
    %v404 = vunpack.c.h.b16 %v154
    %v405 = vunpack.c.l.b16 %v155
    %v406 = vunpack.c.h.b16 %v155
    %v407 = vunpack.c.l.b16 %v156
    %v408 = vunpack.c.h.b16 %v156
    %v409 = vunpack.c.l.b16 %v157
    %v410 = vunpack.c.h.b16 %v157
    %v411 = vunpack.c.l.b16 %v158
    %v412 = vunpack.c.h.b16 %v158
    %v413 = vunpack.c.l.b16 %v159
    %v414 = vunpack.c.h.b16 %v159
    %v415 = vunpack.c.l.b16 %v160
    %v416 = vunpack.c.h.b16 %v160
    %v417 = vunpack.c.l.b16 %v161
    %v418 = vunpack.c.h.b16 %v161
    %v419 = vunpack.c.l.b16 %v162
    %v420 = vunpack.c.h.b16 %v162
    %v421 = vunpack.c.l.b16 %v163
    %v422 = vunpack.c.h.b16 %v163
    %v423 = vunpack.c.l.b16 %v164
    %v424 = vunpack.c.h.b16 %v164
    %v425 = vunpack.c.l.b16 %v165
    %v426 = vunpack.c.h.b16 %v165
    %v427 = vunpack.c.l.b16 %v166
    %v428 = vunpack.c.h.b16 %v166
    %v429 = vunpack.c.l.b16 %v167
    %v430 = vunpack.c.h.b16 %v167
    %v431 = vunpack.c.l.b16 %v168
    %v432 = vunpack.c.h.b16 %v168
    %v433 = vunpack.c.l.b16 %v169
    %v434 = vunpack.c.h.b16 %v169
    %v435 = vunpack.c.l.b16 %v170
    %v436 = vunpack.c.h.b16 %v170
    %v437 = vunpack.c.l.b16 %v171
    %v438 = vunpack.c.h.b16 %v171
    %v439 = vunpack.c.l.b16 %v172
    %v440 = vunpack.c.h.b16 %v172
    %v441 = vunpack.c.l.b16 %v173
    %v442 = vunpack.c.h.b16 %v173
    %v443 = vunpack.c.l.b16 %v174
    %v444 = vunpack.c.h.b16 %v174
    %v445 = vunpack.c.l.b16 %v175
    %v446 = vunpack.c.h.b16 %v175
    %v447 = vunpack.c.l.b16 %v176
    %v448 = vunpack.c.h.b16 %v176
    %v449 = vunpack.c.l.b16 %v177
    %v450 = vunpack.c.h.b16 %v177
    %v451 = vunpack.c.l.b16 %v178
    %v452 = vunpack.c.h.b16 %v178
    %v453 = vunpack.c.l.b16 %v179
    %v454 = vunpack.c.h.b16 %v179
    %v455 = vunpack.c.l.b16 %v180
    %v456 = vunpack.c.h.b16 %v180
    %v457 = vunpack.c.l.b16 %v181
    %v458 = vunpack.c.h.b16 %v181
    %v459 = vunpack.c.l.b16 %v182
    %v460 = vunpack.c.h.b16 %v182
    %v461 = vunpack.c.l.b16 %v183
    %v462 = vunpack.c.h.b16 %v183
    %v463 = vunpack.c.l.b16 %v184
    %v464 = vunpack.c.h.b16 %v184
    %v465 = vunpack.c.l.b16 %v185
    %v466 = vunpack.c.h.b16 %v185
    %v467 = vunpack.c.l.b16 %v186
    %v468 = vunpack.c.h.b16 %v186
    %v469 = vunpack.c.l.b16 %v187
    %v470 = vunpack.c.h.b16 %v187
    %v471 = vunpack.c.l.b16 %v188
    %v472 = vunpack.c.h.b16 %v188
    %v473 = vunpack.c.l.b16 %v189
    %v474 = vunpack.c.h.b16 %v189
    %v475 = vunpack.c.l.b16 %v190
    %v476 = vunpack.c.h.b16 %v190
    %v477 = vunpack.c.l.b16 %v191
    %v478 = vunpack.c.h.b16 %v191
    %v479 = vunpack.c.l.b16 %v192
    %v480 = vunpack.c.h.b16 %v192
    %v481 = vunpack.c.l.b16 %v193
    %v482 = vunpack.c.h.b16 %v193
    %v483 = vunpack.c.l.b16 %v194
    %v484 = vunpack.c.h.b16 %v194
    %v485 = vunpack.c.l.b16 %v195
    %v486 = vunpack.c.h.b16 %v195
    %v487 = vunpack.c.l.b16 %v196
    %v488 = vunpack.c.h.b16 %v196
    %v489 = vunpack.c.l.b16 %v197
    %v490 = vunpack.c.h.b16 %v197
    %v491 = vunpack.c.l.b16 %v198
    %v492 = vunpack.c.h.b16 %v198
    %v493 = vpack.c.b16 %v369, %v365
    %v494 = vpack.c.b16 %v370, %v366
    %v495 = vpack.c.b16 %v371, %v367
    %v496 = vpack.c.b16 %v372, %v368
    %v497 = vpack.c.b16 %v377, %v373
    %v498 = vpack.c.b16 %v378, %v374
    %v499 = vpack.c.b16 %v379, %v375
    %v500 = vpack.c.b16 %v380, %v376
    %v501 = vpack.c.b16 %v385, %v381
    %v502 = vpack.c.b16 %v386, %v382
    %v503 = vpack.c.b16 %v387, %v383
    %v504 = vpack.c.b16 %v388, %v384
    %v505 = vpack.c.b16 %v393, %v389
    %v506 = vpack.c.b16 %v394, %v390
    %v507 = vpack.c.b16 %v395, %v391
    %v508 = vpack.c.b16 %v396, %v392
    %v509 = vpack.c.b16 %v401, %v397
    %v510 = vpack.c.b16 %v402, %v398
    %v511 = vpack.c.b16 %v403, %v399
    %v512 = vpack.c.b16 %v404, %v400
    %v513 = vpack.c.b16 %v409, %v405
    %v514 = vpack.c.b16 %v410, %v406
    %v515 = vpack.c.b16 %v411, %v407
    %v516 = vpack.c.b16 %v412, %v408
    %v517 = vpack.c.b16 %v417, %v413
    %v518 = vpack.c.b16 %v418, %v414
    %v519 = vpack.c.b16 %v419, %v415
    %v520 = vpack.c.b16 %v420, %v416
    %v521 = vpack.c.b16 %v425, %v421
    %v522 = vpack.c.b16 %v426, %v422
    %v523 = vpack.c.b16 %v427, %v423
    %v524 = vpack.c.b16 %v428, %v424
    %v525 = vpack.c.b16 %v433, %v429
    %v526 = vpack.c.b16 %v434, %v430
    %v527 = vpack.c.b16 %v435, %v431
    %v528 = vpack.c.b16 %v436, %v432
    %v529 = vpack.c.b16 %v441, %v437
    %v530 = vpack.c.b16 %v442, %v438
    %v531 = vpack.c.b16 %v443, %v439
    %v532 = vpack.c.b16 %v444, %v440
    %v533 = vpack.c.b16 %v449, %v445
    %v534 = vpack.c.b16 %v450, %v446
    %v535 = vpack.c.b16 %v451, %v447
    %v536 = vpack.c.b16 %v452, %v448
    %v537 = vpack.c.b16 %v457, %v453
    %v538 = vpack.c.b16 %v458, %v454
    %v539 = vpack.c.b16 %v459, %v455
    %v540 = vpack.c.b16 %v460, %v456
    %v541 = vpack.c.b16 %v465, %v461
    %v542 = vpack.c.b16 %v466, %v462
    %v543 = vpack.c.b16 %v467, %v463
    %v544 = vpack.c.b16 %v468, %v464
    %v545 = vpack.c.b16 %v473, %v469
    %v546 = vpack.c.b16 %v474, %v470
    %v547 = vpack.c.b16 %v475, %v471
    %v548 = vpack.c.b16 %v476, %v472
    %v549 = vpack.c.b16 %v481, %v477
    %v550 = vpack.c.b16 %v482, %v478
    %v551 = vpack.c.b16 %v483, %v479
    %v552 = vpack.c.b16 %v484, %v480
    %v553 = vpack.c.b16 %v489, %v485
    %v554 = vpack.c.b16 %v490, %v486
    %v555 = vpack.c.b16 %v491, %v487
    %v556 = vpack.c.b16 %v492, %v488
    %621 = vmatprep.subr.bf16.mxu0 %v494
    %622 = vmatpush1.bf16.msra.mxu0 %v493
    %623 = vmatprep.subr.bf16.mxu0 %v498
    %624 = vmatpush1.bf16.msra.mxu0 %v497
    %625 = vmatprep.subr.bf16.mxu0 %v502
    %626 = vmatpush1.bf16.msra.mxu0 %v501
    %627 = vmatprep.subr.bf16.mxu0 %v506
    %628 = vmatpush1.bf16.msra.mxu0 %v505
    %629 = vmatprep.subr.bf16.mxu0 %v510
    %630 = vmatpush1.bf16.msra.mxu0 %v509
    %631 = vmatprep.subr.bf16.mxu0 %v514
    %632 = vmatpush1.bf16.msra.mxu0 %v513
    %633 = vmatprep.subr.bf16.mxu0 %v518
    %634 = vmatpush1.bf16.msra.mxu0 %v517
    %635 = vmatprep.subr.bf16.mxu0 %v522
    %636 = vmatpush1.bf16.msra.mxu0 %v521
    %637 = vmatprep.subr.bf16.mxu0 %v526
    %638 = vmatpush1.bf16.msra.mxu0 %v525
    %639 = vmatprep.subr.bf16.mxu0 %v530
    %640 = vmatpush1.bf16.msra.mxu0 %v529
    %641 = vmatprep.subr.bf16.mxu0 %v534
    %642 = vmatpush1.bf16.msra.mxu0 %v533
    %643 = vmatprep.subr.bf16.mxu0 %v538
    %644 = vmatpush1.bf16.msra.mxu0 %v537
    %645 = vmatprep.subr.bf16.mxu0 %v542
    %646 = vmatpush1.bf16.msra.mxu0 %v541
    %647 = vmatprep.subr.bf16.mxu0 %v546
    %648 = vmatpush1.bf16.msra.mxu0 %v545
    %649 = vmatprep.subr.bf16.mxu0 %v550
    %650 = vmatpush1.bf16.msra.mxu0 %v549
    %651 = vmatprep.subr.bf16.mxu0 %v554
    %652 = vmatpush1.bf16.msra.mxu0 %v553
    %653 = vmatprep.mubr.bf16.mxu0 %v270
    %654 = vmatmul.mubr.bf16.gmra.mrb[0].mxu0 %v269
    %v655 = vpop.f32.mrb[0].mxu0
    %v656 = vadd.f32 %v204, %v655
    %v657 = vpop.f32.mrb[0].mxu0
    %v658 = vadd.f32 %v208, %v657
    %v659 = vpop.f32.mrb[0].mxu0
    %v660 = vadd.f32 %v204, %v659
    %v661 = vpop.f32.mrb[0].mxu0
    %v662 = vadd.f32 %v208, %v661
    %663 = vmatprep.mubr.bf16.mxu0 %v272
    %664 = vmatmul.mubr.bf16.gmra.mrb[0].mxu0 %v271
    %v665 = vpop.f32.mrb[0].mxu0
    %v666 = vadd.f32 %v204, %v665
    %v667 = vpop.f32.mrb[0].mxu0
    %v668 = vadd.f32 %v208, %v667
    %v669 = vpop.f32.mrb[0].mxu0
    %v670 = vadd.f32 %v204, %v669
    %v671 = vpop.f32.mrb[0].mxu0
    %v672 = vadd.f32 %v208, %v671
    %673 = vmatprep.mubr.bf16.mxu0 %v274
    %674 = vmatmul.mubr.bf16.gmra.mrb[0].mxu0 %v273
    %v675 = vpop.f32.mrb[0].mxu0
    %v676 = vadd.f32 %v204, %v675
    %v677 = vpop.f32.mrb[0].mxu0
    %v678 = vadd.f32 %v208, %v677
    %v679 = vpop.f32.mrb[0].mxu0
    %v680 = vadd.f32 %v204, %v679
    %v681 = vpop.f32.mrb[0].mxu0
    %v682 = vadd.f32 %v208, %v681
    %683 = vmatprep.mubr.bf16.mxu0 %v276
    %684 = vmatmul.mubr.bf16.gmra.mrb[0].mxu0 %v275
    %v685 = vpop.f32.mrb[0].mxu0
    %v686 = vadd.f32 %v204, %v685
    %v687 = vpop.f32.mrb[0].mxu0
    %v688 = vadd.f32 %v208, %v687
    %v689 = vpop.f32.mrb[0].mxu0
    %v690 = vadd.f32 %v204, %v689
    %v691 = vpop.f32.mrb[0].mxu0
    %v692 = vadd.f32 %v208, %v691
    %693 = vmatprep.mubr.bf16.mxu0 %v278
    %694 = vmatmul.mubr.bf16.gmra.mrb[0].mxu0 %v277
    %v695 = vpop.f32.mrb[0].mxu0
    %v696 = vadd.f32 %v204, %v695
    %v697 = vpop.f32.mrb[0].mxu0
    %v698 = vadd.f32 %v208, %v697
    %v699 = vpop.f32.mrb[0].mxu0
    %v700 = vadd.f32 %v204, %v699
    %v701 = vpop.f32.mrb[0].mxu0
    %v702 = vadd.f32 %v208, %v701
    %703 = vmatprep.mubr.bf16.mxu0 %v280
    %704 = vmatmul.mubr.bf16.gmra.mrb[0].mxu0 %v279
    %v705 = vpop.f32.mrb[0].mxu0
    %v706 = vadd.f32 %v204, %v705
    %v707 = vpop.f32.mrb[0].mxu0
    %v708 = vadd.f32 %v208, %v707
    %v709 = vpop.f32.mrb[0].mxu0
    %v710 = vadd.f32 %v204, %v709
    %v711 = vpop.f32.mrb[0].mxu0
    %v712 = vadd.f32 %v208, %v711
    %713 = vmatprep.mubr.bf16.mxu0 %v282
    %714 = vmatmul.mubr.bf16.gmra.mrb[0].mxu0 %v281
    %v715 = vpop.f32.mrb[0].mxu0
    %v716 = vadd.f32 %v204, %v715
    %v717 = vpop.f32.mrb[0].mxu0
    %v718 = vadd.f32 %v208, %v717
    %v719 = vpop.f32.mrb[0].mxu0
    %v720 = vadd.f32 %v204, %v719
    %v721 = vpop.f32.mrb[0].mxu0
    %v722 = vadd.f32 %v208, %v721
    %723 = vmatprep.mubr.bf16.mxu0 %v284
    %724 = vmatmul.mubr.bf16.gmra.mrb[0].mxu0 %v283
    %v725 = vpop.f32.mrb[0].mxu0
    %v726 = vadd.f32 %v204, %v725
    %v727 = vpop.f32.mrb[0].mxu0
    %v728 = vadd.f32 %v208, %v727
    %v729 = vpop.f32.mrb[0].mxu0
    %v730 = vadd.f32 %v204, %v729
    %v731 = vpop.f32.mrb[0].mxu0
    %v732 = vadd.f32 %v208, %v731
    %733 = vdwg.mxu0
    %734 = vmatprep.subr.bf16.mxu0 %v496
    %735 = vmatpush1.bf16.msra.mxu0 %v495
    %736 = vmatprep.subr.bf16.mxu0 %v500
    %737 = vmatpush1.bf16.msra.mxu0 %v499
    %738 = vmatprep.subr.bf16.mxu0 %v504
    %739 = vmatpush1.bf16.msra.mxu0 %v503
    %740 = vmatprep.subr.bf16.mxu0 %v508
    %741 = vmatpush1.bf16.msra.mxu0 %v507
    %742 = vmatprep.subr.bf16.mxu0 %v512
    %743 = vmatpush1.bf16.msra.mxu0 %v511
    %744 = vmatprep.subr.bf16.mxu0 %v516
    %745 = vmatpush1.bf16.msra.mxu0 %v515
    %746 = vmatprep.subr.bf16.mxu0 %v520
    %747 = vmatpush1.bf16.msra.mxu0 %v519
    %748 = vmatprep.subr.bf16.mxu0 %v524
    %749 = vmatpush1.bf16.msra.mxu0 %v523
    %750 = vmatprep.subr.bf16.mxu0 %v528
    %751 = vmatpush1.bf16.msra.mxu0 %v527
    %752 = vmatprep.subr.bf16.mxu0 %v532
    %753 = vmatpush1.bf16.msra.mxu0 %v531
    %754 = vmatprep.subr.bf16.mxu0 %v536
    %755 = vmatpush1.bf16.msra.mxu0 %v535
    %756 = vmatprep.subr.bf16.mxu0 %v540
    %757 = vmatpush1.bf16.msra.mxu0 %v539
    %758 = vmatprep.subr.bf16.mxu0 %v544
    %759 = vmatpush1.bf16.msra.mxu0 %v543
    %760 = vmatprep.subr.bf16.mxu0 %v548
    %761 = vmatpush1.bf16.msra.mxu0 %v547
    %762 = vmatprep.subr.bf16.mxu0 %v552
    %763 = vmatpush1.bf16.msra.mxu0 %v551
    %764 = vmatprep.subr.bf16.mxu0 %v556
    %765 = vmatpush1.bf16.msra.mxu0 %v555
    %766 = vmatprep.mubr.bf16.mxu0 %v270
    %767 = vmatmul.mubr.bf16.gmra.mrb[0].mxu0 %v269
    %v768 = vpop.f32.mrb[0].mxu0
    %v769 = vadd.f32 %v212, %v768
    %v770 = vpop.f32.mrb[0].mxu0
    %v771 = vadd.f32 %v216, %v770
    %v772 = vpop.f32.mrb[0].mxu0
    %v773 = vadd.f32 %v212, %v772
    %v774 = vpop.f32.mrb[0].mxu0
    %v775 = vadd.f32 %v216, %v774
    %776 = vmatprep.mubr.bf16.mxu0 %v272
    %777 = vmatmul.mubr.bf16.gmra.mrb[0].mxu0 %v271
    %v778 = vpop.f32.mrb[0].mxu0
    %v779 = vadd.f32 %v212, %v778
    %v780 = vpop.f32.mrb[0].mxu0
    %v781 = vadd.f32 %v216, %v780
    %v782 = vpop.f32.mrb[0].mxu0
    %v783 = vadd.f32 %v212, %v782
    %v784 = vpop.f32.mrb[0].mxu0
    %v785 = vadd.f32 %v216, %v784
    %786 = vmatprep.mubr.bf16.mxu0 %v274
    %787 = vmatmul.mubr.bf16.gmra.mrb[0].mxu0 %v273
    %v788 = vpop.f32.mrb[0].mxu0
    %v789 = vadd.f32 %v212, %v788
    %v790 = vpop.f32.mrb[0].mxu0
    %v791 = vadd.f32 %v216, %v790
    %v792 = vpop.f32.mrb[0].mxu0
    %v793 = vadd.f32 %v212, %v792
    %v794 = vpop.f32.mrb[0].mxu0
    %v795 = vadd.f32 %v216, %v794
    %796 = vmatprep.mubr.bf16.mxu0 %v276
    %797 = vmatmul.mubr.bf16.gmra.mrb[0].mxu0 %v275
    %v798 = vpop.f32.mrb[0].mxu0
    %v799 = vadd.f32 %v212, %v798
    %v800 = vpop.f32.mrb[0].mxu0
    %v801 = vadd.f32 %v216, %v800
    %v802 = vpop.f32.mrb[0].mxu0
    %v803 = vadd.f32 %v212, %v802
    %v804 = vpop.f32.mrb[0].mxu0
    %v805 = vadd.f32 %v216, %v804
    %806 = vmatprep.mubr.bf16.mxu0 %v278
    %807 = vmatmul.mubr.bf16.gmra.mrb[0].mxu0 %v277
    %v808 = vpop.f32.mrb[0].mxu0
    %v809 = vadd.f32 %v212, %v808
    %v810 = vpop.f32.mrb[0].mxu0
    %v811 = vadd.f32 %v216, %v810
    %v812 = vpop.f32.mrb[0].mxu0
    %v813 = vadd.f32 %v212, %v812
    %v814 = vpop.f32.mrb[0].mxu0
    %v815 = vadd.f32 %v216, %v814
    %816 = vmatprep.mubr.bf16.mxu0 %v280
    %817 = vmatmul.mubr.bf16.gmra.mrb[0].mxu0 %v279
    %v818 = vpop.f32.mrb[0].mxu0
    %v819 = vadd.f32 %v212, %v818
    %v820 = vpop.f32.mrb[0].mxu0
    %v821 = vadd.f32 %v216, %v820
    %v822 = vpop.f32.mrb[0].mxu0
    %v823 = vadd.f32 %v212, %v822
    %v824 = vpop.f32.mrb[0].mxu0
    %v825 = vadd.f32 %v216, %v824
    %826 = vmatprep.mubr.bf16.mxu0 %v282
    %827 = vmatmul.mubr.bf16.gmra.mrb[0].mxu0 %v281
    %v828 = vpop.f32.mrb[0].mxu0
    %v829 = vadd.f32 %v212, %v828
    %v830 = vpop.f32.mrb[0].mxu0
    %v831 = vadd.f32 %v216, %v830
    %v832 = vpop.f32.mrb[0].mxu0
    %v833 = vadd.f32 %v212, %v832
    %v834 = vpop.f32.mrb[0].mxu0
    %v835 = vadd.f32 %v216, %v834
    %836 = vmatprep.mubr.bf16.mxu0 %v284
    %837 = vmatmul.mubr.bf16.gmra.mrb[0].mxu0 %v283
    %v838 = vpop.f32.mrb[0].mxu0
    %v839 = vadd.f32 %v212, %v838
    %v840 = vpop.f32.mrb[0].mxu0
    %v841 = vadd.f32 %v216, %v840
    %v842 = vpop.f32.mrb[0].mxu0
    %v843 = vadd.f32 %v212, %v842
    %v844 = vpop.f32.mrb[0].mxu0
    %v845 = vadd.f32 %v216, %v844
    %846 = vdwg.mxu0
    %v847 = vpack.c.bf16 %v660, %v656
    %v848 = vpack.c.bf16 %v662, %v658
    %v849 = vpack.c.bf16 %v773, %v769
    %v850 = vpack.c.bf16 %v775, %v771
    %v851 = vpack.c.bf16 %v670, %v666
    %v852 = vpack.c.bf16 %v672, %v668
    %v853 = vpack.c.bf16 %v783, %v779
    %v854 = vpack.c.bf16 %v785, %v781
    %v855 = vpack.c.bf16 %v680, %v676
    %v856 = vpack.c.bf16 %v682, %v678
    %v857 = vpack.c.bf16 %v793, %v789
    %v858 = vpack.c.bf16 %v795, %v791
    %v859 = vpack.c.bf16 %v690, %v686
    %v860 = vpack.c.bf16 %v692, %v688
    %v861 = vpack.c.bf16 %v803, %v799
    %v862 = vpack.c.bf16 %v805, %v801
    %v863 = vpack.c.bf16 %v700, %v696
    %v864 = vpack.c.bf16 %v702, %v698
    %v865 = vpack.c.bf16 %v813, %v809
    %v866 = vpack.c.bf16 %v815, %v811
    %v867 = vpack.c.bf16 %v710, %v706
    %v868 = vpack.c.bf16 %v712, %v708
    %v869 = vpack.c.bf16 %v823, %v819
    %v870 = vpack.c.bf16 %v825, %v821
    %v871 = vpack.c.bf16 %v720, %v716
    %v872 = vpack.c.bf16 %v722, %v718
    %v873 = vpack.c.bf16 %v833, %v829
    %v874 = vpack.c.bf16 %v835, %v831
    %v875 = vpack.c.bf16 %v730, %v726
    %v876 = vpack.c.bf16 %v732, %v728
    %v877 = vpack.c.bf16 %v843, %v839
    %v878 = vpack.c.bf16 %v845, %v841
    %879 = vst [vmem:[#allocation2] sm:$0xff] %v847
    %880 = vst [vmem:[#allocation2 + $0x8] sm:$0xff] %v848
    %881 = vst [vmem:[#allocation2 + $0x10] sm:$0xff] %v849
    %882 = vst [vmem:[#allocation2 + $0x18] sm:$0xff] %v850
    %883 = vst [vmem:[#allocation2 + $0x20] sm:$0xff] %v851
    %884 = vst [vmem:[#allocation2 + $0x28] sm:$0xff] %v852
    %885 = vst [vmem:[#allocation2 + $0x30] sm:$0xff] %v853
    %886 = vst [vmem:[#allocation2 + $0x38] sm:$0xff] %v854
    %887 = vst [vmem:[#allocation2 + $0x40] sm:$0xff] %v855
    %888 = vst [vmem:[#allocation2 + $0x48] sm:$0xff] %v856
    %889 = vst [vmem:[#allocation2 + $0x50] sm:$0xff] %v857
    %890 = vst [vmem:[#allocation2 + $0x58] sm:$0xff] %v858
    %891 = vst [vmem:[#allocation2 + $0x60] sm:$0xff] %v859
    %892 = vst [vmem:[#allocation2 + $0x68] sm:$0xff] %v860
    %893 = vst [vmem:[#allocation2 + $0x70] sm:$0xff] %v861
    %894 = vst [vmem:[#allocation2 + $0x78] sm:$0xff] %v862
    %895 = vst [vmem:[#allocation2 + $0x80] sm:$0xff] %v863
    %896 = vst [vmem:[#allocation2 + $0x88] sm:$0xff] %v864
    %897 = vst [vmem:[#allocation2 + $0x90] sm:$0xff] %v865
    %898 = vst [vmem:[#allocation2 + $0x98] sm:$0xff] %v866
    %899 = vst [vmem:[#allocation2 + $0xa0] sm:$0xff] %v867
    %900 = vst [vmem:[#allocation2 + $0xa8] sm:$0xff] %v868
    %901 = vst [vmem:[#allocation2 + $0xb0] sm:$0xff] %v869
    %902 = vst [vmem:[#allocation2 + $0xb8] sm:$0xff] %v870
    %903 = vst [vmem:[#allocation2 + $0xc0] sm:$0xff] %v871
    %904 = vst [vmem:[#allocation2 + $0xc8] sm:$0xff] %v872
    %905 = vst [vmem:[#allocation2 + $0xd0] sm:$0xff] %v873
    %906 = vst [vmem:[#allocation2 + $0xd8] sm:$0xff] %v874
    %907 = vst [vmem:[#allocation2 + $0xe0] sm:$0xff] %v875
    %908 = vst [vmem:[#allocation2 + $0xe8] sm:$0xff] %v876
    %909 = vst [vmem:[#allocation2 + $0xf0] sm:$0xff] %v877
    %910 = vst [vmem:[#allocation2 + $0xf8] sm:$0xff] %v878
    %v911 = vld [vmem:[#allocation12] sm:$0xff]
    %v912 = vld [vmem:[#allocation12 + $0x8] sm:$0xff]
    %v913 = vld [vmem:[#allocation12 + $0x10] sm:$0xff]
    %v914 = vld [vmem:[#allocation12 + $0x18] sm:$0xff]
    %v915 = vld [vmem:[#allocation12 + $0x20] sm:$0xff]
    %v916 = vld [vmem:[#allocation12 + $0x28] sm:$0xff]
    %v917 = vld [vmem:[#allocation12 + $0x30] sm:$0xff]
    %v918 = vld [vmem:[#allocation12 + $0x38] sm:$0xff]
    %v919 = vld [vmem:[#allocation12 + $0x40] sm:$0xff]
    %v920 = vld [vmem:[#allocation12 + $0x48] sm:$0xff]
    %v921 = vld [vmem:[#allocation12 + $0x50] sm:$0xff]
    %v922 = vld [vmem:[#allocation12 + $0x58] sm:$0xff]
    %v923 = vld [vmem:[#allocation12 + $0x60] sm:$0xff]
    %v924 = vld [vmem:[#allocation12 + $0x68] sm:$0xff]
    %v925 = vld [vmem:[#allocation12 + $0x70] sm:$0xff]
    %v926 = vld [vmem:[#allocation12 + $0x78] sm:$0xff]
    %v927 = vld [vmem:[#allocation12 + $0x80] sm:$0xff]
    %v928 = vld [vmem:[#allocation12 + $0x88] sm:$0xff]
    %v929 = vld [vmem:[#allocation12 + $0x90] sm:$0xff]
    %v930 = vld [vmem:[#allocation12 + $0x98] sm:$0xff]
    %v931 = vld [vmem:[#allocation12 + $0xa0] sm:$0xff]
    %v932 = vld [vmem:[#allocation12 + $0xa8] sm:$0xff]
    %v933 = vld [vmem:[#allocation12 + $0xb0] sm:$0xff]
    %v934 = vld [vmem:[#allocation12 + $0xb8] sm:$0xff]
    %v935 = vld [vmem:[#allocation12 + $0xc0] sm:$0xff]
    %v936 = vld [vmem:[#allocation12 + $0xc8] sm:$0xff]
    %v937 = vld [vmem:[#allocation12 + $0xd0] sm:$0xff]
    %v938 = vld [vmem:[#allocation12 + $0xd8] sm:$0xff]
    %v939 = vld [vmem:[#allocation12 + $0xe0] sm:$0xff]
    %v940 = vld [vmem:[#allocation12 + $0xe8] sm:$0xff]
    %v941 = vld [vmem:[#allocation12 + $0xf0] sm:$0xff]
    %v942 = vld [vmem:[#allocation12 + $0xf8] sm:$0xff]
    %v943 = vld [vmem:[#allocation12 + $0x100] sm:$0xff]
    %v944 = vld [vmem:[#allocation12 + $0x108] sm:$0xff]
    %v945 = vld [vmem:[#allocation12 + $0x110] sm:$0xff]
    %v946 = vld [vmem:[#allocation12 + $0x118] sm:$0xff]
    %v947 = vld [vmem:[#allocation12 + $0x120] sm:$0xff]
    %v948 = vld [vmem:[#allocation12 + $0x128] sm:$0xff]
    %v949 = vld [vmem:[#allocation12 + $0x130] sm:$0xff]
    %v950 = vld [vmem:[#allocation12 + $0x138] sm:$0xff]
    %v951 = vld [vmem:[#allocation12 + $0x140] sm:$0xff]
    %v952 = vld [vmem:[#allocation12 + $0x148] sm:$0xff]
    %v953 = vld [vmem:[#allocation12 + $0x150] sm:$0xff]
    %v954 = vld [vmem:[#allocation12 + $0x158] sm:$0xff]
    %v955 = vld [vmem:[#allocation12 + $0x160] sm:$0xff]
    %v956 = vld [vmem:[#allocation12 + $0x168] sm:$0xff]
    %v957 = vld [vmem:[#allocation12 + $0x170] sm:$0xff]
    %v958 = vld [vmem:[#allocation12 + $0x178] sm:$0xff]
    %v959 = vld [vmem:[#allocation12 + $0x180] sm:$0xff]
    %v960 = vld [vmem:[#allocation12 + $0x188] sm:$0xff]
    %v961 = vld [vmem:[#allocation12 + $0x190] sm:$0xff]
    %v962 = vld [vmem:[#allocation12 + $0x198] sm:$0xff]
    %v963 = vld [vmem:[#allocation12 + $0x1a0] sm:$0xff]
    %v964 = vld [vmem:[#allocation12 + $0x1a8] sm:$0xff]
    %v965 = vld [vmem:[#allocation12 + $0x1b0] sm:$0xff]
    %v966 = vld [vmem:[#allocation12 + $0x1b8] sm:$0xff]
    %v967 = vld [vmem:[#allocation12 + $0x1c0] sm:$0xff]
    %v968 = vld [vmem:[#allocation12 + $0x1c8] sm:$0xff]
    %v969 = vld [vmem:[#allocation12 + $0x1d0] sm:$0xff]
    %v970 = vld [vmem:[#allocation12 + $0x1d8] sm:$0xff]
    %v971 = vld [vmem:[#allocation12 + $0x1e0] sm:$0xff]
    %v972 = vld [vmem:[#allocation12 + $0x1e8] sm:$0xff]
    %v973 = vld [vmem:[#allocation12 + $0x1f0] sm:$0xff]
    %v974 = vld [vmem:[#allocation12 + $0x1f8] sm:$0xff]
    %v975 = vld [vmem:[#allocation15] sm:$0xf]
    %v977 = vlaneseq
    %v978 = vshrl.u32 %v977, 7
    %v979 = vsub.s32 0, %v978
    %v980 = vrot.slane %v975, %v979
    %v981 = vlaneseq
    %v982 = vshrl.u32 %v981, 7
    %v983 = vsub.s32 1, %v982
    %v984 = vrot.slane %v975, %v983
    %v985 = vlaneseq
    %v986 = vshrl.u32 %v985, 7
    %v987 = vsub.s32 2, %v986
    %v988 = vrot.slane %v975, %v987
    %v989 = vlaneseq
    %v990 = vshrl.u32 %v989, 7
    %v991 = vsub.s32 3, %v990
    %v992 = vrot.slane %v975, %v991
    %v1061 = vunpack.c.l.b16 %v911
    %v1062 = vunpack.c.h.b16 %v911
    %v1063 = vunpack.c.l.b16 %v912
    %v1064 = vunpack.c.h.b16 %v912
    %v1065 = vunpack.c.l.b16 %v913
    %v1066 = vunpack.c.h.b16 %v913
    %v1067 = vunpack.c.l.b16 %v914
    %v1068 = vunpack.c.h.b16 %v914
    %v1069 = vunpack.c.l.b16 %v915
    %v1070 = vunpack.c.h.b16 %v915
    %v1071 = vunpack.c.l.b16 %v916
    %v1072 = vunpack.c.h.b16 %v916
    %v1073 = vunpack.c.l.b16 %v917
    %v1074 = vunpack.c.h.b16 %v917
    %v1075 = vunpack.c.l.b16 %v918
    %v1076 = vunpack.c.h.b16 %v918
    %v1077 = vunpack.c.l.b16 %v919
    %v1078 = vunpack.c.h.b16 %v919
    %v1079 = vunpack.c.l.b16 %v920
    %v1080 = vunpack.c.h.b16 %v920
    %v1081 = vunpack.c.l.b16 %v921
    %v1082 = vunpack.c.h.b16 %v921
    %v1083 = vunpack.c.l.b16 %v922
    %v1084 = vunpack.c.h.b16 %v922
    %v1085 = vunpack.c.l.b16 %v923
    %v1086 = vunpack.c.h.b16 %v923
    %v1087 = vunpack.c.l.b16 %v924
    %v1088 = vunpack.c.h.b16 %v924
    %v1089 = vunpack.c.l.b16 %v925
    %v1090 = vunpack.c.h.b16 %v925
    %v1091 = vunpack.c.l.b16 %v926
    %v1092 = vunpack.c.h.b16 %v926
    %v1093 = vunpack.c.l.b16 %v927
    %v1094 = vunpack.c.h.b16 %v927
    %v1095 = vunpack.c.l.b16 %v928
    %v1096 = vunpack.c.h.b16 %v928
    %v1097 = vunpack.c.l.b16 %v929
    %v1098 = vunpack.c.h.b16 %v929
    %v1099 = vunpack.c.l.b16 %v930
    %v1100 = vunpack.c.h.b16 %v930
    %v1101 = vunpack.c.l.b16 %v931
    %v1102 = vunpack.c.h.b16 %v931
    %v1103 = vunpack.c.l.b16 %v932
    %v1104 = vunpack.c.h.b16 %v932
    %v1105 = vunpack.c.l.b16 %v933
    %v1106 = vunpack.c.h.b16 %v933
    %v1107 = vunpack.c.l.b16 %v934
    %v1108 = vunpack.c.h.b16 %v934
    %v1109 = vunpack.c.l.b16 %v935
    %v1110 = vunpack.c.h.b16 %v935
    %v1111 = vunpack.c.l.b16 %v936
    %v1112 = vunpack.c.h.b16 %v936
    %v1113 = vunpack.c.l.b16 %v937
    %v1114 = vunpack.c.h.b16 %v937
    %v1115 = vunpack.c.l.b16 %v938
    %v1116 = vunpack.c.h.b16 %v938
    %v1117 = vunpack.c.l.b16 %v939
    %v1118 = vunpack.c.h.b16 %v939
    %v1119 = vunpack.c.l.b16 %v940
    %v1120 = vunpack.c.h.b16 %v940
    %v1121 = vunpack.c.l.b16 %v941
    %v1122 = vunpack.c.h.b16 %v941
    %v1123 = vunpack.c.l.b16 %v942
    %v1124 = vunpack.c.h.b16 %v942
    %v1125 = vunpack.c.l.b16 %v943
    %v1126 = vunpack.c.h.b16 %v943
    %v1127 = vunpack.c.l.b16 %v944
    %v1128 = vunpack.c.h.b16 %v944
    %v1129 = vunpack.c.l.b16 %v945
    %v1130 = vunpack.c.h.b16 %v945
    %v1131 = vunpack.c.l.b16 %v946
    %v1132 = vunpack.c.h.b16 %v946
    %v1133 = vunpack.c.l.b16 %v947
    %v1134 = vunpack.c.h.b16 %v947
    %v1135 = vunpack.c.l.b16 %v948
    %v1136 = vunpack.c.h.b16 %v948
    %v1137 = vunpack.c.l.b16 %v949
    %v1138 = vunpack.c.h.b16 %v949
    %v1139 = vunpack.c.l.b16 %v950
    %v1140 = vunpack.c.h.b16 %v950
    %v1141 = vunpack.c.l.b16 %v951
    %v1142 = vunpack.c.h.b16 %v951
    %v1143 = vunpack.c.l.b16 %v952
    %v1144 = vunpack.c.h.b16 %v952
    %v1145 = vunpack.c.l.b16 %v953
    %v1146 = vunpack.c.h.b16 %v953
    %v1147 = vunpack.c.l.b16 %v954
    %v1148 = vunpack.c.h.b16 %v954
    %v1149 = vunpack.c.l.b16 %v955
    %v1150 = vunpack.c.h.b16 %v955
    %v1151 = vunpack.c.l.b16 %v956
    %v1152 = vunpack.c.h.b16 %v956
    %v1153 = vunpack.c.l.b16 %v957
    %v1154 = vunpack.c.h.b16 %v957
    %v1155 = vunpack.c.l.b16 %v958
    %v1156 = vunpack.c.h.b16 %v958
    %v1157 = vunpack.c.l.b16 %v959
    %v1158 = vunpack.c.h.b16 %v959
    %v1159 = vunpack.c.l.b16 %v960
    %v1160 = vunpack.c.h.b16 %v960
    %v1161 = vunpack.c.l.b16 %v961
    %v1162 = vunpack.c.h.b16 %v961
    %v1163 = vunpack.c.l.b16 %v962
    %v1164 = vunpack.c.h.b16 %v962
    %v1165 = vunpack.c.l.b16 %v963
    %v1166 = vunpack.c.h.b16 %v963
    %v1167 = vunpack.c.l.b16 %v964
    %v1168 = vunpack.c.h.b16 %v964
    %v1169 = vunpack.c.l.b16 %v965
    %v1170 = vunpack.c.h.b16 %v965
    %v1171 = vunpack.c.l.b16 %v966
    %v1172 = vunpack.c.h.b16 %v966
    %v1173 = vunpack.c.l.b16 %v967
    %v1174 = vunpack.c.h.b16 %v967
    %v1175 = vunpack.c.l.b16 %v968
    %v1176 = vunpack.c.h.b16 %v968
    %v1177 = vunpack.c.l.b16 %v969
    %v1178 = vunpack.c.h.b16 %v969
    %v1179 = vunpack.c.l.b16 %v970
    %v1180 = vunpack.c.h.b16 %v970
    %v1181 = vunpack.c.l.b16 %v971
    %v1182 = vunpack.c.h.b16 %v971
    %v1183 = vunpack.c.l.b16 %v972
    %v1184 = vunpack.c.h.b16 %v972
    %v1185 = vunpack.c.l.b16 %v973
    %v1186 = vunpack.c.h.b16 %v973
    %v1187 = vunpack.c.l.b16 %v974
    %v1188 = vunpack.c.h.b16 %v974
    %v1189 = vpack.c.b16 %v1065, %v1061
    %v1190 = vpack.c.b16 %v1066, %v1062
    %v1191 = vpack.c.b16 %v1067, %v1063
    %v1192 = vpack.c.b16 %v1068, %v1064
    %v1193 = vpack.c.b16 %v1073, %v1069
    %v1194 = vpack.c.b16 %v1074, %v1070
    %v1195 = vpack.c.b16 %v1075, %v1071
    %v1196 = vpack.c.b16 %v1076, %v1072
    %v1197 = vpack.c.b16 %v1081, %v1077
    %v1198 = vpack.c.b16 %v1082, %v1078
    %v1199 = vpack.c.b16 %v1083, %v1079
    %v1200 = vpack.c.b16 %v1084, %v1080
    %v1201 = vpack.c.b16 %v1089, %v1085
    %v1202 = vpack.c.b16 %v1090, %v1086
    %v1203 = vpack.c.b16 %v1091, %v1087
    %v1204 = vpack.c.b16 %v1092, %v1088
    %v1205 = vpack.c.b16 %v1097, %v1093
    %v1206 = vpack.c.b16 %v1098, %v1094
    %v1207 = vpack.c.b16 %v1099, %v1095
    %v1208 = vpack.c.b16 %v1100, %v1096
    %v1209 = vpack.c.b16 %v1105, %v1101
    %v1210 = vpack.c.b16 %v1106, %v1102
    %v1211 = vpack.c.b16 %v1107, %v1103
    %v1212 = vpack.c.b16 %v1108, %v1104
    %v1213 = vpack.c.b16 %v1113, %v1109
    %v1214 = vpack.c.b16 %v1114, %v1110
    %v1215 = vpack.c.b16 %v1115, %v1111
    %v1216 = vpack.c.b16 %v1116, %v1112
    %v1217 = vpack.c.b16 %v1121, %v1117
    %v1218 = vpack.c.b16 %v1122, %v1118
    %v1219 = vpack.c.b16 %v1123, %v1119
    %v1220 = vpack.c.b16 %v1124, %v1120
    %v1221 = vpack.c.b16 %v1129, %v1125
    %v1222 = vpack.c.b16 %v1130, %v1126
    %v1223 = vpack.c.b16 %v1131, %v1127
    %v1224 = vpack.c.b16 %v1132, %v1128
    %v1225 = vpack.c.b16 %v1137, %v1133
    %v1226 = vpack.c.b16 %v1138, %v1134
    %v1227 = vpack.c.b16 %v1139, %v1135
    %v1228 = vpack.c.b16 %v1140, %v1136
    %v1229 = vpack.c.b16 %v1145, %v1141
    %v1230 = vpack.c.b16 %v1146, %v1142
    %v1231 = vpack.c.b16 %v1147, %v1143
    %v1232 = vpack.c.b16 %v1148, %v1144
    %v1233 = vpack.c.b16 %v1153, %v1149
    %v1234 = vpack.c.b16 %v1154, %v1150
    %v1235 = vpack.c.b16 %v1155, %v1151
    %v1236 = vpack.c.b16 %v1156, %v1152
    %v1237 = vpack.c.b16 %v1161, %v1157
    %v1238 = vpack.c.b16 %v1162, %v1158
    %v1239 = vpack.c.b16 %v1163, %v1159
    %v1240 = vpack.c.b16 %v1164, %v1160
    %v1241 = vpack.c.b16 %v1169, %v1165
    %v1242 = vpack.c.b16 %v1170, %v1166
    %v1243 = vpack.c.b16 %v1171, %v1167
    %v1244 = vpack.c.b16 %v1172, %v1168
    %v1245 = vpack.c.b16 %v1177, %v1173
    %v1246 = vpack.c.b16 %v1178, %v1174
    %v1247 = vpack.c.b16 %v1179, %v1175
    %v1248 = vpack.c.b16 %v1180, %v1176
    %v1249 = vpack.c.b16 %v1185, %v1181
    %v1250 = vpack.c.b16 %v1186, %v1182
    %v1251 = vpack.c.b16 %v1187, %v1183
    %v1252 = vpack.c.b16 %v1188, %v1184
    %1317 = vmatprep.subr.bf16.mxu0 %v1190
    %1318 = vmatpush1.bf16.msra.mxu0 %v1189
    %1319 = vmatprep.subr.bf16.mxu0 %v1194
    %1320 = vmatpush1.bf16.msra.mxu0 %v1193
    %1321 = vmatprep.subr.bf16.mxu0 %v1198
    %1322 = vmatpush1.bf16.msra.mxu0 %v1197
    %1323 = vmatprep.subr.bf16.mxu0 %v1202
    %1324 = vmatpush1.bf16.msra.mxu0 %v1201
    %1325 = vmatprep.subr.bf16.mxu0 %v1206
    %1326 = vmatpush1.bf16.msra.mxu0 %v1205
    %1327 = vmatprep.subr.bf16.mxu0 %v1210
    %1328 = vmatpush1.bf16.msra.mxu0 %v1209
    %1329 = vmatprep.subr.bf16.mxu0 %v1214
    %1330 = vmatpush1.bf16.msra.mxu0 %v1213
    %1331 = vmatprep.subr.bf16.mxu0 %v1218
    %1332 = vmatpush1.bf16.msra.mxu0 %v1217
    %1333 = vmatprep.subr.bf16.mxu0 %v1222
    %1334 = vmatpush1.bf16.msra.mxu0 %v1221
    %1335 = vmatprep.subr.bf16.mxu0 %v1226
    %1336 = vmatpush1.bf16.msra.mxu0 %v1225
    %1337 = vmatprep.subr.bf16.mxu0 %v1230
    %1338 = vmatpush1.bf16.msra.mxu0 %v1229
    %1339 = vmatprep.subr.bf16.mxu0 %v1234
    %1340 = vmatpush1.bf16.msra.mxu0 %v1233
    %1341 = vmatprep.subr.bf16.mxu0 %v1238
    %1342 = vmatpush1.bf16.msra.mxu0 %v1237
    %1343 = vmatprep.subr.bf16.mxu0 %v1242
    %1344 = vmatpush1.bf16.msra.mxu0 %v1241
    %1345 = vmatprep.subr.bf16.mxu0 %v1246
    %1346 = vmatpush1.bf16.msra.mxu0 %v1245
    %1347 = vmatprep.subr.bf16.mxu0 %v1250
    %1348 = vmatpush1.bf16.msra.mxu0 %v1249
    %1349 = vmatprep.mubr.bf16.mxu0 %v270
    %1350 = vmatmul.mubr.bf16.gmra.mrb[0].mxu0 %v269
    %v1351 = vpop.f32.mrb[0].mxu0
    %v1352 = vadd.f32 %v980, %v1351
    %v1353 = vpop.f32.mrb[0].mxu0
    %v1354 = vadd.f32 %v984, %v1353
    %v1355 = vpop.f32.mrb[0].mxu0
    %v1356 = vadd.f32 %v980, %v1355
    %v1357 = vpop.f32.mrb[0].mxu0
    %v1358 = vadd.f32 %v984, %v1357
    %1359 = vmatprep.mubr.bf16.mxu0 %v272
    %1360 = vmatmul.mubr.bf16.gmra.mrb[0].mxu0 %v271
    %v1361 = vpop.f32.mrb[0].mxu0
    %v1362 = vadd.f32 %v980, %v1361
    %v1363 = vpop.f32.mrb[0].mxu0
    %v1364 = vadd.f32 %v984, %v1363
    %v1365 = vpop.f32.mrb[0].mxu0
    %v1366 = vadd.f32 %v980, %v1365
    %v1367 = vpop.f32.mrb[0].mxu0
    %v1368 = vadd.f32 %v984, %v1367
    %1369 = vmatprep.mubr.bf16.mxu0 %v274
    %1370 = vmatmul.mubr.bf16.gmra.mrb[0].mxu0 %v273
    %v1371 = vpop.f32.mrb[0].mxu0
    %v1372 = vadd.f32 %v980, %v1371
    %v1373 = vpop.f32.mrb[0].mxu0
    %v1374 = vadd.f32 %v984, %v1373
    %v1375 = vpop.f32.mrb[0].mxu0
    %v1376 = vadd.f32 %v980, %v1375
    %v1377 = vpop.f32.mrb[0].mxu0
    %v1378 = vadd.f32 %v984, %v1377
    %1379 = vmatprep.mubr.bf16.mxu0 %v276
    %1380 = vmatmul.mubr.bf16.gmra.mrb[0].mxu0 %v275
    %v1381 = vpop.f32.mrb[0].mxu0
    %v1382 = vadd.f32 %v980, %v1381
    %v1383 = vpop.f32.mrb[0].mxu0
    %v1384 = vadd.f32 %v984, %v1383
    %v1385 = vpop.f32.mrb[0].mxu0
    %v1386 = vadd.f32 %v980, %v1385
    %v1387 = vpop.f32.mrb[0].mxu0
    %v1388 = vadd.f32 %v984, %v1387
    %1389 = vmatprep.mubr.bf16.mxu0 %v278
    %1390 = vmatmul.mubr.bf16.gmra.mrb[0].mxu0 %v277
    %v1391 = vpop.f32.mrb[0].mxu0
    %v1392 = vadd.f32 %v980, %v1391
    %v1393 = vpop.f32.mrb[0].mxu0
    %v1394 = vadd.f32 %v984, %v1393
    %v1395 = vpop.f32.mrb[0].mxu0
    %v1396 = vadd.f32 %v980, %v1395
    %v1397 = vpop.f32.mrb[0].mxu0
    %v1398 = vadd.f32 %v984, %v1397
    %1399 = vmatprep.mubr.bf16.mxu0 %v280
    %1400 = vmatmul.mubr.bf16.gmra.mrb[0].mxu0 %v279
    %v1401 = vpop.f32.mrb[0].mxu0
    %v1402 = vadd.f32 %v980, %v1401
    %v1403 = vpop.f32.mrb[0].mxu0
    %v1404 = vadd.f32 %v984, %v1403
    %v1405 = vpop.f32.mrb[0].mxu0
    %v1406 = vadd.f32 %v980, %v1405
    %v1407 = vpop.f32.mrb[0].mxu0
    %v1408 = vadd.f32 %v984, %v1407
    %1409 = vmatprep.mubr.bf16.mxu0 %v282
    %1410 = vmatmul.mubr.bf16.gmra.mrb[0].mxu0 %v281
    %v1411 = vpop.f32.mrb[0].mxu0
    %v1412 = vadd.f32 %v980, %v1411
    %v1413 = vpop.f32.mrb[0].mxu0
    %v1414 = vadd.f32 %v984, %v1413
    %v1415 = vpop.f32.mrb[0].mxu0
    %v1416 = vadd.f32 %v980, %v1415
    %v1417 = vpop.f32.mrb[0].mxu0
    %v1418 = vadd.f32 %v984, %v1417
    %1419 = vmatprep.mubr.bf16.mxu0 %v284
    %1420 = vmatmul.mubr.bf16.gmra.mrb[0].mxu0 %v283
    %v1421 = vpop.f32.mrb[0].mxu0
    %v1422 = vadd.f32 %v980, %v1421
    %v1423 = vpop.f32.mrb[0].mxu0
    %v1424 = vadd.f32 %v984, %v1423
    %v1425 = vpop.f32.mrb[0].mxu0
    %v1426 = vadd.f32 %v980, %v1425
    %v1427 = vpop.f32.mrb[0].mxu0
    %v1428 = vadd.f32 %v984, %v1427
    %1429 = vdwg.mxu0
    %1430 = vmatprep.subr.bf16.mxu0 %v1192
    %1431 = vmatpush1.bf16.msra.mxu0 %v1191
    %1432 = vmatprep.subr.bf16.mxu0 %v1196
    %1433 = vmatpush1.bf16.msra.mxu0 %v1195
    %1434 = vmatprep.subr.bf16.mxu0 %v1200
    %1435 = vmatpush1.bf16.msra.mxu0 %v1199
    %1436 = vmatprep.subr.bf16.mxu0 %v1204
    %1437 = vmatpush1.bf16.msra.mxu0 %v1203
    %1438 = vmatprep.subr.bf16.mxu0 %v1208
    %1439 = vmatpush1.bf16.msra.mxu0 %v1207
    %1440 = vmatprep.subr.bf16.mxu0 %v1212
    %1441 = vmatpush1.bf16.msra.mxu0 %v1211
    %1442 = vmatprep.subr.bf16.mxu0 %v1216
    %1443 = vmatpush1.bf16.msra.mxu0 %v1215
    %1444 = vmatprep.subr.bf16.mxu0 %v1220
    %1445 = vmatpush1.bf16.msra.mxu0 %v1219
    %1446 = vmatprep.subr.bf16.mxu0 %v1224
    %1447 = vmatpush1.bf16.msra.mxu0 %v1223
    %1448 = vmatprep.subr.bf16.mxu0 %v1228
    %1449 = vmatpush1.bf16.msra.mxu0 %v1227
    %1450 = vmatprep.subr.bf16.mxu0 %v1232
    %1451 = vmatpush1.bf16.msra.mxu0 %v1231
    %1452 = vmatprep.subr.bf16.mxu0 %v1236
    %1453 = vmatpush1.bf16.msra.mxu0 %v1235
    %1454 = vmatprep.subr.bf16.mxu0 %v1240
    %1455 = vmatpush1.bf16.msra.mxu0 %v1239
    %1456 = vmatprep.subr.bf16.mxu0 %v1244
    %1457 = vmatpush1.bf16.msra.mxu0 %v1243
    %1458 = vmatprep.subr.bf16.mxu0 %v1248
    %1459 = vmatpush1.bf16.msra.mxu0 %v1247
    %1460 = vmatprep.subr.bf16.mxu0 %v1252
    %1461 = vmatpush1.bf16.msra.mxu0 %v1251
    %1462 = vmatprep.mubr.bf16.mxu0 %v270
    %1463 = vmatmul.mubr.bf16.gmra.mrb[0].mxu0 %v269
    %v1464 = vpop.f32.mrb[0].mxu0
    %v1465 = vadd.f32 %v988, %v1464
    %v1466 = vpop.f32.mrb[0].mxu0
    %v1467 = vadd.f32 %v992, %v1466
    %v1468 = vpop.f32.mrb[0].mxu0
    %v1469 = vadd.f32 %v988, %v1468
    %v1470 = vpop.f32.mrb[0].mxu0
    %v1471 = vadd.f32 %v992, %v1470
    %1472 = vmatprep.mubr.bf16.mxu0 %v272
    %1473 = vmatmul.mubr.bf16.gmra.mrb[0].mxu0 %v271
    %v1474 = vpop.f32.mrb[0].mxu0
    %v1475 = vadd.f32 %v988, %v1474
    %v1476 = vpop.f32.mrb[0].mxu0
    %v1477 = vadd.f32 %v992, %v1476
    %v1478 = vpop.f32.mrb[0].mxu0
    %v1479 = vadd.f32 %v988, %v1478
    %v1480 = vpop.f32.mrb[0].mxu0
    %v1481 = vadd.f32 %v992, %v1480
    %1482 = vmatprep.mubr.bf16.mxu0 %v274
    %1483 = vmatmul.mubr.bf16.gmra.mrb[0].mxu0 %v273
    %v1484 = vpop.f32.mrb[0].mxu0
    %v1485 = vadd.f32 %v988, %v1484
    %v1486 = vpop.f32.mrb[0].mxu0
    %v1487 = vadd.f32 %v992, %v1486
    %v1488 = vpop.f32.mrb[0].mxu0
    %v1489 = vadd.f32 %v988, %v1488
    %v1490 = vpop.f32.mrb[0].mxu0
    %v1491 = vadd.f32 %v992, %v1490
    %1492 = vmatprep.mubr.bf16.mxu0 %v276
    %1493 = vmatmul.mubr.bf16.gmra.mrb[0].mxu0 %v275
    %v1494 = vpop.f32.mrb[0].mxu0
    %v1495 = vadd.f32 %v988, %v1494
    %v1496 = vpop.f32.mrb[0].mxu0
    %v1497 = vadd.f32 %v992, %v1496
    %v1498 = vpop.f32.mrb[0].mxu0
    %v1499 = vadd.f32 %v988, %v1498
    %v1500 = vpop.f32.mrb[0].mxu0
    %v1501 = vadd.f32 %v992, %v1500
    %1502 = vmatprep.mubr.bf16.mxu0 %v278
    %1503 = vmatmul.mubr.bf16.gmra.mrb[0].mxu0 %v277
    %v1504 = vpop.f32.mrb[0].mxu0
    %v1505 = vadd.f32 %v988, %v1504
    %v1506 = vpop.f32.mrb[0].mxu0
    %v1507 = vadd.f32 %v992, %v1506
    %v1508 = vpop.f32.mrb[0].mxu0
    %v1509 = vadd.f32 %v988, %v1508
    %v1510 = vpop.f32.mrb[0].mxu0
    %v1511 = vadd.f32 %v992, %v1510
    %1512 = vmatprep.mubr.bf16.mxu0 %v280
    %1513 = vmatmul.mubr.bf16.gmra.mrb[0].mxu0 %v279
    %v1514 = vpop.f32.mrb[0].mxu0
    %v1515 = vadd.f32 %v988, %v1514
    %v1516 = vpop.f32.mrb[0].mxu0
    %v1517 = vadd.f32 %v992, %v1516
    %v1518 = vpop.f32.mrb[0].mxu0
    %v1519 = vadd.f32 %v988, %v1518
    %v1520 = vpop.f32.mrb[0].mxu0
    %v1521 = vadd.f32 %v992, %v1520
    %1522 = vmatprep.mubr.bf16.mxu0 %v282
    %1523 = vmatmul.mubr.bf16.gmra.mrb[0].mxu0 %v281
    %v1524 = vpop.f32.mrb[0].mxu0
    %v1525 = vadd.f32 %v988, %v1524
    %v1526 = vpop.f32.mrb[0].mxu0
    %v1527 = vadd.f32 %v992, %v1526
    %v1528 = vpop.f32.mrb[0].mxu0
    %v1529 = vadd.f32 %v988, %v1528
    %v1530 = vpop.f32.mrb[0].mxu0
    %v1531 = vadd.f32 %v992, %v1530
    %1532 = vmatprep.mubr.bf16.mxu0 %v284
    %1533 = vmatmul.mubr.bf16.gmra.mrb[0].mxu0 %v283
    %v1534 = vpop.f32.mrb[0].mxu0
    %v1535 = vadd.f32 %v988, %v1534
    %v1536 = vpop.f32.mrb[0].mxu0
    %v1537 = vadd.f32 %v992, %v1536
    %v1538 = vpop.f32.mrb[0].mxu0
    %v1539 = vadd.f32 %v988, %v1538
    %v1540 = vpop.f32.mrb[0].mxu0
    %v1541 = vadd.f32 %v992, %v1540
    %1542 = vdwg.mxu0
    %v1543 = vpack.c.bf16 %v1356, %v1352
    %v1544 = vpack.c.bf16 %v1358, %v1354
    %v1545 = vpack.c.bf16 %v1469, %v1465
    %v1546 = vpack.c.bf16 %v1471, %v1467
    %v1547 = vpack.c.bf16 %v1366, %v1362
    %v1548 = vpack.c.bf16 %v1368, %v1364
    %v1549 = vpack.c.bf16 %v1479, %v1475
    %v1550 = vpack.c.bf16 %v1481, %v1477
    %v1551 = vpack.c.bf16 %v1376, %v1372
    %v1552 = vpack.c.bf16 %v1378, %v1374
    %v1553 = vpack.c.bf16 %v1489, %v1485
    %v1554 = vpack.c.bf16 %v1491, %v1487
    %v1555 = vpack.c.bf16 %v1386, %v1382
    %v1556 = vpack.c.bf16 %v1388, %v1384
    %v1557 = vpack.c.bf16 %v1499, %v1495
    %v1558 = vpack.c.bf16 %v1501, %v1497
    %v1559 = vpack.c.bf16 %v1396, %v1392
    %v1560 = vpack.c.bf16 %v1398, %v1394
    %v1561 = vpack.c.bf16 %v1509, %v1505
    %v1562 = vpack.c.bf16 %v1511, %v1507
    %v1563 = vpack.c.bf16 %v1406, %v1402
    %v1564 = vpack.c.bf16 %v1408, %v1404
    %v1565 = vpack.c.bf16 %v1519, %v1515
    %v1566 = vpack.c.bf16 %v1521, %v1517
    %v1567 = vpack.c.bf16 %v1416, %v1412
    %v1568 = vpack.c.bf16 %v1418, %v1414
    %v1569 = vpack.c.bf16 %v1529, %v1525
    %v1570 = vpack.c.bf16 %v1531, %v1527
    %v1571 = vpack.c.bf16 %v1426, %v1422
    %v1572 = vpack.c.bf16 %v1428, %v1424
    %v1573 = vpack.c.bf16 %v1539, %v1535
    %v1574 = vpack.c.bf16 %v1541, %v1537
    %1575 = vst [vmem:[#allocation3] sm:$0xff] %v1543
    %1576 = vst [vmem:[#allocation3 + $0x8] sm:$0xff] %v1544
    %1577 = vst [vmem:[#allocation3 + $0x10] sm:$0xff] %v1545
    %1578 = vst [vmem:[#allocation3 + $0x18] sm:$0xff] %v1546
    %1579 = vst [vmem:[#allocation3 + $0x20] sm:$0xff] %v1547
    %1580 = vst [vmem:[#allocation3 + $0x28] sm:$0xff] %v1548
    %1581 = vst [vmem:[#allocation3 + $0x30] sm:$0xff] %v1549
    %1582 = vst [vmem:[#allocation3 + $0x38] sm:$0xff] %v1550
    %1583 = vst [vmem:[#allocation3 + $0x40] sm:$0xff] %v1551
    %1584 = vst [vmem:[#allocation3 + $0x48] sm:$0xff] %v1552
    %1585 = vst [vmem:[#allocation3 + $0x50] sm:$0xff] %v1553
    %1586 = vst [vmem:[#allocation3 + $0x58] sm:$0xff] %v1554
    %1587 = vst [vmem:[#allocation3 + $0x60] sm:$0xff] %v1555
    %1588 = vst [vmem:[#allocation3 + $0x68] sm:$0xff] %v1556
    %1589 = vst [vmem:[#allocation3 + $0x70] sm:$0xff] %v1557
    %1590 = vst [vmem:[#allocation3 + $0x78] sm:$0xff] %v1558
    %1591 = vst [vmem:[#allocation3 + $0x80] sm:$0xff] %v1559
    %1592 = vst [vmem:[#allocation3 + $0x88] sm:$0xff] %v1560
    %1593 = vst [vmem:[#allocation3 + $0x90] sm:$0xff] %v1561
    %1594 = vst [vmem:[#allocation3 + $0x98] sm:$0xff] %v1562
    %1595 = vst [vmem:[#allocation3 + $0xa0] sm:$0xff] %v1563
    %1596 = vst [vmem:[#allocation3 + $0xa8] sm:$0xff] %v1564
    %1597 = vst [vmem:[#allocation3 + $0xb0] sm:$0xff] %v1565
    %1598 = vst [vmem:[#allocation3 + $0xb8] sm:$0xff] %v1566
    %1599 = vst [vmem:[#allocation3 + $0xc0] sm:$0xff] %v1567
    %1600 = vst [vmem:[#allocation3 + $0xc8] sm:$0xff] %v1568
    %1601 = vst [vmem:[#allocation3 + $0xd0] sm:$0xff] %v1569
    %1602 = vst [vmem:[#allocation3 + $0xd8] sm:$0xff] %v1570
    %1603 = vst [vmem:[#allocation3 + $0xe0] sm:$0xff] %v1571
    %1604 = vst [vmem:[#allocation3 + $0xe8] sm:$0xff] %v1572
    %1605 = vst [vmem:[#allocation3 + $0xf0] sm:$0xff] %v1573
    %1606 = vst [vmem:[#allocation3 + $0xf8] sm:$0xff] %v1574
    loop: start=0, step=1, limit=8
    $region58: #{sarcasm_forward.4} parent=1 // loop_pre_header
      _
    $region59: #{sarcasm_forward.4} parent=1 // loop_header
      %s1608 = sphi 0, %s1612
      %p1609 = scmp.ge.s32.totalorder %s1608, 8
      %v1613 = vphi 0.0, %v2278
      %v1614 = vphi 0.0, %v2279
      %v1615 = vphi 0.0, %v2274
      %v1616 = vphi 0.0, %v2275
      %v1617 = vphi 0.0, %v2326
      %v1618 = vphi 0.0, %v2327
      %v1619 = vphi 0.0, %v2322
      %v1620 = vphi 0.0, %v2323
    $region60: #{sarcasm_forward.4} parent=1 // loop_header_branch
      %1611 = sbr.rel (%p1609) target = $region64
    $region61: #{sarcasm_forward.4} parent=1 // loop_body
      %s1621 = smul.u32 %s1608, 16
      %s1622 = ssub.s32 7, %s1608
      %s1623 = smul.u32 %s1622, 16
      %v1624 = vpack.c.bf16 %v1614, %v1613
      %v1625 = vld [vmem:[#allocation9] sm:$0xff]
      %v1626 = vld [vmem:[#allocation9 + $0x8] sm:$0xff]
      %v1627 = vld [vmem:[#allocation9 + $0x10] sm:$0xff]
      %v1628 = vld [vmem:[#allocation9 + $0x18] sm:$0xff]
      %v1629 = vld [vmem:[#allocation9 + $0x20] sm:$0xff]
      %v1630 = vld [vmem:[#allocation9 + $0x28] sm:$0xff]
      %v1631 = vld [vmem:[#allocation9 + $0x30] sm:$0xff]
      %v1632 = vld [vmem:[#allocation9 + $0x38] sm:$0xff]
      %v1633 = vld [vmem:[#allocation9 + $0x40] sm:$0xff]
      %v1634 = vld [vmem:[#allocation9 + $0x48] sm:$0xff]
      %v1635 = vld [vmem:[#allocation9 + $0x50] sm:$0xff]
      %v1636 = vld [vmem:[#allocation9 + $0x58] sm:$0xff]
      %v1637 = vld [vmem:[#allocation9 + $0x60] sm:$0xff]
      %v1638 = vld [vmem:[#allocation9 + $0x68] sm:$0xff]
      %v1639 = vld [vmem:[#allocation9 + $0x70] sm:$0xff]
      %v1640 = vld [vmem:[#allocation9 + $0x78] sm:$0xff]
      %v1641 = vld [vmem:[#allocation9 + $0x80] sm:$0xff]
      %v1642 = vld [vmem:[#allocation9 + $0x88] sm:$0xff]
      %v1643 = vld [vmem:[#allocation9 + $0x90] sm:$0xff]
      %v1644 = vld [vmem:[#allocation9 + $0x98] sm:$0xff]
      %v1645 = vld [vmem:[#allocation9 + $0xa0] sm:$0xff]
      %v1646 = vld [vmem:[#allocation9 + $0xa8] sm:$0xff]
      %v1647 = vld [vmem:[#allocation9 + $0xb0] sm:$0xff]
      %v1648 = vld [vmem:[#allocation9 + $0xb8] sm:$0xff]
      %v1649 = vld [vmem:[#allocation9 + $0xc0] sm:$0xff]
      %v1650 = vld [vmem:[#allocation9 + $0xc8] sm:$0xff]
      %v1651 = vld [vmem:[#allocation9 + $0xd0] sm:$0xff]
      %v1652 = vld [vmem:[#allocation9 + $0xd8] sm:$0xff]
      %v1653 = vld [vmem:[#allocation9 + $0xe0] sm:$0xff]
      %v1654 = vld [vmem:[#allocation9 + $0xe8] sm:$0xff]
      %v1655 = vld [vmem:[#allocation9 + $0xf0] sm:$0xff]
      %v1656 = vld [vmem:[#allocation9 + $0xf8] sm:$0xff]
      %v1689 = vunpack.c.l.b16 %v1625
      %v1690 = vunpack.c.h.b16 %v1625
      %v1691 = vunpack.c.l.b16 %v1626
      %v1692 = vunpack.c.h.b16 %v1626
      %v1693 = vunpack.c.l.b16 %v1627
      %v1694 = vunpack.c.h.b16 %v1627
      %v1695 = vunpack.c.l.b16 %v1628
      %v1696 = vunpack.c.h.b16 %v1628
      %v1697 = vunpack.c.l.b16 %v1629
      %v1698 = vunpack.c.h.b16 %v1629
      %v1699 = vunpack.c.l.b16 %v1630
      %v1700 = vunpack.c.h.b16 %v1630
      %v1701 = vunpack.c.l.b16 %v1631
      %v1702 = vunpack.c.h.b16 %v1631
      %v1703 = vunpack.c.l.b16 %v1632
      %v1704 = vunpack.c.h.b16 %v1632
      %v1705 = vunpack.c.l.b16 %v1633
      %v1706 = vunpack.c.h.b16 %v1633
      %v1707 = vunpack.c.l.b16 %v1634
      %v1708 = vunpack.c.h.b16 %v1634
      %v1709 = vunpack.c.l.b16 %v1635
      %v1710 = vunpack.c.h.b16 %v1635
      %v1711 = vunpack.c.l.b16 %v1636
      %v1712 = vunpack.c.h.b16 %v1636
      %v1713 = vunpack.c.l.b16 %v1637
      %v1714 = vunpack.c.h.b16 %v1637
      %v1715 = vunpack.c.l.b16 %v1638
      %v1716 = vunpack.c.h.b16 %v1638
      %v1717 = vunpack.c.l.b16 %v1639
      %v1718 = vunpack.c.h.b16 %v1639
      %v1719 = vunpack.c.l.b16 %v1640
      %v1720 = vunpack.c.h.b16 %v1640
      %v1721 = vunpack.c.l.b16 %v1641
      %v1722 = vunpack.c.h.b16 %v1641
      %v1723 = vunpack.c.l.b16 %v1642
      %v1724 = vunpack.c.h.b16 %v1642
      %v1725 = vunpack.c.l.b16 %v1643
      %v1726 = vunpack.c.h.b16 %v1643
      %v1727 = vunpack.c.l.b16 %v1644
      %v1728 = vunpack.c.h.b16 %v1644
      %v1729 = vunpack.c.l.b16 %v1645
      %v1730 = vunpack.c.h.b16 %v1645
      %v1731 = vunpack.c.l.b16 %v1646
      %v1732 = vunpack.c.h.b16 %v1646
      %v1733 = vunpack.c.l.b16 %v1647
      %v1734 = vunpack.c.h.b16 %v1647
      %v1735 = vunpack.c.l.b16 %v1648
      %v1736 = vunpack.c.h.b16 %v1648
      %v1737 = vunpack.c.l.b16 %v1649
      %v1738 = vunpack.c.h.b16 %v1649
      %v1739 = vunpack.c.l.b16 %v1650
      %v1740 = vunpack.c.h.b16 %v1650
      %v1741 = vunpack.c.l.b16 %v1651
      %v1742 = vunpack.c.h.b16 %v1651
      %v1743 = vunpack.c.l.b16 %v1652
      %v1744 = vunpack.c.h.b16 %v1652
      %v1745 = vunpack.c.l.b16 %v1653
      %v1746 = vunpack.c.h.b16 %v1653
      %v1747 = vunpack.c.l.b16 %v1654
      %v1748 = vunpack.c.h.b16 %v1654
      %v1749 = vunpack.c.l.b16 %v1655
      %v1750 = vunpack.c.h.b16 %v1655
      %v1751 = vunpack.c.l.b16 %v1656
      %v1752 = vunpack.c.h.b16 %v1656
      %v1753 = vpack.c.b16 %v1693, %v1689
      %v1754 = vpack.c.b16 %v1694, %v1690
      %v1755 = vpack.c.b16 %v1695, %v1691
      %v1756 = vpack.c.b16 %v1696, %v1692
      %v1757 = vpack.c.b16 %v1701, %v1697
      %v1758 = vpack.c.b16 %v1702, %v1698
      %v1759 = vpack.c.b16 %v1703, %v1699
      %v1760 = vpack.c.b16 %v1704, %v1700
      %v1761 = vpack.c.b16 %v1709, %v1705
      %v1762 = vpack.c.b16 %v1710, %v1706
      %v1763 = vpack.c.b16 %v1711, %v1707
      %v1764 = vpack.c.b16 %v1712, %v1708
      %v1765 = vpack.c.b16 %v1717, %v1713
      %v1766 = vpack.c.b16 %v1718, %v1714
      %v1767 = vpack.c.b16 %v1719, %v1715
      %v1768 = vpack.c.b16 %v1720, %v1716
      %v1769 = vpack.c.b16 %v1725, %v1721
      %v1770 = vpack.c.b16 %v1726, %v1722
      %v1771 = vpack.c.b16 %v1727, %v1723
      %v1772 = vpack.c.b16 %v1728, %v1724
      %v1773 = vpack.c.b16 %v1733, %v1729
      %v1774 = vpack.c.b16 %v1734, %v1730
      %v1775 = vpack.c.b16 %v1735, %v1731
      %v1776 = vpack.c.b16 %v1736, %v1732
      %v1777 = vpack.c.b16 %v1741, %v1737
      %v1778 = vpack.c.b16 %v1742, %v1738
      %v1779 = vpack.c.b16 %v1743, %v1739
      %v1780 = vpack.c.b16 %v1744, %v1740
      %v1781 = vpack.c.b16 %v1749, %v1745
      %v1782 = vpack.c.b16 %v1750, %v1746
      %v1783 = vpack.c.b16 %v1751, %v1747
      %v1784 = vpack.c.b16 %v1752, %v1748
      %1817 = vmatprep.subr.bf16.mxu0 %v1754
      %1818 = vmatpush1.bf16.msra.mxu0 %v1753
      %1819 = vmatprep.subr.bf16.mxu0 %v1758
      %1820 = vmatpush1.bf16.msra.mxu0 %v1757
      %1821 = vmatprep.subr.bf16.mxu0 %v1762
      %1822 = vmatpush1.bf16.msra.mxu0 %v1761
      %1823 = vmatprep.subr.bf16.mxu0 %v1766
      %1824 = vmatpush1.bf16.msra.mxu0 %v1765
      %1825 = vmatprep.subr.bf16.mxu0 %v1770
      %1826 = vmatpush1.bf16.msra.mxu0 %v1769
      %1827 = vmatprep.subr.bf16.mxu0 %v1774
      %1828 = vmatpush1.bf16.msra.mxu0 %v1773
      %1829 = vmatprep.subr.bf16.mxu0 %v1778
      %1830 = vmatpush1.bf16.msra.mxu0 %v1777
      %1831 = vmatprep.subr.bf16.mxu0 %v1782
      %1832 = vmatpush1.bf16.msra.mxu0 %v1781
      %1833 = vmatprep.subr.bf16.mxu0 0
      %1834 = vmatpush1.bf16.msra.mxu0 0
      %1835 = vmatprep.subr.bf16.mxu0 0
      %1836 = vmatpush1.bf16.msra.mxu0 0
      %1837 = vmatprep.subr.bf16.mxu0 0
      %1838 = vmatpush1.bf16.msra.mxu0 0
      %1839 = vmatprep.subr.bf16.mxu0 0
      %1840 = vmatpush1.bf16.msra.mxu0 0
      %1841 = vmatprep.subr.bf16.mxu0 0
      %1842 = vmatpush1.bf16.msra.mxu0 0
      %1843 = vmatprep.subr.bf16.mxu0 0
      %1844 = vmatpush1.bf16.msra.mxu0 0
      %1845 = vmatprep.subr.bf16.mxu0 0
      %1846 = vmatpush1.bf16.msra.mxu0 0
      %1847 = vmatprep.subr.bf16.mxu0 0
      %1848 = vmatpush1.bf16.msra.mxu0 0
      %1849 = vmatprep.mubr.bf16.mxu0 0
      %1850 = vmatmul.mubr.bf16.gmra.mrb[0].mxu0 %v1624
      %v1851 = vpop.f32.mrb[0].mxu0
      %v1852 = vadd.f32 0.0, %v1851
      %v1853 = vpop.f32.mrb[0].mxu0
      %v1854 = vadd.f32 0.0, %v1853
      %v1855 = vpop.f32.mrb[0].mxu0
      %v1856 = vadd.f32 0.0, %v1855
      %v1857 = vpop.f32.mrb[0].mxu0
      %v1858 = vadd.f32 0.0, %v1857
      %1859 = vdwg.mxu0
      %1860 = vmatprep.subr.bf16.mxu0 %v1756
      %1861 = vmatpush1.bf16.msra.mxu0 %v1755
      %1862 = vmatprep.subr.bf16.mxu0 %v1760
      %1863 = vmatpush1.bf16.msra.mxu0 %v1759
      %1864 = vmatprep.subr.bf16.mxu0 %v1764
      %1865 = vmatpush1.bf16.msra.mxu0 %v1763
      %1866 = vmatprep.subr.bf16.mxu0 %v1768
      %1867 = vmatpush1.bf16.msra.mxu0 %v1767
      %1868 = vmatprep.subr.bf16.mxu0 %v1772
      %1869 = vmatpush1.bf16.msra.mxu0 %v1771
      %1870 = vmatprep.subr.bf16.mxu0 %v1776
      %1871 = vmatpush1.bf16.msra.mxu0 %v1775
      %1872 = vmatprep.subr.bf16.mxu0 %v1780
      %1873 = vmatpush1.bf16.msra.mxu0 %v1779
      %1874 = vmatprep.subr.bf16.mxu0 %v1784
      %1875 = vmatpush1.bf16.msra.mxu0 %v1783
      %1876 = vmatprep.subr.bf16.mxu0 0
      %1877 = vmatpush1.bf16.msra.mxu0 0
      %1878 = vmatprep.subr.bf16.mxu0 0
      %1879 = vmatpush1.bf16.msra.mxu0 0
      %1880 = vmatprep.subr.bf16.mxu0 0
      %1881 = vmatpush1.bf16.msra.mxu0 0
      %1882 = vmatprep.subr.bf16.mxu0 0
      %1883 = vmatpush1.bf16.msra.mxu0 0
      %1884 = vmatprep.subr.bf16.mxu0 0
      %1885 = vmatpush1.bf16.msra.mxu0 0
      %1886 = vmatprep.subr.bf16.mxu0 0
      %1887 = vmatpush1.bf16.msra.mxu0 0
      %1888 = vmatprep.subr.bf16.mxu0 0
      %1889 = vmatpush1.bf16.msra.mxu0 0
      %1890 = vmatprep.subr.bf16.mxu0 0
      %1891 = vmatpush1.bf16.msra.mxu0 0
      %1892 = vmatprep.mubr.bf16.mxu0 0
      %1893 = vmatmul.mubr.bf16.gmra.mrb[0].mxu0 %v1624
      %v1894 = vpop.f32.mrb[0].mxu0
      %v1895 = vadd.f32 0.0, %v1894
      %v1896 = vpop.f32.mrb[0].mxu0
      %v1897 = vadd.f32 0.0, %v1896
      %v1898 = vpop.f32.mrb[0].mxu0
      %v1899 = vadd.f32 0.0, %v1898
      %v1900 = vpop.f32.mrb[0].mxu0
      %v1901 = vadd.f32 0.0, %v1900
      %1902 = vdwg.mxu0
      %v1903 = vpack.c.bf16 %v1618, %v1617
      %v1904 = vld [vmem:[#allocation13] sm:$0xff]
      %v1905 = vld [vmem:[#allocation13 + $0x8] sm:$0xff]
      %v1906 = vld [vmem:[#allocation13 + $0x10] sm:$0xff]
      %v1907 = vld [vmem:[#allocation13 + $0x18] sm:$0xff]
      %v1908 = vld [vmem:[#allocation13 + $0x20] sm:$0xff]
      %v1909 = vld [vmem:[#allocation13 + $0x28] sm:$0xff]
      %v1910 = vld [vmem:[#allocation13 + $0x30] sm:$0xff]
      %v1911 = vld [vmem:[#allocation13 + $0x38] sm:$0xff]
      %v1912 = vld [vmem:[#allocation13 + $0x40] sm:$0xff]
      %v1913 = vld [vmem:[#allocation13 + $0x48] sm:$0xff]
      %v1914 = vld [vmem:[#allocation13 + $0x50] sm:$0xff]
      %v1915 = vld [vmem:[#allocation13 + $0x58] sm:$0xff]
      %v1916 = vld [vmem:[#allocation13 + $0x60] sm:$0xff]
      %v1917 = vld [vmem:[#allocation13 + $0x68] sm:$0xff]
      %v1918 = vld [vmem:[#allocation13 + $0x70] sm:$0xff]
      %v1919 = vld [vmem:[#allocation13 + $0x78] sm:$0xff]
      %v1920 = vld [vmem:[#allocation13 + $0x80] sm:$0xff]
      %v1921 = vld [vmem:[#allocation13 + $0x88] sm:$0xff]
      %v1922 = vld [vmem:[#allocation13 + $0x90] sm:$0xff]
      %v1923 = vld [vmem:[#allocation13 + $0x98] sm:$0xff]
      %v1924 = vld [vmem:[#allocation13 + $0xa0] sm:$0xff]
      %v1925 = vld [vmem:[#allocation13 + $0xa8] sm:$0xff]
      %v1926 = vld [vmem:[#allocation13 + $0xb0] sm:$0xff]
      %v1927 = vld [vmem:[#allocation13 + $0xb8] sm:$0xff]
      %v1928 = vld [vmem:[#allocation13 + $0xc0] sm:$0xff]
      %v1929 = vld [vmem:[#allocation13 + $0xc8] sm:$0xff]
      %v1930 = vld [vmem:[#allocation13 + $0xd0] sm:$0xff]
      %v1931 = vld [vmem:[#allocation13 + $0xd8] sm:$0xff]
      %v1932 = vld [vmem:[#allocation13 + $0xe0] sm:$0xff]
      %v1933 = vld [vmem:[#allocation13 + $0xe8] sm:$0xff]
      %v1934 = vld [vmem:[#allocation13 + $0xf0] sm:$0xff]
      %v1935 = vld [vmem:[#allocation13 + $0xf8] sm:$0xff]
      %v1968 = vunpack.c.l.b16 %v1904
      %v1969 = vunpack.c.h.b16 %v1904
      %v1970 = vunpack.c.l.b16 %v1905
      %v1971 = vunpack.c.h.b16 %v1905
      %v1972 = vunpack.c.l.b16 %v1906
      %v1973 = vunpack.c.h.b16 %v1906
      %v1974 = vunpack.c.l.b16 %v1907
      %v1975 = vunpack.c.h.b16 %v1907
      %v1976 = vunpack.c.l.b16 %v1908
      %v1977 = vunpack.c.h.b16 %v1908
      %v1978 = vunpack.c.l.b16 %v1909
      %v1979 = vunpack.c.h.b16 %v1909
      %v1980 = vunpack.c.l.b16 %v1910
      %v1981 = vunpack.c.h.b16 %v1910
      %v1982 = vunpack.c.l.b16 %v1911
      %v1983 = vunpack.c.h.b16 %v1911
      %v1984 = vunpack.c.l.b16 %v1912
      %v1985 = vunpack.c.h.b16 %v1912
      %v1986 = vunpack.c.l.b16 %v1913
      %v1987 = vunpack.c.h.b16 %v1913
      %v1988 = vunpack.c.l.b16 %v1914
      %v1989 = vunpack.c.h.b16 %v1914
      %v1990 = vunpack.c.l.b16 %v1915
      %v1991 = vunpack.c.h.b16 %v1915
      %v1992 = vunpack.c.l.b16 %v1916
      %v1993 = vunpack.c.h.b16 %v1916
      %v1994 = vunpack.c.l.b16 %v1917
      %v1995 = vunpack.c.h.b16 %v1917
      %v1996 = vunpack.c.l.b16 %v1918
      %v1997 = vunpack.c.h.b16 %v1918
      %v1998 = vunpack.c.l.b16 %v1919
      %v1999 = vunpack.c.h.b16 %v1919
      %v2000 = vunpack.c.l.b16 %v1920
      %v2001 = vunpack.c.h.b16 %v1920
      %v2002 = vunpack.c.l.b16 %v1921
      %v2003 = vunpack.c.h.b16 %v1921
      %v2004 = vunpack.c.l.b16 %v1922
      %v2005 = vunpack.c.h.b16 %v1922
      %v2006 = vunpack.c.l.b16 %v1923
      %v2007 = vunpack.c.h.b16 %v1923
      %v2008 = vunpack.c.l.b16 %v1924
      %v2009 = vunpack.c.h.b16 %v1924
      %v2010 = vunpack.c.l.b16 %v1925
      %v2011 = vunpack.c.h.b16 %v1925
      %v2012 = vunpack.c.l.b16 %v1926
      %v2013 = vunpack.c.h.b16 %v1926
      %v2014 = vunpack.c.l.b16 %v1927
      %v2015 = vunpack.c.h.b16 %v1927
      %v2016 = vunpack.c.l.b16 %v1928
      %v2017 = vunpack.c.h.b16 %v1928
      %v2018 = vunpack.c.l.b16 %v1929
      %v2019 = vunpack.c.h.b16 %v1929
      %v2020 = vunpack.c.l.b16 %v1930
      %v2021 = vunpack.c.h.b16 %v1930
      %v2022 = vunpack.c.l.b16 %v1931
      %v2023 = vunpack.c.h.b16 %v1931
      %v2024 = vunpack.c.l.b16 %v1932
      %v2025 = vunpack.c.h.b16 %v1932
      %v2026 = vunpack.c.l.b16 %v1933
      %v2027 = vunpack.c.h.b16 %v1933
      %v2028 = vunpack.c.l.b16 %v1934
      %v2029 = vunpack.c.h.b16 %v1934
      %v2030 = vunpack.c.l.b16 %v1935
      %v2031 = vunpack.c.h.b16 %v1935
      %v2032 = vpack.c.b16 %v1972, %v1968
      %v2033 = vpack.c.b16 %v1973, %v1969
      %v2034 = vpack.c.b16 %v1974, %v1970
      %v2035 = vpack.c.b16 %v1975, %v1971
      %v2036 = vpack.c.b16 %v1980, %v1976
      %v2037 = vpack.c.b16 %v1981, %v1977
      %v2038 = vpack.c.b16 %v1982, %v1978
      %v2039 = vpack.c.b16 %v1983, %v1979
      %v2040 = vpack.c.b16 %v1988, %v1984
      %v2041 = vpack.c.b16 %v1989, %v1985
      %v2042 = vpack.c.b16 %v1990, %v1986
      %v2043 = vpack.c.b16 %v1991, %v1987
      %v2044 = vpack.c.b16 %v1996, %v1992
      %v2045 = vpack.c.b16 %v1997, %v1993
      %v2046 = vpack.c.b16 %v1998, %v1994
      %v2047 = vpack.c.b16 %v1999, %v1995
      %v2048 = vpack.c.b16 %v2004, %v2000
      %v2049 = vpack.c.b16 %v2005, %v2001
      %v2050 = vpack.c.b16 %v2006, %v2002
      %v2051 = vpack.c.b16 %v2007, %v2003
      %v2052 = vpack.c.b16 %v2012, %v2008
      %v2053 = vpack.c.b16 %v2013, %v2009
      %v2054 = vpack.c.b16 %v2014, %v2010
      %v2055 = vpack.c.b16 %v2015, %v2011
      %v2056 = vpack.c.b16 %v2020, %v2016
      %v2057 = vpack.c.b16 %v2021, %v2017
      %v2058 = vpack.c.b16 %v2022, %v2018
      %v2059 = vpack.c.b16 %v2023, %v2019
      %v2060 = vpack.c.b16 %v2028, %v2024
      %v2061 = vpack.c.b16 %v2029, %v2025
      %v2062 = vpack.c.b16 %v2030, %v2026
      %v2063 = vpack.c.b16 %v2031, %v2027
      %2096 = vmatprep.subr.bf16.mxu0 %v2033
      %2097 = vmatpush1.bf16.msra.mxu0 %v2032
      %2098 = vmatprep.subr.bf16.mxu0 %v2037
      %2099 = vmatpush1.bf16.msra.mxu0 %v2036
      %2100 = vmatprep.subr.bf16.mxu0 %v2041
      %2101 = vmatpush1.bf16.msra.mxu0 %v2040
      %2102 = vmatprep.subr.bf16.mxu0 %v2045
      %2103 = vmatpush1.bf16.msra.mxu0 %v2044
      %2104 = vmatprep.subr.bf16.mxu0 %v2049
      %2105 = vmatpush1.bf16.msra.mxu0 %v2048
      %2106 = vmatprep.subr.bf16.mxu0 %v2053
      %2107 = vmatpush1.bf16.msra.mxu0 %v2052
      %2108 = vmatprep.subr.bf16.mxu0 %v2057
      %2109 = vmatpush1.bf16.msra.mxu0 %v2056
      %2110 = vmatprep.subr.bf16.mxu0 %v2061
      %2111 = vmatpush1.bf16.msra.mxu0 %v2060
      %2112 = vmatprep.subr.bf16.mxu0 0
      %2113 = vmatpush1.bf16.msra.mxu0 0
      %2114 = vmatprep.subr.bf16.mxu0 0
      %2115 = vmatpush1.bf16.msra.mxu0 0
      %2116 = vmatprep.subr.bf16.mxu0 0
      %2117 = vmatpush1.bf16.msra.mxu0 0
      %2118 = vmatprep.subr.bf16.mxu0 0
      %2119 = vmatpush1.bf16.msra.mxu0 0
      %2120 = vmatprep.subr.bf16.mxu0 0
      %2121 = vmatpush1.bf16.msra.mxu0 0
      %2122 = vmatprep.subr.bf16.mxu0 0
      %2123 = vmatpush1.bf16.msra.mxu0 0
      %2124 = vmatprep.subr.bf16.mxu0 0
      %2125 = vmatpush1.bf16.msra.mxu0 0
      %2126 = vmatprep.subr.bf16.mxu0 0
      %2127 = vmatpush1.bf16.msra.mxu0 0
      %2128 = vmatprep.mubr.bf16.mxu0 0
      %2129 = vmatmul.mubr.bf16.gmra.mrb[0].mxu0 %v1903
      %v2130 = vpop.f32.mrb[0].mxu0
      %v2131 = vadd.f32 0.0, %v2130
      %v2132 = vpop.f32.mrb[0].mxu0
      %v2133 = vadd.f32 0.0, %v2132
      %v2134 = vpop.f32.mrb[0].mxu0
      %v2135 = vadd.f32 0.0, %v2134
      %v2136 = vpop.f32.mrb[0].mxu0
      %v2137 = vadd.f32 0.0, %v2136
      %2138 = vdwg.mxu0
      %2139 = vmatprep.subr.bf16.mxu0 %v2035
      %2140 = vmatpush1.bf16.msra.mxu0 %v2034
      %2141 = vmatprep.subr.bf16.mxu0 %v2039
      %2142 = vmatpush1.bf16.msra.mxu0 %v2038
      %2143 = vmatprep.subr.bf16.mxu0 %v2043
      %2144 = vmatpush1.bf16.msra.mxu0 %v2042
      %2145 = vmatprep.subr.bf16.mxu0 %v2047
      %2146 = vmatpush1.bf16.msra.mxu0 %v2046
      %2147 = vmatprep.subr.bf16.mxu0 %v2051
      %2148 = vmatpush1.bf16.msra.mxu0 %v2050
      %2149 = vmatprep.subr.bf16.mxu0 %v2055
      %2150 = vmatpush1.bf16.msra.mxu0 %v2054
      %2151 = vmatprep.subr.bf16.mxu0 %v2059
      %2152 = vmatpush1.bf16.msra.mxu0 %v2058
      %2153 = vmatprep.subr.bf16.mxu0 %v2063
      %2154 = vmatpush1.bf16.msra.mxu0 %v2062
      %2155 = vmatprep.subr.bf16.mxu0 0
      %2156 = vmatpush1.bf16.msra.mxu0 0
      %2157 = vmatprep.subr.bf16.mxu0 0
      %2158 = vmatpush1.bf16.msra.mxu0 0
      %2159 = vmatprep.subr.bf16.mxu0 0
      %2160 = vmatpush1.bf16.msra.mxu0 0
      %2161 = vmatprep.subr.bf16.mxu0 0
      %2162 = vmatpush1.bf16.msra.mxu0 0
      %2163 = vmatprep.subr.bf16.mxu0 0
      %2164 = vmatpush1.bf16.msra.mxu0 0
      %2165 = vmatprep.subr.bf16.mxu0 0
      %2166 = vmatpush1.bf16.msra.mxu0 0
      %2167 = vmatprep.subr.bf16.mxu0 0
      %2168 = vmatpush1.bf16.msra.mxu0 0
      %2169 = vmatprep.subr.bf16.mxu0 0
      %2170 = vmatpush1.bf16.msra.mxu0 0
      %2171 = vmatprep.mubr.bf16.mxu0 0
      %2172 = vmatmul.mubr.bf16.gmra.mrb[0].mxu0 %v1903
      %v2173 = vpop.f32.mrb[0].mxu0
      %v2174 = vadd.f32 0.0, %v2173
      %v2175 = vpop.f32.mrb[0].mxu0
      %v2176 = vadd.f32 0.0, %v2175
      %v2177 = vpop.f32.mrb[0].mxu0
      %v2178 = vadd.f32 0.0, %v2177
      %v2179 = vpop.f32.mrb[0].mxu0
      %v2180 = vadd.f32 0.0, %v2179
      %2181 = vdwg.mxu0
      %s2182 = sshra.s32 %s1621, 4
      %s2183 = sand.u32 %s1621, 15
      %s2184 = smul.u32 %s2182, 4
      %s2185 = smul.addr %s2184, 8
      %s2186 = scalar_lea.vmem [#allocation2], %s2185
      %v2187 = vld [vmem:[%s2186] sm:$0xff]
      %v2188 = vld [vmem:[%s2186 + $0x8] sm:$0xff]
      %v2189 = vld [vmem:[%s2186 + $0x10] sm:$0xff]
      %v2190 = vld [vmem:[%s2186 + $0x18] sm:$0xff]
      %v2191 = vunpack.c.l.bf16 %v2187
      %v2192 = vunpack.c.l.bf16 %v2188
      %v2193 = vunpack.c.l.bf16 %v2189
      %v2194 = vunpack.c.l.bf16 %v2190
      %v2195 = vunpack.c.h.bf16 %v2187
      %v2196 = vunpack.c.h.bf16 %v2188
      %v2197 = vunpack.c.h.bf16 %v2189
      %v2198 = vunpack.c.h.bf16 %v2190
      %v2199 = vadd.f32 %v2191, %v1852
      %v2200 = vadd.f32 %v2192, %v1854
      %v2201 = vadd.f32 %v2193, %v1895
      %v2202 = vadd.f32 %v2194, %v1897
      %v2203 = vadd.f32 %v2195, %v1856
      %v2204 = vadd.f32 %v2196, %v1858
      %v2205 = vadd.f32 %v2197, %v1899
      %v2206 = vadd.f32 %v2198, %v1901
      %s2207 = sshra.s32 %s1623, 4
      %s2208 = sand.u32 %s1623, 15
      %s2209 = smul.u32 %s2207, 4
      %s2210 = smul.addr %s2209, 8
      %s2211 = scalar_lea.vmem [#allocation3], %s2210
      %v2212 = vld [vmem:[%s2211] sm:$0xff]
      %v2213 = vld [vmem:[%s2211 + $0x8] sm:$0xff]
      %v2214 = vld [vmem:[%s2211 + $0x10] sm:$0xff]
      %v2215 = vld [vmem:[%s2211 + $0x18] sm:$0xff]
      %v2216 = vunpack.c.l.bf16 %v2212
      %v2217 = vunpack.c.l.bf16 %v2213
      %v2218 = vunpack.c.l.bf16 %v2214
      %v2219 = vunpack.c.l.bf16 %v2215
      %v2220 = vunpack.c.h.bf16 %v2212
      %v2221 = vunpack.c.h.bf16 %v2213
      %v2222 = vunpack.c.h.bf16 %v2214
      %v2223 = vunpack.c.h.bf16 %v2215
      %v2224 = vadd.f32 %v2216, %v2131
      %v2225 = vadd.f32 %v2217, %v2133
      %v2226 = vadd.f32 %v2218, %v2174
      %v2227 = vadd.f32 %v2219, %v2176
      %v2228 = vadd.f32 %v2220, %v2135
      %v2229 = vadd.f32 %v2221, %v2137
      %v2230 = vadd.f32 %v2222, %v2178
      %v2231 = vadd.f32 %v2223, %v2180
      %v2232 = vxor.u32 %v2199, 2147483648
      %v2233 = vxor.u32 %v2203, 2147483648
      %v2234 = vmul.f32 %v2232, 1.442695
      %v2235 = vpow.pop %v2234
      %v2236 = vmul.f32 %v2233, 1.442695
      %v2237 = vpow.pop %v2236
      %v2238 = vadd.f32 %v2235, 1.0
      %v2239 = vadd.f32 %v2237, 1.0
      %v2240 = vrcp.pop %v2238
      %v2241 = vmul.f32 1.0, %v2240
      %v2242 = vrcp.pop %v2239
      %v2243 = vmul.f32 1.0, %v2242
      %v2244 = vxor.u32 %v2200, 2147483648
      %v2245 = vxor.u32 %v2204, 2147483648
      %v2246 = vmul.f32 %v2244, 1.442695
      %v2247 = vpow.pop %v2246
      %v2248 = vmul.f32 %v2245, 1.442695
      %v2249 = vpow.pop %v2248
      %v2250 = vadd.f32 %v2247, 1.0
      %v2251 = vadd.f32 %v2249, 1.0
      %v2252 = vrcp.pop %v2250
      %v2253 = vmul.f32 1.0, %v2252
      %v2254 = vrcp.pop %v2251
      %v2255 = vmul.f32 1.0, %v2254
      %v2256 = vtanh.pop %v2201
      %v2257 = vtanh.pop %v2205
      %v2258 = vxor.u32 %v2202, 2147483648
      %v2259 = vxor.u32 %v2206, 2147483648
      %v2260 = vmul.f32 %v2258, 1.442695
      %v2261 = vpow.pop %v2260
      %v2262 = vmul.f32 %v2259, 1.442695
      %v2263 = vpow.pop %v2262
      %v2264 = vadd.f32 %v2261, 1.0
      %v2265 = vadd.f32 %v2263, 1.0
      %v2266 = vrcp.pop %v2264
      %v2267 = vmul.f32 1.0, %v2266
      %v2268 = vrcp.pop %v2265
      %v2269 = vmul.f32 1.0, %v2268
      %v2270 = vmul.f32 %v2253, %v1615
      %v2271 = vmul.f32 %v2255, %v1616
      %v2272 = vmul.f32 %v2241, %v2256
      %v2273 = vmul.f32 %v2243, %v2257
      %v2274 = vadd.f32 %v2270, %v2272
      %v2275 = vadd.f32 %v2271, %v2273
      %v2276 = vtanh.pop %v2274
      %v2277 = vtanh.pop %v2275
      %v2278 = vmul.f32 %v2267, %v2276
      %v2279 = vmul.f32 %v2269, %v2277
      %v2280 = vxor.u32 %v2224, 2147483648
      %v2281 = vxor.u32 %v2228, 2147483648
      %v2282 = vmul.f32 %v2280, 1.442695
      %v2283 = vpow.pop %v2282
      %v2284 = vmul.f32 %v2281, 1.442695
      %v2285 = vpow.pop %v2284
      %v2286 = vadd.f32 %v2283, 1.0
      %v2287 = vadd.f32 %v2285, 1.0
      %v2288 = vrcp.pop %v2286
      %v2289 = vmul.f32 1.0, %v2288
      %v2290 = vrcp.pop %v2287
      %v2291 = vmul.f32 1.0, %v2290
      %v2292 = vxor.u32 %v2225, 2147483648
      %v2293 = vxor.u32 %v2229, 2147483648
      %v2294 = vmul.f32 %v2292, 1.442695
      %v2295 = vpow.pop %v2294
      %v2296 = vmul.f32 %v2293, 1.442695
      %v2297 = vpow.pop %v2296
      %v2298 = vadd.f32 %v2295, 1.0
      %v2299 = vadd.f32 %v2297, 1.0
      %v2300 = vrcp.pop %v2298
      %v2301 = vmul.f32 1.0, %v2300
      %v2302 = vrcp.pop %v2299
      %v2303 = vmul.f32 1.0, %v2302
      %v2304 = vtanh.pop %v2226
      %v2305 = vtanh.pop %v2230
      %v2306 = vxor.u32 %v2227, 2147483648
      %v2307 = vxor.u32 %v2231, 2147483648
      %v2308 = vmul.f32 %v2306, 1.442695
      %v2309 = vpow.pop %v2308
      %v2310 = vmul.f32 %v2307, 1.442695
      %v2311 = vpow.pop %v2310
      %v2312 = vadd.f32 %v2309, 1.0
      %v2313 = vadd.f32 %v2311, 1.0
      %v2314 = vrcp.pop %v2312
      %v2315 = vmul.f32 1.0, %v2314
      %v2316 = vrcp.pop %v2313
      %v2317 = vmul.f32 1.0, %v2316
      %v2318 = vmul.f32 %v2301, %v1619
      %v2319 = vmul.f32 %v2303, %v1620
      %v2320 = vmul.f32 %v2289, %v2304
      %v2321 = vmul.f32 %v2291, %v2305
      %v2322 = vadd.f32 %v2318, %v2320
      %v2323 = vadd.f32 %v2319, %v2321
      %v2324 = vtanh.pop %v2322
      %v2325 = vtanh.pop %v2323
      %v2326 = vmul.f32 %v2315, %v2324
      %v2327 = vmul.f32 %v2317, %v2325
      %v2328 = vpack.c.bf16 %v2279, %v2278
      %v2330 = vunpack.c.l.b16 %v2328
      %v2331 = vunpack.c.h.b16 %v2328
      %v2332 = vpack.c.b16 %v2330, %v2330
      %v2333 = vpack.c.b16 %v2331, %v2331
      %s2336 = sshra.s32 %s1621, 3
      %s2337 = sand.u32 %s1621, 7
      %s2338 = smul.u32 %s2336, 2
      %s2339 = smul.addr %s2338, 4
      %s2340 = scalar_lea.vmem [#allocation16], %s2339
      %2341 = vst [vmem:[%s2340] sm:$0xf] %v2332
      %2342 = vst [vmem:[%s2340 + $0x8] sm:$0xf] %v2333
      %v2343 = vpack.c.bf16 %v2327, %v2326
      %v2345 = vunpack.c.l.b16 %v2343
      %v2346 = vunpack.c.h.b16 %v2343
      %v2347 = vpack.c.b16 %v2345, %v2345
      %v2348 = vpack.c.b16 %v2346, %v2346
      %s2351 = sshra.s32 %s1623, 3
      %s2352 = sand.u32 %s1623, 7
      %s2353 = smul.u32 %s2351, 2
      %s2354 = smul.addr %s2353, 4
      %s2355 = scalar_lea.vmem [#allocation16], %s2354
      %2356 = vst [vmem:[%s2355 + $0x4] sm:$0xf] %v2347
      %2357 = vst [vmem:[%s2355 + $0xc] sm:$0xf] %v2348
    $region62: #{sarcasm_forward.4} parent=1 // loop_footer
      %s1612 = sadd.s32 1, %s1608
    $region63: #{sarcasm_forward.4} parent=1 // loop_footer_branch
      %1607 = sbr.rel target = $region59
    $region64: #{sarcasm_forward.4} parent=1 // loop_exit
      _
    // Predicated region
    $region65: #{sarcasm_forward.4} parent=1 // pred_check
      _
    $region66: #{sarcasm_forward.4} parent=1 // pred_check_branch
      %2359 = sbr.rel (0) target = $region68
    $region67: #{sarcasm_forward.4} parent=1 // pred_region
      %s2361 = ssub.s32 2048, 2048
      %2362 = vsyncadd [#allocation6], %s2361
      %s2363 = sshll.u32 [#allocation16], 4
      %s2364 = int_to_ptr.vmem [resolvable:$true] %s2363
      %2369 = dma.vmem_to_hbm [thread:$0]  %s2364, 2048, %s7, [#allocation6], 128, 128, 8
    $region68: #{sarcasm_forward.4} parent=1 // pred_fallthru
      _
    // Predicated region
    $region69: #{sarcasm_forward.4} parent=1 // pred_check
      _
    $region70: #{sarcasm_forward.4} parent=1 // pred_check_branch
      %2371 = sbr.rel (0) target = $region72
    $region71: #{sarcasm_forward.4} parent=1 // pred_region
      %2372 = dma.done [#allocation6], 2048
    $region72: #{sarcasm_forward.4} parent=1 // pred_fallthru
      _
    %2373 = vsyncpa [#allocation5], 1
    %2374 = vsyncpa [#allocation8], 1
    %2375 = vsyncpa [#allocation11], 1
    %2376 = vsyncpa [#allocation14], 1
    %2377 = vsyncpa [#allocation6], 1

// kernel: sarcasm_forward.5
$region0: #{sarcasm_forward.5}
  #allocation0 [shape = 'u32[]', space=smem, size = 0x4, offset = 0x4, fixed_abs, tag = 'smem constant byte address 0x4 - core index']
  #allocation1 [shape = 'u32[144,128]{1,0:T(1,128)}', space=vmem, size = 0x12000, scoped, tag = 'internal scratch']
  #allocation2 [shape = 'bf16[128,512]{1,0:T(16,128)(2,1)}', space=vmem, size = 0x20000, scoped, tag = 'scratch operand']
  %s0 = inlined_call_operand.hbm [shape: bf16[128,256], index: 0, kind: input, shape index: {}]
  %s1 = inlined_call_operand.hbm [shape: bf16[256,512], index: 1, kind: input, shape index: {}]
  %s2 = inlined_call_operand.hbm [shape: bf16[128,512], index: 2, kind: input, shape index: {}]
  %s3 = inlined_call_operand.hbm [shape: f32[1,512], index: 3, kind: input, shape index: {}]
  %s4 = inlined_call_operand.hbm [shape: bf16[256,512], index: 4, kind: input, shape index: {}]
  %s5 = inlined_call_operand.hbm [shape: f32[1,512], index: 5, kind: input, shape index: {}]
  %s6 = inlined_call_operand.hbm [shape: f32[256,64], index: 6, kind: input, shape index: {}]
  %s7 = inlined_call_operand.hbm [shape: f32[1,64], index: 7, kind: input, shape index: {}]
  %s8 = inlined_call_operand.hbm [shape: f32[64,2], index: 8, kind: input, shape index: {}]
  %s9 = inlined_call_operand.hbm [shape: f32[1,2], index: 9, kind: input, shape index: {}]
  %s10 = inlined_call_operand.hbm [shape: f32[16,2], index: 10, kind: output, shape index: {}]
  %s11 = sld [smem:[#allocation0]]
  $region97: #{sarcasm_forward.5} parent=0
    _
  %s13 = ssub.s32 1, %s11
  %s14 = scalar_select 0, %s13, %s11
  $region1: #{sarcasm_forward.5} parent=0
    #allocation3 [shape = 'u8[65536]{0}', space=vmem, size = 0x10000, scoped, tag = 'input window, operand 0, single buffered']
    #allocation4 [shape = 's32[1]{0}', space=sflag, size = 0x4, scoped, tag = 'scoped memory for sarcasm_forward.5']
    #allocation5 [shape = 's32[1]{0}', space=sflag, size = 0x4, scoped, tag = 'scoped memory for sarcasm_forward.5']
    #allocation6 [shape = 'u8[262144]{0}', space=vmem, size = 0x40000, scoped, tag = 'input window, operand 1, single buffered']
    #allocation7 [shape = 's32[1]{0}', space=sflag, size = 0x4, scoped, tag = 'scoped memory for sarcasm_forward.5']
    #allocation8 [shape = 'u8[131072]{0}', space=vmem, size = 0x20000, scoped, tag = 'input window, operand 2, single buffered']
    #allocation9 [shape = 'u8[2048]{0}', space=vmem, size = 0x800, scoped, tag = 'input window, operand 3, single buffered']
    #allocation10 [shape = 's32[1]{0}', space=sflag, size = 0x4, scoped, tag = 'scoped memory for sarcasm_forward.5']
    #allocation11 [shape = 'u8[262144]{0}', space=vmem, size = 0x40000, scoped, tag = 'input window, operand 4, single buffered']
    #allocation12 [shape = 'u8[2048]{0}', space=vmem, size = 0x800, scoped, tag = 'input window, operand 5, single buffered']
    #allocation13 [shape = 's32[1]{0}', space=sflag, size = 0x4, scoped, tag = 'scoped memory for sarcasm_forward.5']
    #allocation14 [shape = 'u8[131072]{0}', space=vmem, size = 0x20000, scoped, tag = 'input window, operand 6, single buffered']
    #allocation15 [shape = 'u8[512]{0}', space=vmem, size = 0x400, scoped, tag = 'input window, operand 7, single buffered']
    #allocation16 [shape = 's32[1]{0}', space=sflag, size = 0x4, scoped, tag = 'scoped memory for sarcasm_forward.5']
    #allocation17 [shape = 'u8[32768]{0}', space=vmem, size = 0x8000, scoped, tag = 'input window, operand 8, single buffered']
    #allocation18 [shape = 'u8[512]{0}', space=vmem, size = 0x400, scoped, tag = 'input window, operand 9, single buffered']
    #allocation19 [shape = 's32[1]{0}', space=sflag, size = 0x4, scoped, tag = 'scoped memory for sarcasm_forward.5']
    #allocation20 [shape = 'u8[8192]{0}', space=vmem, size = 0x2000, scoped, tag = 'output window, operand 0, single buffered']
    %15 = vsyncpa [#allocation4], 0
    %16 = vsyncpa [#allocation7], 0
    %17 = vsyncpa [#allocation10], 0
    %18 = vsyncpa [#allocation13], 0
    %19 = vsyncpa [#allocation16], 0
    %20 = vsyncpa [#allocation19], 0
    %21 = vsyncpa [#allocation5], 0
    // Predicated region
    $region2: #{sarcasm_forward.5} parent=1 // pred_check
      _
    $region3: #{sarcasm_forward.5} parent=1 // pred_check_branch
      %23 = sbr.rel (0) target = $region5
    $region4: #{sarcasm_forward.5} parent=1 // pred_region
      %s25 = ssub.s32 2048, 2048
      %26 = vsyncadd [#allocation4], %s25
      %s27 = sshll.u32 [#allocation3], 4
      %s28 = int_to_ptr.vmem [resolvable:$true] %s27
      %33 = dma.hbm_to_vmem [thread:$0]  %s0, 2048, %s28, [#allocation4], 128, 128, 8
    $region5: #{sarcasm_forward.5} parent=1 // pred_fallthru
      _
    // Predicated region
    $region6: #{sarcasm_forward.5} parent=1 // pred_check
      _
    $region7: #{sarcasm_forward.5} parent=1 // pred_check_branch
      %35 = sbr.rel (0) target = $region9
    $region8: #{sarcasm_forward.5} parent=1 // pred_region
      %s37 = ssub.s32 8192, 8192
      %38 = vsyncadd [#allocation7], %s37
      %s39 = sshll.u32 [#allocation6], 4
      %s40 = int_to_ptr.vmem [resolvable:$true] %s39
      %45 = dma.hbm_to_vmem [thread:$0]  %s1, 8192, %s40, [#allocation7], 256, 256, 16
    $region9: #{sarcasm_forward.5} parent=1 // pred_fallthru
      _
    // Predicated region
    $region10: #{sarcasm_forward.5} parent=1 // pred_check
      _
    $region11: #{sarcasm_forward.5} parent=1 // pred_check_branch
      %47 = sbr.rel (0) target = $region13
    $region12: #{sarcasm_forward.5} parent=1 // pred_region
      %s49 = ssub.s32 4096, 4096
      %50 = vsyncadd [#allocation7], %s49
      %s51 = sshll.u32 [#allocation8], 4
      %s52 = int_to_ptr.vmem [resolvable:$true] %s51
      %57 = dma.hbm_to_vmem [thread:$0]  %s2, 4096, %s52, [#allocation7], 256, 256, 16
    $region13: #{sarcasm_forward.5} parent=1 // pred_fallthru
      _
    // Predicated region
    $region14: #{sarcasm_forward.5} parent=1 // pred_check
      _
    $region15: #{sarcasm_forward.5} parent=1 // pred_check_branch
      %59 = sbr.rel (0) target = $region17
    $region16: #{sarcasm_forward.5} parent=1 // pred_region
      %s61 = ssub.s32 64, 64
      %62 = vsyncadd [#allocation10], %s61
      %s64 = sshll.u32 [#allocation9], 4
      %s65 = int_to_ptr.vmem [resolvable:$true] %s64
      %67 = dma.hbm_to_vmem [thread:$0]  %s3, 64, %s65, [#allocation10]
    $region17: #{sarcasm_forward.5} parent=1 // pred_fallthru
      _
    // Predicated region
    $region18: #{sarcasm_forward.5} parent=1 // pred_check
      _
    $region19: #{sarcasm_forward.5} parent=1 // pred_check_branch
      %69 = sbr.rel (0) target = $region21
    $region20: #{sarcasm_forward.5} parent=1 // pred_region
      %s71 = ssub.s32 8192, 8192
      %72 = vsyncadd [#allocation10], %s71
      %s73 = sshll.u32 [#allocation11], 4
      %s74 = int_to_ptr.vmem [resolvable:$true] %s73
      %79 = dma.hbm_to_vmem [thread:$0]  %s4, 8192, %s74, [#allocation10], 256, 256, 16
    $region21: #{sarcasm_forward.5} parent=1 // pred_fallthru
      _
    // Predicated region
    $region22: #{sarcasm_forward.5} parent=1 // pred_check
      _
    $region23: #{sarcasm_forward.5} parent=1 // pred_check_branch
      %81 = sbr.rel (0) target = $region25
    $region24: #{sarcasm_forward.5} parent=1 // pred_region
      %s83 = ssub.s32 64, 64
      %84 = vsyncadd [#allocation13], %s83
      %s86 = sshll.u32 [#allocation12], 4
      %s87 = int_to_ptr.vmem [resolvable:$true] %s86
      %89 = dma.hbm_to_vmem [thread:$0]  %s5, 64, %s87, [#allocation13]
    $region25: #{sarcasm_forward.5} parent=1 // pred_fallthru
      _
    // Predicated region
    $region26: #{sarcasm_forward.5} parent=1 // pred_check
      _
    $region27: #{sarcasm_forward.5} parent=1 // pred_check_branch
      %91 = sbr.rel (0) target = $region29
    $region28: #{sarcasm_forward.5} parent=1 // pred_region
      %s93 = ssub.s32 4096, 4096
      %94 = vsyncadd [#allocation13], %s93
      %s95 = sshll.u32 [#allocation14], 4
      %s96 = int_to_ptr.vmem [resolvable:$true] %s95
      %101 = dma.hbm_to_vmem [thread:$0]  %s6, 4096, %s96, [#allocation13], 128, 128, 8
    $region29: #{sarcasm_forward.5} parent=1 // pred_fallthru
      _
    // Predicated region
    $region30: #{sarcasm_forward.5} parent=1 // pred_check
      _
    $region31: #{sarcasm_forward.5} parent=1 // pred_check_branch
      %103 = sbr.rel (0) target = $region33
    $region32: #{sarcasm_forward.5} parent=1 // pred_region
      %s105 = ssub.s32 16, 16
      %106 = vsyncadd [#allocation16], %s105
      %s108 = sshll.u32 [#allocation15], 4
      %s109 = int_to_ptr.vmem [resolvable:$true] %s108
      %111 = dma.hbm_to_vmem [thread:$0]  %s7, 16, %s109, [#allocation16]
    $region33: #{sarcasm_forward.5} parent=1 // pred_fallthru
      _
    // Predicated region
    $region34: #{sarcasm_forward.5} parent=1 // pred_check
      _
    $region35: #{sarcasm_forward.5} parent=1 // pred_check_branch
      %113 = sbr.rel (0) target = $region37
    $region36: #{sarcasm_forward.5} parent=1 // pred_region
      %s115 = ssub.s32 1024, 1024
      %116 = vsyncadd [#allocation16], %s115
      %s117 = sshll.u32 [#allocation17], 4
      %s118 = int_to_ptr.vmem [resolvable:$true] %s117
      %123 = dma.hbm_to_vmem [thread:$0]  %s8, 1024, %s118, [#allocation16], 128, 128, 8
    $region37: #{sarcasm_forward.5} parent=1 // pred_fallthru
      _
    // Predicated region
    $region38: #{sarcasm_forward.5} parent=1 // pred_check
      _
    $region39: #{sarcasm_forward.5} parent=1 // pred_check_branch
      %125 = sbr.rel (0) target = $region41
    $region40: #{sarcasm_forward.5} parent=1 // pred_region
      %s127 = ssub.s32 16, 16
      %128 = vsyncadd [#allocation19], %s127
      %s130 = sshll.u32 [#allocation18], 4
      %s131 = int_to_ptr.vmem [resolvable:$true] %s130
      %133 = dma.hbm_to_vmem [thread:$0]  %s9, 16, %s131, [#allocation19]
    $region41: #{sarcasm_forward.5} parent=1 // pred_fallthru
      _
    // Predicated region
    $region42: #{sarcasm_forward.5} parent=1 // pred_check
      _
    $region43: #{sarcasm_forward.5} parent=1 // pred_check_branch
      %135 = sbr.rel (0) target = $region45
    $region44: #{sarcasm_forward.5} parent=1 // pred_region
      %136 = dma.done [#allocation4], 2048
    $region45: #{sarcasm_forward.5} parent=1 // pred_fallthru
      _
    // Predicated region
    $region46: #{sarcasm_forward.5} parent=1 // pred_check
      _
    $region47: #{sarcasm_forward.5} parent=1 // pred_check_branch
      %138 = sbr.rel (0) target = $region49
    $region48: #{sarcasm_forward.5} parent=1 // pred_region
      %139 = dma.done [#allocation7], 8192
    $region49: #{sarcasm_forward.5} parent=1 // pred_fallthru
      _
    // Predicated region
    $region50: #{sarcasm_forward.5} parent=1 // pred_check
      _
    $region51: #{sarcasm_forward.5} parent=1 // pred_check_branch
      %141 = sbr.rel (0) target = $region53
    $region52: #{sarcasm_forward.5} parent=1 // pred_region
      %142 = dma.done [#allocation7], 4096
    $region53: #{sarcasm_forward.5} parent=1 // pred_fallthru
      _
    // Predicated region
    $region54: #{sarcasm_forward.5} parent=1 // pred_check
      _
    $region55: #{sarcasm_forward.5} parent=1 // pred_check_branch
      %144 = sbr.rel (0) target = $region57
    $region56: #{sarcasm_forward.5} parent=1 // pred_region
      %145 = dma.done [#allocation10], 64
    $region57: #{sarcasm_forward.5} parent=1 // pred_fallthru
      _
    // Predicated region
    $region58: #{sarcasm_forward.5} parent=1 // pred_check
      _
    $region59: #{sarcasm_forward.5} parent=1 // pred_check_branch
      %147 = sbr.rel (0) target = $region61
    $region60: #{sarcasm_forward.5} parent=1 // pred_region
      %148 = dma.done [#allocation10], 8192
    $region61: #{sarcasm_forward.5} parent=1 // pred_fallthru
      _
    // Predicated region
    $region62: #{sarcasm_forward.5} parent=1 // pred_check
      _
    $region63: #{sarcasm_forward.5} parent=1 // pred_check_branch
      %150 = sbr.rel (0) target = $region65
    $region64: #{sarcasm_forward.5} parent=1 // pred_region
      %151 = dma.done [#allocation13], 64
    $region65: #{sarcasm_forward.5} parent=1 // pred_fallthru
      _
    // Predicated region
    $region66: #{sarcasm_forward.5} parent=1 // pred_check
      _
    $region67: #{sarcasm_forward.5} parent=1 // pred_check_branch
      %153 = sbr.rel (0) target = $region69
    $region68: #{sarcasm_forward.5} parent=1 // pred_region
      %154 = dma.done [#allocation13], 4096
    $region69: #{sarcasm_forward.5} parent=1 // pred_fallthru
      _
    // Predicated region
    $region70: #{sarcasm_forward.5} parent=1 // pred_check
      _
    $region71: #{sarcasm_forward.5} parent=1 // pred_check_branch
      %156 = sbr.rel (0) target = $region73
    $region72: #{sarcasm_forward.5} parent=1 // pred_region
      %157 = dma.done [#allocation16], 16
    $region73: #{sarcasm_forward.5} parent=1 // pred_fallthru
      _
    // Predicated region
    $region74: #{sarcasm_forward.5} parent=1 // pred_check
      _
    $region75: #{sarcasm_forward.5} parent=1 // pred_check_branch
      %159 = sbr.rel (0) target = $region77
    $region76: #{sarcasm_forward.5} parent=1 // pred_region
      %160 = dma.done [#allocation16], 1024
    $region77: #{sarcasm_forward.5} parent=1 // pred_fallthru
      _
    // Predicated region
    $region78: #{sarcasm_forward.5} parent=1 // pred_check
      _
    $region79: #{sarcasm_forward.5} parent=1 // pred_check_branch
      %162 = sbr.rel (0) target = $region81
    $region80: #{sarcasm_forward.5} parent=1 // pred_region
      %163 = dma.done [#allocation19], 16
    $region81: #{sarcasm_forward.5} parent=1 // pred_fallthru
      _
    %v165 = vld [vmem:[#allocation3] sm:$0xff]
    %v166 = vld [vmem:[#allocation3 + $0x8] sm:$0xff]
    %v167 = vld [vmem:[#allocation3 + $0x10] sm:$0xff]
    %v168 = vld [vmem:[#allocation3 + $0x18] sm:$0xff]
    %v169 = vld [vmem:[#allocation3 + $0x20] sm:$0xff]
    %v170 = vld [vmem:[#allocation3 + $0x28] sm:$0xff]
    %v171 = vld [vmem:[#allocation3 + $0x30] sm:$0xff]
    %v172 = vld [vmem:[#allocation3 + $0x38] sm:$0xff]
    %v173 = vld [vmem:[#allocation3 + $0x40] sm:$0xff]
    %v174 = vld [vmem:[#allocation3 + $0x48] sm:$0xff]
    %v175 = vld [vmem:[#allocation3 + $0x50] sm:$0xff]
    %v176 = vld [vmem:[#allocation3 + $0x58] sm:$0xff]
    %v177 = vld [vmem:[#allocation3 + $0x60] sm:$0xff]
    %v178 = vld [vmem:[#allocation3 + $0x68] sm:$0xff]
    %v179 = vld [vmem:[#allocation3 + $0x70] sm:$0xff]
    %v180 = vld [vmem:[#allocation3 + $0x78] sm:$0xff]
    %v181 = vld [vmem:[#allocation6] sm:$0xff]
    %v182 = vld [vmem:[#allocation6 + $0x8] sm:$0xff]
    %v183 = vld [vmem:[#allocation6 + $0x10] sm:$0xff]
    %v184 = vld [vmem:[#allocation6 + $0x18] sm:$0xff]
    %v185 = vld [vmem:[#allocation6 + $0x20] sm:$0xff]
    %v186 = vld [vmem:[#allocation6 + $0x28] sm:$0xff]
    %v187 = vld [vmem:[#allocation6 + $0x30] sm:$0xff]
    %v188 = vld [vmem:[#allocation6 + $0x38] sm:$0xff]
    %v189 = vld [vmem:[#allocation6 + $0x40] sm:$0xff]
    %v190 = vld [vmem:[#allocation6 + $0x48] sm:$0xff]
    %v191 = vld [vmem:[#allocation6 + $0x50] sm:$0xff]
    %v192 = vld [vmem:[#allocation6 + $0x58] sm:$0xff]
    %v193 = vld [vmem:[#allocation6 + $0x60] sm:$0xff]
    %v194 = vld [vmem:[#allocation6 + $0x68] sm:$0xff]
    %v195 = vld [vmem:[#allocation6 + $0x70] sm:$0xff]
    %v196 = vld [vmem:[#allocation6 + $0x78] sm:$0xff]
    %v197 = vld [vmem:[#allocation6 + $0x80] sm:$0xff]
    %v198 = vld [vmem:[#allocation6 + $0x88] sm:$0xff]
    %v199 = vld [vmem:[#allocation6 + $0x90] sm:$0xff]
    %v200 = vld [vmem:[#allocation6 + $0x98] sm:$0xff]
    %v201 = vld [vmem:[#allocation6 + $0xa0] sm:$0xff]
    %v202 = vld [vmem:[#allocation6 + $0xa8] sm:$0xff]
    %v203 = vld [vmem:[#allocation6 + $0xb0] sm:$0xff]
    %v204 = vld [vmem:[#allocation6 + $0xb8] sm:$0xff]
    %v205 = vld [vmem:[#allocation6 + $0xc0] sm:$0xff]
    %v206 = vld [vmem:[#allocation6 + $0xc8] sm:$0xff]
    %v207 = vld [vmem:[#allocation6 + $0xd0] sm:$0xff]
    %v208 = vld [vmem:[#allocation6 + $0xd8] sm:$0xff]
    %v209 = vld [vmem:[#allocation6 + $0xe0] sm:$0xff]
    %v210 = vld [vmem:[#allocation6 + $0xe8] sm:$0xff]
    %v211 = vld [vmem:[#allocation6 + $0xf0] sm:$0xff]
    %v212 = vld [vmem:[#allocation6 + $0xf8] sm:$0xff]
    %v213 = vld [vmem:[#allocation6 + $0x100] sm:$0xff]
    %v214 = vld [vmem:[#allocation6 + $0x108] sm:$0xff]
    %v215 = vld [vmem:[#allocation6 + $0x110] sm:$0xff]
    %v216 = vld [vmem:[#allocation6 + $0x118] sm:$0xff]
    %v217 = vld [vmem:[#allocation6 + $0x120] sm:$0xff]
    %v218 = vld [vmem:[#allocation6 + $0x128] sm:$0xff]
    %v219 = vld [vmem:[#allocation6 + $0x130] sm:$0xff]
    %v220 = vld [vmem:[#allocation6 + $0x138] sm:$0xff]
    %v221 = vld [vmem:[#allocation6 + $0x140] sm:$0xff]
    %v222 = vld [vmem:[#allocation6 + $0x148] sm:$0xff]
    %v223 = vld [vmem:[#allocation6 + $0x150] sm:$0xff]
    %v224 = vld [vmem:[#allocation6 + $0x158] sm:$0xff]
    %v225 = vld [vmem:[#allocation6 + $0x160] sm:$0xff]
    %v226 = vld [vmem:[#allocation6 + $0x168] sm:$0xff]
    %v227 = vld [vmem:[#allocation6 + $0x170] sm:$0xff]
    %v228 = vld [vmem:[#allocation6 + $0x178] sm:$0xff]
    %v229 = vld [vmem:[#allocation6 + $0x180] sm:$0xff]
    %v230 = vld [vmem:[#allocation6 + $0x188] sm:$0xff]
    %v231 = vld [vmem:[#allocation6 + $0x190] sm:$0xff]
    %v232 = vld [vmem:[#allocation6 + $0x198] sm:$0xff]
    %v233 = vld [vmem:[#allocation6 + $0x1a0] sm:$0xff]
    %v234 = vld [vmem:[#allocation6 + $0x1a8] sm:$0xff]
    %v235 = vld [vmem:[#allocation6 + $0x1b0] sm:$0xff]
    %v236 = vld [vmem:[#allocation6 + $0x1b8] sm:$0xff]
    %v237 = vld [vmem:[#allocation6 + $0x1c0] sm:$0xff]
    %v238 = vld [vmem:[#allocation6 + $0x1c8] sm:$0xff]
    %v239 = vld [vmem:[#allocation6 + $0x1d0] sm:$0xff]
    %v240 = vld [vmem:[#allocation6 + $0x1d8] sm:$0xff]
    %v241 = vld [vmem:[#allocation6 + $0x1e0] sm:$0xff]
    %v242 = vld [vmem:[#allocation6 + $0x1e8] sm:$0xff]
    %v243 = vld [vmem:[#allocation6 + $0x1f0] sm:$0xff]
    %v244 = vld [vmem:[#allocation6 + $0x1f8] sm:$0xff]
    %v245 = vld [vmem:[#allocation9] sm:$0xf]
    %v247 = vlaneseq
    %v248 = vshrl.u32 %v247, 7
    %v249 = vsub.s32 0, %v248
    %v250 = vrot.slane %v245, %v249
    %v251 = vlaneseq
    %v252 = vshrl.u32 %v251, 7
    %v253 = vsub.s32 1, %v252
    %v254 = vrot.slane %v245, %v253
    %v255 = vlaneseq
    %v256 = vshrl.u32 %v255, 7
    %v257 = vsub.s32 2, %v256
    %v258 = vrot.slane %v245, %v257
    %v259 = vlaneseq
    %v260 = vshrl.u32 %v259, 7
    %v261 = vsub.s32 3, %v260
    %v262 = vrot.slane %v245, %v261
    %v283 = vunpack.c.l.b16 %v165
    %v284 = vunpack.c.h.b16 %v165
    %v285 = vunpack.c.l.b16 %v166
    %v286 = vunpack.c.h.b16 %v166
    %v287 = vunpack.c.l.b16 %v167
    %v288 = vunpack.c.h.b16 %v167
    %v289 = vunpack.c.l.b16 %v168
    %v290 = vunpack.c.h.b16 %v168
    %v291 = vunpack.c.l.b16 %v169
    %v292 = vunpack.c.h.b16 %v169
    %v293 = vunpack.c.l.b16 %v170
    %v294 = vunpack.c.h.b16 %v170
    %v295 = vunpack.c.l.b16 %v171
    %v296 = vunpack.c.h.b16 %v171
    %v297 = vunpack.c.l.b16 %v172
    %v298 = vunpack.c.h.b16 %v172
    %v299 = vunpack.c.l.b16 %v173
    %v300 = vunpack.c.h.b16 %v173
    %v301 = vunpack.c.l.b16 %v174
    %v302 = vunpack.c.h.b16 %v174
    %v303 = vunpack.c.l.b16 %v175
    %v304 = vunpack.c.h.b16 %v175
    %v305 = vunpack.c.l.b16 %v176
    %v306 = vunpack.c.h.b16 %v176
    %v307 = vunpack.c.l.b16 %v177
    %v308 = vunpack.c.h.b16 %v177
    %v309 = vunpack.c.l.b16 %v178
    %v310 = vunpack.c.h.b16 %v178
    %v311 = vunpack.c.l.b16 %v179
    %v312 = vunpack.c.h.b16 %v179
    %v313 = vunpack.c.l.b16 %v180
    %v314 = vunpack.c.h.b16 %v180
    %v315 = vpack.c.b16 %v285, %v283
    %v316 = vpack.c.b16 %v286, %v284
    %v317 = vpack.c.b16 %v289, %v287
    %v318 = vpack.c.b16 %v290, %v288
    %v319 = vpack.c.b16 %v293, %v291
    %v320 = vpack.c.b16 %v294, %v292
    %v321 = vpack.c.b16 %v297, %v295
    %v322 = vpack.c.b16 %v298, %v296
    %v323 = vpack.c.b16 %v301, %v299
    %v324 = vpack.c.b16 %v302, %v300
    %v325 = vpack.c.b16 %v305, %v303
    %v326 = vpack.c.b16 %v306, %v304
    %v327 = vpack.c.b16 %v309, %v307
    %v328 = vpack.c.b16 %v310, %v308
    %v329 = vpack.c.b16 %v313, %v311
    %v330 = vpack.c.b16 %v314, %v312
    %v411 = vunpack.c.l.b16 %v181
    %v412 = vunpack.c.h.b16 %v181
    %v413 = vunpack.c.l.b16 %v182
    %v414 = vunpack.c.h.b16 %v182
    %v415 = vunpack.c.l.b16 %v183
    %v416 = vunpack.c.h.b16 %v183
    %v417 = vunpack.c.l.b16 %v184
    %v418 = vunpack.c.h.b16 %v184
    %v419 = vunpack.c.l.b16 %v185
    %v420 = vunpack.c.h.b16 %v185
    %v421 = vunpack.c.l.b16 %v186
    %v422 = vunpack.c.h.b16 %v186
    %v423 = vunpack.c.l.b16 %v187
    %v424 = vunpack.c.h.b16 %v187
    %v425 = vunpack.c.l.b16 %v188
    %v426 = vunpack.c.h.b16 %v188
    %v427 = vunpack.c.l.b16 %v189
    %v428 = vunpack.c.h.b16 %v189
    %v429 = vunpack.c.l.b16 %v190
    %v430 = vunpack.c.h.b16 %v190
    %v431 = vunpack.c.l.b16 %v191
    %v432 = vunpack.c.h.b16 %v191
    %v433 = vunpack.c.l.b16 %v192
    %v434 = vunpack.c.h.b16 %v192
    %v435 = vunpack.c.l.b16 %v193
    %v436 = vunpack.c.h.b16 %v193
    %v437 = vunpack.c.l.b16 %v194
    %v438 = vunpack.c.h.b16 %v194
    %v439 = vunpack.c.l.b16 %v195
    %v440 = vunpack.c.h.b16 %v195
    %v441 = vunpack.c.l.b16 %v196
    %v442 = vunpack.c.h.b16 %v196
    %v443 = vunpack.c.l.b16 %v197
    %v444 = vunpack.c.h.b16 %v197
    %v445 = vunpack.c.l.b16 %v198
    %v446 = vunpack.c.h.b16 %v198
    %v447 = vunpack.c.l.b16 %v199
    %v448 = vunpack.c.h.b16 %v199
    %v449 = vunpack.c.l.b16 %v200
    %v450 = vunpack.c.h.b16 %v200
    %v451 = vunpack.c.l.b16 %v201
    %v452 = vunpack.c.h.b16 %v201
    %v453 = vunpack.c.l.b16 %v202
    %v454 = vunpack.c.h.b16 %v202
    %v455 = vunpack.c.l.b16 %v203
    %v456 = vunpack.c.h.b16 %v203
    %v457 = vunpack.c.l.b16 %v204
    %v458 = vunpack.c.h.b16 %v204
    %v459 = vunpack.c.l.b16 %v205
    %v460 = vunpack.c.h.b16 %v205
    %v461 = vunpack.c.l.b16 %v206
    %v462 = vunpack.c.h.b16 %v206
    %v463 = vunpack.c.l.b16 %v207
    %v464 = vunpack.c.h.b16 %v207
    %v465 = vunpack.c.l.b16 %v208
    %v466 = vunpack.c.h.b16 %v208
    %v467 = vunpack.c.l.b16 %v209
    %v468 = vunpack.c.h.b16 %v209
    %v469 = vunpack.c.l.b16 %v210
    %v470 = vunpack.c.h.b16 %v210
    %v471 = vunpack.c.l.b16 %v211
    %v472 = vunpack.c.h.b16 %v211
    %v473 = vunpack.c.l.b16 %v212
    %v474 = vunpack.c.h.b16 %v212
    %v475 = vunpack.c.l.b16 %v213
    %v476 = vunpack.c.h.b16 %v213
    %v477 = vunpack.c.l.b16 %v214
    %v478 = vunpack.c.h.b16 %v214
    %v479 = vunpack.c.l.b16 %v215
    %v480 = vunpack.c.h.b16 %v215
    %v481 = vunpack.c.l.b16 %v216
    %v482 = vunpack.c.h.b16 %v216
    %v483 = vunpack.c.l.b16 %v217
    %v484 = vunpack.c.h.b16 %v217
    %v485 = vunpack.c.l.b16 %v218
    %v486 = vunpack.c.h.b16 %v218
    %v487 = vunpack.c.l.b16 %v219
    %v488 = vunpack.c.h.b16 %v219
    %v489 = vunpack.c.l.b16 %v220
    %v490 = vunpack.c.h.b16 %v220
    %v491 = vunpack.c.l.b16 %v221
    %v492 = vunpack.c.h.b16 %v221
    %v493 = vunpack.c.l.b16 %v222
    %v494 = vunpack.c.h.b16 %v222
    %v495 = vunpack.c.l.b16 %v223
    %v496 = vunpack.c.h.b16 %v223
    %v497 = vunpack.c.l.b16 %v224
    %v498 = vunpack.c.h.b16 %v224
    %v499 = vunpack.c.l.b16 %v225
    %v500 = vunpack.c.h.b16 %v225
    %v501 = vunpack.c.l.b16 %v226
    %v502 = vunpack.c.h.b16 %v226
    %v503 = vunpack.c.l.b16 %v227
    %v504 = vunpack.c.h.b16 %v227
    %v505 = vunpack.c.l.b16 %v228
    %v506 = vunpack.c.h.b16 %v228
    %v507 = vunpack.c.l.b16 %v229
    %v508 = vunpack.c.h.b16 %v229
    %v509 = vunpack.c.l.b16 %v230
    %v510 = vunpack.c.h.b16 %v230
    %v511 = vunpack.c.l.b16 %v231
    %v512 = vunpack.c.h.b16 %v231
    %v513 = vunpack.c.l.b16 %v232
    %v514 = vunpack.c.h.b16 %v232
    %v515 = vunpack.c.l.b16 %v233
    %v516 = vunpack.c.h.b16 %v233
    %v517 = vunpack.c.l.b16 %v234
    %v518 = vunpack.c.h.b16 %v234
    %v519 = vunpack.c.l.b16 %v235
    %v520 = vunpack.c.h.b16 %v235
    %v521 = vunpack.c.l.b16 %v236
    %v522 = vunpack.c.h.b16 %v236
    %v523 = vunpack.c.l.b16 %v237
    %v524 = vunpack.c.h.b16 %v237
    %v525 = vunpack.c.l.b16 %v238
    %v526 = vunpack.c.h.b16 %v238
    %v527 = vunpack.c.l.b16 %v239
    %v528 = vunpack.c.h.b16 %v239
    %v529 = vunpack.c.l.b16 %v240
    %v530 = vunpack.c.h.b16 %v240
    %v531 = vunpack.c.l.b16 %v241
    %v532 = vunpack.c.h.b16 %v241
    %v533 = vunpack.c.l.b16 %v242
    %v534 = vunpack.c.h.b16 %v242
    %v535 = vunpack.c.l.b16 %v243
    %v536 = vunpack.c.h.b16 %v243
    %v537 = vunpack.c.l.b16 %v244
    %v538 = vunpack.c.h.b16 %v244
    %v539 = vpack.c.b16 %v415, %v411
    %v540 = vpack.c.b16 %v416, %v412
    %v541 = vpack.c.b16 %v417, %v413
    %v542 = vpack.c.b16 %v418, %v414
    %v543 = vpack.c.b16 %v423, %v419
    %v544 = vpack.c.b16 %v424, %v420
    %v545 = vpack.c.b16 %v425, %v421
    %v546 = vpack.c.b16 %v426, %v422
    %v547 = vpack.c.b16 %v431, %v427
    %v548 = vpack.c.b16 %v432, %v428
    %v549 = vpack.c.b16 %v433, %v429
    %v550 = vpack.c.b16 %v434, %v430
    %v551 = vpack.c.b16 %v439, %v435
    %v552 = vpack.c.b16 %v440, %v436
    %v553 = vpack.c.b16 %v441, %v437
    %v554 = vpack.c.b16 %v442, %v438
    %v555 = vpack.c.b16 %v447, %v443
    %v556 = vpack.c.b16 %v448, %v444
    %v557 = vpack.c.b16 %v449, %v445
    %v558 = vpack.c.b16 %v450, %v446
    %v559 = vpack.c.b16 %v455, %v451
    %v560 = vpack.c.b16 %v456, %v452
    %v561 = vpack.c.b16 %v457, %v453
    %v562 = vpack.c.b16 %v458, %v454
    %v563 = vpack.c.b16 %v463, %v459
    %v564 = vpack.c.b16 %v464, %v460
    %v565 = vpack.c.b16 %v465, %v461
    %v566 = vpack.c.b16 %v466, %v462
    %v567 = vpack.c.b16 %v471, %v467
    %v568 = vpack.c.b16 %v472, %v468
    %v569 = vpack.c.b16 %v473, %v469
    %v570 = vpack.c.b16 %v474, %v470
    %v571 = vpack.c.b16 %v479, %v475
    %v572 = vpack.c.b16 %v480, %v476
    %v573 = vpack.c.b16 %v481, %v477
    %v574 = vpack.c.b16 %v482, %v478
    %v575 = vpack.c.b16 %v487, %v483
    %v576 = vpack.c.b16 %v488, %v484
    %v577 = vpack.c.b16 %v489, %v485
    %v578 = vpack.c.b16 %v490, %v486
    %v579 = vpack.c.b16 %v495, %v491
    %v580 = vpack.c.b16 %v496, %v492
    %v581 = vpack.c.b16 %v497, %v493
    %v582 = vpack.c.b16 %v498, %v494
    %v583 = vpack.c.b16 %v503, %v499
    %v584 = vpack.c.b16 %v504, %v500
    %v585 = vpack.c.b16 %v505, %v501
    %v586 = vpack.c.b16 %v506, %v502
    %v587 = vpack.c.b16 %v511, %v507
    %v588 = vpack.c.b16 %v512, %v508
    %v589 = vpack.c.b16 %v513, %v509
    %v590 = vpack.c.b16 %v514, %v510
    %v591 = vpack.c.b16 %v519, %v515
    %v592 = vpack.c.b16 %v520, %v516
    %v593 = vpack.c.b16 %v521, %v517
    %v594 = vpack.c.b16 %v522, %v518
    %v595 = vpack.c.b16 %v527, %v523
    %v596 = vpack.c.b16 %v528, %v524
    %v597 = vpack.c.b16 %v529, %v525
    %v598 = vpack.c.b16 %v530, %v526
    %v599 = vpack.c.b16 %v535, %v531
    %v600 = vpack.c.b16 %v536, %v532
    %v601 = vpack.c.b16 %v537, %v533
    %v602 = vpack.c.b16 %v538, %v534
    %667 = vmatprep.subr.bf16.mxu0 %v540
    %668 = vmatpush1.bf16.msra.mxu0 %v539
    %669 = vmatprep.subr.bf16.mxu0 %v544
    %670 = vmatpush1.bf16.msra.mxu0 %v543
    %671 = vmatprep.subr.bf16.mxu0 %v548
    %672 = vmatpush1.bf16.msra.mxu0 %v547
    %673 = vmatprep.subr.bf16.mxu0 %v552
    %674 = vmatpush1.bf16.msra.mxu0 %v551
    %675 = vmatprep.subr.bf16.mxu0 %v556
    %676 = vmatpush1.bf16.msra.mxu0 %v555
    %677 = vmatprep.subr.bf16.mxu0 %v560
    %678 = vmatpush1.bf16.msra.mxu0 %v559
    %679 = vmatprep.subr.bf16.mxu0 %v564
    %680 = vmatpush1.bf16.msra.mxu0 %v563
    %681 = vmatprep.subr.bf16.mxu0 %v568
    %682 = vmatpush1.bf16.msra.mxu0 %v567
    %683 = vmatprep.subr.bf16.mxu0 %v572
    %684 = vmatpush1.bf16.msra.mxu0 %v571
    %685 = vmatprep.subr.bf16.mxu0 %v576
    %686 = vmatpush1.bf16.msra.mxu0 %v575
    %687 = vmatprep.subr.bf16.mxu0 %v580
    %688 = vmatpush1.bf16.msra.mxu0 %v579
    %689 = vmatprep.subr.bf16.mxu0 %v584
    %690 = vmatpush1.bf16.msra.mxu0 %v583
    %691 = vmatprep.subr.bf16.mxu0 %v588
    %692 = vmatpush1.bf16.msra.mxu0 %v587
    %693 = vmatprep.subr.bf16.mxu0 %v592
    %694 = vmatpush1.bf16.msra.mxu0 %v591
    %695 = vmatprep.subr.bf16.mxu0 %v596
    %696 = vmatpush1.bf16.msra.mxu0 %v595
    %697 = vmatprep.subr.bf16.mxu0 %v600
    %698 = vmatpush1.bf16.msra.mxu0 %v599
    %699 = vmatprep.mubr.bf16.mxu0 %v316
    %700 = vmatmul.mubr.bf16.gmra.mrb[0].mxu0 %v315
    %v701 = vpop.f32.mrb[0].mxu0
    %v702 = vadd.f32 %v250, %v701
    %v703 = vpop.f32.mrb[0].mxu0
    %v704 = vadd.f32 %v254, %v703
    %v705 = vpop.f32.mrb[0].mxu0
    %v706 = vadd.f32 %v250, %v705
    %v707 = vpop.f32.mrb[0].mxu0
    %v708 = vadd.f32 %v254, %v707
    %709 = vmatprep.mubr.bf16.mxu0 %v318
    %710 = vmatmul.mubr.bf16.gmra.mrb[0].mxu0 %v317
    %v711 = vpop.f32.mrb[0].mxu0
    %v712 = vadd.f32 %v250, %v711
    %v713 = vpop.f32.mrb[0].mxu0
    %v714 = vadd.f32 %v254, %v713
    %v715 = vpop.f32.mrb[0].mxu0
    %v716 = vadd.f32 %v250, %v715
    %v717 = vpop.f32.mrb[0].mxu0
    %v718 = vadd.f32 %v254, %v717
    %719 = vmatprep.mubr.bf16.mxu0 %v320
    %720 = vmatmul.mubr.bf16.gmra.mrb[0].mxu0 %v319
    %v721 = vpop.f32.mrb[0].mxu0
    %v722 = vadd.f32 %v250, %v721
    %v723 = vpop.f32.mrb[0].mxu0
    %v724 = vadd.f32 %v254, %v723
    %v725 = vpop.f32.mrb[0].mxu0
    %v726 = vadd.f32 %v250, %v725
    %v727 = vpop.f32.mrb[0].mxu0
    %v728 = vadd.f32 %v254, %v727
    %729 = vmatprep.mubr.bf16.mxu0 %v322
    %730 = vmatmul.mubr.bf16.gmra.mrb[0].mxu0 %v321
    %v731 = vpop.f32.mrb[0].mxu0
    %v732 = vadd.f32 %v250, %v731
    %v733 = vpop.f32.mrb[0].mxu0
    %v734 = vadd.f32 %v254, %v733
    %v735 = vpop.f32.mrb[0].mxu0
    %v736 = vadd.f32 %v250, %v735
    %v737 = vpop.f32.mrb[0].mxu0
    %v738 = vadd.f32 %v254, %v737
    %739 = vmatprep.mubr.bf16.mxu0 %v324
    %740 = vmatmul.mubr.bf16.gmra.mrb[0].mxu0 %v323
    %v741 = vpop.f32.mrb[0].mxu0
    %v742 = vadd.f32 %v250, %v741
    %v743 = vpop.f32.mrb[0].mxu0
    %v744 = vadd.f32 %v254, %v743
    %v745 = vpop.f32.mrb[0].mxu0
    %v746 = vadd.f32 %v250, %v745
    %v747 = vpop.f32.mrb[0].mxu0
    %v748 = vadd.f32 %v254, %v747
    %749 = vmatprep.mubr.bf16.mxu0 %v326
    %750 = vmatmul.mubr.bf16.gmra.mrb[0].mxu0 %v325
    %v751 = vpop.f32.mrb[0].mxu0
    %v752 = vadd.f32 %v250, %v751
    %v753 = vpop.f32.mrb[0].mxu0
    %v754 = vadd.f32 %v254, %v753
    %v755 = vpop.f32.mrb[0].mxu0
    %v756 = vadd.f32 %v250, %v755
    %v757 = vpop.f32.mrb[0].mxu0
    %v758 = vadd.f32 %v254, %v757
    %759 = vmatprep.mubr.bf16.mxu0 %v328
    %760 = vmatmul.mubr.bf16.gmra.mrb[0].mxu0 %v327
    %v761 = vpop.f32.mrb[0].mxu0
    %v762 = vadd.f32 %v250, %v761
    %v763 = vpop.f32.mrb[0].mxu0
    %v764 = vadd.f32 %v254, %v763
    %v765 = vpop.f32.mrb[0].mxu0
    %v766 = vadd.f32 %v250, %v765
    %v767 = vpop.f32.mrb[0].mxu0
    %v768 = vadd.f32 %v254, %v767
    %769 = vmatprep.mubr.bf16.mxu0 %v330
    %770 = vmatmul.mubr.bf16.gmra.mrb[0].mxu0 %v329
    %v771 = vpop.f32.mrb[0].mxu0
    %v772 = vadd.f32 %v250, %v771
    %v773 = vpop.f32.mrb[0].mxu0
    %v774 = vadd.f32 %v254, %v773
    %v775 = vpop.f32.mrb[0].mxu0
    %v776 = vadd.f32 %v250, %v775
    %v777 = vpop.f32.mrb[0].mxu0
    %v778 = vadd.f32 %v254, %v777
    %779 = vdwg.mxu0
    %780 = vmatprep.subr.bf16.mxu0 %v542
    %781 = vmatpush1.bf16.msra.mxu0 %v541
    %782 = vmatprep.subr.bf16.mxu0 %v546
    %783 = vmatpush1.bf16.msra.mxu0 %v545
    %784 = vmatprep.subr.bf16.mxu0 %v550
    %785 = vmatpush1.bf16.msra.mxu0 %v549
    %786 = vmatprep.subr.bf16.mxu0 %v554
    %787 = vmatpush1.bf16.msra.mxu0 %v553
    %788 = vmatprep.subr.bf16.mxu0 %v558
    %789 = vmatpush1.bf16.msra.mxu0 %v557
    %790 = vmatprep.subr.bf16.mxu0 %v562
    %791 = vmatpush1.bf16.msra.mxu0 %v561
    %792 = vmatprep.subr.bf16.mxu0 %v566
    %793 = vmatpush1.bf16.msra.mxu0 %v565
    %794 = vmatprep.subr.bf16.mxu0 %v570
    %795 = vmatpush1.bf16.msra.mxu0 %v569
    %796 = vmatprep.subr.bf16.mxu0 %v574
    %797 = vmatpush1.bf16.msra.mxu0 %v573
    %798 = vmatprep.subr.bf16.mxu0 %v578
    %799 = vmatpush1.bf16.msra.mxu0 %v577
    %800 = vmatprep.subr.bf16.mxu0 %v582
    %801 = vmatpush1.bf16.msra.mxu0 %v581
    %802 = vmatprep.subr.bf16.mxu0 %v586
    %803 = vmatpush1.bf16.msra.mxu0 %v585
    %804 = vmatprep.subr.bf16.mxu0 %v590
    %805 = vmatpush1.bf16.msra.mxu0 %v589
    %806 = vmatprep.subr.bf16.mxu0 %v594
    %807 = vmatpush1.bf16.msra.mxu0 %v593
    %808 = vmatprep.subr.bf16.mxu0 %v598
    %809 = vmatpush1.bf16.msra.mxu0 %v597
    %810 = vmatprep.subr.bf16.mxu0 %v602
    %811 = vmatpush1.bf16.msra.mxu0 %v601
    %812 = vmatprep.mubr.bf16.mxu0 %v316
    %813 = vmatmul.mubr.bf16.gmra.mrb[0].mxu0 %v315
    %v814 = vpop.f32.mrb[0].mxu0
    %v815 = vadd.f32 %v258, %v814
    %v816 = vpop.f32.mrb[0].mxu0
    %v817 = vadd.f32 %v262, %v816
    %v818 = vpop.f32.mrb[0].mxu0
    %v819 = vadd.f32 %v258, %v818
    %v820 = vpop.f32.mrb[0].mxu0
    %v821 = vadd.f32 %v262, %v820
    %822 = vmatprep.mubr.bf16.mxu0 %v318
    %823 = vmatmul.mubr.bf16.gmra.mrb[0].mxu0 %v317
    %v824 = vpop.f32.mrb[0].mxu0
    %v825 = vadd.f32 %v258, %v824
    %v826 = vpop.f32.mrb[0].mxu0
    %v827 = vadd.f32 %v262, %v826
    %v828 = vpop.f32.mrb[0].mxu0
    %v829 = vadd.f32 %v258, %v828
    %v830 = vpop.f32.mrb[0].mxu0
    %v831 = vadd.f32 %v262, %v830
    %832 = vmatprep.mubr.bf16.mxu0 %v320
    %833 = vmatmul.mubr.bf16.gmra.mrb[0].mxu0 %v319
    %v834 = vpop.f32.mrb[0].mxu0
    %v835 = vadd.f32 %v258, %v834
    %v836 = vpop.f32.mrb[0].mxu0
    %v837 = vadd.f32 %v262, %v836
    %v838 = vpop.f32.mrb[0].mxu0
    %v839 = vadd.f32 %v258, %v838
    %v840 = vpop.f32.mrb[0].mxu0
    %v841 = vadd.f32 %v262, %v840
    %842 = vmatprep.mubr.bf16.mxu0 %v322
    %843 = vmatmul.mubr.bf16.gmra.mrb[0].mxu0 %v321
    %v844 = vpop.f32.mrb[0].mxu0
    %v845 = vadd.f32 %v258, %v844
    %v846 = vpop.f32.mrb[0].mxu0
    %v847 = vadd.f32 %v262, %v846
    %v848 = vpop.f32.mrb[0].mxu0
    %v849 = vadd.f32 %v258, %v848
    %v850 = vpop.f32.mrb[0].mxu0
    %v851 = vadd.f32 %v262, %v850
    %852 = vmatprep.mubr.bf16.mxu0 %v324
    %853 = vmatmul.mubr.bf16.gmra.mrb[0].mxu0 %v323
    %v854 = vpop.f32.mrb[0].mxu0
    %v855 = vadd.f32 %v258, %v854
    %v856 = vpop.f32.mrb[0].mxu0
    %v857 = vadd.f32 %v262, %v856
    %v858 = vpop.f32.mrb[0].mxu0
    %v859 = vadd.f32 %v258, %v858
    %v860 = vpop.f32.mrb[0].mxu0
    %v861 = vadd.f32 %v262, %v860
    %862 = vmatprep.mubr.bf16.mxu0 %v326
    %863 = vmatmul.mubr.bf16.gmra.mrb[0].mxu0 %v325
    %v864 = vpop.f32.mrb[0].mxu0
    %v865 = vadd.f32 %v258, %v864
    %v866 = vpop.f32.mrb[0].mxu0
    %v867 = vadd.f32 %v262, %v866
    %v868 = vpop.f32.mrb[0].mxu0
    %v869 = vadd.f32 %v258, %v868
    %v870 = vpop.f32.mrb[0].mxu0
    %v871 = vadd.f32 %v262, %v870
    %872 = vmatprep.mubr.bf16.mxu0 %v328
    %873 = vmatmul.mubr.bf16.gmra.mrb[0].mxu0 %v327
    %v874 = vpop.f32.mrb[0].mxu0
    %v875 = vadd.f32 %v258, %v874
    %v876 = vpop.f32.mrb[0].mxu0
    %v877 = vadd.f32 %v262, %v876
    %v878 = vpop.f32.mrb[0].mxu0
    %v879 = vadd.f32 %v258, %v878
    %v880 = vpop.f32.mrb[0].mxu0
    %v881 = vadd.f32 %v262, %v880
    %882 = vmatprep.mubr.bf16.mxu0 %v330
    %883 = vmatmul.mubr.bf16.gmra.mrb[0].mxu0 %v329
    %v884 = vpop.f32.mrb[0].mxu0
    %v885 = vadd.f32 %v258, %v884
    %v886 = vpop.f32.mrb[0].mxu0
    %v887 = vadd.f32 %v262, %v886
    %v888 = vpop.f32.mrb[0].mxu0
    %v889 = vadd.f32 %v258, %v888
    %v890 = vpop.f32.mrb[0].mxu0
    %v891 = vadd.f32 %v262, %v890
    %892 = vdwg.mxu0
    %v893 = vpack.c.bf16 %v706, %v702
    %v894 = vpack.c.bf16 %v708, %v704
    %v895 = vpack.c.bf16 %v819, %v815
    %v896 = vpack.c.bf16 %v821, %v817
    %v897 = vpack.c.bf16 %v716, %v712
    %v898 = vpack.c.bf16 %v718, %v714
    %v899 = vpack.c.bf16 %v829, %v825
    %v900 = vpack.c.bf16 %v831, %v827
    %v901 = vpack.c.bf16 %v726, %v722
    %v902 = vpack.c.bf16 %v728, %v724
    %v903 = vpack.c.bf16 %v839, %v835
    %v904 = vpack.c.bf16 %v841, %v837
    %v905 = vpack.c.bf16 %v736, %v732
    %v906 = vpack.c.bf16 %v738, %v734
    %v907 = vpack.c.bf16 %v849, %v845
    %v908 = vpack.c.bf16 %v851, %v847
    %v909 = vpack.c.bf16 %v746, %v742
    %v910 = vpack.c.bf16 %v748, %v744
    %v911 = vpack.c.bf16 %v859, %v855
    %v912 = vpack.c.bf16 %v861, %v857
    %v913 = vpack.c.bf16 %v756, %v752
    %v914 = vpack.c.bf16 %v758, %v754
    %v915 = vpack.c.bf16 %v869, %v865
    %v916 = vpack.c.bf16 %v871, %v867
    %v917 = vpack.c.bf16 %v766, %v762
    %v918 = vpack.c.bf16 %v768, %v764
    %v919 = vpack.c.bf16 %v879, %v875
    %v920 = vpack.c.bf16 %v881, %v877
    %v921 = vpack.c.bf16 %v776, %v772
    %v922 = vpack.c.bf16 %v778, %v774
    %v923 = vpack.c.bf16 %v889, %v885
    %v924 = vpack.c.bf16 %v891, %v887
    %925 = vst [vmem:[#allocation2] sm:$0xff] %v893
    %926 = vst [vmem:[#allocation2 + $0x8] sm:$0xff] %v894
    %927 = vst [vmem:[#allocation2 + $0x10] sm:$0xff] %v895
    %928 = vst [vmem:[#allocation2 + $0x18] sm:$0xff] %v896
    %929 = vst [vmem:[#allocation2 + $0x20] sm:$0xff] %v897
    %930 = vst [vmem:[#allocation2 + $0x28] sm:$0xff] %v898
    %931 = vst [vmem:[#allocation2 + $0x30] sm:$0xff] %v899
    %932 = vst [vmem:[#allocation2 + $0x38] sm:$0xff] %v900
    %933 = vst [vmem:[#allocation2 + $0x40] sm:$0xff] %v901
    %934 = vst [vmem:[#allocation2 + $0x48] sm:$0xff] %v902
    %935 = vst [vmem:[#allocation2 + $0x50] sm:$0xff] %v903
    %936 = vst [vmem:[#allocation2 + $0x58] sm:$0xff] %v904
    %937 = vst [vmem:[#allocation2 + $0x60] sm:$0xff] %v905
    %938 = vst [vmem:[#allocation2 + $0x68] sm:$0xff] %v906
    %939 = vst [vmem:[#allocation2 + $0x70] sm:$0xff] %v907
    %940 = vst [vmem:[#allocation2 + $0x78] sm:$0xff] %v908
    %941 = vst [vmem:[#allocation2 + $0x80] sm:$0xff] %v909
    %942 = vst [vmem:[#allocation2 + $0x88] sm:$0xff] %v910
    %943 = vst [vmem:[#allocation2 + $0x90] sm:$0xff] %v911
    %944 = vst [vmem:[#allocation2 + $0x98] sm:$0xff] %v912
    %945 = vst [vmem:[#allocation2 + $0xa0] sm:$0xff] %v913
    %946 = vst [vmem:[#allocation2 + $0xa8] sm:$0xff] %v914
    %947 = vst [vmem:[#allocation2 + $0xb0] sm:$0xff] %v915
    %948 = vst [vmem:[#allocation2 + $0xb8] sm:$0xff] %v916
    %949 = vst [vmem:[#allocation2 + $0xc0] sm:$0xff] %v917
    %950 = vst [vmem:[#allocation2 + $0xc8] sm:$0xff] %v918
    %951 = vst [vmem:[#allocation2 + $0xd0] sm:$0xff] %v919
    %952 = vst [vmem:[#allocation2 + $0xd8] sm:$0xff] %v920
    %953 = vst [vmem:[#allocation2 + $0xe0] sm:$0xff] %v921
    %954 = vst [vmem:[#allocation2 + $0xe8] sm:$0xff] %v922
    %955 = vst [vmem:[#allocation2 + $0xf0] sm:$0xff] %v923
    %956 = vst [vmem:[#allocation2 + $0xf8] sm:$0xff] %v924
    loop: start=0, step=1, limit=8
    $region82: #{sarcasm_forward.5} parent=1 // loop_pre_header
      _
    $region83: #{sarcasm_forward.5} parent=1 // loop_header
      %s958 = sphi 0, %s962
      %p959 = scmp.ge.s32.totalorder %s958, 8
      %v963 = vphi 0.0, %v1318
      %v964 = vphi 0.0, %v1319
      %v965 = vphi 0.0, %v1314
      %v966 = vphi 0.0, %v1315
    $region84: #{sarcasm_forward.5} parent=1 // loop_header_branch
      %961 = sbr.rel (%p959) target = $region88
    $region85: #{sarcasm_forward.5} parent=1 // loop_body
      %s967 = smul.u32 %s958, 16
      %s968 = sshra.s32 %s967, 4
      %s969 = sand.u32 %s967, 15
      %s970 = smul.u32 %s968, 4
      %s971 = smul.addr %s970, 8
      %s972 = scalar_lea.vmem [#allocation2], %s971
      %v973 = vld [vmem:[%s972] sm:$0xff]
      %v974 = vld [vmem:[%s972 + $0x8] sm:$0xff]
      %v975 = vld [vmem:[%s972 + $0x10] sm:$0xff]
      %v976 = vld [vmem:[%s972 + $0x18] sm:$0xff]
      %v977 = vunpack.c.l.bf16 %v973
      %v978 = vunpack.c.l.bf16 %v974
      %v979 = vunpack.c.l.bf16 %v975
      %v980 = vunpack.c.l.bf16 %v976
      %v981 = vunpack.c.h.bf16 %v973
      %v982 = vunpack.c.h.bf16 %v974
      %v983 = vunpack.c.h.bf16 %v975
      %v984 = vunpack.c.h.bf16 %v976
      %v985 = vpack.c.bf16 %v964, %v963
      %v986 = vld [vmem:[#allocation8] sm:$0xff]
      %v987 = vld [vmem:[#allocation8 + $0x8] sm:$0xff]
      %v988 = vld [vmem:[#allocation8 + $0x10] sm:$0xff]
      %v989 = vld [vmem:[#allocation8 + $0x18] sm:$0xff]
      %v990 = vld [vmem:[#allocation8 + $0x20] sm:$0xff]
      %v991 = vld [vmem:[#allocation8 + $0x28] sm:$0xff]
      %v992 = vld [vmem:[#allocation8 + $0x30] sm:$0xff]
      %v993 = vld [vmem:[#allocation8 + $0x38] sm:$0xff]
      %v994 = vld [vmem:[#allocation8 + $0x40] sm:$0xff]
      %v995 = vld [vmem:[#allocation8 + $0x48] sm:$0xff]
      %v996 = vld [vmem:[#allocation8 + $0x50] sm:$0xff]
      %v997 = vld [vmem:[#allocation8 + $0x58] sm:$0xff]
      %v998 = vld [vmem:[#allocation8 + $0x60] sm:$0xff]
      %v999 = vld [vmem:[#allocation8 + $0x68] sm:$0xff]
      %v1000 = vld [vmem:[#allocation8 + $0x70] sm:$0xff]
      %v1001 = vld [vmem:[#allocation8 + $0x78] sm:$0xff]
      %v1002 = vld [vmem:[#allocation8 + $0x80] sm:$0xff]
      %v1003 = vld [vmem:[#allocation8 + $0x88] sm:$0xff]
      %v1004 = vld [vmem:[#allocation8 + $0x90] sm:$0xff]
      %v1005 = vld [vmem:[#allocation8 + $0x98] sm:$0xff]
      %v1006 = vld [vmem:[#allocation8 + $0xa0] sm:$0xff]
      %v1007 = vld [vmem:[#allocation8 + $0xa8] sm:$0xff]
      %v1008 = vld [vmem:[#allocation8 + $0xb0] sm:$0xff]
      %v1009 = vld [vmem:[#allocation8 + $0xb8] sm:$0xff]
      %v1010 = vld [vmem:[#allocation8 + $0xc0] sm:$0xff]
      %v1011 = vld [vmem:[#allocation8 + $0xc8] sm:$0xff]
      %v1012 = vld [vmem:[#allocation8 + $0xd0] sm:$0xff]
      %v1013 = vld [vmem:[#allocation8 + $0xd8] sm:$0xff]
      %v1014 = vld [vmem:[#allocation8 + $0xe0] sm:$0xff]
      %v1015 = vld [vmem:[#allocation8 + $0xe8] sm:$0xff]
      %v1016 = vld [vmem:[#allocation8 + $0xf0] sm:$0xff]
      %v1017 = vld [vmem:[#allocation8 + $0xf8] sm:$0xff]
      %v1050 = vunpack.c.l.b16 %v986
      %v1051 = vunpack.c.h.b16 %v986
      %v1052 = vunpack.c.l.b16 %v987
      %v1053 = vunpack.c.h.b16 %v987
      %v1054 = vunpack.c.l.b16 %v988
      %v1055 = vunpack.c.h.b16 %v988
      %v1056 = vunpack.c.l.b16 %v989
      %v1057 = vunpack.c.h.b16 %v989
      %v1058 = vunpack.c.l.b16 %v990
      %v1059 = vunpack.c.h.b16 %v990
      %v1060 = vunpack.c.l.b16 %v991
      %v1061 = vunpack.c.h.b16 %v991
      %v1062 = vunpack.c.l.b16 %v992
      %v1063 = vunpack.c.h.b16 %v992
      %v1064 = vunpack.c.l.b16 %v993
      %v1065 = vunpack.c.h.b16 %v993
      %v1066 = vunpack.c.l.b16 %v994
      %v1067 = vunpack.c.h.b16 %v994
      %v1068 = vunpack.c.l.b16 %v995
      %v1069 = vunpack.c.h.b16 %v995
      %v1070 = vunpack.c.l.b16 %v996
      %v1071 = vunpack.c.h.b16 %v996
      %v1072 = vunpack.c.l.b16 %v997
      %v1073 = vunpack.c.h.b16 %v997
      %v1074 = vunpack.c.l.b16 %v998
      %v1075 = vunpack.c.h.b16 %v998
      %v1076 = vunpack.c.l.b16 %v999
      %v1077 = vunpack.c.h.b16 %v999
      %v1078 = vunpack.c.l.b16 %v1000
      %v1079 = vunpack.c.h.b16 %v1000
      %v1080 = vunpack.c.l.b16 %v1001
      %v1081 = vunpack.c.h.b16 %v1001
      %v1082 = vunpack.c.l.b16 %v1002
      %v1083 = vunpack.c.h.b16 %v1002
      %v1084 = vunpack.c.l.b16 %v1003
      %v1085 = vunpack.c.h.b16 %v1003
      %v1086 = vunpack.c.l.b16 %v1004
      %v1087 = vunpack.c.h.b16 %v1004
      %v1088 = vunpack.c.l.b16 %v1005
      %v1089 = vunpack.c.h.b16 %v1005
      %v1090 = vunpack.c.l.b16 %v1006
      %v1091 = vunpack.c.h.b16 %v1006
      %v1092 = vunpack.c.l.b16 %v1007
      %v1093 = vunpack.c.h.b16 %v1007
      %v1094 = vunpack.c.l.b16 %v1008
      %v1095 = vunpack.c.h.b16 %v1008
      %v1096 = vunpack.c.l.b16 %v1009
      %v1097 = vunpack.c.h.b16 %v1009
      %v1098 = vunpack.c.l.b16 %v1010
      %v1099 = vunpack.c.h.b16 %v1010
      %v1100 = vunpack.c.l.b16 %v1011
      %v1101 = vunpack.c.h.b16 %v1011
      %v1102 = vunpack.c.l.b16 %v1012
      %v1103 = vunpack.c.h.b16 %v1012
      %v1104 = vunpack.c.l.b16 %v1013
      %v1105 = vunpack.c.h.b16 %v1013
      %v1106 = vunpack.c.l.b16 %v1014
      %v1107 = vunpack.c.h.b16 %v1014
      %v1108 = vunpack.c.l.b16 %v1015
      %v1109 = vunpack.c.h.b16 %v1015
      %v1110 = vunpack.c.l.b16 %v1016
      %v1111 = vunpack.c.h.b16 %v1016
      %v1112 = vunpack.c.l.b16 %v1017
      %v1113 = vunpack.c.h.b16 %v1017
      %v1114 = vpack.c.b16 %v1054, %v1050
      %v1115 = vpack.c.b16 %v1055, %v1051
      %v1116 = vpack.c.b16 %v1056, %v1052
      %v1117 = vpack.c.b16 %v1057, %v1053
      %v1118 = vpack.c.b16 %v1062, %v1058
      %v1119 = vpack.c.b16 %v1063, %v1059
      %v1120 = vpack.c.b16 %v1064, %v1060
      %v1121 = vpack.c.b16 %v1065, %v1061
      %v1122 = vpack.c.b16 %v1070, %v1066
      %v1123 = vpack.c.b16 %v1071, %v1067
      %v1124 = vpack.c.b16 %v1072, %v1068
      %v1125 = vpack.c.b16 %v1073, %v1069
      %v1126 = vpack.c.b16 %v1078, %v1074
      %v1127 = vpack.c.b16 %v1079, %v1075
      %v1128 = vpack.c.b16 %v1080, %v1076
      %v1129 = vpack.c.b16 %v1081, %v1077
      %v1130 = vpack.c.b16 %v1086, %v1082
      %v1131 = vpack.c.b16 %v1087, %v1083
      %v1132 = vpack.c.b16 %v1088, %v1084
      %v1133 = vpack.c.b16 %v1089, %v1085
      %v1134 = vpack.c.b16 %v1094, %v1090
      %v1135 = vpack.c.b16 %v1095, %v1091
      %v1136 = vpack.c.b16 %v1096, %v1092
      %v1137 = vpack.c.b16 %v1097, %v1093
      %v1138 = vpack.c.b16 %v1102, %v1098
      %v1139 = vpack.c.b16 %v1103, %v1099
      %v1140 = vpack.c.b16 %v1104, %v1100
      %v1141 = vpack.c.b16 %v1105, %v1101
      %v1142 = vpack.c.b16 %v1110, %v1106
      %v1143 = vpack.c.b16 %v1111, %v1107
      %v1144 = vpack.c.b16 %v1112, %v1108
      %v1145 = vpack.c.b16 %v1113, %v1109
      %1178 = vmatprep.subr.bf16.mxu0 %v1115
      %1179 = vmatpush1.bf16.msra.mxu0 %v1114
      %1180 = vmatprep.subr.bf16.mxu0 %v1119
      %1181 = vmatpush1.bf16.msra.mxu0 %v1118
      %1182 = vmatprep.subr.bf16.mxu0 %v1123
      %1183 = vmatpush1.bf16.msra.mxu0 %v1122
      %1184 = vmatprep.subr.bf16.mxu0 %v1127
      %1185 = vmatpush1.bf16.msra.mxu0 %v1126
      %1186 = vmatprep.subr.bf16.mxu0 %v1131
      %1187 = vmatpush1.bf16.msra.mxu0 %v1130
      %1188 = vmatprep.subr.bf16.mxu0 %v1135
      %1189 = vmatpush1.bf16.msra.mxu0 %v1134
      %1190 = vmatprep.subr.bf16.mxu0 %v1139
      %1191 = vmatpush1.bf16.msra.mxu0 %v1138
      %1192 = vmatprep.subr.bf16.mxu0 %v1143
      %1193 = vmatpush1.bf16.msra.mxu0 %v1142
      %1194 = vmatprep.subr.bf16.mxu0 0
      %1195 = vmatpush1.bf16.msra.mxu0 0
      %1196 = vmatprep.subr.bf16.mxu0 0
      %1197 = vmatpush1.bf16.msra.mxu0 0
      %1198 = vmatprep.subr.bf16.mxu0 0
      %1199 = vmatpush1.bf16.msra.mxu0 0
      %1200 = vmatprep.subr.bf16.mxu0 0
      %1201 = vmatpush1.bf16.msra.mxu0 0
      %1202 = vmatprep.subr.bf16.mxu0 0
      %1203 = vmatpush1.bf16.msra.mxu0 0
      %1204 = vmatprep.subr.bf16.mxu0 0
      %1205 = vmatpush1.bf16.msra.mxu0 0
      %1206 = vmatprep.subr.bf16.mxu0 0
      %1207 = vmatpush1.bf16.msra.mxu0 0
      %1208 = vmatprep.subr.bf16.mxu0 0
      %1209 = vmatpush1.bf16.msra.mxu0 0
      %1210 = vmatprep.mubr.bf16.mxu0 0
      %1211 = vmatmul.mubr.bf16.gmra.mrb[0].mxu0 %v985
      %v1212 = vpop.f32.mrb[0].mxu0
      %v1213 = vadd.f32 0.0, %v1212
      %v1214 = vpop.f32.mrb[0].mxu0
      %v1215 = vadd.f32 0.0, %v1214
      %v1216 = vpop.f32.mrb[0].mxu0
      %v1217 = vadd.f32 0.0, %v1216
      %v1218 = vpop.f32.mrb[0].mxu0
      %v1219 = vadd.f32 0.0, %v1218
      %1220 = vdwg.mxu0
      %1221 = vmatprep.subr.bf16.mxu0 %v1117
      %1222 = vmatpush1.bf16.msra.mxu0 %v1116
      %1223 = vmatprep.subr.bf16.mxu0 %v1121
      %1224 = vmatpush1.bf16.msra.mxu0 %v1120
      %1225 = vmatprep.subr.bf16.mxu0 %v1125
      %1226 = vmatpush1.bf16.msra.mxu0 %v1124
      %1227 = vmatprep.subr.bf16.mxu0 %v1129
      %1228 = vmatpush1.bf16.msra.mxu0 %v1128
      %1229 = vmatprep.subr.bf16.mxu0 %v1133
      %1230 = vmatpush1.bf16.msra.mxu0 %v1132
      %1231 = vmatprep.subr.bf16.mxu0 %v1137
      %1232 = vmatpush1.bf16.msra.mxu0 %v1136
      %1233 = vmatprep.subr.bf16.mxu0 %v1141
      %1234 = vmatpush1.bf16.msra.mxu0 %v1140
      %1235 = vmatprep.subr.bf16.mxu0 %v1145
      %1236 = vmatpush1.bf16.msra.mxu0 %v1144
      %1237 = vmatprep.subr.bf16.mxu0 0
      %1238 = vmatpush1.bf16.msra.mxu0 0
      %1239 = vmatprep.subr.bf16.mxu0 0
      %1240 = vmatpush1.bf16.msra.mxu0 0
      %1241 = vmatprep.subr.bf16.mxu0 0
      %1242 = vmatpush1.bf16.msra.mxu0 0
      %1243 = vmatprep.subr.bf16.mxu0 0
      %1244 = vmatpush1.bf16.msra.mxu0 0
      %1245 = vmatprep.subr.bf16.mxu0 0
      %1246 = vmatpush1.bf16.msra.mxu0 0
      %1247 = vmatprep.subr.bf16.mxu0 0
      %1248 = vmatpush1.bf16.msra.mxu0 0
      %1249 = vmatprep.subr.bf16.mxu0 0
      %1250 = vmatpush1.bf16.msra.mxu0 0
      %1251 = vmatprep.subr.bf16.mxu0 0
      %1252 = vmatpush1.bf16.msra.mxu0 0
      %1253 = vmatprep.mubr.bf16.mxu0 0
      %1254 = vmatmul.mubr.bf16.gmra.mrb[0].mxu0 %v985
      %v1255 = vpop.f32.mrb[0].mxu0
      %v1256 = vadd.f32 0.0, %v1255
      %v1257 = vpop.f32.mrb[0].mxu0
      %v1258 = vadd.f32 0.0, %v1257
      %v1259 = vpop.f32.mrb[0].mxu0
      %v1260 = vadd.f32 0.0, %v1259
      %v1261 = vpop.f32.mrb[0].mxu0
      %v1262 = vadd.f32 0.0, %v1261
      %1263 = vdwg.mxu0
      %v1264 = vadd.f32 %v977, %v1213
      %v1265 = vadd.f32 %v978, %v1215
      %v1266 = vadd.f32 %v979, %v1256
      %v1267 = vadd.f32 %v980, %v1258
      %v1268 = vadd.f32 %v981, %v1217
      %v1269 = vadd.f32 %v982, %v1219
      %v1270 = vadd.f32 %v983, %v1260
      %v1271 = vadd.f32 %v984, %v1262
      %v1272 = vxor.u32 %v1264, 2147483648
      %v1273 = vxor.u32 %v1268, 2147483648
      %v1274 = vmul.f32 %v1272, 1.442695
      %v1275 = vpow.pop %v1274
      %v1276 = vmul.f32 %v1273, 1.442695
      %v1277 = vpow.pop %v1276
      %v1278 = vadd.f32 %v1275, 1.0
      %v1279 = vadd.f32 %v1277, 1.0
      %v1280 = vrcp.pop %v1278
      %v1281 = vmul.f32 1.0, %v1280
      %v1282 = vrcp.pop %v1279
      %v1283 = vmul.f32 1.0, %v1282
      %v1284 = vxor.u32 %v1265, 2147483648
      %v1285 = vxor.u32 %v1269, 2147483648
      %v1286 = vmul.f32 %v1284, 1.442695
      %v1287 = vpow.pop %v1286
      %v1288 = vmul.f32 %v1285, 1.442695
      %v1289 = vpow.pop %v1288
      %v1290 = vadd.f32 %v1287, 1.0
      %v1291 = vadd.f32 %v1289, 1.0
      %v1292 = vrcp.pop %v1290
      %v1293 = vmul.f32 1.0, %v1292
      %v1294 = vrcp.pop %v1291
      %v1295 = vmul.f32 1.0, %v1294
      %v1296 = vtanh.pop %v1266
      %v1297 = vtanh.pop %v1270
      %v1298 = vxor.u32 %v1267, 2147483648
      %v1299 = vxor.u32 %v1271, 2147483648
      %v1300 = vmul.f32 %v1298, 1.442695
      %v1301 = vpow.pop %v1300
      %v1302 = vmul.f32 %v1299, 1.442695
      %v1303 = vpow.pop %v1302
      %v1304 = vadd.f32 %v1301, 1.0
      %v1305 = vadd.f32 %v1303, 1.0
      %v1306 = vrcp.pop %v1304
      %v1307 = vmul.f32 1.0, %v1306
      %v1308 = vrcp.pop %v1305
      %v1309 = vmul.f32 1.0, %v1308
      %v1310 = vmul.f32 %v1293, %v965
      %v1311 = vmul.f32 %v1295, %v966
      %v1312 = vmul.f32 %v1281, %v1296
      %v1313 = vmul.f32 %v1283, %v1297
      %v1314 = vadd.f32 %v1310, %v1312
      %v1315 = vadd.f32 %v1311, %v1313
      %v1316 = vtanh.pop %v1314
      %v1317 = vtanh.pop %v1315
      %v1318 = vmul.f32 %v1307, %v1316
      %v1319 = vmul.f32 %v1309, %v1317
    $region86: #{sarcasm_forward.5} parent=1 // loop_footer
      %s962 = sadd.s32 1, %s958
    $region87: #{sarcasm_forward.5} parent=1 // loop_footer_branch
      %957 = sbr.rel target = $region83
    $region88: #{sarcasm_forward.5} parent=1 // loop_exit
      _
    %v1320 = vld [vmem:[#allocation3 + $0x70] sm:$0xff]
    %v1321 = vld [vmem:[#allocation3 + $0x78] sm:$0xff]
    %v1322 = vld [vmem:[#allocation11] sm:$0xff]
    %v1323 = vld [vmem:[#allocation11 + $0x8] sm:$0xff]
    %v1324 = vld [vmem:[#allocation11 + $0x10] sm:$0xff]
    %v1325 = vld [vmem:[#allocation11 + $0x18] sm:$0xff]
    %v1326 = vld [vmem:[#allocation11 + $0x20] sm:$0xff]
    %v1327 = vld [vmem:[#allocation11 + $0x28] sm:$0xff]
    %v1328 = vld [vmem:[#allocation11 + $0x30] sm:$0xff]
    %v1329 = vld [vmem:[#allocation11 + $0x38] sm:$0xff]
    %v1330 = vld [vmem:[#allocation11 + $0x40] sm:$0xff]
    %v1331 = vld [vmem:[#allocation11 + $0x48] sm:$0xff]
    %v1332 = vld [vmem:[#allocation11 + $0x50] sm:$0xff]
    %v1333 = vld [vmem:[#allocation11 + $0x58] sm:$0xff]
    %v1334 = vld [vmem:[#allocation11 + $0x60] sm:$0xff]
    %v1335 = vld [vmem:[#allocation11 + $0x68] sm:$0xff]
    %v1336 = vld [vmem:[#allocation11 + $0x70] sm:$0xff]
    %v1337 = vld [vmem:[#allocation11 + $0x78] sm:$0xff]
    %v1338 = vld [vmem:[#allocation11 + $0x80] sm:$0xff]
    %v1339 = vld [vmem:[#allocation11 + $0x88] sm:$0xff]
    %v1340 = vld [vmem:[#allocation11 + $0x90] sm:$0xff]
    %v1341 = vld [vmem:[#allocation11 + $0x98] sm:$0xff]
    %v1342 = vld [vmem:[#allocation11 + $0xa0] sm:$0xff]
    %v1343 = vld [vmem:[#allocation11 + $0xa8] sm:$0xff]
    %v1344 = vld [vmem:[#allocation11 + $0xb0] sm:$0xff]
    %v1345 = vld [vmem:[#allocation11 + $0xb8] sm:$0xff]
    %v1346 = vld [vmem:[#allocation11 + $0xc0] sm:$0xff]
    %v1347 = vld [vmem:[#allocation11 + $0xc8] sm:$0xff]
    %v1348 = vld [vmem:[#allocation11 + $0xd0] sm:$0xff]
    %v1349 = vld [vmem:[#allocation11 + $0xd8] sm:$0xff]
    %v1350 = vld [vmem:[#allocation11 + $0xe0] sm:$0xff]
    %v1351 = vld [vmem:[#allocation11 + $0xe8] sm:$0xff]
    %v1352 = vld [vmem:[#allocation11 + $0xf0] sm:$0xff]
    %v1353 = vld [vmem:[#allocation11 + $0xf8] sm:$0xff]
    %v1354 = vld [vmem:[#allocation11 + $0x100] sm:$0xff]
    %v1355 = vld [vmem:[#allocation11 + $0x108] sm:$0xff]
    %v1356 = vld [vmem:[#allocation11 + $0x110] sm:$0xff]
    %v1357 = vld [vmem:[#allocation11 + $0x118] sm:$0xff]
    %v1358 = vld [vmem:[#allocation11 + $0x120] sm:$0xff]
    %v1359 = vld [vmem:[#allocation11 + $0x128] sm:$0xff]
    %v1360 = vld [vmem:[#allocation11 + $0x130] sm:$0xff]
    %v1361 = vld [vmem:[#allocation11 + $0x138] sm:$0xff]
    %v1362 = vld [vmem:[#allocation11 + $0x140] sm:$0xff]
    %v1363 = vld [vmem:[#allocation11 + $0x148] sm:$0xff]
    %v1364 = vld [vmem:[#allocation11 + $0x150] sm:$0xff]
    %v1365 = vld [vmem:[#allocation11 + $0x158] sm:$0xff]
    %v1366 = vld [vmem:[#allocation11 + $0x160] sm:$0xff]
    %v1367 = vld [vmem:[#allocation11 + $0x168] sm:$0xff]
    %v1368 = vld [vmem:[#allocation11 + $0x170] sm:$0xff]
    %v1369 = vld [vmem:[#allocation11 + $0x178] sm:$0xff]
    %v1370 = vld [vmem:[#allocation11 + $0x180] sm:$0xff]
    %v1371 = vld [vmem:[#allocation11 + $0x188] sm:$0xff]
    %v1372 = vld [vmem:[#allocation11 + $0x190] sm:$0xff]
    %v1373 = vld [vmem:[#allocation11 + $0x198] sm:$0xff]
    %v1374 = vld [vmem:[#allocation11 + $0x1a0] sm:$0xff]
    %v1375 = vld [vmem:[#allocation11 + $0x1a8] sm:$0xff]
    %v1376 = vld [vmem:[#allocation11 + $0x1b0] sm:$0xff]
    %v1377 = vld [vmem:[#allocation11 + $0x1b8] sm:$0xff]
    %v1378 = vld [vmem:[#allocation11 + $0x1c0] sm:$0xff]
    %v1379 = vld [vmem:[#allocation11 + $0x1c8] sm:$0xff]
    %v1380 = vld [vmem:[#allocation11 + $0x1d0] sm:$0xff]
    %v1381 = vld [vmem:[#allocation11 + $0x1d8] sm:$0xff]
    %v1382 = vld [vmem:[#allocation11 + $0x1e0] sm:$0xff]
    %v1383 = vld [vmem:[#allocation11 + $0x1e8] sm:$0xff]
    %v1384 = vld [vmem:[#allocation11 + $0x1f0] sm:$0xff]
    %v1385 = vld [vmem:[#allocation11 + $0x1f8] sm:$0xff]
    %v1386 = vld [vmem:[#allocation12] sm:$0xf]
    %v1388 = vlaneseq
    %v1389 = vshrl.u32 %v1388, 7
    %v1390 = vsub.s32 0, %v1389
    %v1391 = vrot.slane %v1386, %v1390
    %v1392 = vlaneseq
    %v1393 = vshrl.u32 %v1392, 7
    %v1394 = vsub.s32 1, %v1393
    %v1395 = vrot.slane %v1386, %v1394
    %v1396 = vlaneseq
    %v1397 = vshrl.u32 %v1396, 7
    %v1398 = vsub.s32 2, %v1397
    %v1399 = vrot.slane %v1386, %v1398
    %v1400 = vlaneseq
    %v1401 = vshrl.u32 %v1400, 7
    %v1402 = vsub.s32 3, %v1401
    %v1403 = vrot.slane %v1386, %v1402
    %v1410 = vunpack.c.l.b16 %v1320
    %v1411 = vunpack.c.h.b16 %v1320
    %v1412 = vunpack.c.l.b16 %v1321
    %v1413 = vunpack.c.h.b16 %v1321
    %v1414 = vpack.c.b16 %v1412, %v1410
    %v1415 = vpack.c.b16 %v1413, %v1411
    %v1482 = vunpack.c.l.b16 %v1322
    %v1483 = vunpack.c.h.b16 %v1322
    %v1484 = vunpack.c.l.b16 %v1323
    %v1485 = vunpack.c.h.b16 %v1323
    %v1486 = vunpack.c.l.b16 %v1324
    %v1487 = vunpack.c.h.b16 %v1324
    %v1488 = vunpack.c.l.b16 %v1325
    %v1489 = vunpack.c.h.b16 %v1325
    %v1490 = vunpack.c.l.b16 %v1326
    %v1491 = vunpack.c.h.b16 %v1326
    %v1492 = vunpack.c.l.b16 %v1327
    %v1493 = vunpack.c.h.b16 %v1327
    %v1494 = vunpack.c.l.b16 %v1328
    %v1495 = vunpack.c.h.b16 %v1328
    %v1496 = vunpack.c.l.b16 %v1329
    %v1497 = vunpack.c.h.b16 %v1329
    %v1498 = vunpack.c.l.b16 %v1330
    %v1499 = vunpack.c.h.b16 %v1330
    %v1500 = vunpack.c.l.b16 %v1331
    %v1501 = vunpack.c.h.b16 %v1331
    %v1502 = vunpack.c.l.b16 %v1332
    %v1503 = vunpack.c.h.b16 %v1332
    %v1504 = vunpack.c.l.b16 %v1333
    %v1505 = vunpack.c.h.b16 %v1333
    %v1506 = vunpack.c.l.b16 %v1334
    %v1507 = vunpack.c.h.b16 %v1334
    %v1508 = vunpack.c.l.b16 %v1335
    %v1509 = vunpack.c.h.b16 %v1335
    %v1510 = vunpack.c.l.b16 %v1336
    %v1511 = vunpack.c.h.b16 %v1336
    %v1512 = vunpack.c.l.b16 %v1337
    %v1513 = vunpack.c.h.b16 %v1337
    %v1514 = vunpack.c.l.b16 %v1338
    %v1515 = vunpack.c.h.b16 %v1338
    %v1516 = vunpack.c.l.b16 %v1339
    %v1517 = vunpack.c.h.b16 %v1339
    %v1518 = vunpack.c.l.b16 %v1340
    %v1519 = vunpack.c.h.b16 %v1340
    %v1520 = vunpack.c.l.b16 %v1341
    %v1521 = vunpack.c.h.b16 %v1341
    %v1522 = vunpack.c.l.b16 %v1342
    %v1523 = vunpack.c.h.b16 %v1342
    %v1524 = vunpack.c.l.b16 %v1343
    %v1525 = vunpack.c.h.b16 %v1343
    %v1526 = vunpack.c.l.b16 %v1344
    %v1527 = vunpack.c.h.b16 %v1344
    %v1528 = vunpack.c.l.b16 %v1345
    %v1529 = vunpack.c.h.b16 %v1345
    %v1530 = vunpack.c.l.b16 %v1346
    %v1531 = vunpack.c.h.b16 %v1346
    %v1532 = vunpack.c.l.b16 %v1347
    %v1533 = vunpack.c.h.b16 %v1347
    %v1534 = vunpack.c.l.b16 %v1348
    %v1535 = vunpack.c.h.b16 %v1348
    %v1536 = vunpack.c.l.b16 %v1349
    %v1537 = vunpack.c.h.b16 %v1349
    %v1538 = vunpack.c.l.b16 %v1350
    %v1539 = vunpack.c.h.b16 %v1350
    %v1540 = vunpack.c.l.b16 %v1351
    %v1541 = vunpack.c.h.b16 %v1351
    %v1542 = vunpack.c.l.b16 %v1352
    %v1543 = vunpack.c.h.b16 %v1352
    %v1544 = vunpack.c.l.b16 %v1353
    %v1545 = vunpack.c.h.b16 %v1353
    %v1546 = vunpack.c.l.b16 %v1354
    %v1547 = vunpack.c.h.b16 %v1354
    %v1548 = vunpack.c.l.b16 %v1355
    %v1549 = vunpack.c.h.b16 %v1355
    %v1550 = vunpack.c.l.b16 %v1356
    %v1551 = vunpack.c.h.b16 %v1356
    %v1552 = vunpack.c.l.b16 %v1357
    %v1553 = vunpack.c.h.b16 %v1357
    %v1554 = vunpack.c.l.b16 %v1358
    %v1555 = vunpack.c.h.b16 %v1358
    %v1556 = vunpack.c.l.b16 %v1359
    %v1557 = vunpack.c.h.b16 %v1359
    %v1558 = vunpack.c.l.b16 %v1360
    %v1559 = vunpack.c.h.b16 %v1360
    %v1560 = vunpack.c.l.b16 %v1361
    %v1561 = vunpack.c.h.b16 %v1361
    %v1562 = vunpack.c.l.b16 %v1362
    %v1563 = vunpack.c.h.b16 %v1362
    %v1564 = vunpack.c.l.b16 %v1363
    %v1565 = vunpack.c.h.b16 %v1363
    %v1566 = vunpack.c.l.b16 %v1364
    %v1567 = vunpack.c.h.b16 %v1364
    %v1568 = vunpack.c.l.b16 %v1365
    %v1569 = vunpack.c.h.b16 %v1365
    %v1570 = vunpack.c.l.b16 %v1366
    %v1571 = vunpack.c.h.b16 %v1366
    %v1572 = vunpack.c.l.b16 %v1367
    %v1573 = vunpack.c.h.b16 %v1367
    %v1574 = vunpack.c.l.b16 %v1368
    %v1575 = vunpack.c.h.b16 %v1368
    %v1576 = vunpack.c.l.b16 %v1369
    %v1577 = vunpack.c.h.b16 %v1369
    %v1578 = vunpack.c.l.b16 %v1370
    %v1579 = vunpack.c.h.b16 %v1370
    %v1580 = vunpack.c.l.b16 %v1371
    %v1581 = vunpack.c.h.b16 %v1371
    %v1582 = vunpack.c.l.b16 %v1372
    %v1583 = vunpack.c.h.b16 %v1372
    %v1584 = vunpack.c.l.b16 %v1373
    %v1585 = vunpack.c.h.b16 %v1373
    %v1586 = vunpack.c.l.b16 %v1374
    %v1587 = vunpack.c.h.b16 %v1374
    %v1588 = vunpack.c.l.b16 %v1375
    %v1589 = vunpack.c.h.b16 %v1375
    %v1590 = vunpack.c.l.b16 %v1376
    %v1591 = vunpack.c.h.b16 %v1376
    %v1592 = vunpack.c.l.b16 %v1377
    %v1593 = vunpack.c.h.b16 %v1377
    %v1594 = vunpack.c.l.b16 %v1378
    %v1595 = vunpack.c.h.b16 %v1378
    %v1596 = vunpack.c.l.b16 %v1379
    %v1597 = vunpack.c.h.b16 %v1379
    %v1598 = vunpack.c.l.b16 %v1380
    %v1599 = vunpack.c.h.b16 %v1380
    %v1600 = vunpack.c.l.b16 %v1381
    %v1601 = vunpack.c.h.b16 %v1381
    %v1602 = vunpack.c.l.b16 %v1382
    %v1603 = vunpack.c.h.b16 %v1382
    %v1604 = vunpack.c.l.b16 %v1383
    %v1605 = vunpack.c.h.b16 %v1383
    %v1606 = vunpack.c.l.b16 %v1384
    %v1607 = vunpack.c.h.b16 %v1384
    %v1608 = vunpack.c.l.b16 %v1385
    %v1609 = vunpack.c.h.b16 %v1385
    %v1610 = vpack.c.b16 %v1486, %v1482
    %v1611 = vpack.c.b16 %v1487, %v1483
    %v1612 = vpack.c.b16 %v1488, %v1484
    %v1613 = vpack.c.b16 %v1489, %v1485
    %v1614 = vpack.c.b16 %v1494, %v1490
    %v1615 = vpack.c.b16 %v1495, %v1491
    %v1616 = vpack.c.b16 %v1496, %v1492
    %v1617 = vpack.c.b16 %v1497, %v1493
    %v1618 = vpack.c.b16 %v1502, %v1498
    %v1619 = vpack.c.b16 %v1503, %v1499
    %v1620 = vpack.c.b16 %v1504, %v1500
    %v1621 = vpack.c.b16 %v1505, %v1501
    %v1622 = vpack.c.b16 %v1510, %v1506
    %v1623 = vpack.c.b16 %v1511, %v1507
    %v1624 = vpack.c.b16 %v1512, %v1508
    %v1625 = vpack.c.b16 %v1513, %v1509
    %v1626 = vpack.c.b16 %v1518, %v1514
    %v1627 = vpack.c.b16 %v1519, %v1515
    %v1628 = vpack.c.b16 %v1520, %v1516
    %v1629 = vpack.c.b16 %v1521, %v1517
    %v1630 = vpack.c.b16 %v1526, %v1522
    %v1631 = vpack.c.b16 %v1527, %v1523
    %v1632 = vpack.c.b16 %v1528, %v1524
    %v1633 = vpack.c.b16 %v1529, %v1525
    %v1634 = vpack.c.b16 %v1534, %v1530
    %v1635 = vpack.c.b16 %v1535, %v1531
    %v1636 = vpack.c.b16 %v1536, %v1532
    %v1637 = vpack.c.b16 %v1537, %v1533
    %v1638 = vpack.c.b16 %v1542, %v1538
    %v1639 = vpack.c.b16 %v1543, %v1539
    %v1640 = vpack.c.b16 %v1544, %v1540
    %v1641 = vpack.c.b16 %v1545, %v1541
    %v1642 = vpack.c.b16 %v1550, %v1546
    %v1643 = vpack.c.b16 %v1551, %v1547
    %v1644 = vpack.c.b16 %v1552, %v1548
    %v1645 = vpack.c.b16 %v1553, %v1549
    %v1646 = vpack.c.b16 %v1558, %v1554
    %v1647 = vpack.c.b16 %v1559, %v1555
    %v1648 = vpack.c.b16 %v1560, %v1556
    %v1649 = vpack.c.b16 %v1561, %v1557
    %v1650 = vpack.c.b16 %v1566, %v1562
    %v1651 = vpack.c.b16 %v1567, %v1563
    %v1652 = vpack.c.b16 %v1568, %v1564
    %v1653 = vpack.c.b16 %v1569, %v1565
    %v1654 = vpack.c.b16 %v1574, %v1570
    %v1655 = vpack.c.b16 %v1575, %v1571
    %v1656 = vpack.c.b16 %v1576, %v1572
    %v1657 = vpack.c.b16 %v1577, %v1573
    %v1658 = vpack.c.b16 %v1582, %v1578
    %v1659 = vpack.c.b16 %v1583, %v1579
    %v1660 = vpack.c.b16 %v1584, %v1580
    %v1661 = vpack.c.b16 %v1585, %v1581
    %v1662 = vpack.c.b16 %v1590, %v1586
    %v1663 = vpack.c.b16 %v1591, %v1587
    %v1664 = vpack.c.b16 %v1592, %v1588
    %v1665 = vpack.c.b16 %v1593, %v1589
    %v1666 = vpack.c.b16 %v1598, %v1594
    %v1667 = vpack.c.b16 %v1599, %v1595
    %v1668 = vpack.c.b16 %v1600, %v1596
    %v1669 = vpack.c.b16 %v1601, %v1597
    %v1670 = vpack.c.b16 %v1606, %v1602
    %v1671 = vpack.c.b16 %v1607, %v1603
    %v1672 = vpack.c.b16 %v1608, %v1604
    %v1673 = vpack.c.b16 %v1609, %v1605
    %1738 = vmatprep.subr.bf16.mxu0 %v1611
    %1739 = vmatpush1.bf16.msra.mxu0 %v1610
    %1740 = vmatprep.subr.bf16.mxu0 %v1615
    %1741 = vmatpush1.bf16.msra.mxu0 %v1614
    %1742 = vmatprep.subr.bf16.mxu0 %v1619
    %1743 = vmatpush1.bf16.msra.mxu0 %v1618
    %1744 = vmatprep.subr.bf16.mxu0 %v1623
    %1745 = vmatpush1.bf16.msra.mxu0 %v1622
    %1746 = vmatprep.subr.bf16.mxu0 %v1627
    %1747 = vmatpush1.bf16.msra.mxu0 %v1626
    %1748 = vmatprep.subr.bf16.mxu0 %v1631
    %1749 = vmatpush1.bf16.msra.mxu0 %v1630
    %1750 = vmatprep.subr.bf16.mxu0 %v1635
    %1751 = vmatpush1.bf16.msra.mxu0 %v1634
    %1752 = vmatprep.subr.bf16.mxu0 %v1639
    %1753 = vmatpush1.bf16.msra.mxu0 %v1638
    %1754 = vmatprep.subr.bf16.mxu0 %v1643
    %1755 = vmatpush1.bf16.msra.mxu0 %v1642
    %1756 = vmatprep.subr.bf16.mxu0 %v1647
    %1757 = vmatpush1.bf16.msra.mxu0 %v1646
    %1758 = vmatprep.subr.bf16.mxu0 %v1651
    %1759 = vmatpush1.bf16.msra.mxu0 %v1650
    %1760 = vmatprep.subr.bf16.mxu0 %v1655
    %1761 = vmatpush1.bf16.msra.mxu0 %v1654
    %1762 = vmatprep.subr.bf16.mxu0 %v1659
    %1763 = vmatpush1.bf16.msra.mxu0 %v1658
    %1764 = vmatprep.subr.bf16.mxu0 %v1663
    %1765 = vmatpush1.bf16.msra.mxu0 %v1662
    %1766 = vmatprep.subr.bf16.mxu0 %v1667
    %1767 = vmatpush1.bf16.msra.mxu0 %v1666
    %1768 = vmatprep.subr.bf16.mxu0 %v1671
    %1769 = vmatpush1.bf16.msra.mxu0 %v1670
    %1770 = vmatprep.mubr.bf16.mxu0 %v1415
    %1771 = vmatmul.mubr.bf16.gmra.mrb[0].mxu0 %v1414
    %v1772 = vpop.f32.mrb[0].mxu0
    %v1773 = vadd.f32 %v1391, %v1772
    %v1774 = vpop.f32.mrb[0].mxu0
    %v1775 = vadd.f32 %v1395, %v1774
    %v1776 = vpop.f32.mrb[0].mxu0
    %v1777 = vadd.f32 %v1391, %v1776
    %v1778 = vpop.f32.mrb[0].mxu0
    %v1779 = vadd.f32 %v1395, %v1778
    %1780 = vdwg.mxu0
    %1781 = vmatprep.subr.bf16.mxu0 %v1613
    %1782 = vmatpush1.bf16.msra.mxu0 %v1612
    %1783 = vmatprep.subr.bf16.mxu0 %v1617
    %1784 = vmatpush1.bf16.msra.mxu0 %v1616
    %1785 = vmatprep.subr.bf16.mxu0 %v1621
    %1786 = vmatpush1.bf16.msra.mxu0 %v1620
    %1787 = vmatprep.subr.bf16.mxu0 %v1625
    %1788 = vmatpush1.bf16.msra.mxu0 %v1624
    %1789 = vmatprep.subr.bf16.mxu0 %v1629
    %1790 = vmatpush1.bf16.msra.mxu0 %v1628
    %1791 = vmatprep.subr.bf16.mxu0 %v1633
    %1792 = vmatpush1.bf16.msra.mxu0 %v1632
    %1793 = vmatprep.subr.bf16.mxu0 %v1637
    %1794 = vmatpush1.bf16.msra.mxu0 %v1636
    %1795 = vmatprep.subr.bf16.mxu0 %v1641
    %1796 = vmatpush1.bf16.msra.mxu0 %v1640
    %1797 = vmatprep.subr.bf16.mxu0 %v1645
    %1798 = vmatpush1.bf16.msra.mxu0 %v1644
    %1799 = vmatprep.subr.bf16.mxu0 %v1649
    %1800 = vmatpush1.bf16.msra.mxu0 %v1648
    %1801 = vmatprep.subr.bf16.mxu0 %v1653
    %1802 = vmatpush1.bf16.msra.mxu0 %v1652
    %1803 = vmatprep.subr.bf16.mxu0 %v1657
    %1804 = vmatpush1.bf16.msra.mxu0 %v1656
    %1805 = vmatprep.subr.bf16.mxu0 %v1661
    %1806 = vmatpush1.bf16.msra.mxu0 %v1660
    %1807 = vmatprep.subr.bf16.mxu0 %v1665
    %1808 = vmatpush1.bf16.msra.mxu0 %v1664
    %1809 = vmatprep.subr.bf16.mxu0 %v1669
    %1810 = vmatpush1.bf16.msra.mxu0 %v1668
    %1811 = vmatprep.subr.bf16.mxu0 %v1673
    %1812 = vmatpush1.bf16.msra.mxu0 %v1672
    %1813 = vmatprep.mubr.bf16.mxu0 %v1415
    %1814 = vmatmul.mubr.bf16.gmra.mrb[0].mxu0 %v1414
    %v1815 = vpop.f32.mrb[0].mxu0
    %v1816 = vadd.f32 %v1399, %v1815
    %v1817 = vpop.f32.mrb[0].mxu0
    %v1818 = vadd.f32 %v1403, %v1817
    %v1819 = vpop.f32.mrb[0].mxu0
    %v1820 = vadd.f32 %v1399, %v1819
    %v1821 = vpop.f32.mrb[0].mxu0
    %v1822 = vadd.f32 %v1403, %v1821
    %1823 = vdwg.mxu0
    %v1824 = vxor.u32 %v1773, 2147483648
    %v1825 = vxor.u32 %v1777, 2147483648
    %v1826 = vmul.f32 %v1824, 1.442695
    %v1827 = vpow.pop %v1826
    %v1828 = vmul.f32 %v1825, 1.442695
    %v1829 = vpow.pop %v1828
    %v1830 = vadd.f32 %v1827, 1.0
    %v1831 = vadd.f32 %v1829, 1.0
    %v1832 = vrcp.pop %v1830
    %v1833 = vmul.f32 1.0, %v1832
    %v1834 = vrcp.pop %v1831
    %v1835 = vmul.f32 1.0, %v1834
    %v1836 = vxor.u32 %v1775, 2147483648
    %v1837 = vxor.u32 %v1779, 2147483648
    %v1838 = vmul.f32 %v1836, 1.442695
    %v1839 = vpow.pop %v1838
    %v1840 = vmul.f32 %v1837, 1.442695
    %v1841 = vpow.pop %v1840
    %v1842 = vadd.f32 %v1839, 1.0
    %v1843 = vadd.f32 %v1841, 1.0
    %v1844 = vrcp.pop %v1842
    %v1845 = vmul.f32 1.0, %v1844
    %v1846 = vrcp.pop %v1843
    %v1847 = vmul.f32 1.0, %v1846
    %v1848 = vtanh.pop %v1816
    %v1849 = vtanh.pop %v1820
    %v1850 = vxor.u32 %v1818, 2147483648
    %v1851 = vxor.u32 %v1822, 2147483648
    %v1852 = vmul.f32 %v1850, 1.442695
    %v1853 = vpow.pop %v1852
    %v1854 = vmul.f32 %v1851, 1.442695
    %v1855 = vpow.pop %v1854
    %v1856 = vadd.f32 %v1853, 1.0
    %v1857 = vadd.f32 %v1855, 1.0
    %v1858 = vrcp.pop %v1856
    %v1859 = vmul.f32 1.0, %v1858
    %v1860 = vrcp.pop %v1857
    %v1861 = vmul.f32 1.0, %v1860
    %v1862 = vmul.f32 %v1845, 0.0
    %v1863 = vmul.f32 %v1847, 0.0
    %v1864 = vmul.f32 %v1833, %v1848
    %v1865 = vmul.f32 %v1835, %v1849
    %v1866 = vadd.f32 %v1862, %v1864
    %v1867 = vadd.f32 %v1863, %v1865
    %v1868 = vtanh.pop %v1866
    %v1869 = vtanh.pop %v1867
    %v1870 = vmul.f32 %v1859, %v1868
    %v1871 = vmul.f32 %v1861, %v1869
    %v1872 = vld [vmem:[#allocation14] sm:$0xff]
    %v1873 = vld [vmem:[#allocation14 + $0x8] sm:$0xff]
    %v1874 = vld [vmem:[#allocation14 + $0x10] sm:$0xff]
    %v1875 = vld [vmem:[#allocation14 + $0x18] sm:$0xff]
    %v1876 = vld [vmem:[#allocation14 + $0x20] sm:$0xff]
    %v1877 = vld [vmem:[#allocation14 + $0x28] sm:$0xff]
    %v1878 = vld [vmem:[#allocation14 + $0x30] sm:$0xff]
    %v1879 = vld [vmem:[#allocation14 + $0x38] sm:$0xff]
    %v1880 = vld [vmem:[#allocation14 + $0x40] sm:$0xff]
    %v1881 = vld [vmem:[#allocation14 + $0x48] sm:$0xff]
    %v1882 = vld [vmem:[#allocation14 + $0x50] sm:$0xff]
    %v1883 = vld [vmem:[#allocation14 + $0x58] sm:$0xff]
    %v1884 = vld [vmem:[#allocation14 + $0x60] sm:$0xff]
    %v1885 = vld [vmem:[#allocation14 + $0x68] sm:$0xff]
    %v1886 = vld [vmem:[#allocation14 + $0x70] sm:$0xff]
    %v1887 = vld [vmem:[#allocation14 + $0x78] sm:$0xff]
    %v1888 = vld [vmem:[#allocation14 + $0x80] sm:$0xff]
    %v1889 = vld [vmem:[#allocation14 + $0x88] sm:$0xff]
    %v1890 = vld [vmem:[#allocation14 + $0x90] sm:$0xff]
    %v1891 = vld [vmem:[#allocation14 + $0x98] sm:$0xff]
    %v1892 = vld [vmem:[#allocation14 + $0xa0] sm:$0xff]
    %v1893 = vld [vmem:[#allocation14 + $0xa8] sm:$0xff]
    %v1894 = vld [vmem:[#allocation14 + $0xb0] sm:$0xff]
    %v1895 = vld [vmem:[#allocation14 + $0xb8] sm:$0xff]
    %v1896 = vld [vmem:[#allocation14 + $0xc0] sm:$0xff]
    %v1897 = vld [vmem:[#allocation14 + $0xc8] sm:$0xff]
    %v1898 = vld [vmem:[#allocation14 + $0xd0] sm:$0xff]
    %v1899 = vld [vmem:[#allocation14 + $0xd8] sm:$0xff]
    %v1900 = vld [vmem:[#allocation14 + $0xe0] sm:$0xff]
    %v1901 = vld [vmem:[#allocation14 + $0xe8] sm:$0xff]
    %v1902 = vld [vmem:[#allocation14 + $0xf0] sm:$0xff]
    %v1903 = vld [vmem:[#allocation14 + $0xf8] sm:$0xff]
    %v1904 = vld [vmem:[#allocation15] sm:$0x1]
    %v1906 = vlaneseq
    %v1907 = vshrl.u32 %v1906, 7
    %v1908 = vsub.s32 0, %v1907
    %v1909 = vrot.slane %v1904, %v1908
    %1911 = vmatprep.subr.mxu0 0.0
    %1912 = vmatpush1.msra.mxu0 %v1872
    %1913 = vmatprep.subr.mxu0 0.0
    %1914 = vmatpush1.msra.mxu0 %v1873
    %1915 = vmatprep.subr.mxu0 0.0
    %1916 = vmatpush1.msra.mxu0 %v1874
    %1917 = vmatprep.subr.mxu0 0.0
    %1918 = vmatpush1.msra.mxu0 %v1875
    %1919 = vmatprep.subr.mxu0 0.0
    %1920 = vmatpush1.msra.mxu0 %v1876
    %1921 = vmatprep.subr.mxu0 0.0
    %1922 = vmatpush1.msra.mxu0 %v1877
    %1923 = vmatprep.subr.mxu0 0.0
    %1924 = vmatpush1.msra.mxu0 %v1878
    %1925 = vmatprep.subr.mxu0 0.0
    %1926 = vmatpush1.msra.mxu0 %v1879
    %1927 = vmatprep.subr.mxu0 0.0
    %1928 = vmatpush1.msra.mxu0 %v1880
    %1929 = vmatprep.subr.mxu0 0.0
    %1930 = vmatpush1.msra.mxu0 %v1881
    %1931 = vmatprep.subr.mxu0 0.0
    %1932 = vmatpush1.msra.mxu0 %v1882
    %1933 = vmatprep.subr.mxu0 0.0
    %1934 = vmatpush1.msra.mxu0 %v1883
    %1935 = vmatprep.subr.mxu0 0.0
    %1936 = vmatpush1.msra.mxu0 %v1884
    %1937 = vmatprep.subr.mxu0 0.0
    %1938 = vmatpush1.msra.mxu0 %v1885
    %1939 = vmatprep.subr.mxu0 0.0
    %1940 = vmatpush1.msra.mxu0 %v1886
    %1941 = vmatprep.subr.mxu0 0.0
    %1942 = vmatpush1.msra.mxu0 %v1887
    %1943 = vmatprep.subr.mxu0 0.0
    %1944 = vmatpush1.msra.mxu0 %v1888
    %1945 = vmatprep.subr.mxu0 0.0
    %1946 = vmatpush1.msra.mxu0 %v1889
    %1947 = vmatprep.subr.mxu0 0.0
    %1948 = vmatpush1.msra.mxu0 %v1890
    %1949 = vmatprep.subr.mxu0 0.0
    %1950 = vmatpush1.msra.mxu0 %v1891
    %1951 = vmatprep.subr.mxu0 0.0
    %1952 = vmatpush1.msra.mxu0 %v1892
    %1953 = vmatprep.subr.mxu0 0.0
    %1954 = vmatpush1.msra.mxu0 %v1893
    %1955 = vmatprep.subr.mxu0 0.0
    %1956 = vmatpush1.msra.mxu0 %v1894
    %1957 = vmatprep.subr.mxu0 0.0
    %1958 = vmatpush1.msra.mxu0 %v1895
    %1959 = vmatprep.subr.mxu0 0.0
    %1960 = vmatpush1.msra.mxu0 %v1896
    %1961 = vmatprep.subr.mxu0 0.0
    %1962 = vmatpush1.msra.mxu0 %v1897
    %1963 = vmatprep.subr.mxu0 0.0
    %1964 = vmatpush1.msra.mxu0 %v1898
    %1965 = vmatprep.subr.mxu0 0.0
    %1966 = vmatpush1.msra.mxu0 %v1899
    %1967 = vmatprep.subr.mxu0 0.0
    %1968 = vmatpush1.msra.mxu0 %v1900
    %1969 = vmatprep.subr.mxu0 0.0
    %1970 = vmatpush1.msra.mxu0 %v1901
    %1971 = vmatprep.subr.mxu0 0.0
    %1972 = vmatpush1.msra.mxu0 %v1902
    %1973 = vmatprep.subr.mxu0 0.0
    %1974 = vmatpush1.msra.mxu0 %v1903
    %1975 = vmatprep.mubr.f32.mxu0 %v1870
    %1976 = vmatmul.mubr.f32.gmra.mrb[0].mxu0 %v963
    %v1977 = vpop.f32.mrb[0].mxu0
    %v1978 = vadd.f32 %v1909, %v1977
    %v1979 = vpop.f32.mrb[0].mxu0
    %1980 = vmatprep.mubr.f32.mxu0 %v1871
    %1981 = vmatmul.mubr.f32.gmra.mrb[0].mxu0 %v964
    %v1982 = vpop.f32.mrb[0].mxu0
    %v1983 = vadd.f32 %v1909, %v1982
    %v1984 = vpop.f32.mrb[0].mxu0
    %1985 = vdwg.mxu0
    %v1986 = vmax.f32 %v1978, 0.0
    %v1987 = vmax.f32 %v1983, 0.0
    %v1988 = vld [vmem:[#allocation17] sm:$0xff]
    %v1989 = vld [vmem:[#allocation17 + $0x8] sm:$0xff]
    %v1990 = vld [vmem:[#allocation17 + $0x10] sm:$0xff]
    %v1991 = vld [vmem:[#allocation17 + $0x18] sm:$0xff]
    %v1992 = vld [vmem:[#allocation17 + $0x20] sm:$0xff]
    %v1993 = vld [vmem:[#allocation17 + $0x28] sm:$0xff]
    %v1994 = vld [vmem:[#allocation17 + $0x30] sm:$0xff]
    %v1995 = vld [vmem:[#allocation17 + $0x38] sm:$0xff]
    %v1996 = vld [vmem:[#allocation18] sm:$0x1]
    %v1998 = vlaneseq
    %v1999 = vshrl.u32 %v1998, 7
    %v2000 = vsub.s32 0, %v1999
    %v2001 = vrot.slane %v1996, %v2000
    %vm2003 = vcmask 523264
    %v2005 = vsel %vm2003, %v1986, 0
    %v2008 = vsel %vm2003, %v1987, 0
    %2010 = vmatprep.subr.mxu0 0.0
    %2011 = vmatpush1.msra.mxu0 %v1988
    %2012 = vmatprep.subr.mxu0 0.0
    %2013 = vmatpush1.msra.mxu0 %v1989
    %2014 = vmatprep.subr.mxu0 0.0
    %2015 = vmatpush1.msra.mxu0 %v1990
    %2016 = vmatprep.subr.mxu0 0.0
    %2017 = vmatpush1.msra.mxu0 %v1991
    %2018 = vmatprep.subr.mxu0 0.0
    %2019 = vmatpush1.msra.mxu0 %v1992
    %2020 = vmatprep.subr.mxu0 0.0
    %2021 = vmatpush1.msra.mxu0 %v1993
    %2022 = vmatprep.subr.mxu0 0.0
    %2023 = vmatpush1.msra.mxu0 %v1994
    %2024 = vmatprep.subr.mxu0 0.0
    %2025 = vmatpush1.msra.mxu0 %v1995
    %2026 = vmatprep.subr.mxu0 0.0
    %2027 = vmatpush1.msra.mxu0 0.0
    %2028 = vmatprep.subr.mxu0 0.0
    %2029 = vmatpush1.msra.mxu0 0.0
    %2030 = vmatprep.subr.mxu0 0.0
    %2031 = vmatpush1.msra.mxu0 0.0
    %2032 = vmatprep.subr.mxu0 0.0
    %2033 = vmatpush1.msra.mxu0 0.0
    %2034 = vmatprep.subr.mxu0 0.0
    %2035 = vmatpush1.msra.mxu0 0.0
    %2036 = vmatprep.subr.mxu0 0.0
    %2037 = vmatpush1.msra.mxu0 0.0
    %2038 = vmatprep.subr.mxu0 0.0
    %2039 = vmatpush1.msra.mxu0 0.0
    %2040 = vmatprep.subr.mxu0 0.0
    %2041 = vmatpush1.msra.mxu0 0.0
    %2042 = vmatprep.subr.mxu0 0.0
    %2043 = vmatpush1.msra.mxu0 0.0
    %2044 = vmatprep.subr.mxu0 0.0
    %2045 = vmatpush1.msra.mxu0 0.0
    %2046 = vmatprep.subr.mxu0 0.0
    %2047 = vmatpush1.msra.mxu0 0.0
    %2048 = vmatprep.subr.mxu0 0.0
    %2049 = vmatpush1.msra.mxu0 0.0
    %2050 = vmatprep.subr.mxu0 0.0
    %2051 = vmatpush1.msra.mxu0 0.0
    %2052 = vmatprep.subr.mxu0 0.0
    %2053 = vmatpush1.msra.mxu0 0.0
    %2054 = vmatprep.subr.mxu0 0.0
    %2055 = vmatpush1.msra.mxu0 0.0
    %2056 = vmatprep.subr.mxu0 0.0
    %2057 = vmatpush1.msra.mxu0 0.0
    %2058 = vmatprep.subr.mxu0 0.0
    %2059 = vmatpush1.msra.mxu0 0.0
    %2060 = vmatprep.subr.mxu0 0.0
    %2061 = vmatpush1.msra.mxu0 0.0
    %2062 = vmatprep.subr.mxu0 0.0
    %2063 = vmatpush1.msra.mxu0 0.0
    %2064 = vmatprep.subr.mxu0 0.0
    %2065 = vmatpush1.msra.mxu0 0.0
    %2066 = vmatprep.subr.mxu0 0.0
    %2067 = vmatpush1.msra.mxu0 0.0
    %2068 = vmatprep.subr.mxu0 0.0
    %2069 = vmatpush1.msra.mxu0 0.0
    %2070 = vmatprep.subr.mxu0 0.0
    %2071 = vmatpush1.msra.mxu0 0.0
    %2072 = vmatprep.subr.mxu0 0.0
    %2073 = vmatpush1.msra.mxu0 0.0
    %2074 = vmatprep.mubr.f32.mxu0 0.0
    %2075 = vmatmul.mubr.f32.gmra.mrb[0].mxu0 %v2005
    %v2076 = vpop.f32.mrb[0].mxu0
    %v2077 = vadd.f32 %v2001, %v2076
    %v2078 = vpop.f32.mrb[0].mxu0
    %2079 = vmatprep.mubr.f32.mxu0 0.0
    %2080 = vmatmul.mubr.f32.gmra.mrb[0].mxu0 %v2008
    %v2081 = vpop.f32.mrb[0].mxu0
    %v2082 = vadd.f32 %v2001, %v2081
    %v2083 = vpop.f32.mrb[0].mxu0
    %2084 = vdwg.mxu0
    %vm2085 = vcmask 15360
    %v2086 = vsel %vm2085, %v2077, -inf
    %2087 = vmax.xlane.f32.xlu0 %v2086
    %v2088 = vpop.xlane.xlu0 %2087
    %v2089 = vsel %vm2085, %v2082, -inf
    %2090 = vmax.xlane.f32.xlu0 %v2089
    %v2091 = vpop.xlane.xlu0 %2090
    %v2092 = vsub.f32 %v2077, %v2088
    %v2093 = vsub.f32 %v2082, %v2091
    %v2094 = vmul.f32 %v2092, 1.442695
    %v2095 = vpow.pop %v2094
    %v2096 = vmul.f32 %v2093, 1.442695
    %v2097 = vpow.pop %v2096
    %v2098 = vsel %vm2085, %v2095, 0.0
    %2099 = vadd.xlane.f32.xlu0 %v2098
    %v2100 = vpop.xlane.xlu0 %2099
    %v2101 = vsel %vm2085, %v2097, 0.0
    %2102 = vadd.xlane.f32.xlu0 %v2101
    %v2103 = vpop.xlane.xlu0 %2102
    %v2104 = vrcp.pop %v2100
    %v2105 = vmul.f32 %v2095, %v2104
    %v2106 = vrcp.pop %v2103
    %v2107 = vmul.f32 %v2097, %v2106
    %2108 = vst.msk [vmem:[#allocation20] sm:$0xff] %vm2085, %v2105
    %2109 = vst.msk [vmem:[#allocation20 + $0x8] sm:$0xff] %vm2085, %v2107
    // Predicated region
    $region89: #{sarcasm_forward.5} parent=1 // pred_check
      _
    $region90: #{sarcasm_forward.5} parent=1 // pred_check_branch
      %2111 = sbr.rel (0) target = $region92
    $region91: #{sarcasm_forward.5} parent=1 // pred_region
      %s2113 = ssub.s32 256, 256
      %2114 = vsyncadd [#allocation5], %s2113
      %s2115 = sshll.u32 [#allocation20], 4
      %s2116 = int_to_ptr.vmem [resolvable:$true] %s2115
      %2121 = dma.vmem_to_hbm [thread:$0]  %s2116, 256, %s10, [#allocation5], 128, 128, 8
    $region92: #{sarcasm_forward.5} parent=1 // pred_fallthru
      _
    // Predicated region
    $region93: #{sarcasm_forward.5} parent=1 // pred_check
      _
    $region94: #{sarcasm_forward.5} parent=1 // pred_check_branch
      %2123 = sbr.rel (0) target = $region96
    $region95: #{sarcasm_forward.5} parent=1 // pred_region
      %2124 = dma.done [#allocation5], 256
    $region96: #{sarcasm_forward.5} parent=1 // pred_fallthru
      _
    %2125 = vsyncpa [#allocation4], 1
    %2126 = vsyncpa [#allocation7], 1
    %2127 = vsyncpa [#allocation10], 1
    %2128 = vsyncpa [#allocation13], 1
    %2129 = vsyncpa [#allocation16], 1
    %2130 = vsyncpa [#allocation19], 1
    %2131 = vsyncpa [#allocation5], 1

// kernel: sarcasm_forward.3
$region0: #{sarcasm_forward.3}
  #allocation0 [shape = 'u32[]', space=smem, size = 0x4, offset = 0x4, fixed_abs, tag = 'smem constant byte address 0x4 - core index']
  #allocation1 [shape = 'u32[144,128]{1,0:T(1,128)}', space=vmem, size = 0x12000, scoped, tag = 'internal scratch']
  %s0 = inlined_call_operand.hbm [shape: bf16[8,16,768], index: 0, kind: input, shape index: {}]
  %s1 = inlined_call_operand.hbm [shape: bf16[3,768,256], index: 1, kind: input, shape index: {}]
  %s2 = inlined_call_operand.hbm [shape: f32[1,1,256], index: 2, kind: input, shape index: {}]
  %s3 = inlined_call_operand.hbm [shape: bf16[8,16,256], index: 3, kind: output, shape index: {}]
  %s4 = sld [smem:[#allocation0]]
  $region34: #{sarcasm_forward.3} parent=0
    _
  %s6 = ssub.s32 1, %s4
  %s7 = scalar_select 0, %s6, %s4
  $region1: #{sarcasm_forward.3} parent=0
    #allocation2 [shape = 'u8[196608]{0}', space=vmem, size = 0x30000, scoped, tag = 'input window, operand 0, single buffered']
    #allocation3 [shape = 's32[1]{0}', space=sflag, size = 0x4, scoped, tag = 'scoped memory for sarcasm_forward.3']
    #allocation4 [shape = 's32[1]{0}', space=sflag, size = 0x4, scoped, tag = 'scoped memory for sarcasm_forward.3']
    #allocation5 [shape = 'u8[1179648]{0}', space=vmem, size = 0x120000, scoped, tag = 'input window, operand 1, single buffered']
    #allocation6 [shape = 's32[1]{0}', space=sflag, size = 0x4, scoped, tag = 'scoped memory for sarcasm_forward.3']
    #allocation7 [shape = 'u8[1024]{0}', space=vmem, size = 0x400, scoped, tag = 'input window, operand 2, single buffered']
    #allocation8 [shape = 'u8[65536]{0}', space=vmem, size = 0x10000, scoped, tag = 'output window, operand 0, single buffered']
    %8 = vsyncpa [#allocation3], 0
    %9 = vsyncpa [#allocation6], 0
    %10 = vsyncpa [#allocation4], 0
    // Predicated region
    $region2: #{sarcasm_forward.3} parent=1 // pred_check
      _
    $region3: #{sarcasm_forward.3} parent=1 // pred_check_branch
      %12 = sbr.rel (0) target = $region5
    $region4: #{sarcasm_forward.3} parent=1 // pred_region
      %s14 = ssub.s32 6144, 6144
      %15 = vsyncadd [#allocation3], %s14
      %s16 = sshll.u32 [#allocation2], 4
      %s17 = int_to_ptr.vmem [resolvable:$true] %s16
      %22 = dma.hbm_to_vmem [thread:$0]  %s0, 6144, %s17, [#allocation3], 384, 384, 24
    $region5: #{sarcasm_forward.3} parent=1 // pred_fallthru
      _
    // Predicated region
    $region6: #{sarcasm_forward.3} parent=1 // pred_check
      _
    $region7: #{sarcasm_forward.3} parent=1 // pred_check_branch
      %24 = sbr.rel (0) target = $region9
    $region8: #{sarcasm_forward.3} parent=1 // pred_region
      %s26 = ssub.s32 36864, 36864
      %27 = vsyncadd [#allocation6], %s26
      %s28 = sshll.u32 [#allocation5], 4
      %s29 = int_to_ptr.vmem [resolvable:$true] %s28
      %34 = dma.hbm_to_vmem [thread:$0]  %s1, 36864, %s29, [#allocation6], 128, 128, 8
    $region9: #{sarcasm_forward.3} parent=1 // pred_fallthru
      _
    // Predicated region
    $region10: #{sarcasm_forward.3} parent=1 // pred_check
      _
    $region11: #{sarcasm_forward.3} parent=1 // pred_check_branch
      %36 = sbr.rel (0) target = $region13
    $region12: #{sarcasm_forward.3} parent=1 // pred_region
      %s38 = ssub.s32 32, 32
      %39 = vsyncadd [#allocation6], %s38
      %s41 = sshll.u32 [#allocation7], 4
      %s42 = int_to_ptr.vmem [resolvable:$true] %s41
      %44 = dma.hbm_to_vmem [thread:$0]  %s2, 32, %s42, [#allocation6]
    $region13: #{sarcasm_forward.3} parent=1 // pred_fallthru
      _
    // Predicated region
    $region14: #{sarcasm_forward.3} parent=1 // pred_check
      _
    $region15: #{sarcasm_forward.3} parent=1 // pred_check_branch
      %46 = sbr.rel (0) target = $region17
    $region16: #{sarcasm_forward.3} parent=1 // pred_region
      %47 = dma.done [#allocation3], 6144
    $region17: #{sarcasm_forward.3} parent=1 // pred_fallthru
      _
    // Predicated region
    $region18: #{sarcasm_forward.3} parent=1 // pred_check
      _
    $region19: #{sarcasm_forward.3} parent=1 // pred_check_branch
      %49 = sbr.rel (0) target = $region21
    $region20: #{sarcasm_forward.3} parent=1 // pred_region
      %50 = dma.done [#allocation6], 36864
    $region21: #{sarcasm_forward.3} parent=1 // pred_fallthru
      _
    // Predicated region
    $region22: #{sarcasm_forward.3} parent=1 // pred_check
      _
    $region23: #{sarcasm_forward.3} parent=1 // pred_check_branch
      %52 = sbr.rel (0) target = $region25
    $region24: #{sarcasm_forward.3} parent=1 // pred_region
      %53 = dma.done [#allocation6], 32
    $region25: #{sarcasm_forward.3} parent=1 // pred_fallthru
      _
    %v54 = vld [vmem:[#allocation2] sm:$0xff]
    %v55 = vld [vmem:[#allocation2 + $0x8] sm:$0xff]
    %v56 = vld [vmem:[#allocation2 + $0x10] sm:$0xff]
    %v57 = vld [vmem:[#allocation2 + $0x18] sm:$0xff]
    %v58 = vld [vmem:[#allocation2 + $0x20] sm:$0xff]
    %v59 = vld [vmem:[#allocation2 + $0x28] sm:$0xff]
    %v60 = vld [vmem:[#allocation2 + $0x30] sm:$0xff]
    %v61 = vld [vmem:[#allocation2 + $0x38] sm:$0xff]
    %v62 = vld [vmem:[#allocation2 + $0x40] sm:$0xff]
    %v63 = vld [vmem:[#allocation2 + $0x48] sm:$0xff]
    %v64 = vld [vmem:[#allocation2 + $0x50] sm:$0xff]
    %v65 = vld [vmem:[#allocation2 + $0x58] sm:$0xff]
    %v66 = vld [vmem:[#allocation2 + $0x60] sm:$0xff]
    %v67 = vld [vmem:[#allocation2 + $0x68] sm:$0xff]
    %v68 = vld [vmem:[#allocation2 + $0x70] sm:$0xff]
    %v69 = vld [vmem:[#allocation2 + $0x78] sm:$0xff]
    %v70 = vld [vmem:[#allocation2 + $0x80] sm:$0xff]
    %v71 = vld [vmem:[#allocation2 + $0x88] sm:$0xff]
    %v72 = vld [vmem:[#allocation2 + $0x90] sm:$0xff]
    %v73 = vld [vmem:[#allocation2 + $0x98] sm:$0xff]
    %v74 = vld [vmem:[#allocation2 + $0xa0] sm:$0xff]
    %v75 = vld [vmem:[#allocation2 + $0xa8] sm:$0xff]
    %v76 = vld [vmem:[#allocation2 + $0xb0] sm:$0xff]
    %v77 = vld [vmem:[#allocation2 + $0xb8] sm:$0xff]
    %v78 = vld [vmem:[#allocation2 + $0xc0] sm:$0xff]
    %v79 = vld [vmem:[#allocation2 + $0xc8] sm:$0xff]
    %v80 = vld [vmem:[#allocation2 + $0xd0] sm:$0xff]
    %v81 = vld [vmem:[#allocation2 + $0xd8] sm:$0xff]
    %v82 = vld [vmem:[#allocation2 + $0xe0] sm:$0xff]
    %v83 = vld [vmem:[#allocation2 + $0xe8] sm:$0xff]
    %v84 = vld [vmem:[#allocation2 + $0xf0] sm:$0xff]
    %v85 = vld [vmem:[#allocation2 + $0xf8] sm:$0xff]
    %v86 = vld [vmem:[#allocation2 + $0x100] sm:$0xff]
    %v87 = vld [vmem:[#allocation2 + $0x108] sm:$0xff]
    %v88 = vld [vmem:[#allocation2 + $0x110] sm:$0xff]
    %v89 = vld [vmem:[#allocation2 + $0x118] sm:$0xff]
    %v90 = vld [vmem:[#allocation2 + $0x120] sm:$0xff]
    %v91 = vld [vmem:[#allocation2 + $0x128] sm:$0xff]
    %v92 = vld [vmem:[#allocation2 + $0x130] sm:$0xff]
    %v93 = vld [vmem:[#allocation2 + $0x138] sm:$0xff]
    %v94 = vld [vmem:[#allocation2 + $0x140] sm:$0xff]
    %v95 = vld [vmem:[#allocation2 + $0x148] sm:$0xff]
    %v96 = vld [vmem:[#allocation2 + $0x150] sm:$0xff]
    %v97 = vld [vmem:[#allocation2 + $0x158] sm:$0xff]
    %v98 = vld [vmem:[#allocation2 + $0x160] sm:$0xff]
    %v99 = vld [vmem:[#allocation2 + $0x168] sm:$0xff]
    %v100 = vld [vmem:[#allocation2 + $0x170] sm:$0xff]
    %v101 = vld [vmem:[#allocation2 + $0x178] sm:$0xff]
    %s102 = scalar_lea.vmem [#allocation5], 768
    %v103 = vld [vmem:[%s102] sm:$0xff]
    %v104 = vld [vmem:[%s102 + $0x8] sm:$0xff]
    %v105 = vld [vmem:[%s102 + $0x10] sm:$0xff]
    %v106 = vld [vmem:[%s102 + $0x18] sm:$0xff]
    %v107 = vld [vmem:[%s102 + $0x20] sm:$0xff]
    %v108 = vld [vmem:[%s102 + $0x28] sm:$0xff]
    %v109 = vld [vmem:[%s102 + $0x30] sm:$0xff]
    %v110 = vld [vmem:[%s102 + $0x38] sm:$0xff]
    %v111 = vld [vmem:[%s102 + $0x40] sm:$0xff]
    %v112 = vld [vmem:[%s102 + $0x48] sm:$0xff]
    %v113 = vld [vmem:[%s102 + $0x50] sm:$0xff]
    %v114 = vld [vmem:[%s102 + $0x58] sm:$0xff]
    %v115 = vld [vmem:[%s102 + $0x60] sm:$0xff]
    %v116 = vld [vmem:[%s102 + $0x68] sm:$0xff]
    %v117 = vld [vmem:[%s102 + $0x70] sm:$0xff]
    %v118 = vld [vmem:[%s102 + $0x78] sm:$0xff]
    %v119 = vld [vmem:[%s102 + $0x80] sm:$0xff]
    %v120 = vld [vmem:[%s102 + $0x88] sm:$0xff]
    %v121 = vld [vmem:[%s102 + $0x90] sm:$0xff]
    %v122 = vld [vmem:[%s102 + $0x98] sm:$0xff]
    %v123 = vld [vmem:[%s102 + $0xa0] sm:$0xff]
    %v124 = vld [vmem:[%s102 + $0xa8] sm:$0xff]
    %v125 = vld [vmem:[%s102 + $0xb0] sm:$0xff]
    %v126 = vld [vmem:[%s102 + $0xb8] sm:$0xff]
    %v127 = vld [vmem:[%s102 + $0xc0] sm:$0xff]
    %v128 = vld [vmem:[%s102 + $0xc8] sm:$0xff]
    %v129 = vld [vmem:[%s102 + $0xd0] sm:$0xff]
    %v130 = vld [vmem:[%s102 + $0xd8] sm:$0xff]
    %v131 = vld [vmem:[%s102 + $0xe0] sm:$0xff]
    %v132 = vld [vmem:[%s102 + $0xe8] sm:$0xff]
    %v133 = vld [vmem:[%s102 + $0xf0] sm:$0xff]
    %v134 = vld [vmem:[%s102 + $0xf8] sm:$0xff]
    %v135 = vld [vmem:[%s102 + $0x100] sm:$0xff]
    %v136 = vld [vmem:[%s102 + $0x108] sm:$0xff]
    %v137 = vld [vmem:[%s102 + $0x110] sm:$0xff]
    %v138 = vld [vmem:[%s102 + $0x118] sm:$0xff]
    %v139 = vld [vmem:[%s102 + $0x120] sm:$0xff]
    %v140 = vld [vmem:[%s102 + $0x128] sm:$0xff]
    %v141 = vld [vmem:[%s102 + $0x130] sm:$0xff]
    %v142 = vld [vmem:[%s102 + $0x138] sm:$0xff]
    %v143 = vld [vmem:[%s102 + $0x140] sm:$0xff]
    %v144 = vld [vmem:[%s102 + $0x148] sm:$0xff]
    %v145 = vld [vmem:[%s102 + $0x150] sm:$0xff]
    %v146 = vld [vmem:[%s102 + $0x158] sm:$0xff]
    %v147 = vld [vmem:[%s102 + $0x160] sm:$0xff]
    %v148 = vld [vmem:[%s102 + $0x168] sm:$0xff]
    %v149 = vld [vmem:[%s102 + $0x170] sm:$0xff]
    %v150 = vld [vmem:[%s102 + $0x178] sm:$0xff]
    %v151 = vld [vmem:[%s102 + $0x180] sm:$0xff]
    %v152 = vld [vmem:[%s102 + $0x188] sm:$0xff]
    %v153 = vld [vmem:[%s102 + $0x190] sm:$0xff]
    %v154 = vld [vmem:[%s102 + $0x198] sm:$0xff]
    %v155 = vld [vmem:[%s102 + $0x1a0] sm:$0xff]
    %v156 = vld [vmem:[%s102 + $0x1a8] sm:$0xff]
    %v157 = vld [vmem:[%s102 + $0x1b0] sm:$0xff]
    %v158 = vld [vmem:[%s102 + $0x1b8] sm:$0xff]
    %v159 = vld [vmem:[%s102 + $0x1c0] sm:$0xff]
    %v160 = vld [vmem:[%s102 + $0x1c8] sm:$0xff]
    %v161 = vld [vmem:[%s102 + $0x1d0] sm:$0xff]
    %v162 = vld [vmem:[%s102 + $0x1d8] sm:$0xff]
    %v163 = vld [vmem:[%s102 + $0x1e0] sm:$0xff]
    %v164 = vld [vmem:[%s102 + $0x1e8] sm:$0xff]
    %v165 = vld [vmem:[%s102 + $0x1f0] sm:$0xff]
    %v166 = vld [vmem:[%s102 + $0x1f8] sm:$0xff]
    %v167 = vld [vmem:[%s102 + $0x200] sm:$0xff]
    %v168 = vld [vmem:[%s102 + $0x208] sm:$0xff]
    %v169 = vld [vmem:[%s102 + $0x210] sm:$0xff]
    %v170 = vld [vmem:[%s102 + $0x218] sm:$0xff]
    %v171 = vld [vmem:[%s102 + $0x220] sm:$0xff]
    %v172 = vld [vmem:[%s102 + $0x228] sm:$0xff]
    %v173 = vld [vmem:[%s102 + $0x230] sm:$0xff]
    %v174 = vld [vmem:[%s102 + $0x238] sm:$0xff]
    %v175 = vld [vmem:[%s102 + $0x240] sm:$0xff]
    %v176 = vld [vmem:[%s102 + $0x248] sm:$0xff]
    %v177 = vld [vmem:[%s102 + $0x250] sm:$0xff]
    %v178 = vld [vmem:[%s102 + $0x258] sm:$0xff]
    %v179 = vld [vmem:[%s102 + $0x260] sm:$0xff]
    %v180 = vld [vmem:[%s102 + $0x268] sm:$0xff]
    %v181 = vld [vmem:[%s102 + $0x270] sm:$0xff]
    %v182 = vld [vmem:[%s102 + $0x278] sm:$0xff]
    %v183 = vld [vmem:[%s102 + $0x280] sm:$0xff]
    %v184 = vld [vmem:[%s102 + $0x288] sm:$0xff]
    %v185 = vld [vmem:[%s102 + $0x290] sm:$0xff]
    %v186 = vld [vmem:[%s102 + $0x298] sm:$0xff]
    %v187 = vld [vmem:[%s102 + $0x2a0] sm:$0xff]
    %v188 = vld [vmem:[%s102 + $0x2a8] sm:$0xff]
    %v189 = vld [vmem:[%s102 + $0x2b0] sm:$0xff]
    %v190 = vld [vmem:[%s102 + $0x2b8] sm:$0xff]
    %v191 = vld [vmem:[%s102 + $0x2c0] sm:$0xff]
    %v192 = vld [vmem:[%s102 + $0x2c8] sm:$0xff]
    %v193 = vld [vmem:[%s102 + $0x2d0] sm:$0xff]
    %v194 = vld [vmem:[%s102 + $0x2d8] sm:$0xff]
    %v195 = vld [vmem:[%s102 + $0x2e0] sm:$0xff]
    %v196 = vld [vmem:[%s102 + $0x2e8] sm:$0xff]
    %v197 = vld [vmem:[%s102 + $0x2f0] sm:$0xff]
    %v198 = vld [vmem:[%s102 + $0x2f8] sm:$0xff]
    %v199 = vld [vmem:[#allocation7] sm:$0x3]
    %v201 = vlaneseq
    %v202 = vshrl.u32 %v201, 7
    %v203 = vsub.s32 0, %v202
    %v204 = vrot.slane %v199, %v203
    %v205 = vlaneseq
    %v206 = vshrl.u32 %v205, 7
    %v207 = vsub.s32 1, %v206
    %v208 = vrot.slane %v199, %v207
    %v259 = vunpack.c.l.b16 %v54
    %v260 = vunpack.c.h.b16 %v54
    %v261 = vunpack.c.l.b16 %v55
    %v262 = vunpack.c.h.b16 %v55
    %v263 = vunpack.c.l.b16 %v56
    %v264 = vunpack.c.h.b16 %v56
    %v265 = vunpack.c.l.b16 %v57
    %v266 = vunpack.c.h.b16 %v57
    %v267 = vunpack.c.l.b16 %v58
    %v268 = vunpack.c.h.b16 %v58
    %v269 = vunpack.c.l.b16 %v59
    %v270 = vunpack.c.h.b16 %v59
    %v271 = vunpack.c.l.b16 %v60
    %v272 = vunpack.c.h.b16 %v60
    %v273 = vunpack.c.l.b16 %v61
    %v274 = vunpack.c.h.b16 %v61
    %v275 = vunpack.c.l.b16 %v62
    %v276 = vunpack.c.h.b16 %v62
    %v277 = vunpack.c.l.b16 %v63
    %v278 = vunpack.c.h.b16 %v63
    %v279 = vunpack.c.l.b16 %v64
    %v280 = vunpack.c.h.b16 %v64
    %v281 = vunpack.c.l.b16 %v65
    %v282 = vunpack.c.h.b16 %v65
    %v283 = vunpack.c.l.b16 %v66
    %v284 = vunpack.c.h.b16 %v66
    %v285 = vunpack.c.l.b16 %v67
    %v286 = vunpack.c.h.b16 %v67
    %v287 = vunpack.c.l.b16 %v68
    %v288 = vunpack.c.h.b16 %v68
    %v289 = vunpack.c.l.b16 %v69
    %v290 = vunpack.c.h.b16 %v69
    %v291 = vunpack.c.l.b16 %v70
    %v292 = vunpack.c.h.b16 %v70
    %v293 = vunpack.c.l.b16 %v71
    %v294 = vunpack.c.h.b16 %v71
    %v295 = vunpack.c.l.b16 %v72
    %v296 = vunpack.c.h.b16 %v72
    %v297 = vunpack.c.l.b16 %v73
    %v298 = vunpack.c.h.b16 %v73
    %v299 = vunpack.c.l.b16 %v74
    %v300 = vunpack.c.h.b16 %v74
    %v301 = vunpack.c.l.b16 %v75
    %v302 = vunpack.c.h.b16 %v75
    %v303 = vunpack.c.l.b16 %v76
    %v304 = vunpack.c.h.b16 %v76
    %v305 = vunpack.c.l.b16 %v77
    %v306 = vunpack.c.h.b16 %v77
    %v307 = vunpack.c.l.b16 %v78
    %v308 = vunpack.c.h.b16 %v78
    %v309 = vunpack.c.l.b16 %v79
    %v310 = vunpack.c.h.b16 %v79
    %v311 = vunpack.c.l.b16 %v80
    %v312 = vunpack.c.h.b16 %v80
    %v313 = vunpack.c.l.b16 %v81
    %v314 = vunpack.c.h.b16 %v81
    %v315 = vunpack.c.l.b16 %v82
    %v316 = vunpack.c.h.b16 %v82
    %v317 = vunpack.c.l.b16 %v83
    %v318 = vunpack.c.h.b16 %v83
    %v319 = vunpack.c.l.b16 %v84
    %v320 = vunpack.c.h.b16 %v84
    %v321 = vunpack.c.l.b16 %v85
    %v322 = vunpack.c.h.b16 %v85
    %v323 = vunpack.c.l.b16 %v86
    %v324 = vunpack.c.h.b16 %v86
    %v325 = vunpack.c.l.b16 %v87
    %v326 = vunpack.c.h.b16 %v87
    %v327 = vunpack.c.l.b16 %v88
    %v328 = vunpack.c.h.b16 %v88
    %v329 = vunpack.c.l.b16 %v89
    %v330 = vunpack.c.h.b16 %v89
    %v331 = vunpack.c.l.b16 %v90
    %v332 = vunpack.c.h.b16 %v90
    %v333 = vunpack.c.l.b16 %v91
    %v334 = vunpack.c.h.b16 %v91
    %v335 = vunpack.c.l.b16 %v92
    %v336 = vunpack.c.h.b16 %v92
    %v337 = vunpack.c.l.b16 %v93
    %v338 = vunpack.c.h.b16 %v93
    %v339 = vunpack.c.l.b16 %v94
    %v340 = vunpack.c.h.b16 %v94
    %v341 = vunpack.c.l.b16 %v95
    %v342 = vunpack.c.h.b16 %v95
    %v343 = vunpack.c.l.b16 %v96
    %v344 = vunpack.c.h.b16 %v96
    %v345 = vunpack.c.l.b16 %v97
    %v346 = vunpack.c.h.b16 %v97
    %v347 = vunpack.c.l.b16 %v98
    %v348 = vunpack.c.h.b16 %v98
    %v349 = vunpack.c.l.b16 %v99
    %v350 = vunpack.c.h.b16 %v99
    %v351 = vunpack.c.l.b16 %v100
    %v352 = vunpack.c.h.b16 %v100
    %v353 = vunpack.c.l.b16 %v101
    %v354 = vunpack.c.h.b16 %v101
    %v355 = vpack.c.b16 %v265, %v259
    %v356 = vpack.c.b16 %v266, %v260
    %v357 = vpack.c.b16 %v267, %v261
    %v358 = vpack.c.b16 %v268, %v262
    %v359 = vpack.c.b16 %v269, %v263
    %v360 = vpack.c.b16 %v270, %v264
    %v361 = vpack.c.b16 %v277, %v271
    %v362 = vpack.c.b16 %v278, %v272
    %v363 = vpack.c.b16 %v279, %v273
    %v364 = vpack.c.b16 %v280, %v274
    %v365 = vpack.c.b16 %v281, %v275
    %v366 = vpack.c.b16 %v282, %v276
    %v367 = vpack.c.b16 %v289, %v283
    %v368 = vpack.c.b16 %v290, %v284
    %v369 = vpack.c.b16 %v291, %v285
    %v370 = vpack.c.b16 %v292, %v286
    %v371 = vpack.c.b16 %v293, %v287
    %v372 = vpack.c.b16 %v294, %v288
    %v373 = vpack.c.b16 %v301, %v295
    %v374 = vpack.c.b16 %v302, %v296
    %v375 = vpack.c.b16 %v303, %v297
    %v376 = vpack.c.b16 %v304, %v298
    %v377 = vpack.c.b16 %v305, %v299
    %v378 = vpack.c.b16 %v306, %v300
    %v379 = vpack.c.b16 %v313, %v307
    %v380 = vpack.c.b16 %v314, %v308
    %v381 = vpack.c.b16 %v315, %v309
    %v382 = vpack.c.b16 %v316, %v310
    %v383 = vpack.c.b16 %v317, %v311
    %v384 = vpack.c.b16 %v318, %v312
    %v385 = vpack.c.b16 %v325, %v319
    %v386 = vpack.c.b16 %v326, %v320
    %v387 = vpack.c.b16 %v327, %v321
    %v388 = vpack.c.b16 %v328, %v322
    %v389 = vpack.c.b16 %v329, %v323
    %v390 = vpack.c.b16 %v330, %v324
    %v391 = vpack.c.b16 %v337, %v331
    %v392 = vpack.c.b16 %v338, %v332
    %v393 = vpack.c.b16 %v339, %v333
    %v394 = vpack.c.b16 %v340, %v334
    %v395 = vpack.c.b16 %v341, %v335
    %v396 = vpack.c.b16 %v342, %v336
    %v397 = vpack.c.b16 %v349, %v343
    %v398 = vpack.c.b16 %v350, %v344
    %v399 = vpack.c.b16 %v351, %v345
    %v400 = vpack.c.b16 %v352, %v346
    %v401 = vpack.c.b16 %v353, %v347
    %v402 = vpack.c.b16 %v354, %v348
    %v547 = vunpack.c.l.b16 %v103
    %v548 = vunpack.c.h.b16 %v103
    %v549 = vunpack.c.l.b16 %v104
    %v550 = vunpack.c.h.b16 %v104
    %v551 = vunpack.c.l.b16 %v105
    %v552 = vunpack.c.h.b16 %v105
    %v553 = vunpack.c.l.b16 %v106
    %v554 = vunpack.c.h.b16 %v106
    %v555 = vunpack.c.l.b16 %v107
    %v556 = vunpack.c.h.b16 %v107
    %v557 = vunpack.c.l.b16 %v108
    %v558 = vunpack.c.h.b16 %v108
    %v559 = vunpack.c.l.b16 %v109
    %v560 = vunpack.c.h.b16 %v109
    %v561 = vunpack.c.l.b16 %v110
    %v562 = vunpack.c.h.b16 %v110
    %v563 = vunpack.c.l.b16 %v111
    %v564 = vunpack.c.h.b16 %v111
    %v565 = vunpack.c.l.b16 %v112
    %v566 = vunpack.c.h.b16 %v112
    %v567 = vunpack.c.l.b16 %v113
    %v568 = vunpack.c.h.b16 %v113
    %v569 = vunpack.c.l.b16 %v114
    %v570 = vunpack.c.h.b16 %v114
    %v571 = vunpack.c.l.b16 %v115
    %v572 = vunpack.c.h.b16 %v115
    %v573 = vunpack.c.l.b16 %v116
    %v574 = vunpack.c.h.b16 %v116
    %v575 = vunpack.c.l.b16 %v117
    %v576 = vunpack.c.h.b16 %v117
    %v577 = vunpack.c.l.b16 %v118
    %v578 = vunpack.c.h.b16 %v118
    %v579 = vunpack.c.l.b16 %v119
    %v580 = vunpack.c.h.b16 %v119
    %v581 = vunpack.c.l.b16 %v120
    %v582 = vunpack.c.h.b16 %v120
    %v583 = vunpack.c.l.b16 %v121
    %v584 = vunpack.c.h.b16 %v121
    %v585 = vunpack.c.l.b16 %v122
    %v586 = vunpack.c.h.b16 %v122
    %v587 = vunpack.c.l.b16 %v123
    %v588 = vunpack.c.h.b16 %v123
    %v589 = vunpack.c.l.b16 %v124
    %v590 = vunpack.c.h.b16 %v124
    %v591 = vunpack.c.l.b16 %v125
    %v592 = vunpack.c.h.b16 %v125
    %v593 = vunpack.c.l.b16 %v126
    %v594 = vunpack.c.h.b16 %v126
    %v595 = vunpack.c.l.b16 %v127
    %v596 = vunpack.c.h.b16 %v127
    %v597 = vunpack.c.l.b16 %v128
    %v598 = vunpack.c.h.b16 %v128
    %v599 = vunpack.c.l.b16 %v129
    %v600 = vunpack.c.h.b16 %v129
    %v601 = vunpack.c.l.b16 %v130
    %v602 = vunpack.c.h.b16 %v130
    %v603 = vunpack.c.l.b16 %v131
    %v604 = vunpack.c.h.b16 %v131
    %v605 = vunpack.c.l.b16 %v132
    %v606 = vunpack.c.h.b16 %v132
    %v607 = vunpack.c.l.b16 %v133
    %v608 = vunpack.c.h.b16 %v133
    %v609 = vunpack.c.l.b16 %v134
    %v610 = vunpack.c.h.b16 %v134
    %v611 = vunpack.c.l.b16 %v135
    %v612 = vunpack.c.h.b16 %v135
    %v613 = vunpack.c.l.b16 %v136
    %v614 = vunpack.c.h.b16 %v136
    %v615 = vunpack.c.l.b16 %v137
    %v616 = vunpack.c.h.b16 %v137
    %v617 = vunpack.c.l.b16 %v138
    %v618 = vunpack.c.h.b16 %v138
    %v619 = vunpack.c.l.b16 %v139
    %v620 = vunpack.c.h.b16 %v139
    %v621 = vunpack.c.l.b16 %v140
    %v622 = vunpack.c.h.b16 %v140
    %v623 = vunpack.c.l.b16 %v141
    %v624 = vunpack.c.h.b16 %v141
    %v625 = vunpack.c.l.b16 %v142
    %v626 = vunpack.c.h.b16 %v142
    %v627 = vunpack.c.l.b16 %v143
    %v628 = vunpack.c.h.b16 %v143
    %v629 = vunpack.c.l.b16 %v144
    %v630 = vunpack.c.h.b16 %v144
    %v631 = vunpack.c.l.b16 %v145
    %v632 = vunpack.c.h.b16 %v145
    %v633 = vunpack.c.l.b16 %v146
    %v634 = vunpack.c.h.b16 %v146
    %v635 = vunpack.c.l.b16 %v147
    %v636 = vunpack.c.h.b16 %v147
    %v637 = vunpack.c.l.b16 %v148
    %v638 = vunpack.c.h.b16 %v148
    %v639 = vunpack.c.l.b16 %v149
    %v640 = vunpack.c.h.b16 %v149
    %v641 = vunpack.c.l.b16 %v150
    %v642 = vunpack.c.h.b16 %v150
    %v643 = vunpack.c.l.b16 %v151
    %v644 = vunpack.c.h.b16 %v151
    %v645 = vunpack.c.l.b16 %v152
    %v646 = vunpack.c.h.b16 %v152
    %v647 = vunpack.c.l.b16 %v153
    %v648 = vunpack.c.h.b16 %v153
    %v649 = vunpack.c.l.b16 %v154
    %v650 = vunpack.c.h.b16 %v154
    %v651 = vunpack.c.l.b16 %v155
    %v652 = vunpack.c.h.b16 %v155
    %v653 = vunpack.c.l.b16 %v156
    %v654 = vunpack.c.h.b16 %v156
    %v655 = vunpack.c.l.b16 %v157
    %v656 = vunpack.c.h.b16 %v157
    %v657 = vunpack.c.l.b16 %v158
    %v658 = vunpack.c.h.b16 %v158
    %v659 = vunpack.c.l.b16 %v159
    %v660 = vunpack.c.h.b16 %v159
    %v661 = vunpack.c.l.b16 %v160
    %v662 = vunpack.c.h.b16 %v160
    %v663 = vunpack.c.l.b16 %v161
    %v664 = vunpack.c.h.b16 %v161
    %v665 = vunpack.c.l.b16 %v162
    %v666 = vunpack.c.h.b16 %v162
    %v667 = vunpack.c.l.b16 %v163
    %v668 = vunpack.c.h.b16 %v163
    %v669 = vunpack.c.l.b16 %v164
    %v670 = vunpack.c.h.b16 %v164
    %v671 = vunpack.c.l.b16 %v165
    %v672 = vunpack.c.h.b16 %v165
    %v673 = vunpack.c.l.b16 %v166
    %v674 = vunpack.c.h.b16 %v166
    %v675 = vunpack.c.l.b16 %v167
    %v676 = vunpack.c.h.b16 %v167
    %v677 = vunpack.c.l.b16 %v168
    %v678 = vunpack.c.h.b16 %v168
    %v679 = vunpack.c.l.b16 %v169
    %v680 = vunpack.c.h.b16 %v169
    %v681 = vunpack.c.l.b16 %v170
    %v682 = vunpack.c.h.b16 %v170
    %v683 = vunpack.c.l.b16 %v171
    %v684 = vunpack.c.h.b16 %v171
    %v685 = vunpack.c.l.b16 %v172
    %v686 = vunpack.c.h.b16 %v172
    %v687 = vunpack.c.l.b16 %v173
    %v688 = vunpack.c.h.b16 %v173
    %v689 = vunpack.c.l.b16 %v174
    %v690 = vunpack.c.h.b16 %v174
    %v691 = vunpack.c.l.b16 %v175
    %v692 = vunpack.c.h.b16 %v175
    %v693 = vunpack.c.l.b16 %v176
    %v694 = vunpack.c.h.b16 %v176
    %v695 = vunpack.c.l.b16 %v177
    %v696 = vunpack.c.h.b16 %v177
    %v697 = vunpack.c.l.b16 %v178
    %v698 = vunpack.c.h.b16 %v178
    %v699 = vunpack.c.l.b16 %v179
    %v700 = vunpack.c.h.b16 %v179
    %v701 = vunpack.c.l.b16 %v180
    %v702 = vunpack.c.h.b16 %v180
    %v703 = vunpack.c.l.b16 %v181
    %v704 = vunpack.c.h.b16 %v181
    %v705 = vunpack.c.l.b16 %v182
    %v706 = vunpack.c.h.b16 %v182
    %v707 = vunpack.c.l.b16 %v183
    %v708 = vunpack.c.h.b16 %v183
    %v709 = vunpack.c.l.b16 %v184
    %v710 = vunpack.c.h.b16 %v184
    %v711 = vunpack.c.l.b16 %v185
    %v712 = vunpack.c.h.b16 %v185
    %v713 = vunpack.c.l.b16 %v186
    %v714 = vunpack.c.h.b16 %v186
    %v715 = vunpack.c.l.b16 %v187
    %v716 = vunpack.c.h.b16 %v187
    %v717 = vunpack.c.l.b16 %v188
    %v718 = vunpack.c.h.b16 %v188
    %v719 = vunpack.c.l.b16 %v189
    %v720 = vunpack.c.h.b16 %v189
    %v721 = vunpack.c.l.b16 %v190
    %v722 = vunpack.c.h.b16 %v190
    %v723 = vunpack.c.l.b16 %v191
    %v724 = vunpack.c.h.b16 %v191
    %v725 = vunpack.c.l.b16 %v192
    %v726 = vunpack.c.h.b16 %v192
    %v727 = vunpack.c.l.b16 %v193
    %v728 = vunpack.c.h.b16 %v193
    %v729 = vunpack.c.l.b16 %v194
    %v730 = vunpack.c.h.b16 %v194
    %v731 = vunpack.c.l.b16 %v195
    %v732 = vunpack.c.h.b16 %v195
    %v733 = vunpack.c.l.b16 %v196
    %v734 = vunpack.c.h.b16 %v196
    %v735 = vunpack.c.l.b16 %v197
    %v736 = vunpack.c.h.b16 %v197
    %v737 = vunpack.c.l.b16 %v198
    %v738 = vunpack.c.h.b16 %v198
    %v739 = vpack.c.b16 %v549, %v547
    %v740 = vpack.c.b16 %v550, %v548
    %v741 = vpack.c.b16 %v553, %v551
    %v742 = vpack.c.b16 %v554, %v552
    %v743 = vpack.c.b16 %v557, %v555
    %v744 = vpack.c.b16 %v558, %v556
    %v745 = vpack.c.b16 %v561, %v559
    %v746 = vpack.c.b16 %v562, %v560
    %v747 = vpack.c.b16 %v565, %v563
    %v748 = vpack.c.b16 %v566, %v564
    %v749 = vpack.c.b16 %v569, %v567
    %v750 = vpack.c.b16 %v570, %v568
    %v751 = vpack.c.b16 %v573, %v571
    %v752 = vpack.c.b16 %v574, %v572
    %v753 = vpack.c.b16 %v577, %v575
    %v754 = vpack.c.b16 %v578, %v576
    %v755 = vpack.c.b16 %v581, %v579
    %v756 = vpack.c.b16 %v582, %v580
    %v757 = vpack.c.b16 %v585, %v583
    %v758 = vpack.c.b16 %v586, %v584
    %v759 = vpack.c.b16 %v589, %v587
    %v760 = vpack.c.b16 %v590, %v588
    %v761 = vpack.c.b16 %v593, %v591
    %v762 = vpack.c.b16 %v594, %v592
    %v763 = vpack.c.b16 %v597, %v595
    %v764 = vpack.c.b16 %v598, %v596
    %v765 = vpack.c.b16 %v601, %v599
    %v766 = vpack.c.b16 %v602, %v600
    %v767 = vpack.c.b16 %v605, %v603
    %v768 = vpack.c.b16 %v606, %v604
    %v769 = vpack.c.b16 %v609, %v607
    %v770 = vpack.c.b16 %v610, %v608
    %v771 = vpack.c.b16 %v613, %v611
    %v772 = vpack.c.b16 %v614, %v612
    %v773 = vpack.c.b16 %v617, %v615
    %v774 = vpack.c.b16 %v618, %v616
    %v775 = vpack.c.b16 %v621, %v619
    %v776 = vpack.c.b16 %v622, %v620
    %v777 = vpack.c.b16 %v625, %v623
    %v778 = vpack.c.b16 %v626, %v624
    %v779 = vpack.c.b16 %v629, %v627
    %v780 = vpack.c.b16 %v630, %v628
    %v781 = vpack.c.b16 %v633, %v631
    %v782 = vpack.c.b16 %v634, %v632
    %v783 = vpack.c.b16 %v637, %v635
    %v784 = vpack.c.b16 %v638, %v636
    %v785 = vpack.c.b16 %v641, %v639
    %v786 = vpack.c.b16 %v642, %v640
    %v787 = vpack.c.b16 %v645, %v643
    %v788 = vpack.c.b16 %v646, %v644
    %v789 = vpack.c.b16 %v649, %v647
    %v790 = vpack.c.b16 %v650, %v648
    %v791 = vpack.c.b16 %v653, %v651
    %v792 = vpack.c.b16 %v654, %v652
    %v793 = vpack.c.b16 %v657, %v655
    %v794 = vpack.c.b16 %v658, %v656
    %v795 = vpack.c.b16 %v661, %v659
    %v796 = vpack.c.b16 %v662, %v660
    %v797 = vpack.c.b16 %v665, %v663
    %v798 = vpack.c.b16 %v666, %v664
    %v799 = vpack.c.b16 %v669, %v667
    %v800 = vpack.c.b16 %v670, %v668
    %v801 = vpack.c.b16 %v673, %v671
    %v802 = vpack.c.b16 %v674, %v672
    %v803 = vpack.c.b16 %v677, %v675
    %v804 = vpack.c.b16 %v678, %v676
    %v805 = vpack.c.b16 %v681, %v679
    %v806 = vpack.c.b16 %v682, %v680
    %v807 = vpack.c.b16 %v685, %v683
    %v808 = vpack.c.b16 %v686, %v684
    %v809 = vpack.c.b16 %v689, %v687
    %v810 = vpack.c.b16 %v690, %v688
    %v811 = vpack.c.b16 %v693, %v691
    %v812 = vpack.c.b16 %v694, %v692
    %v813 = vpack.c.b16 %v697, %v695
    %v814 = vpack.c.b16 %v698, %v696
    %v815 = vpack.c.b16 %v701, %v699
    %v816 = vpack.c.b16 %v702, %v700
    %v817 = vpack.c.b16 %v705, %v703
    %v818 = vpack.c.b16 %v706, %v704
    %v819 = vpack.c.b16 %v709, %v707
    %v820 = vpack.c.b16 %v710, %v708
    %v821 = vpack.c.b16 %v713, %v711
    %v822 = vpack.c.b16 %v714, %v712
    %v823 = vpack.c.b16 %v717, %v715
    %v824 = vpack.c.b16 %v718, %v716
    %v825 = vpack.c.b16 %v721, %v719
    %v826 = vpack.c.b16 %v722, %v720
    %v827 = vpack.c.b16 %v725, %v723
    %v828 = vpack.c.b16 %v726, %v724
    %v829 = vpack.c.b16 %v729, %v727
    %v830 = vpack.c.b16 %v730, %v728
    %v831 = vpack.c.b16 %v733, %v731
    %v832 = vpack.c.b16 %v734, %v732
    %v833 = vpack.c.b16 %v737, %v735
    %v834 = vpack.c.b16 %v738, %v736
    %931 = vmatprep.subr.bf16.mxu0 %v740
    %932 = vmatpush1.bf16.msra.mxu0 %v739
    %933 = vmatprep.subr.bf16.mxu0 %v742
    %934 = vmatpush1.bf16.msra.mxu0 %v741
    %935 = vmatprep.subr.bf16.mxu0 %v744
    %936 = vmatpush1.bf16.msra.mxu0 %v743
    %937 = vmatprep.subr.bf16.mxu0 %v746
    %938 = vmatpush1.bf16.msra.mxu0 %v745
    %939 = vmatprep.subr.bf16.mxu0 %v748
    %940 = vmatpush1.bf16.msra.mxu0 %v747
    %941 = vmatprep.subr.bf16.mxu0 %v750
    %942 = vmatpush1.bf16.msra.mxu0 %v749
    %943 = vmatprep.subr.bf16.mxu0 %v752
    %944 = vmatpush1.bf16.msra.mxu0 %v751
    %945 = vmatprep.subr.bf16.mxu0 %v754
    %946 = vmatpush1.bf16.msra.mxu0 %v753
    %947 = vmatprep.subr.bf16.mxu0 %v756
    %948 = vmatpush1.bf16.msra.mxu0 %v755
    %949 = vmatprep.subr.bf16.mxu0 %v758
    %950 = vmatpush1.bf16.msra.mxu0 %v757
    %951 = vmatprep.subr.bf16.mxu0 %v760
    %952 = vmatpush1.bf16.msra.mxu0 %v759
    %953 = vmatprep.subr.bf16.mxu0 %v762
    %954 = vmatpush1.bf16.msra.mxu0 %v761
    %955 = vmatprep.subr.bf16.mxu0 %v764
    %956 = vmatpush1.bf16.msra.mxu0 %v763
    %957 = vmatprep.subr.bf16.mxu0 %v766
    %958 = vmatpush1.bf16.msra.mxu0 %v765
    %959 = vmatprep.subr.bf16.mxu0 %v768
    %960 = vmatpush1.bf16.msra.mxu0 %v767
    %961 = vmatprep.subr.bf16.mxu0 %v770
    %962 = vmatpush1.bf16.msra.mxu0 %v769
    %963 = vmatprep.mubr.bf16.mxu0 %v356
    %964 = vmatmul.mubr.bf16.gmra.mrb[0].mxu0 %v355
    %v965 = vpop.f32.mrb[0].mxu0
    %v966 = vadd.f32 %v204, %v965
    %v967 = vpop.f32.mrb[0].mxu0
    %v968 = vadd.f32 %v208, %v967
    %v969 = vpop.f32.mrb[0].mxu0
    %v970 = vadd.f32 %v204, %v969
    %v971 = vpop.f32.mrb[0].mxu0
    %v972 = vadd.f32 %v208, %v971
    %973 = vmatprep.mubr.bf16.mxu0 %v362
    %974 = vmatmul.mubr.bf16.gmra.mrb[0].mxu0 %v361
    %v975 = vpop.f32.mrb[0].mxu0
    %v976 = vadd.f32 %v204, %v975
    %v977 = vpop.f32.mrb[0].mxu0
    %v978 = vadd.f32 %v208, %v977
    %v979 = vpop.f32.mrb[0].mxu0
    %v980 = vadd.f32 %v204, %v979
    %v981 = vpop.f32.mrb[0].mxu0
    %v982 = vadd.f32 %v208, %v981
    %983 = vmatprep.mubr.bf16.mxu0 %v368
    %984 = vmatmul.mubr.bf16.gmra.mrb[0].mxu0 %v367
    %v985 = vpop.f32.mrb[0].mxu0
    %v986 = vadd.f32 %v204, %v985
    %v987 = vpop.f32.mrb[0].mxu0
    %v988 = vadd.f32 %v208, %v987
    %v989 = vpop.f32.mrb[0].mxu0
    %v990 = vadd.f32 %v204, %v989
    %v991 = vpop.f32.mrb[0].mxu0
    %v992 = vadd.f32 %v208, %v991
    %993 = vmatprep.mubr.bf16.mxu0 %v374
    %994 = vmatmul.mubr.bf16.gmra.mrb[0].mxu0 %v373
    %v995 = vpop.f32.mrb[0].mxu0
    %v996 = vadd.f32 %v204, %v995
    %v997 = vpop.f32.mrb[0].mxu0
    %v998 = vadd.f32 %v208, %v997
    %v999 = vpop.f32.mrb[0].mxu0
    %v1000 = vadd.f32 %v204, %v999
    %v1001 = vpop.f32.mrb[0].mxu0
    %v1002 = vadd.f32 %v208, %v1001
    %1003 = vmatprep.mubr.bf16.mxu0 %v380
    %1004 = vmatmul.mubr.bf16.gmra.mrb[0].mxu0 %v379
    %v1005 = vpop.f32.mrb[0].mxu0
    %v1006 = vadd.f32 %v204, %v1005
    %v1007 = vpop.f32.mrb[0].mxu0
    %v1008 = vadd.f32 %v208, %v1007
    %v1009 = vpop.f32.mrb[0].mxu0
    %v1010 = vadd.f32 %v204, %v1009
    %v1011 = vpop.f32.mrb[0].mxu0
    %v1012 = vadd.f32 %v208, %v1011
    %1013 = vmatprep.mubr.bf16.mxu0 %v386
    %1014 = vmatmul.mubr.bf16.gmra.mrb[0].mxu0 %v385
    %v1015 = vpop.f32.mrb[0].mxu0
    %v1016 = vadd.f32 %v204, %v1015
    %v1017 = vpop.f32.mrb[0].mxu0
    %v1018 = vadd.f32 %v208, %v1017
    %v1019 = vpop.f32.mrb[0].mxu0
    %v1020 = vadd.f32 %v204, %v1019
    %v1021 = vpop.f32.mrb[0].mxu0
    %v1022 = vadd.f32 %v208, %v1021
    %1023 = vmatprep.mubr.bf16.mxu0 %v392
    %1024 = vmatmul.mubr.bf16.gmra.mrb[0].mxu0 %v391
    %v1025 = vpop.f32.mrb[0].mxu0
    %v1026 = vadd.f32 %v204, %v1025
    %v1027 = vpop.f32.mrb[0].mxu0
    %v1028 = vadd.f32 %v208, %v1027
    %v1029 = vpop.f32.mrb[0].mxu0
    %v1030 = vadd.f32 %v204, %v1029
    %v1031 = vpop.f32.mrb[0].mxu0
    %v1032 = vadd.f32 %v208, %v1031
    %1033 = vmatprep.mubr.bf16.mxu0 %v398
    %1034 = vmatmul.mubr.bf16.gmra.mrb[0].mxu0 %v397
    %v1035 = vpop.f32.mrb[0].mxu0
    %v1036 = vadd.f32 %v204, %v1035
    %v1037 = vpop.f32.mrb[0].mxu0
    %v1038 = vadd.f32 %v208, %v1037
    %v1039 = vpop.f32.mrb[0].mxu0
    %v1040 = vadd.f32 %v204, %v1039
    %v1041 = vpop.f32.mrb[0].mxu0
    %v1042 = vadd.f32 %v208, %v1041
    %1043 = vdwg.mxu0
    %1044 = vmatprep.subr.bf16.mxu0 %v772
    %1045 = vmatpush1.bf16.msra.mxu0 %v771
    %1046 = vmatprep.subr.bf16.mxu0 %v774
    %1047 = vmatpush1.bf16.msra.mxu0 %v773
    %1048 = vmatprep.subr.bf16.mxu0 %v776
    %1049 = vmatpush1.bf16.msra.mxu0 %v775
    %1050 = vmatprep.subr.bf16.mxu0 %v778
    %1051 = vmatpush1.bf16.msra.mxu0 %v777
    %1052 = vmatprep.subr.bf16.mxu0 %v780
    %1053 = vmatpush1.bf16.msra.mxu0 %v779
    %1054 = vmatprep.subr.bf16.mxu0 %v782
    %1055 = vmatpush1.bf16.msra.mxu0 %v781
    %1056 = vmatprep.subr.bf16.mxu0 %v784
    %1057 = vmatpush1.bf16.msra.mxu0 %v783
    %1058 = vmatprep.subr.bf16.mxu0 %v786
    %1059 = vmatpush1.bf16.msra.mxu0 %v785
    %1060 = vmatprep.subr.bf16.mxu0 %v788
    %1061 = vmatpush1.bf16.msra.mxu0 %v787
    %1062 = vmatprep.subr.bf16.mxu0 %v790
    %1063 = vmatpush1.bf16.msra.mxu0 %v789
    %1064 = vmatprep.subr.bf16.mxu0 %v792
    %1065 = vmatpush1.bf16.msra.mxu0 %v791
    %1066 = vmatprep.subr.bf16.mxu0 %v794
    %1067 = vmatpush1.bf16.msra.mxu0 %v793
    %1068 = vmatprep.subr.bf16.mxu0 %v796
    %1069 = vmatpush1.bf16.msra.mxu0 %v795
    %1070 = vmatprep.subr.bf16.mxu0 %v798
    %1071 = vmatpush1.bf16.msra.mxu0 %v797
    %1072 = vmatprep.subr.bf16.mxu0 %v800
    %1073 = vmatpush1.bf16.msra.mxu0 %v799
    %1074 = vmatprep.subr.bf16.mxu0 %v802
    %1075 = vmatpush1.bf16.msra.mxu0 %v801
    %1076 = vmatprep.mubr.bf16.mxu0 %v358
    %1077 = vmatmul.mubr.bf16.gmra.mrb[0].mxu0 %v357
    %v1078 = vpop.f32.mrb[0].mxu0
    %v1079 = vadd.f32 %v966, %v1078
    %v1080 = vpop.f32.mrb[0].mxu0
    %v1081 = vadd.f32 %v968, %v1080
    %v1082 = vpop.f32.mrb[0].mxu0
    %v1083 = vadd.f32 %v970, %v1082
    %v1084 = vpop.f32.mrb[0].mxu0
    %v1085 = vadd.f32 %v972, %v1084
    %1086 = vmatprep.mubr.bf16.mxu0 %v364
    %1087 = vmatmul.mubr.bf16.gmra.mrb[0].mxu0 %v363
    %v1088 = vpop.f32.mrb[0].mxu0
    %v1089 = vadd.f32 %v976, %v1088
    %v1090 = vpop.f32.mrb[0].mxu0
    %v1091 = vadd.f32 %v978, %v1090
    %v1092 = vpop.f32.mrb[0].mxu0
    %v1093 = vadd.f32 %v980, %v1092
    %v1094 = vpop.f32.mrb[0].mxu0
    %v1095 = vadd.f32 %v982, %v1094
    %1096 = vmatprep.mubr.bf16.mxu0 %v370
    %1097 = vmatmul.mubr.bf16.gmra.mrb[0].mxu0 %v369
    %v1098 = vpop.f32.mrb[0].mxu0
    %v1099 = vadd.f32 %v986, %v1098
    %v1100 = vpop.f32.mrb[0].mxu0
    %v1101 = vadd.f32 %v988, %v1100
    %v1102 = vpop.f32.mrb[0].mxu0
    %v1103 = vadd.f32 %v990, %v1102
    %v1104 = vpop.f32.mrb[0].mxu0
    %v1105 = vadd.f32 %v992, %v1104
    %1106 = vmatprep.mubr.bf16.mxu0 %v376
    %1107 = vmatmul.mubr.bf16.gmra.mrb[0].mxu0 %v375
    %v1108 = vpop.f32.mrb[0].mxu0
    %v1109 = vadd.f32 %v996, %v1108
    %v1110 = vpop.f32.mrb[0].mxu0
    %v1111 = vadd.f32 %v998, %v1110
    %v1112 = vpop.f32.mrb[0].mxu0
    %v1113 = vadd.f32 %v1000, %v1112
    %v1114 = vpop.f32.mrb[0].mxu0
    %v1115 = vadd.f32 %v1002, %v1114
    %1116 = vmatprep.mubr.bf16.mxu0 %v382
    %1117 = vmatmul.mubr.bf16.gmra.mrb[0].mxu0 %v381
    %v1118 = vpop.f32.mrb[0].mxu0
    %v1119 = vadd.f32 %v1006, %v1118
    %v1120 = vpop.f32.mrb[0].mxu0
    %v1121 = vadd.f32 %v1008, %v1120
    %v1122 = vpop.f32.mrb[0].mxu0
    %v1123 = vadd.f32 %v1010, %v1122
    %v1124 = vpop.f32.mrb[0].mxu0
    %v1125 = vadd.f32 %v1012, %v1124
    %1126 = vmatprep.mubr.bf16.mxu0 %v388
    %1127 = vmatmul.mubr.bf16.gmra.mrb[0].mxu0 %v387
    %v1128 = vpop.f32.mrb[0].mxu0
    %v1129 = vadd.f32 %v1016, %v1128
    %v1130 = vpop.f32.mrb[0].mxu0
    %v1131 = vadd.f32 %v1018, %v1130
    %v1132 = vpop.f32.mrb[0].mxu0
    %v1133 = vadd.f32 %v1020, %v1132
    %v1134 = vpop.f32.mrb[0].mxu0
    %v1135 = vadd.f32 %v1022, %v1134
    %1136 = vmatprep.mubr.bf16.mxu0 %v394
    %1137 = vmatmul.mubr.bf16.gmra.mrb[0].mxu0 %v393
    %v1138 = vpop.f32.mrb[0].mxu0
    %v1139 = vadd.f32 %v1026, %v1138
    %v1140 = vpop.f32.mrb[0].mxu0
    %v1141 = vadd.f32 %v1028, %v1140
    %v1142 = vpop.f32.mrb[0].mxu0
    %v1143 = vadd.f32 %v1030, %v1142
    %v1144 = vpop.f32.mrb[0].mxu0
    %v1145 = vadd.f32 %v1032, %v1144
    %1146 = vmatprep.mubr.bf16.mxu0 %v400
    %1147 = vmatmul.mubr.bf16.gmra.mrb[0].mxu0 %v399
    %v1148 = vpop.f32.mrb[0].mxu0
    %v1149 = vadd.f32 %v1036, %v1148
    %v1150 = vpop.f32.mrb[0].mxu0
    %v1151 = vadd.f32 %v1038, %v1150
    %v1152 = vpop.f32.mrb[0].mxu0
    %v1153 = vadd.f32 %v1040, %v1152
    %v1154 = vpop.f32.mrb[0].mxu0
    %v1155 = vadd.f32 %v1042, %v1154
    %1156 = vdwg.mxu0
    %1157 = vmatprep.subr.bf16.mxu0 %v804
    %1158 = vmatpush1.bf16.msra.mxu0 %v803
    %1159 = vmatprep.subr.bf16.mxu0 %v806
    %1160 = vmatpush1.bf16.msra.mxu0 %v805
    %1161 = vmatprep.subr.bf16.mxu0 %v808
    %1162 = vmatpush1.bf16.msra.mxu0 %v807
    %1163 = vmatprep.subr.bf16.mxu0 %v810
    %1164 = vmatpush1.bf16.msra.mxu0 %v809
    %1165 = vmatprep.subr.bf16.mxu0 %v812
    %1166 = vmatpush1.bf16.msra.mxu0 %v811
    %1167 = vmatprep.subr.bf16.mxu0 %v814
    %1168 = vmatpush1.bf16.msra.mxu0 %v813
    %1169 = vmatprep.subr.bf16.mxu0 %v816
    %1170 = vmatpush1.bf16.msra.mxu0 %v815
    %1171 = vmatprep.subr.bf16.mxu0 %v818
    %1172 = vmatpush1.bf16.msra.mxu0 %v817
    %1173 = vmatprep.subr.bf16.mxu0 %v820
    %1174 = vmatpush1.bf16.msra.mxu0 %v819
    %1175 = vmatprep.subr.bf16.mxu0 %v822
    %1176 = vmatpush1.bf16.msra.mxu0 %v821
    %1177 = vmatprep.subr.bf16.mxu0 %v824
    %1178 = vmatpush1.bf16.msra.mxu0 %v823
    %1179 = vmatprep.subr.bf16.mxu0 %v826
    %1180 = vmatpush1.bf16.msra.mxu0 %v825
    %1181 = vmatprep.subr.bf16.mxu0 %v828
    %1182 = vmatpush1.bf16.msra.mxu0 %v827
    %1183 = vmatprep.subr.bf16.mxu0 %v830
    %1184 = vmatpush1.bf16.msra.mxu0 %v829
    %1185 = vmatprep.subr.bf16.mxu0 %v832
    %1186 = vmatpush1.bf16.msra.mxu0 %v831
    %1187 = vmatprep.subr.bf16.mxu0 %v834
    %1188 = vmatpush1.bf16.msra.mxu0 %v833
    %1189 = vmatprep.mubr.bf16.mxu0 %v360
    %1190 = vmatmul.mubr.bf16.gmra.mrb[0].mxu0 %v359
    %v1191 = vpop.f32.mrb[0].mxu0
    %v1192 = vadd.f32 %v1079, %v1191
    %v1193 = vpop.f32.mrb[0].mxu0
    %v1194 = vadd.f32 %v1081, %v1193
    %v1195 = vpop.f32.mrb[0].mxu0
    %v1196 = vadd.f32 %v1083, %v1195
    %v1197 = vpop.f32.mrb[0].mxu0
    %v1198 = vadd.f32 %v1085, %v1197
    %1199 = vmatprep.mubr.bf16.mxu0 %v366
    %1200 = vmatmul.mubr.bf16.gmra.mrb[0].mxu0 %v365
    %v1201 = vpop.f32.mrb[0].mxu0
    %v1202 = vadd.f32 %v1089, %v1201
    %v1203 = vpop.f32.mrb[0].mxu0
    %v1204 = vadd.f32 %v1091, %v1203
    %v1205 = vpop.f32.mrb[0].mxu0
    %v1206 = vadd.f32 %v1093, %v1205
    %v1207 = vpop.f32.mrb[0].mxu0
    %v1208 = vadd.f32 %v1095, %v1207
    %1209 = vmatprep.mubr.bf16.mxu0 %v372
    %1210 = vmatmul.mubr.bf16.gmra.mrb[0].mxu0 %v371
    %v1211 = vpop.f32.mrb[0].mxu0
    %v1212 = vadd.f32 %v1099, %v1211
    %v1213 = vpop.f32.mrb[0].mxu0
    %v1214 = vadd.f32 %v1101, %v1213
    %v1215 = vpop.f32.mrb[0].mxu0
    %v1216 = vadd.f32 %v1103, %v1215
    %v1217 = vpop.f32.mrb[0].mxu0
    %v1218 = vadd.f32 %v1105, %v1217
    %1219 = vmatprep.mubr.bf16.mxu0 %v378
    %1220 = vmatmul.mubr.bf16.gmra.mrb[0].mxu0 %v377
    %v1221 = vpop.f32.mrb[0].mxu0
    %v1222 = vadd.f32 %v1109, %v1221
    %v1223 = vpop.f32.mrb[0].mxu0
    %v1224 = vadd.f32 %v1111, %v1223
    %v1225 = vpop.f32.mrb[0].mxu0
    %v1226 = vadd.f32 %v1113, %v1225
    %v1227 = vpop.f32.mrb[0].mxu0
    %v1228 = vadd.f32 %v1115, %v1227
    %1229 = vmatprep.mubr.bf16.mxu0 %v384
    %1230 = vmatmul.mubr.bf16.gmra.mrb[0].mxu0 %v383
    %v1231 = vpop.f32.mrb[0].mxu0
    %v1232 = vadd.f32 %v1119, %v1231
    %v1233 = vpop.f32.mrb[0].mxu0
    %v1234 = vadd.f32 %v1121, %v1233
    %v1235 = vpop.f32.mrb[0].mxu0
    %v1236 = vadd.f32 %v1123, %v1235
    %v1237 = vpop.f32.mrb[0].mxu0
    %v1238 = vadd.f32 %v1125, %v1237
    %1239 = vmatprep.mubr.bf16.mxu0 %v390
    %1240 = vmatmul.mubr.bf16.gmra.mrb[0].mxu0 %v389
    %v1241 = vpop.f32.mrb[0].mxu0
    %v1242 = vadd.f32 %v1129, %v1241
    %v1243 = vpop.f32.mrb[0].mxu0
    %v1244 = vadd.f32 %v1131, %v1243
    %v1245 = vpop.f32.mrb[0].mxu0
    %v1246 = vadd.f32 %v1133, %v1245
    %v1247 = vpop.f32.mrb[0].mxu0
    %v1248 = vadd.f32 %v1135, %v1247
    %1249 = vmatprep.mubr.bf16.mxu0 %v396
    %1250 = vmatmul.mubr.bf16.gmra.mrb[0].mxu0 %v395
    %v1251 = vpop.f32.mrb[0].mxu0
    %v1252 = vadd.f32 %v1139, %v1251
    %v1253 = vpop.f32.mrb[0].mxu0
    %v1254 = vadd.f32 %v1141, %v1253
    %v1255 = vpop.f32.mrb[0].mxu0
    %v1256 = vadd.f32 %v1143, %v1255
    %v1257 = vpop.f32.mrb[0].mxu0
    %v1258 = vadd.f32 %v1145, %v1257
    %1259 = vmatprep.mubr.bf16.mxu0 %v402
    %1260 = vmatmul.mubr.bf16.gmra.mrb[0].mxu0 %v401
    %v1261 = vpop.f32.mrb[0].mxu0
    %v1262 = vadd.f32 %v1149, %v1261
    %v1263 = vpop.f32.mrb[0].mxu0
    %v1264 = vadd.f32 %v1151, %v1263
    %v1265 = vpop.f32.mrb[0].mxu0
    %v1266 = vadd.f32 %v1153, %v1265
    %v1267 = vpop.f32.mrb[0].mxu0
    %v1268 = vadd.f32 %v1155, %v1267
    %1269 = vdwg.mxu0
    %v1270 = vld [vmem:[#allocation5] sm:$0xff]
    %v1271 = vld [vmem:[#allocation5 + $0x8] sm:$0xff]
    %v1272 = vld [vmem:[#allocation5 + $0x10] sm:$0xff]
    %v1273 = vld [vmem:[#allocation5 + $0x18] sm:$0xff]
    %v1274 = vld [vmem:[#allocation5 + $0x20] sm:$0xff]
    %v1275 = vld [vmem:[#allocation5 + $0x28] sm:$0xff]
    %v1276 = vld [vmem:[#allocation5 + $0x30] sm:$0xff]
    %v1277 = vld [vmem:[#allocation5 + $0x38] sm:$0xff]
    %v1278 = vld [vmem:[#allocation5 + $0x40] sm:$0xff]
    %v1279 = vld [vmem:[#allocation5 + $0x48] sm:$0xff]
    %v1280 = vld [vmem:[#allocation5 + $0x50] sm:$0xff]
    %v1281 = vld [vmem:[#allocation5 + $0x58] sm:$0xff]
    %v1282 = vld [vmem:[#allocation5 + $0x60] sm:$0xff]
    %v1283 = vld [vmem:[#allocation5 + $0x68] sm:$0xff]
    %v1284 = vld [vmem:[#allocation5 + $0x70] sm:$0xff]
    %v1285 = vld [vmem:[#allocation5 + $0x78] sm:$0xff]
    %v1286 = vld [vmem:[#allocation5 + $0x80] sm:$0xff]
    %v1287 = vld [vmem:[#allocation5 + $0x88] sm:$0xff]
    %v1288 = vld [vmem:[#allocation5 + $0x90] sm:$0xff]
    %v1289 = vld [vmem:[#allocation5 + $0x98] sm:$0xff]
    %v1290 = vld [vmem:[#allocation5 + $0xa0] sm:$0xff]
    %v1291 = vld [vmem:[#allocation5 + $0xa8] sm:$0xff]
    %v1292 = vld [vmem:[#allocation5 + $0xb0] sm:$0xff]
    %v1293 = vld [vmem:[#allocation5 + $0xb8] sm:$0xff]
    %v1294 = vld [vmem:[#allocation5 + $0xc0] sm:$0xff]
    %v1295 = vld [vmem:[#allocation5 + $0xc8] sm:$0xff]
    %v1296 = vld [vmem:[#allocation5 + $0xd0] sm:$0xff]
    %v1297 = vld [vmem:[#allocation5 + $0xd8] sm:$0xff]
    %v1298 = vld [vmem:[#allocation5 + $0xe0] sm:$0xff]
    %v1299 = vld [vmem:[#allocation5 + $0xe8] sm:$0xff]
    %v1300 = vld [vmem:[#allocation5 + $0xf0] sm:$0xff]
    %v1301 = vld [vmem:[#allocation5 + $0xf8] sm:$0xff]
    %v1302 = vld [vmem:[#allocation5 + $0x100] sm:$0xff]
    %v1303 = vld [vmem:[#allocation5 + $0x108] sm:$0xff]
    %v1304 = vld [vmem:[#allocation5 + $0x110] sm:$0xff]
    %v1305 = vld [vmem:[#allocation5 + $0x118] sm:$0xff]
    %v1306 = vld [vmem:[#allocation5 + $0x120] sm:$0xff]
    %v1307 = vld [vmem:[#allocation5 + $0x128] sm:$0xff]
    %v1308 = vld [vmem:[#allocation5 + $0x130] sm:$0xff]
    %v1309 = vld [vmem:[#allocation5 + $0x138] sm:$0xff]
    %v1310 = vld [vmem:[#allocation5 + $0x140] sm:$0xff]
    %v1311 = vld [vmem:[#allocation5 + $0x148] sm:$0xff]
    %v1312 = vld [vmem:[#allocation5 + $0x150] sm:$0xff]
    %v1313 = vld [vmem:[#allocation5 + $0x158] sm:$0xff]
    %v1314 = vld [vmem:[#allocation5 + $0x160] sm:$0xff]
    %v1315 = vld [vmem:[#allocation5 + $0x168] sm:$0xff]
    %v1316 = vld [vmem:[#allocation5 + $0x170] sm:$0xff]
    %v1317 = vld [vmem:[#allocation5 + $0x178] sm:$0xff]
    %v1318 = vld [vmem:[#allocation5 + $0x180] sm:$0xff]
    %v1319 = vld [vmem:[#allocation5 + $0x188] sm:$0xff]
    %v1320 = vld [vmem:[#allocation5 + $0x190] sm:$0xff]
    %v1321 = vld [vmem:[#allocation5 + $0x198] sm:$0xff]
    %v1322 = vld [vmem:[#allocation5 + $0x1a0] sm:$0xff]
    %v1323 = vld [vmem:[#allocation5 + $0x1a8] sm:$0xff]
    %v1324 = vld [vmem:[#allocation5 + $0x1b0] sm:$0xff]
    %v1325 = vld [vmem:[#allocation5 + $0x1b8] sm:$0xff]
    %v1326 = vld [vmem:[#allocation5 + $0x1c0] sm:$0xff]
    %v1327 = vld [vmem:[#allocation5 + $0x1c8] sm:$0xff]
    %v1328 = vld [vmem:[#allocation5 + $0x1d0] sm:$0xff]
    %v1329 = vld [vmem:[#allocation5 + $0x1d8] sm:$0xff]
    %v1330 = vld [vmem:[#allocation5 + $0x1e0] sm:$0xff]
    %v1331 = vld [vmem:[#allocation5 + $0x1e8] sm:$0xff]
    %v1332 = vld [vmem:[#allocation5 + $0x1f0] sm:$0xff]
    %v1333 = vld [vmem:[#allocation5 + $0x1f8] sm:$0xff]
    %v1334 = vld [vmem:[#allocation5 + $0x200] sm:$0xff]
    %v1335 = vld [vmem:[#allocation5 + $0x208] sm:$0xff]
    %v1336 = vld [vmem:[#allocation5 + $0x210] sm:$0xff]
    %v1337 = vld [vmem:[#allocation5 + $0x218] sm:$0xff]
    %v1338 = vld [vmem:[#allocation5 + $0x220] sm:$0xff]
    %v1339 = vld [vmem:[#allocation5 + $0x228] sm:$0xff]
    %v1340 = vld [vmem:[#allocation5 + $0x230] sm:$0xff]
    %v1341 = vld [vmem:[#allocation5 + $0x238] sm:$0xff]
    %v1342 = vld [vmem:[#allocation5 + $0x240] sm:$0xff]
    %v1343 = vld [vmem:[#allocation5 + $0x248] sm:$0xff]
    %v1344 = vld [vmem:[#allocation5 + $0x250] sm:$0xff]
    %v1345 = vld [vmem:[#allocation5 + $0x258] sm:$0xff]
    %v1346 = vld [vmem:[#allocation5 + $0x260] sm:$0xff]
    %v1347 = vld [vmem:[#allocation5 + $0x268] sm:$0xff]
    %v1348 = vld [vmem:[#allocation5 + $0x270] sm:$0xff]
    %v1349 = vld [vmem:[#allocation5 + $0x278] sm:$0xff]
    %v1350 = vld [vmem:[#allocation5 + $0x280] sm:$0xff]
    %v1351 = vld [vmem:[#allocation5 + $0x288] sm:$0xff]
    %v1352 = vld [vmem:[#allocation5 + $0x290] sm:$0xff]
    %v1353 = vld [vmem:[#allocation5 + $0x298] sm:$0xff]
    %v1354 = vld [vmem:[#allocation5 + $0x2a0] sm:$0xff]
    %v1355 = vld [vmem:[#allocation5 + $0x2a8] sm:$0xff]
    %v1356 = vld [vmem:[#allocation5 + $0x2b0] sm:$0xff]
    %v1357 = vld [vmem:[#allocation5 + $0x2b8] sm:$0xff]
    %v1358 = vld [vmem:[#allocation5 + $0x2c0] sm:$0xff]
    %v1359 = vld [vmem:[#allocation5 + $0x2c8] sm:$0xff]
    %v1360 = vld [vmem:[#allocation5 + $0x2d0] sm:$0xff]
    %v1361 = vld [vmem:[#allocation5 + $0x2d8] sm:$0xff]
    %v1362 = vld [vmem:[#allocation5 + $0x2e0] sm:$0xff]
    %v1363 = vld [vmem:[#allocation5 + $0x2e8] sm:$0xff]
    %v1364 = vld [vmem:[#allocation5 + $0x2f0] sm:$0xff]
    %v1365 = vld [vmem:[#allocation5 + $0x2f8] sm:$0xff]
    %v1462 = vunpack.c.l.b16 %v1270
    %v1463 = vunpack.c.h.b16 %v1270
    %v1464 = vunpack.c.l.b16 %v1271
    %v1465 = vunpack.c.h.b16 %v1271
    %v1466 = vunpack.c.l.b16 %v1272
    %v1467 = vunpack.c.h.b16 %v1272
    %v1468 = vunpack.c.l.b16 %v1273
    %v1469 = vunpack.c.h.b16 %v1273
    %v1470 = vunpack.c.l.b16 %v1274
    %v1471 = vunpack.c.h.b16 %v1274
    %v1472 = vunpack.c.l.b16 %v1275
    %v1473 = vunpack.c.h.b16 %v1275
    %v1474 = vunpack.c.l.b16 %v1276
    %v1475 = vunpack.c.h.b16 %v1276
    %v1476 = vunpack.c.l.b16 %v1277
    %v1477 = vunpack.c.h.b16 %v1277
    %v1478 = vunpack.c.l.b16 %v1278
    %v1479 = vunpack.c.h.b16 %v1278
    %v1480 = vunpack.c.l.b16 %v1279
    %v1481 = vunpack.c.h.b16 %v1279
    %v1482 = vunpack.c.l.b16 %v1280
    %v1483 = vunpack.c.h.b16 %v1280
    %v1484 = vunpack.c.l.b16 %v1281
    %v1485 = vunpack.c.h.b16 %v1281
    %v1486 = vunpack.c.l.b16 %v1282
    %v1487 = vunpack.c.h.b16 %v1282
    %v1488 = vunpack.c.l.b16 %v1283
    %v1489 = vunpack.c.h.b16 %v1283
    %v1490 = vunpack.c.l.b16 %v1284
    %v1491 = vunpack.c.h.b16 %v1284
    %v1492 = vunpack.c.l.b16 %v1285
    %v1493 = vunpack.c.h.b16 %v1285
    %v1494 = vunpack.c.l.b16 %v1286
    %v1495 = vunpack.c.h.b16 %v1286
    %v1496 = vunpack.c.l.b16 %v1287
    %v1497 = vunpack.c.h.b16 %v1287
    %v1498 = vunpack.c.l.b16 %v1288
    %v1499 = vunpack.c.h.b16 %v1288
    %v1500 = vunpack.c.l.b16 %v1289
    %v1501 = vunpack.c.h.b16 %v1289
    %v1502 = vunpack.c.l.b16 %v1290
    %v1503 = vunpack.c.h.b16 %v1290
    %v1504 = vunpack.c.l.b16 %v1291
    %v1505 = vunpack.c.h.b16 %v1291
    %v1506 = vunpack.c.l.b16 %v1292
    %v1507 = vunpack.c.h.b16 %v1292
    %v1508 = vunpack.c.l.b16 %v1293
    %v1509 = vunpack.c.h.b16 %v1293
    %v1510 = vunpack.c.l.b16 %v1294
    %v1511 = vunpack.c.h.b16 %v1294
    %v1512 = vunpack.c.l.b16 %v1295
    %v1513 = vunpack.c.h.b16 %v1295
    %v1514 = vunpack.c.l.b16 %v1296
    %v1515 = vunpack.c.h.b16 %v1296
    %v1516 = vunpack.c.l.b16 %v1297
    %v1517 = vunpack.c.h.b16 %v1297
    %v1518 = vunpack.c.l.b16 %v1298
    %v1519 = vunpack.c.h.b16 %v1298
    %v1520 = vunpack.c.l.b16 %v1299
    %v1521 = vunpack.c.h.b16 %v1299
    %v1522 = vunpack.c.l.b16 %v1300
    %v1523 = vunpack.c.h.b16 %v1300
    %v1524 = vunpack.c.l.b16 %v1301
    %v1525 = vunpack.c.h.b16 %v1301
    %v1526 = vunpack.c.l.b16 %v1302
    %v1527 = vunpack.c.h.b16 %v1302
    %v1528 = vunpack.c.l.b16 %v1303
    %v1529 = vunpack.c.h.b16 %v1303
    %v1530 = vunpack.c.l.b16 %v1304
    %v1531 = vunpack.c.h.b16 %v1304
    %v1532 = vunpack.c.l.b16 %v1305
    %v1533 = vunpack.c.h.b16 %v1305
    %v1534 = vunpack.c.l.b16 %v1306
    %v1535 = vunpack.c.h.b16 %v1306
    %v1536 = vunpack.c.l.b16 %v1307
    %v1537 = vunpack.c.h.b16 %v1307
    %v1538 = vunpack.c.l.b16 %v1308
    %v1539 = vunpack.c.h.b16 %v1308
    %v1540 = vunpack.c.l.b16 %v1309
    %v1541 = vunpack.c.h.b16 %v1309
    %v1542 = vunpack.c.l.b16 %v1310
    %v1543 = vunpack.c.h.b16 %v1310
    %v1544 = vunpack.c.l.b16 %v1311
    %v1545 = vunpack.c.h.b16 %v1311
    %v1546 = vunpack.c.l.b16 %v1312
    %v1547 = vunpack.c.h.b16 %v1312
    %v1548 = vunpack.c.l.b16 %v1313
    %v1549 = vunpack.c.h.b16 %v1313
    %v1550 = vunpack.c.l.b16 %v1314
    %v1551 = vunpack.c.h.b16 %v1314
    %v1552 = vunpack.c.l.b16 %v1315
    %v1553 = vunpack.c.h.b16 %v1315
    %v1554 = vunpack.c.l.b16 %v1316
    %v1555 = vunpack.c.h.b16 %v1316
    %v1556 = vunpack.c.l.b16 %v1317
    %v1557 = vunpack.c.h.b16 %v1317
    %v1558 = vunpack.c.l.b16 %v1318
    %v1559 = vunpack.c.h.b16 %v1318
    %v1560 = vunpack.c.l.b16 %v1319
    %v1561 = vunpack.c.h.b16 %v1319
    %v1562 = vunpack.c.l.b16 %v1320
    %v1563 = vunpack.c.h.b16 %v1320
    %v1564 = vunpack.c.l.b16 %v1321
    %v1565 = vunpack.c.h.b16 %v1321
    %v1566 = vunpack.c.l.b16 %v1322
    %v1567 = vunpack.c.h.b16 %v1322
    %v1568 = vunpack.c.l.b16 %v1323
    %v1569 = vunpack.c.h.b16 %v1323
    %v1570 = vunpack.c.l.b16 %v1324
    %v1571 = vunpack.c.h.b16 %v1324
    %v1572 = vunpack.c.l.b16 %v1325
    %v1573 = vunpack.c.h.b16 %v1325
    %v1574 = vunpack.c.l.b16 %v1326
    %v1575 = vunpack.c.h.b16 %v1326
    %v1576 = vunpack.c.l.b16 %v1327
    %v1577 = vunpack.c.h.b16 %v1327
    %v1578 = vunpack.c.l.b16 %v1328
    %v1579 = vunpack.c.h.b16 %v1328
    %v1580 = vunpack.c.l.b16 %v1329
    %v1581 = vunpack.c.h.b16 %v1329
    %v1582 = vunpack.c.l.b16 %v1330
    %v1583 = vunpack.c.h.b16 %v1330
    %v1584 = vunpack.c.l.b16 %v1331
    %v1585 = vunpack.c.h.b16 %v1331
    %v1586 = vunpack.c.l.b16 %v1332
    %v1587 = vunpack.c.h.b16 %v1332
    %v1588 = vunpack.c.l.b16 %v1333
    %v1589 = vunpack.c.h.b16 %v1333
    %v1590 = vunpack.c.l.b16 %v1334
    %v1591 = vunpack.c.h.b16 %v1334
    %v1592 = vunpack.c.l.b16 %v1335
    %v1593 = vunpack.c.h.b16 %v1335
    %v1594 = vunpack.c.l.b16 %v1336
    %v1595 = vunpack.c.h.b16 %v1336
    %v1596 = vunpack.c.l.b16 %v1337
    %v1597 = vunpack.c.h.b16 %v1337
    %v1598 = vunpack.c.l.b16 %v1338
    %v1599 = vunpack.c.h.b16 %v1338
    %v1600 = vunpack.c.l.b16 %v1339
    %v1601 = vunpack.c.h.b16 %v1339
    %v1602 = vunpack.c.l.b16 %v1340
    %v1603 = vunpack.c.h.b16 %v1340
    %v1604 = vunpack.c.l.b16 %v1341
    %v1605 = vunpack.c.h.b16 %v1341
    %v1606 = vunpack.c.l.b16 %v1342
    %v1607 = vunpack.c.h.b16 %v1342
    %v1608 = vunpack.c.l.b16 %v1343
    %v1609 = vunpack.c.h.b16 %v1343
    %v1610 = vunpack.c.l.b16 %v1344
    %v1611 = vunpack.c.h.b16 %v1344
    %v1612 = vunpack.c.l.b16 %v1345
    %v1613 = vunpack.c.h.b16 %v1345
    %v1614 = vunpack.c.l.b16 %v1346
    %v1615 = vunpack.c.h.b16 %v1346
    %v1616 = vunpack.c.l.b16 %v1347
    %v1617 = vunpack.c.h.b16 %v1347
    %v1618 = vunpack.c.l.b16 %v1348
    %v1619 = vunpack.c.h.b16 %v1348
    %v1620 = vunpack.c.l.b16 %v1349
    %v1621 = vunpack.c.h.b16 %v1349
    %v1622 = vunpack.c.l.b16 %v1350
    %v1623 = vunpack.c.h.b16 %v1350
    %v1624 = vunpack.c.l.b16 %v1351
    %v1625 = vunpack.c.h.b16 %v1351
    %v1626 = vunpack.c.l.b16 %v1352
    %v1627 = vunpack.c.h.b16 %v1352
    %v1628 = vunpack.c.l.b16 %v1353
    %v1629 = vunpack.c.h.b16 %v1353
    %v1630 = vunpack.c.l.b16 %v1354
    %v1631 = vunpack.c.h.b16 %v1354
    %v1632 = vunpack.c.l.b16 %v1355
    %v1633 = vunpack.c.h.b16 %v1355
    %v1634 = vunpack.c.l.b16 %v1356
    %v1635 = vunpack.c.h.b16 %v1356
    %v1636 = vunpack.c.l.b16 %v1357
    %v1637 = vunpack.c.h.b16 %v1357
    %v1638 = vunpack.c.l.b16 %v1358
    %v1639 = vunpack.c.h.b16 %v1358
    %v1640 = vunpack.c.l.b16 %v1359
    %v1641 = vunpack.c.h.b16 %v1359
    %v1642 = vunpack.c.l.b16 %v1360
    %v1643 = vunpack.c.h.b16 %v1360
    %v1644 = vunpack.c.l.b16 %v1361
    %v1645 = vunpack.c.h.b16 %v1361
    %v1646 = vunpack.c.l.b16 %v1362
    %v1647 = vunpack.c.h.b16 %v1362
    %v1648 = vunpack.c.l.b16 %v1363
    %v1649 = vunpack.c.h.b16 %v1363
    %v1650 = vunpack.c.l.b16 %v1364
    %v1651 = vunpack.c.h.b16 %v1364
    %v1652 = vunpack.c.l.b16 %v1365
    %v1653 = vunpack.c.h.b16 %v1365
    %v1654 = vpack.c.b16 %v1464, %v1462
    %v1655 = vpack.c.b16 %v1465, %v1463
    %v1656 = vpack.c.b16 %v1468, %v1466
    %v1657 = vpack.c.b16 %v1469, %v1467
    %v1658 = vpack.c.b16 %v1472, %v1470
    %v1659 = vpack.c.b16 %v1473, %v1471
    %v1660 = vpack.c.b16 %v1476, %v1474
    %v1661 = vpack.c.b16 %v1477, %v1475
    %v1662 = vpack.c.b16 %v1480, %v1478
    %v1663 = vpack.c.b16 %v1481, %v1479
    %v1664 = vpack.c.b16 %v1484, %v1482
    %v1665 = vpack.c.b16 %v1485, %v1483
    %v1666 = vpack.c.b16 %v1488, %v1486
    %v1667 = vpack.c.b16 %v1489, %v1487
    %v1668 = vpack.c.b16 %v1492, %v1490
    %v1669 = vpack.c.b16 %v1493, %v1491
    %v1670 = vpack.c.b16 %v1496, %v1494
    %v1671 = vpack.c.b16 %v1497, %v1495
    %v1672 = vpack.c.b16 %v1500, %v1498
    %v1673 = vpack.c.b16 %v1501, %v1499
    %v1674 = vpack.c.b16 %v1504, %v1502
    %v1675 = vpack.c.b16 %v1505, %v1503
    %v1676 = vpack.c.b16 %v1508, %v1506
    %v1677 = vpack.c.b16 %v1509, %v1507
    %v1678 = vpack.c.b16 %v1512, %v1510
    %v1679 = vpack.c.b16 %v1513, %v1511
    %v1680 = vpack.c.b16 %v1516, %v1514
    %v1681 = vpack.c.b16 %v1517, %v1515
    %v1682 = vpack.c.b16 %v1520, %v1518
    %v1683 = vpack.c.b16 %v1521, %v1519
    %v1684 = vpack.c.b16 %v1524, %v1522
    %v1685 = vpack.c.b16 %v1525, %v1523
    %v1686 = vpack.c.b16 %v1528, %v1526
    %v1687 = vpack.c.b16 %v1529, %v1527
    %v1688 = vpack.c.b16 %v1532, %v1530
    %v1689 = vpack.c.b16 %v1533, %v1531
    %v1690 = vpack.c.b16 %v1536, %v1534
    %v1691 = vpack.c.b16 %v1537, %v1535
    %v1692 = vpack.c.b16 %v1540, %v1538
    %v1693 = vpack.c.b16 %v1541, %v1539
    %v1694 = vpack.c.b16 %v1544, %v1542
    %v1695 = vpack.c.b16 %v1545, %v1543
    %v1696 = vpack.c.b16 %v1548, %v1546
    %v1697 = vpack.c.b16 %v1549, %v1547
    %v1698 = vpack.c.b16 %v1552, %v1550
    %v1699 = vpack.c.b16 %v1553, %v1551
    %v1700 = vpack.c.b16 %v1556, %v1554
    %v1701 = vpack.c.b16 %v1557, %v1555
    %v1702 = vpack.c.b16 %v1560, %v1558
    %v1703 = vpack.c.b16 %v1561, %v1559
    %v1704 = vpack.c.b16 %v1564, %v1562
    %v1705 = vpack.c.b16 %v1565, %v1563
    %v1706 = vpack.c.b16 %v1568, %v1566
    %v1707 = vpack.c.b16 %v1569, %v1567
    %v1708 = vpack.c.b16 %v1572, %v1570
    %v1709 = vpack.c.b16 %v1573, %v1571
    %v1710 = vpack.c.b16 %v1576, %v1574
    %v1711 = vpack.c.b16 %v1577, %v1575
    %v1712 = vpack.c.b16 %v1580, %v1578
    %v1713 = vpack.c.b16 %v1581, %v1579
    %v1714 = vpack.c.b16 %v1584, %v1582
    %v1715 = vpack.c.b16 %v1585, %v1583
    %v1716 = vpack.c.b16 %v1588, %v1586
    %v1717 = vpack.c.b16 %v1589, %v1587
    %v1718 = vpack.c.b16 %v1592, %v1590
    %v1719 = vpack.c.b16 %v1593, %v1591
    %v1720 = vpack.c.b16 %v1596, %v1594
    %v1721 = vpack.c.b16 %v1597, %v1595
    %v1722 = vpack.c.b16 %v1600, %v1598
    %v1723 = vpack.c.b16 %v1601, %v1599
    %v1724 = vpack.c.b16 %v1604, %v1602
    %v1725 = vpack.c.b16 %v1605, %v1603
    %v1726 = vpack.c.b16 %v1608, %v1606
    %v1727 = vpack.c.b16 %v1609, %v1607
    %v1728 = vpack.c.b16 %v1612, %v1610
    %v1729 = vpack.c.b16 %v1613, %v1611
    %v1730 = vpack.c.b16 %v1616, %v1614
    %v1731 = vpack.c.b16 %v1617, %v1615
    %v1732 = vpack.c.b16 %v1620, %v1618
    %v1733 = vpack.c.b16 %v1621, %v1619
    %v1734 = vpack.c.b16 %v1624, %v1622
    %v1735 = vpack.c.b16 %v1625, %v1623
    %v1736 = vpack.c.b16 %v1628, %v1626
    %v1737 = vpack.c.b16 %v1629, %v1627
    %v1738 = vpack.c.b16 %v1632, %v1630
    %v1739 = vpack.c.b16 %v1633, %v1631
    %v1740 = vpack.c.b16 %v1636, %v1634
    %v1741 = vpack.c.b16 %v1637, %v1635
    %v1742 = vpack.c.b16 %v1640, %v1638
    %v1743 = vpack.c.b16 %v1641, %v1639
    %v1744 = vpack.c.b16 %v1644, %v1642
    %v1745 = vpack.c.b16 %v1645, %v1643
    %v1746 = vpack.c.b16 %v1648, %v1646
    %v1747 = vpack.c.b16 %v1649, %v1647
    %v1748 = vpack.c.b16 %v1652, %v1650
    %v1749 = vpack.c.b16 %v1653, %v1651
    %1846 = vmatprep.subr.bf16.mxu0 %v1655
    %1847 = vmatpush1.bf16.msra.mxu0 %v1654
    %1848 = vmatprep.subr.bf16.mxu0 %v1657
    %1849 = vmatpush1.bf16.msra.mxu0 %v1656
    %1850 = vmatprep.subr.bf16.mxu0 %v1659
    %1851 = vmatpush1.bf16.msra.mxu0 %v1658
    %1852 = vmatprep.subr.bf16.mxu0 %v1661
    %1853 = vmatpush1.bf16.msra.mxu0 %v1660
    %1854 = vmatprep.subr.bf16.mxu0 %v1663
    %1855 = vmatpush1.bf16.msra.mxu0 %v1662
    %1856 = vmatprep.subr.bf16.mxu0 %v1665
    %1857 = vmatpush1.bf16.msra.mxu0 %v1664
    %1858 = vmatprep.subr.bf16.mxu0 %v1667
    %1859 = vmatpush1.bf16.msra.mxu0 %v1666
    %1860 = vmatprep.subr.bf16.mxu0 %v1669
    %1861 = vmatpush1.bf16.msra.mxu0 %v1668
    %1862 = vmatprep.subr.bf16.mxu0 %v1671
    %1863 = vmatpush1.bf16.msra.mxu0 %v1670
    %1864 = vmatprep.subr.bf16.mxu0 %v1673
    %1865 = vmatpush1.bf16.msra.mxu0 %v1672
    %1866 = vmatprep.subr.bf16.mxu0 %v1675
    %1867 = vmatpush1.bf16.msra.mxu0 %v1674
    %1868 = vmatprep.subr.bf16.mxu0 %v1677
    %1869 = vmatpush1.bf16.msra.mxu0 %v1676
    %1870 = vmatprep.subr.bf16.mxu0 %v1679
    %1871 = vmatpush1.bf16.msra.mxu0 %v1678
    %1872 = vmatprep.subr.bf16.mxu0 %v1681
    %1873 = vmatpush1.bf16.msra.mxu0 %v1680
    %1874 = vmatprep.subr.bf16.mxu0 %v1683
    %1875 = vmatpush1.bf16.msra.mxu0 %v1682
    %1876 = vmatprep.subr.bf16.mxu0 %v1685
    %1877 = vmatpush1.bf16.msra.mxu0 %v1684
    %1878 = vmatprep.mubr.bf16.mxu0 %v356
    %1879 = vmatmul.mubr.bf16.gmra.mrb[0].mxu0 %v355
    %v1880 = vpop.f32.mrb[0].mxu0
    %v1881 = vadd.f32 0.0, %v1880
    %v1882 = vpop.f32.mrb[0].mxu0
    %v1883 = vadd.f32 0.0, %v1882
    %v1884 = vpop.f32.mrb[0].mxu0
    %v1885 = vadd.f32 0.0, %v1884
    %v1886 = vpop.f32.mrb[0].mxu0
    %v1887 = vadd.f32 0.0, %v1886
    %1888 = vmatprep.mubr.bf16.mxu0 %v362
    %1889 = vmatmul.mubr.bf16.gmra.mrb[0].mxu0 %v361
    %v1890 = vpop.f32.mrb[0].mxu0
    %v1891 = vadd.f32 0.0, %v1890
    %v1892 = vpop.f32.mrb[0].mxu0
    %v1893 = vadd.f32 0.0, %v1892
    %v1894 = vpop.f32.mrb[0].mxu0
    %v1895 = vadd.f32 0.0, %v1894
    %v1896 = vpop.f32.mrb[0].mxu0
    %v1897 = vadd.f32 0.0, %v1896
    %1898 = vmatprep.mubr.bf16.mxu0 %v368
    %1899 = vmatmul.mubr.bf16.gmra.mrb[0].mxu0 %v367
    %v1900 = vpop.f32.mrb[0].mxu0
    %v1901 = vadd.f32 0.0, %v1900
    %v1902 = vpop.f32.mrb[0].mxu0
    %v1903 = vadd.f32 0.0, %v1902
    %v1904 = vpop.f32.mrb[0].mxu0
    %v1905 = vadd.f32 0.0, %v1904
    %v1906 = vpop.f32.mrb[0].mxu0
    %v1907 = vadd.f32 0.0, %v1906
    %1908 = vmatprep.mubr.bf16.mxu0 %v374
    %1909 = vmatmul.mubr.bf16.gmra.mrb[0].mxu0 %v373
    %v1910 = vpop.f32.mrb[0].mxu0
    %v1911 = vadd.f32 0.0, %v1910
    %v1912 = vpop.f32.mrb[0].mxu0
    %v1913 = vadd.f32 0.0, %v1912
    %v1914 = vpop.f32.mrb[0].mxu0
    %v1915 = vadd.f32 0.0, %v1914
    %v1916 = vpop.f32.mrb[0].mxu0
    %v1917 = vadd.f32 0.0, %v1916
    %1918 = vmatprep.mubr.bf16.mxu0 %v380
    %1919 = vmatmul.mubr.bf16.gmra.mrb[0].mxu0 %v379
    %v1920 = vpop.f32.mrb[0].mxu0
    %v1921 = vadd.f32 0.0, %v1920
    %v1922 = vpop.f32.mrb[0].mxu0
    %v1923 = vadd.f32 0.0, %v1922
    %v1924 = vpop.f32.mrb[0].mxu0
    %v1925 = vadd.f32 0.0, %v1924
    %v1926 = vpop.f32.mrb[0].mxu0
    %v1927 = vadd.f32 0.0, %v1926
    %1928 = vmatprep.mubr.bf16.mxu0 %v386
    %1929 = vmatmul.mubr.bf16.gmra.mrb[0].mxu0 %v385
    %v1930 = vpop.f32.mrb[0].mxu0
    %v1931 = vadd.f32 0.0, %v1930
    %v1932 = vpop.f32.mrb[0].mxu0
    %v1933 = vadd.f32 0.0, %v1932
    %v1934 = vpop.f32.mrb[0].mxu0
    %v1935 = vadd.f32 0.0, %v1934
    %v1936 = vpop.f32.mrb[0].mxu0
    %v1937 = vadd.f32 0.0, %v1936
    %1938 = vmatprep.mubr.bf16.mxu0 %v392
    %1939 = vmatmul.mubr.bf16.gmra.mrb[0].mxu0 %v391
    %v1940 = vpop.f32.mrb[0].mxu0
    %v1941 = vadd.f32 0.0, %v1940
    %v1942 = vpop.f32.mrb[0].mxu0
    %v1943 = vadd.f32 0.0, %v1942
    %v1944 = vpop.f32.mrb[0].mxu0
    %v1945 = vadd.f32 0.0, %v1944
    %v1946 = vpop.f32.mrb[0].mxu0
    %v1947 = vadd.f32 0.0, %v1946
    %1948 = vmatprep.mubr.bf16.mxu0 %v398
    %1949 = vmatmul.mubr.bf16.gmra.mrb[0].mxu0 %v397
    %v1950 = vpop.f32.mrb[0].mxu0
    %v1951 = vpop.f32.mrb[0].mxu0
    %v1952 = vpop.f32.mrb[0].mxu0
    %v1953 = vpop.f32.mrb[0].mxu0
    %1954 = vdwg.mxu0
    %1955 = vmatprep.subr.bf16.mxu0 %v1687
    %1956 = vmatpush1.bf16.msra.mxu0 %v1686
    %1957 = vmatprep.subr.bf16.mxu0 %v1689
    %1958 = vmatpush1.bf16.msra.mxu0 %v1688
    %1959 = vmatprep.subr.bf16.mxu0 %v1691
    %1960 = vmatpush1.bf16.msra.mxu0 %v1690
    %1961 = vmatprep.subr.bf16.mxu0 %v1693
    %1962 = vmatpush1.bf16.msra.mxu0 %v1692
    %1963 = vmatprep.subr.bf16.mxu0 %v1695
    %1964 = vmatpush1.bf16.msra.mxu0 %v1694
    %1965 = vmatprep.subr.bf16.mxu0 %v1697
    %1966 = vmatpush1.bf16.msra.mxu0 %v1696
    %1967 = vmatprep.subr.bf16.mxu0 %v1699
    %1968 = vmatpush1.bf16.msra.mxu0 %v1698
    %1969 = vmatprep.subr.bf16.mxu0 %v1701
    %1970 = vmatpush1.bf16.msra.mxu0 %v1700
    %1971 = vmatprep.subr.bf16.mxu0 %v1703
    %1972 = vmatpush1.bf16.msra.mxu0 %v1702
    %1973 = vmatprep.subr.bf16.mxu0 %v1705
    %1974 = vmatpush1.bf16.msra.mxu0 %v1704
    %1975 = vmatprep.subr.bf16.mxu0 %v1707
    %1976 = vmatpush1.bf16.msra.mxu0 %v1706
    %1977 = vmatprep.subr.bf16.mxu0 %v1709
    %1978 = vmatpush1.bf16.msra.mxu0 %v1708
    %1979 = vmatprep.subr.bf16.mxu0 %v1711
    %1980 = vmatpush1.bf16.msra.mxu0 %v1710
    %1981 = vmatprep.subr.bf16.mxu0 %v1713
    %1982 = vmatpush1.bf16.msra.mxu0 %v1712
    %1983 = vmatprep.subr.bf16.mxu0 %v1715
    %1984 = vmatpush1.bf16.msra.mxu0 %v1714
    %1985 = vmatprep.subr.bf16.mxu0 %v1717
    %1986 = vmatpush1.bf16.msra.mxu0 %v1716
    %1987 = vmatprep.mubr.bf16.mxu0 %v358
    %1988 = vmatmul.mubr.bf16.gmra.mrb[0].mxu0 %v357
    %v1989 = vpop.f32.mrb[0].mxu0
    %v1990 = vadd.f32 %v1881, %v1989
    %v1991 = vpop.f32.mrb[0].mxu0
    %v1992 = vadd.f32 %v1883, %v1991
    %v1993 = vpop.f32.mrb[0].mxu0
    %v1994 = vadd.f32 %v1885, %v1993
    %v1995 = vpop.f32.mrb[0].mxu0
    %v1996 = vadd.f32 %v1887, %v1995
    %1997 = vmatprep.mubr.bf16.mxu0 %v364
    %1998 = vmatmul.mubr.bf16.gmra.mrb[0].mxu0 %v363
    %v1999 = vpop.f32.mrb[0].mxu0
    %v2000 = vadd.f32 %v1891, %v1999
    %v2001 = vpop.f32.mrb[0].mxu0
    %v2002 = vadd.f32 %v1893, %v2001
    %v2003 = vpop.f32.mrb[0].mxu0
    %v2004 = vadd.f32 %v1895, %v2003
    %v2005 = vpop.f32.mrb[0].mxu0
    %v2006 = vadd.f32 %v1897, %v2005
    %2007 = vmatprep.mubr.bf16.mxu0 %v370
    %2008 = vmatmul.mubr.bf16.gmra.mrb[0].mxu0 %v369
    %v2009 = vpop.f32.mrb[0].mxu0
    %v2010 = vadd.f32 %v1901, %v2009
    %v2011 = vpop.f32.mrb[0].mxu0
    %v2012 = vadd.f32 %v1903, %v2011
    %v2013 = vpop.f32.mrb[0].mxu0
    %v2014 = vadd.f32 %v1905, %v2013
    %v2015 = vpop.f32.mrb[0].mxu0
    %v2016 = vadd.f32 %v1907, %v2015
    %2017 = vmatprep.mubr.bf16.mxu0 %v376
    %2018 = vmatmul.mubr.bf16.gmra.mrb[0].mxu0 %v375
    %v2019 = vpop.f32.mrb[0].mxu0
    %v2020 = vadd.f32 %v1911, %v2019
    %v2021 = vpop.f32.mrb[0].mxu0
    %v2022 = vadd.f32 %v1913, %v2021
    %v2023 = vpop.f32.mrb[0].mxu0
    %v2024 = vadd.f32 %v1915, %v2023
    %v2025 = vpop.f32.mrb[0].mxu0
    %v2026 = vadd.f32 %v1917, %v2025
    %2027 = vmatprep.mubr.bf16.mxu0 %v382
    %2028 = vmatmul.mubr.bf16.gmra.mrb[0].mxu0 %v381
    %v2029 = vpop.f32.mrb[0].mxu0
    %v2030 = vadd.f32 %v1921, %v2029
    %v2031 = vpop.f32.mrb[0].mxu0
    %v2032 = vadd.f32 %v1923, %v2031
    %v2033 = vpop.f32.mrb[0].mxu0
    %v2034 = vadd.f32 %v1925, %v2033
    %v2035 = vpop.f32.mrb[0].mxu0
    %v2036 = vadd.f32 %v1927, %v2035
    %2037 = vmatprep.mubr.bf16.mxu0 %v388
    %2038 = vmatmul.mubr.bf16.gmra.mrb[0].mxu0 %v387
    %v2039 = vpop.f32.mrb[0].mxu0
    %v2040 = vadd.f32 %v1931, %v2039
    %v2041 = vpop.f32.mrb[0].mxu0
    %v2042 = vadd.f32 %v1933, %v2041
    %v2043 = vpop.f32.mrb[0].mxu0
    %v2044 = vadd.f32 %v1935, %v2043
    %v2045 = vpop.f32.mrb[0].mxu0
    %v2046 = vadd.f32 %v1937, %v2045
    %2047 = vmatprep.mubr.bf16.mxu0 %v394
    %2048 = vmatmul.mubr.bf16.gmra.mrb[0].mxu0 %v393
    %v2049 = vpop.f32.mrb[0].mxu0
    %v2050 = vadd.f32 %v1941, %v2049
    %v2051 = vpop.f32.mrb[0].mxu0
    %v2052 = vadd.f32 %v1943, %v2051
    %v2053 = vpop.f32.mrb[0].mxu0
    %v2054 = vadd.f32 %v1945, %v2053
    %v2055 = vpop.f32.mrb[0].mxu0
    %v2056 = vadd.f32 %v1947, %v2055
    %2057 = vmatprep.mubr.bf16.mxu0 %v400
    %2058 = vmatmul.mubr.bf16.gmra.mrb[0].mxu0 %v399
    %v2059 = vpop.f32.mrb[0].mxu0
    %v2060 = vpop.f32.mrb[0].mxu0
    %v2061 = vpop.f32.mrb[0].mxu0
    %v2062 = vpop.f32.mrb[0].mxu0
    %2063 = vdwg.mxu0
    %2064 = vmatprep.subr.bf16.mxu0 %v1719
    %2065 = vmatpush1.bf16.msra.mxu0 %v1718
    %2066 = vmatprep.subr.bf16.mxu0 %v1721
    %2067 = vmatpush1.bf16.msra.mxu0 %v1720
    %2068 = vmatprep.subr.bf16.mxu0 %v1723
    %2069 = vmatpush1.bf16.msra.mxu0 %v1722
    %2070 = vmatprep.subr.bf16.mxu0 %v1725
    %2071 = vmatpush1.bf16.msra.mxu0 %v1724
    %2072 = vmatprep.subr.bf16.mxu0 %v1727
    %2073 = vmatpush1.bf16.msra.mxu0 %v1726
    %2074 = vmatprep.subr.bf16.mxu0 %v1729
    %2075 = vmatpush1.bf16.msra.mxu0 %v1728
    %2076 = vmatprep.subr.bf16.mxu0 %v1731
    %2077 = vmatpush1.bf16.msra.mxu0 %v1730
    %2078 = vmatprep.subr.bf16.mxu0 %v1733
    %2079 = vmatpush1.bf16.msra.mxu0 %v1732
    %2080 = vmatprep.subr.bf16.mxu0 %v1735
    %2081 = vmatpush1.bf16.msra.mxu0 %v1734
    %2082 = vmatprep.subr.bf16.mxu0 %v1737
    %2083 = vmatpush1.bf16.msra.mxu0 %v1736
    %2084 = vmatprep.subr.bf16.mxu0 %v1739
    %2085 = vmatpush1.bf16.msra.mxu0 %v1738
    %2086 = vmatprep.subr.bf16.mxu0 %v1741
    %2087 = vmatpush1.bf16.msra.mxu0 %v1740
    %2088 = vmatprep.subr.bf16.mxu0 %v1743
    %2089 = vmatpush1.bf16.msra.mxu0 %v1742
    %2090 = vmatprep.subr.bf16.mxu0 %v1745
    %2091 = vmatpush1.bf16.msra.mxu0 %v1744
    %2092 = vmatprep.subr.bf16.mxu0 %v1747
    %2093 = vmatpush1.bf16.msra.mxu0 %v1746
    %2094 = vmatprep.subr.bf16.mxu0 %v1749
    %2095 = vmatpush1.bf16.msra.mxu0 %v1748
    %2096 = vmatprep.mubr.bf16.mxu0 %v360
    %2097 = vmatmul.mubr.bf16.gmra.mrb[0].mxu0 %v359
    %v2098 = vpop.f32.mrb[0].mxu0
    %v2099 = vadd.f32 %v1990, %v2098
    %v2100 = vpop.f32.mrb[0].mxu0
    %v2101 = vadd.f32 %v1992, %v2100
    %v2102 = vpop.f32.mrb[0].mxu0
    %v2103 = vadd.f32 %v1994, %v2102
    %v2104 = vpop.f32.mrb[0].mxu0
    %v2105 = vadd.f32 %v1996, %v2104
    %2106 = vmatprep.mubr.bf16.mxu0 %v366
    %2107 = vmatmul.mubr.bf16.gmra.mrb[0].mxu0 %v365
    %v2108 = vpop.f32.mrb[0].mxu0
    %v2109 = vadd.f32 %v2000, %v2108
    %v2110 = vpop.f32.mrb[0].mxu0
    %v2111 = vadd.f32 %v2002, %v2110
    %v2112 = vpop.f32.mrb[0].mxu0
    %v2113 = vadd.f32 %v2004, %v2112
    %v2114 = vpop.f32.mrb[0].mxu0
    %v2115 = vadd.f32 %v2006, %v2114
    %2116 = vmatprep.mubr.bf16.mxu0 %v372
    %2117 = vmatmul.mubr.bf16.gmra.mrb[0].mxu0 %v371
    %v2118 = vpop.f32.mrb[0].mxu0
    %v2119 = vadd.f32 %v2010, %v2118
    %v2120 = vpop.f32.mrb[0].mxu0
    %v2121 = vadd.f32 %v2012, %v2120
    %v2122 = vpop.f32.mrb[0].mxu0
    %v2123 = vadd.f32 %v2014, %v2122
    %v2124 = vpop.f32.mrb[0].mxu0
    %v2125 = vadd.f32 %v2016, %v2124
    %2126 = vmatprep.mubr.bf16.mxu0 %v378
    %2127 = vmatmul.mubr.bf16.gmra.mrb[0].mxu0 %v377
    %v2128 = vpop.f32.mrb[0].mxu0
    %v2129 = vadd.f32 %v2020, %v2128
    %v2130 = vpop.f32.mrb[0].mxu0
    %v2131 = vadd.f32 %v2022, %v2130
    %v2132 = vpop.f32.mrb[0].mxu0
    %v2133 = vadd.f32 %v2024, %v2132
    %v2134 = vpop.f32.mrb[0].mxu0
    %v2135 = vadd.f32 %v2026, %v2134
    %2136 = vmatprep.mubr.bf16.mxu0 %v384
    %2137 = vmatmul.mubr.bf16.gmra.mrb[0].mxu0 %v383
    %v2138 = vpop.f32.mrb[0].mxu0
    %v2139 = vadd.f32 %v2030, %v2138
    %v2140 = vpop.f32.mrb[0].mxu0
    %v2141 = vadd.f32 %v2032, %v2140
    %v2142 = vpop.f32.mrb[0].mxu0
    %v2143 = vadd.f32 %v2034, %v2142
    %v2144 = vpop.f32.mrb[0].mxu0
    %v2145 = vadd.f32 %v2036, %v2144
    %2146 = vmatprep.mubr.bf16.mxu0 %v390
    %2147 = vmatmul.mubr.bf16.gmra.mrb[0].mxu0 %v389
    %v2148 = vpop.f32.mrb[0].mxu0
    %v2149 = vadd.f32 %v2040, %v2148
    %v2150 = vpop.f32.mrb[0].mxu0
    %v2151 = vadd.f32 %v2042, %v2150
    %v2152 = vpop.f32.mrb[0].mxu0
    %v2153 = vadd.f32 %v2044, %v2152
    %v2154 = vpop.f32.mrb[0].mxu0
    %v2155 = vadd.f32 %v2046, %v2154
    %2156 = vmatprep.mubr.bf16.mxu0 %v396
    %2157 = vmatmul.mubr.bf16.gmra.mrb[0].mxu0 %v395
    %v2158 = vpop.f32.mrb[0].mxu0
    %v2159 = vadd.f32 %v2050, %v2158
    %v2160 = vpop.f32.mrb[0].mxu0
    %v2161 = vadd.f32 %v2052, %v2160
    %v2162 = vpop.f32.mrb[0].mxu0
    %v2163 = vadd.f32 %v2054, %v2162
    %v2164 = vpop.f32.mrb[0].mxu0
    %v2165 = vadd.f32 %v2056, %v2164
    %2166 = vmatprep.mubr.bf16.mxu0 %v402
    %2167 = vmatmul.mubr.bf16.gmra.mrb[0].mxu0 %v401
    %v2168 = vpop.f32.mrb[0].mxu0
    %v2169 = vpop.f32.mrb[0].mxu0
    %v2170 = vpop.f32.mrb[0].mxu0
    %v2171 = vpop.f32.mrb[0].mxu0
    %2172 = vdwg.mxu0
    %v2173 = vadd.f32 %v1192, 0.0
    %v2174 = vadd.f32 %v1194, 0.0
    %v2175 = vadd.f32 %v1196, 0.0
    %v2176 = vadd.f32 %v1198, 0.0
    %v2177 = vadd.f32 %v1202, %v2099
    %v2178 = vadd.f32 %v1204, %v2101
    %v2179 = vadd.f32 %v1206, %v2103
    %v2180 = vadd.f32 %v1208, %v2105
    %v2181 = vadd.f32 %v1212, %v2109
    %v2182 = vadd.f32 %v1214, %v2111
    %v2183 = vadd.f32 %v1216, %v2113
    %v2184 = vadd.f32 %v1218, %v2115
    %v2185 = vadd.f32 %v1222, %v2119
    %v2186 = vadd.f32 %v1224, %v2121
    %v2187 = vadd.f32 %v1226, %v2123
    %v2188 = vadd.f32 %v1228, %v2125
    %v2189 = vadd.f32 %v1232, %v2129
    %v2190 = vadd.f32 %v1234, %v2131
    %v2191 = vadd.f32 %v1236, %v2133
    %v2192 = vadd.f32 %v1238, %v2135
    %v2193 = vadd.f32 %v1242, %v2139
    %v2194 = vadd.f32 %v1244, %v2141
    %v2195 = vadd.f32 %v1246, %v2143
    %v2196 = vadd.f32 %v1248, %v2145
    %v2197 = vadd.f32 %v1252, %v2149
    %v2198 = vadd.f32 %v1254, %v2151
    %v2199 = vadd.f32 %v1256, %v2153
    %v2200 = vadd.f32 %v1258, %v2155
    %v2201 = vadd.f32 %v1262, %v2159
    %v2202 = vadd.f32 %v1264, %v2161
    %v2203 = vadd.f32 %v1266, %v2163
    %v2204 = vadd.f32 %v1268, %v2165
    %s2205 = scalar_lea.vmem [#allocation5], 1536
    %v2206 = vld [vmem:[%s2205] sm:$0xff]
    %v2207 = vld [vmem:[%s2205 + $0x8] sm:$0xff]
    %v2208 = vld [vmem:[%s2205 + $0x10] sm:$0xff]
    %v2209 = vld [vmem:[%s2205 + $0x18] sm:$0xff]
    %v2210 = vld [vmem:[%s2205 + $0x20] sm:$0xff]
    %v2211 = vld [vmem:[%s2205 + $0x28] sm:$0xff]
    %v2212 = vld [vmem:[%s2205 + $0x30] sm:$0xff]
    %v2213 = vld [vmem:[%s2205 + $0x38] sm:$0xff]
    %v2214 = vld [vmem:[%s2205 + $0x40] sm:$0xff]
    %v2215 = vld [vmem:[%s2205 + $0x48] sm:$0xff]
    %v2216 = vld [vmem:[%s2205 + $0x50] sm:$0xff]
    %v2217 = vld [vmem:[%s2205 + $0x58] sm:$0xff]
    %v2218 = vld [vmem:[%s2205 + $0x60] sm:$0xff]
    %v2219 = vld [vmem:[%s2205 + $0x68] sm:$0xff]
    %v2220 = vld [vmem:[%s2205 + $0x70] sm:$0xff]
    %v2221 = vld [vmem:[%s2205 + $0x78] sm:$0xff]
    %v2222 = vld [vmem:[%s2205 + $0x80] sm:$0xff]
    %v2223 = vld [vmem:[%s2205 + $0x88] sm:$0xff]
    %v2224 = vld [vmem:[%s2205 + $0x90] sm:$0xff]
    %v2225 = vld [vmem:[%s2205 + $0x98] sm:$0xff]
    %v2226 = vld [vmem:[%s2205 + $0xa0] sm:$0xff]
    %v2227 = vld [vmem:[%s2205 + $0xa8] sm:$0xff]
    %v2228 = vld [vmem:[%s2205 + $0xb0] sm:$0xff]
    %v2229 = vld [vmem:[%s2205 + $0xb8] sm:$0xff]
    %v2230 = vld [vmem:[%s2205 + $0xc0] sm:$0xff]
    %v2231 = vld [vmem:[%s2205 + $0xc8] sm:$0xff]
    %v2232 = vld [vmem:[%s2205 + $0xd0] sm:$0xff]
    %v2233 = vld [vmem:[%s2205 + $0xd8] sm:$0xff]
    %v2234 = vld [vmem:[%s2205 + $0xe0] sm:$0xff]
    %v2235 = vld [vmem:[%s2205 + $0xe8] sm:$0xff]
    %v2236 = vld [vmem:[%s2205 + $0xf0] sm:$0xff]
    %v2237 = vld [vmem:[%s2205 + $0xf8] sm:$0xff]
    %v2238 = vld [vmem:[%s2205 + $0x100] sm:$0xff]
    %v2239 = vld [vmem:[%s2205 + $0x108] sm:$0xff]
    %v2240 = vld [vmem:[%s2205 + $0x110] sm:$0xff]
    %v2241 = vld [vmem:[%s2205 + $0x118] sm:$0xff]
    %v2242 = vld [vmem:[%s2205 + $0x120] sm:$0xff]
    %v2243 = vld [vmem:[%s2205 + $0x128] sm:$0xff]
    %v2244 = vld [vmem:[%s2205 + $0x130] sm:$0xff]
    %v2245 = vld [vmem:[%s2205 + $0x138] sm:$0xff]
    %v2246 = vld [vmem:[%s2205 + $0x140] sm:$0xff]
    %v2247 = vld [vmem:[%s2205 + $0x148] sm:$0xff]
    %v2248 = vld [vmem:[%s2205 + $0x150] sm:$0xff]
    %v2249 = vld [vmem:[%s2205 + $0x158] sm:$0xff]
    %v2250 = vld [vmem:[%s2205 + $0x160] sm:$0xff]
    %v2251 = vld [vmem:[%s2205 + $0x168] sm:$0xff]
    %v2252 = vld [vmem:[%s2205 + $0x170] sm:$0xff]
    %v2253 = vld [vmem:[%s2205 + $0x178] sm:$0xff]
    %v2254 = vld [vmem:[%s2205 + $0x180] sm:$0xff]
    %v2255 = vld [vmem:[%s2205 + $0x188] sm:$0xff]
    %v2256 = vld [vmem:[%s2205 + $0x190] sm:$0xff]
    %v2257 = vld [vmem:[%s2205 + $0x198] sm:$0xff]
    %v2258 = vld [vmem:[%s2205 + $0x1a0] sm:$0xff]
    %v2259 = vld [vmem:[%s2205 + $0x1a8] sm:$0xff]
    %v2260 = vld [vmem:[%s2205 + $0x1b0] sm:$0xff]
    %v2261 = vld [vmem:[%s2205 + $0x1b8] sm:$0xff]
    %v2262 = vld [vmem:[%s2205 + $0x1c0] sm:$0xff]
    %v2263 = vld [vmem:[%s2205 + $0x1c8] sm:$0xff]
    %v2264 = vld [vmem:[%s2205 + $0x1d0] sm:$0xff]
    %v2265 = vld [vmem:[%s2205 + $0x1d8] sm:$0xff]
    %v2266 = vld [vmem:[%s2205 + $0x1e0] sm:$0xff]
    %v2267 = vld [vmem:[%s2205 + $0x1e8] sm:$0xff]
    %v2268 = vld [vmem:[%s2205 + $0x1f0] sm:$0xff]
    %v2269 = vld [vmem:[%s2205 + $0x1f8] sm:$0xff]
    %v2270 = vld [vmem:[%s2205 + $0x200] sm:$0xff]
    %v2271 = vld [vmem:[%s2205 + $0x208] sm:$0xff]
    %v2272 = vld [vmem:[%s2205 + $0x210] sm:$0xff]
    %v2273 = vld [vmem:[%s2205 + $0x218] sm:$0xff]
    %v2274 = vld [vmem:[%s2205 + $0x220] sm:$0xff]
    %v2275 = vld [vmem:[%s2205 + $0x228] sm:$0xff]
    %v2276 = vld [vmem:[%s2205 + $0x230] sm:$0xff]
    %v2277 = vld [vmem:[%s2205 + $0x238] sm:$0xff]
    %v2278 = vld [vmem:[%s2205 + $0x240] sm:$0xff]
    %v2279 = vld [vmem:[%s2205 + $0x248] sm:$0xff]
    %v2280 = vld [vmem:[%s2205 + $0x250] sm:$0xff]
    %v2281 = vld [vmem:[%s2205 + $0x258] sm:$0xff]
    %v2282 = vld [vmem:[%s2205 + $0x260] sm:$0xff]
    %v2283 = vld [vmem:[%s2205 + $0x268] sm:$0xff]
    %v2284 = vld [vmem:[%s2205 + $0x270] sm:$0xff]
    %v2285 = vld [vmem:[%s2205 + $0x278] sm:$0xff]
    %v2286 = vld [vmem:[%s2205 + $0x280] sm:$0xff]
    %v2287 = vld [vmem:[%s2205 + $0x288] sm:$0xff]
    %v2288 = vld [vmem:[%s2205 + $0x290] sm:$0xff]
    %v2289 = vld [vmem:[%s2205 + $0x298] sm:$0xff]
    %v2290 = vld [vmem:[%s2205 + $0x2a0] sm:$0xff]
    %v2291 = vld [vmem:[%s2205 + $0x2a8] sm:$0xff]
    %v2292 = vld [vmem:[%s2205 + $0x2b0] sm:$0xff]
    %v2293 = vld [vmem:[%s2205 + $0x2b8] sm:$0xff]
    %v2294 = vld [vmem:[%s2205 + $0x2c0] sm:$0xff]
    %v2295 = vld [vmem:[%s2205 + $0x2c8] sm:$0xff]
    %v2296 = vld [vmem:[%s2205 + $0x2d0] sm:$0xff]
    %v2297 = vld [vmem:[%s2205 + $0x2d8] sm:$0xff]
    %v2298 = vld [vmem:[%s2205 + $0x2e0] sm:$0xff]
    %v2299 = vld [vmem:[%s2205 + $0x2e8] sm:$0xff]
    %v2300 = vld [vmem:[%s2205 + $0x2f0] sm:$0xff]
    %v2301 = vld [vmem:[%s2205 + $0x2f8] sm:$0xff]
    %v2398 = vunpack.c.l.b16 %v2206
    %v2399 = vunpack.c.h.b16 %v2206
    %v2400 = vunpack.c.l.b16 %v2207
    %v2401 = vunpack.c.h.b16 %v2207
    %v2402 = vunpack.c.l.b16 %v2208
    %v2403 = vunpack.c.h.b16 %v2208
    %v2404 = vunpack.c.l.b16 %v2209
    %v2405 = vunpack.c.h.b16 %v2209
    %v2406 = vunpack.c.l.b16 %v2210
    %v2407 = vunpack.c.h.b16 %v2210
    %v2408 = vunpack.c.l.b16 %v2211
    %v2409 = vunpack.c.h.b16 %v2211
    %v2410 = vunpack.c.l.b16 %v2212
    %v2411 = vunpack.c.h.b16 %v2212
    %v2412 = vunpack.c.l.b16 %v2213
    %v2413 = vunpack.c.h.b16 %v2213
    %v2414 = vunpack.c.l.b16 %v2214
    %v2415 = vunpack.c.h.b16 %v2214
    %v2416 = vunpack.c.l.b16 %v2215
    %v2417 = vunpack.c.h.b16 %v2215
    %v2418 = vunpack.c.l.b16 %v2216
    %v2419 = vunpack.c.h.b16 %v2216
    %v2420 = vunpack.c.l.b16 %v2217
    %v2421 = vunpack.c.h.b16 %v2217
    %v2422 = vunpack.c.l.b16 %v2218
    %v2423 = vunpack.c.h.b16 %v2218
    %v2424 = vunpack.c.l.b16 %v2219
    %v2425 = vunpack.c.h.b16 %v2219
    %v2426 = vunpack.c.l.b16 %v2220
    %v2427 = vunpack.c.h.b16 %v2220
    %v2428 = vunpack.c.l.b16 %v2221
    %v2429 = vunpack.c.h.b16 %v2221
    %v2430 = vunpack.c.l.b16 %v2222
    %v2431 = vunpack.c.h.b16 %v2222
    %v2432 = vunpack.c.l.b16 %v2223
    %v2433 = vunpack.c.h.b16 %v2223
    %v2434 = vunpack.c.l.b16 %v2224
    %v2435 = vunpack.c.h.b16 %v2224
    %v2436 = vunpack.c.l.b16 %v2225
    %v2437 = vunpack.c.h.b16 %v2225
    %v2438 = vunpack.c.l.b16 %v2226
    %v2439 = vunpack.c.h.b16 %v2226
    %v2440 = vunpack.c.l.b16 %v2227
    %v2441 = vunpack.c.h.b16 %v2227
    %v2442 = vunpack.c.l.b16 %v2228
    %v2443 = vunpack.c.h.b16 %v2228
    %v2444 = vunpack.c.l.b16 %v2229
    %v2445 = vunpack.c.h.b16 %v2229
    %v2446 = vunpack.c.l.b16 %v2230
    %v2447 = vunpack.c.h.b16 %v2230
    %v2448 = vunpack.c.l.b16 %v2231
    %v2449 = vunpack.c.h.b16 %v2231
    %v2450 = vunpack.c.l.b16 %v2232
    %v2451 = vunpack.c.h.b16 %v2232
    %v2452 = vunpack.c.l.b16 %v2233
    %v2453 = vunpack.c.h.b16 %v2233
    %v2454 = vunpack.c.l.b16 %v2234
    %v2455 = vunpack.c.h.b16 %v2234
    %v2456 = vunpack.c.l.b16 %v2235
    %v2457 = vunpack.c.h.b16 %v2235
    %v2458 = vunpack.c.l.b16 %v2236
    %v2459 = vunpack.c.h.b16 %v2236
    %v2460 = vunpack.c.l.b16 %v2237
    %v2461 = vunpack.c.h.b16 %v2237
    %v2462 = vunpack.c.l.b16 %v2238
    %v2463 = vunpack.c.h.b16 %v2238
    %v2464 = vunpack.c.l.b16 %v2239
    %v2465 = vunpack.c.h.b16 %v2239
    %v2466 = vunpack.c.l.b16 %v2240
    %v2467 = vunpack.c.h.b16 %v2240
    %v2468 = vunpack.c.l.b16 %v2241
    %v2469 = vunpack.c.h.b16 %v2241
    %v2470 = vunpack.c.l.b16 %v2242
    %v2471 = vunpack.c.h.b16 %v2242
    %v2472 = vunpack.c.l.b16 %v2243
    %v2473 = vunpack.c.h.b16 %v2243
    %v2474 = vunpack.c.l.b16 %v2244
    %v2475 = vunpack.c.h.b16 %v2244
    %v2476 = vunpack.c.l.b16 %v2245
    %v2477 = vunpack.c.h.b16 %v2245
    %v2478 = vunpack.c.l.b16 %v2246
    %v2479 = vunpack.c.h.b16 %v2246
    %v2480 = vunpack.c.l.b16 %v2247
    %v2481 = vunpack.c.h.b16 %v2247
    %v2482 = vunpack.c.l.b16 %v2248
    %v2483 = vunpack.c.h.b16 %v2248
    %v2484 = vunpack.c.l.b16 %v2249
    %v2485 = vunpack.c.h.b16 %v2249
    %v2486 = vunpack.c.l.b16 %v2250
    %v2487 = vunpack.c.h.b16 %v2250
    %v2488 = vunpack.c.l.b16 %v2251
    %v2489 = vunpack.c.h.b16 %v2251
    %v2490 = vunpack.c.l.b16 %v2252
    %v2491 = vunpack.c.h.b16 %v2252
    %v2492 = vunpack.c.l.b16 %v2253
    %v2493 = vunpack.c.h.b16 %v2253
    %v2494 = vunpack.c.l.b16 %v2254
    %v2495 = vunpack.c.h.b16 %v2254
    %v2496 = vunpack.c.l.b16 %v2255
    %v2497 = vunpack.c.h.b16 %v2255
    %v2498 = vunpack.c.l.b16 %v2256
    %v2499 = vunpack.c.h.b16 %v2256
    %v2500 = vunpack.c.l.b16 %v2257
    %v2501 = vunpack.c.h.b16 %v2257
    %v2502 = vunpack.c.l.b16 %v2258
    %v2503 = vunpack.c.h.b16 %v2258
    %v2504 = vunpack.c.l.b16 %v2259
    %v2505 = vunpack.c.h.b16 %v2259
    %v2506 = vunpack.c.l.b16 %v2260
    %v2507 = vunpack.c.h.b16 %v2260
    %v2508 = vunpack.c.l.b16 %v2261
    %v2509 = vunpack.c.h.b16 %v2261
    %v2510 = vunpack.c.l.b16 %v2262
    %v2511 = vunpack.c.h.b16 %v2262
    %v2512 = vunpack.c.l.b16 %v2263
    %v2513 = vunpack.c.h.b16 %v2263
    %v2514 = vunpack.c.l.b16 %v2264
    %v2515 = vunpack.c.h.b16 %v2264
    %v2516 = vunpack.c.l.b16 %v2265
    %v2517 = vunpack.c.h.b16 %v2265
    %v2518 = vunpack.c.l.b16 %v2266
    %v2519 = vunpack.c.h.b16 %v2266
    %v2520 = vunpack.c.l.b16 %v2267
    %v2521 = vunpack.c.h.b16 %v2267
    %v2522 = vunpack.c.l.b16 %v2268
    %v2523 = vunpack.c.h.b16 %v2268
    %v2524 = vunpack.c.l.b16 %v2269
    %v2525 = vunpack.c.h.b16 %v2269
    %v2526 = vunpack.c.l.b16 %v2270
    %v2527 = vunpack.c.h.b16 %v2270
    %v2528 = vunpack.c.l.b16 %v2271
    %v2529 = vunpack.c.h.b16 %v2271
    %v2530 = vunpack.c.l.b16 %v2272
    %v2531 = vunpack.c.h.b16 %v2272
    %v2532 = vunpack.c.l.b16 %v2273
    %v2533 = vunpack.c.h.b16 %v2273
    %v2534 = vunpack.c.l.b16 %v2274
    %v2535 = vunpack.c.h.b16 %v2274
    %v2536 = vunpack.c.l.b16 %v2275
    %v2537 = vunpack.c.h.b16 %v2275
    %v2538 = vunpack.c.l.b16 %v2276
    %v2539 = vunpack.c.h.b16 %v2276
    %v2540 = vunpack.c.l.b16 %v2277
    %v2541 = vunpack.c.h.b16 %v2277
    %v2542 = vunpack.c.l.b16 %v2278
    %v2543 = vunpack.c.h.b16 %v2278
    %v2544 = vunpack.c.l.b16 %v2279
    %v2545 = vunpack.c.h.b16 %v2279
    %v2546 = vunpack.c.l.b16 %v2280
    %v2547 = vunpack.c.h.b16 %v2280
    %v2548 = vunpack.c.l.b16 %v2281
    %v2549 = vunpack.c.h.b16 %v2281
    %v2550 = vunpack.c.l.b16 %v2282
    %v2551 = vunpack.c.h.b16 %v2282
    %v2552 = vunpack.c.l.b16 %v2283
    %v2553 = vunpack.c.h.b16 %v2283
    %v2554 = vunpack.c.l.b16 %v2284
    %v2555 = vunpack.c.h.b16 %v2284
    %v2556 = vunpack.c.l.b16 %v2285
    %v2557 = vunpack.c.h.b16 %v2285
    %v2558 = vunpack.c.l.b16 %v2286
    %v2559 = vunpack.c.h.b16 %v2286
    %v2560 = vunpack.c.l.b16 %v2287
    %v2561 = vunpack.c.h.b16 %v2287
    %v2562 = vunpack.c.l.b16 %v2288
    %v2563 = vunpack.c.h.b16 %v2288
    %v2564 = vunpack.c.l.b16 %v2289
    %v2565 = vunpack.c.h.b16 %v2289
    %v2566 = vunpack.c.l.b16 %v2290
    %v2567 = vunpack.c.h.b16 %v2290
    %v2568 = vunpack.c.l.b16 %v2291
    %v2569 = vunpack.c.h.b16 %v2291
    %v2570 = vunpack.c.l.b16 %v2292
    %v2571 = vunpack.c.h.b16 %v2292
    %v2572 = vunpack.c.l.b16 %v2293
    %v2573 = vunpack.c.h.b16 %v2293
    %v2574 = vunpack.c.l.b16 %v2294
    %v2575 = vunpack.c.h.b16 %v2294
    %v2576 = vunpack.c.l.b16 %v2295
    %v2577 = vunpack.c.h.b16 %v2295
    %v2578 = vunpack.c.l.b16 %v2296
    %v2579 = vunpack.c.h.b16 %v2296
    %v2580 = vunpack.c.l.b16 %v2297
    %v2581 = vunpack.c.h.b16 %v2297
    %v2582 = vunpack.c.l.b16 %v2298
    %v2583 = vunpack.c.h.b16 %v2298
    %v2584 = vunpack.c.l.b16 %v2299
    %v2585 = vunpack.c.h.b16 %v2299
    %v2586 = vunpack.c.l.b16 %v2300
    %v2587 = vunpack.c.h.b16 %v2300
    %v2588 = vunpack.c.l.b16 %v2301
    %v2589 = vunpack.c.h.b16 %v2301
    %v2590 = vpack.c.b16 %v2400, %v2398
    %v2591 = vpack.c.b16 %v2401, %v2399
    %v2592 = vpack.c.b16 %v2404, %v2402
    %v2593 = vpack.c.b16 %v2405, %v2403
    %v2594 = vpack.c.b16 %v2408, %v2406
    %v2595 = vpack.c.b16 %v2409, %v2407
    %v2596 = vpack.c.b16 %v2412, %v2410
    %v2597 = vpack.c.b16 %v2413, %v2411
    %v2598 = vpack.c.b16 %v2416, %v2414
    %v2599 = vpack.c.b16 %v2417, %v2415
    %v2600 = vpack.c.b16 %v2420, %v2418
    %v2601 = vpack.c.b16 %v2421, %v2419
    %v2602 = vpack.c.b16 %v2424, %v2422
    %v2603 = vpack.c.b16 %v2425, %v2423
    %v2604 = vpack.c.b16 %v2428, %v2426
    %v2605 = vpack.c.b16 %v2429, %v2427
    %v2606 = vpack.c.b16 %v2432, %v2430
    %v2607 = vpack.c.b16 %v2433, %v2431
    %v2608 = vpack.c.b16 %v2436, %v2434
    %v2609 = vpack.c.b16 %v2437, %v2435
    %v2610 = vpack.c.b16 %v2440, %v2438
    %v2611 = vpack.c.b16 %v2441, %v2439
    %v2612 = vpack.c.b16 %v2444, %v2442
    %v2613 = vpack.c.b16 %v2445, %v2443
    %v2614 = vpack.c.b16 %v2448, %v2446
    %v2615 = vpack.c.b16 %v2449, %v2447
    %v2616 = vpack.c.b16 %v2452, %v2450
    %v2617 = vpack.c.b16 %v2453, %v2451
    %v2618 = vpack.c.b16 %v2456, %v2454
    %v2619 = vpack.c.b16 %v2457, %v2455
    %v2620 = vpack.c.b16 %v2460, %v2458
    %v2621 = vpack.c.b16 %v2461, %v2459
    %v2622 = vpack.c.b16 %v2464, %v2462
    %v2623 = vpack.c.b16 %v2465, %v2463
    %v2624 = vpack.c.b16 %v2468, %v2466
    %v2625 = vpack.c.b16 %v2469, %v2467
    %v2626 = vpack.c.b16 %v2472, %v2470
    %v2627 = vpack.c.b16 %v2473, %v2471
    %v2628 = vpack.c.b16 %v2476, %v2474
    %v2629 = vpack.c.b16 %v2477, %v2475
    %v2630 = vpack.c.b16 %v2480, %v2478
    %v2631 = vpack.c.b16 %v2481, %v2479
    %v2632 = vpack.c.b16 %v2484, %v2482
    %v2633 = vpack.c.b16 %v2485, %v2483
    %v2634 = vpack.c.b16 %v2488, %v2486
    %v2635 = vpack.c.b16 %v2489, %v2487
    %v2636 = vpack.c.b16 %v2492, %v2490
    %v2637 = vpack.c.b16 %v2493, %v2491
    %v2638 = vpack.c.b16 %v2496, %v2494
    %v2639 = vpack.c.b16 %v2497, %v2495
    %v2640 = vpack.c.b16 %v2500, %v2498
    %v2641 = vpack.c.b16 %v2501, %v2499
    %v2642 = vpack.c.b16 %v2504, %v2502
    %v2643 = vpack.c.b16 %v2505, %v2503
    %v2644 = vpack.c.b16 %v2508, %v2506
    %v2645 = vpack.c.b16 %v2509, %v2507
    %v2646 = vpack.c.b16 %v2512, %v2510
    %v2647 = vpack.c.b16 %v2513, %v2511
    %v2648 = vpack.c.b16 %v2516, %v2514
    %v2649 = vpack.c.b16 %v2517, %v2515
    %v2650 = vpack.c.b16 %v2520, %v2518
    %v2651 = vpack.c.b16 %v2521, %v2519
    %v2652 = vpack.c.b16 %v2524, %v2522
    %v2653 = vpack.c.b16 %v2525, %v2523
    %v2654 = vpack.c.b16 %v2528, %v2526
    %v2655 = vpack.c.b16 %v2529, %v2527
    %v2656 = vpack.c.b16 %v2532, %v2530
    %v2657 = vpack.c.b16 %v2533, %v2531
    %v2658 = vpack.c.b16 %v2536, %v2534
    %v2659 = vpack.c.b16 %v2537, %v2535
    %v2660 = vpack.c.b16 %v2540, %v2538
    %v2661 = vpack.c.b16 %v2541, %v2539
    %v2662 = vpack.c.b16 %v2544, %v2542
    %v2663 = vpack.c.b16 %v2545, %v2543
    %v2664 = vpack.c.b16 %v2548, %v2546
    %v2665 = vpack.c.b16 %v2549, %v2547
    %v2666 = vpack.c.b16 %v2552, %v2550
    %v2667 = vpack.c.b16 %v2553, %v2551
    %v2668 = vpack.c.b16 %v2556, %v2554
    %v2669 = vpack.c.b16 %v2557, %v2555
    %v2670 = vpack.c.b16 %v2560, %v2558
    %v2671 = vpack.c.b16 %v2561, %v2559
    %v2672 = vpack.c.b16 %v2564, %v2562
    %v2673 = vpack.c.b16 %v2565, %v2563
    %v2674 = vpack.c.b16 %v2568, %v2566
    %v2675 = vpack.c.b16 %v2569, %v2567
    %v2676 = vpack.c.b16 %v2572, %v2570
    %v2677 = vpack.c.b16 %v2573, %v2571
    %v2678 = vpack.c.b16 %v2576, %v2574
    %v2679 = vpack.c.b16 %v2577, %v2575
    %v2680 = vpack.c.b16 %v2580, %v2578
    %v2681 = vpack.c.b16 %v2581, %v2579
    %v2682 = vpack.c.b16 %v2584, %v2582
    %v2683 = vpack.c.b16 %v2585, %v2583
    %v2684 = vpack.c.b16 %v2588, %v2586
    %v2685 = vpack.c.b16 %v2589, %v2587
    %2782 = vmatprep.subr.bf16.mxu0 %v2591
    %2783 = vmatpush1.bf16.msra.mxu0 %v2590
    %2784 = vmatprep.subr.bf16.mxu0 %v2593
    %2785 = vmatpush1.bf16.msra.mxu0 %v2592
    %2786 = vmatprep.subr.bf16.mxu0 %v2595
    %2787 = vmatpush1.bf16.msra.mxu0 %v2594
    %2788 = vmatprep.subr.bf16.mxu0 %v2597
    %2789 = vmatpush1.bf16.msra.mxu0 %v2596
    %2790 = vmatprep.subr.bf16.mxu0 %v2599
    %2791 = vmatpush1.bf16.msra.mxu0 %v2598
    %2792 = vmatprep.subr.bf16.mxu0 %v2601
    %2793 = vmatpush1.bf16.msra.mxu0 %v2600
    %2794 = vmatprep.subr.bf16.mxu0 %v2603
    %2795 = vmatpush1.bf16.msra.mxu0 %v2602
    %2796 = vmatprep.subr.bf16.mxu0 %v2605
    %2797 = vmatpush1.bf16.msra.mxu0 %v2604
    %2798 = vmatprep.subr.bf16.mxu0 %v2607
    %2799 = vmatpush1.bf16.msra.mxu0 %v2606
    %2800 = vmatprep.subr.bf16.mxu0 %v2609
    %2801 = vmatpush1.bf16.msra.mxu0 %v2608
    %2802 = vmatprep.subr.bf16.mxu0 %v2611
    %2803 = vmatpush1.bf16.msra.mxu0 %v2610
    %2804 = vmatprep.subr.bf16.mxu0 %v2613
    %2805 = vmatpush1.bf16.msra.mxu0 %v2612
    %2806 = vmatprep.subr.bf16.mxu0 %v2615
    %2807 = vmatpush1.bf16.msra.mxu0 %v2614
    %2808 = vmatprep.subr.bf16.mxu0 %v2617
    %2809 = vmatpush1.bf16.msra.mxu0 %v2616
    %2810 = vmatprep.subr.bf16.mxu0 %v2619
    %2811 = vmatpush1.bf16.msra.mxu0 %v2618
    %2812 = vmatprep.subr.bf16.mxu0 %v2621
    %2813 = vmatpush1.bf16.msra.mxu0 %v2620
    %2814 = vmatprep.mubr.bf16.mxu0 %v356
    %2815 = vmatmul.mubr.bf16.gmra.mrb[0].mxu0 %v355
    %v2816 = vpop.f32.mrb[0].mxu0
    %v2817 = vpop.f32.mrb[0].mxu0
    %v2818 = vpop.f32.mrb[0].mxu0
    %v2819 = vpop.f32.mrb[0].mxu0
    %2820 = vmatprep.mubr.bf16.mxu0 %v362
    %2821 = vmatmul.mubr.bf16.gmra.mrb[0].mxu0 %v361
    %v2822 = vpop.f32.mrb[0].mxu0
    %v2823 = vadd.f32 0.0, %v2822
    %v2824 = vpop.f32.mrb[0].mxu0
    %v2825 = vadd.f32 0.0, %v2824
    %v2826 = vpop.f32.mrb[0].mxu0
    %v2827 = vadd.f32 0.0, %v2826
    %v2828 = vpop.f32.mrb[0].mxu0
    %v2829 = vadd.f32 0.0, %v2828
    %2830 = vmatprep.mubr.bf16.mxu0 %v368
    %2831 = vmatmul.mubr.bf16.gmra.mrb[0].mxu0 %v367
    %v2832 = vpop.f32.mrb[0].mxu0
    %v2833 = vadd.f32 0.0, %v2832
    %v2834 = vpop.f32.mrb[0].mxu0
    %v2835 = vadd.f32 0.0, %v2834
    %v2836 = vpop.f32.mrb[0].mxu0
    %v2837 = vadd.f32 0.0, %v2836
    %v2838 = vpop.f32.mrb[0].mxu0
    %v2839 = vadd.f32 0.0, %v2838
    %2840 = vmatprep.mubr.bf16.mxu0 %v374
    %2841 = vmatmul.mubr.bf16.gmra.mrb[0].mxu0 %v373
    %v2842 = vpop.f32.mrb[0].mxu0
    %v2843 = vadd.f32 0.0, %v2842
    %v2844 = vpop.f32.mrb[0].mxu0
    %v2845 = vadd.f32 0.0, %v2844
    %v2846 = vpop.f32.mrb[0].mxu0
    %v2847 = vadd.f32 0.0, %v2846
    %v2848 = vpop.f32.mrb[0].mxu0
    %v2849 = vadd.f32 0.0, %v2848
    %2850 = vmatprep.mubr.bf16.mxu0 %v380
    %2851 = vmatmul.mubr.bf16.gmra.mrb[0].mxu0 %v379
    %v2852 = vpop.f32.mrb[0].mxu0
    %v2853 = vadd.f32 0.0, %v2852
    %v2854 = vpop.f32.mrb[0].mxu0
    %v2855 = vadd.f32 0.0, %v2854
    %v2856 = vpop.f32.mrb[0].mxu0
    %v2857 = vadd.f32 0.0, %v2856
    %v2858 = vpop.f32.mrb[0].mxu0
    %v2859 = vadd.f32 0.0, %v2858
    %2860 = vmatprep.mubr.bf16.mxu0 %v386
    %2861 = vmatmul.mubr.bf16.gmra.mrb[0].mxu0 %v385
    %v2862 = vpop.f32.mrb[0].mxu0
    %v2863 = vadd.f32 0.0, %v2862
    %v2864 = vpop.f32.mrb[0].mxu0
    %v2865 = vadd.f32 0.0, %v2864
    %v2866 = vpop.f32.mrb[0].mxu0
    %v2867 = vadd.f32 0.0, %v2866
    %v2868 = vpop.f32.mrb[0].mxu0
    %v2869 = vadd.f32 0.0, %v2868
    %2870 = vmatprep.mubr.bf16.mxu0 %v392
    %2871 = vmatmul.mubr.bf16.gmra.mrb[0].mxu0 %v391
    %v2872 = vpop.f32.mrb[0].mxu0
    %v2873 = vadd.f32 0.0, %v2872
    %v2874 = vpop.f32.mrb[0].mxu0
    %v2875 = vadd.f32 0.0, %v2874
    %v2876 = vpop.f32.mrb[0].mxu0
    %v2877 = vadd.f32 0.0, %v2876
    %v2878 = vpop.f32.mrb[0].mxu0
    %v2879 = vadd.f32 0.0, %v2878
    %2880 = vmatprep.mubr.bf16.mxu0 %v398
    %2881 = vmatmul.mubr.bf16.gmra.mrb[0].mxu0 %v397
    %v2882 = vpop.f32.mrb[0].mxu0
    %v2883 = vadd.f32 0.0, %v2882
    %v2884 = vpop.f32.mrb[0].mxu0
    %v2885 = vadd.f32 0.0, %v2884
    %v2886 = vpop.f32.mrb[0].mxu0
    %v2887 = vadd.f32 0.0, %v2886
    %v2888 = vpop.f32.mrb[0].mxu0
    %v2889 = vadd.f32 0.0, %v2888
    %2890 = vdwg.mxu0
    %2891 = vmatprep.subr.bf16.mxu0 %v2623
    %2892 = vmatpush1.bf16.msra.mxu0 %v2622
    %2893 = vmatprep.subr.bf16.mxu0 %v2625
    %2894 = vmatpush1.bf16.msra.mxu0 %v2624
    %2895 = vmatprep.subr.bf16.mxu0 %v2627
    %2896 = vmatpush1.bf16.msra.mxu0 %v2626
    %2897 = vmatprep.subr.bf16.mxu0 %v2629
    %2898 = vmatpush1.bf16.msra.mxu0 %v2628
    %2899 = vmatprep.subr.bf16.mxu0 %v2631
    %2900 = vmatpush1.bf16.msra.mxu0 %v2630
    %2901 = vmatprep.subr.bf16.mxu0 %v2633
    %2902 = vmatpush1.bf16.msra.mxu0 %v2632
    %2903 = vmatprep.subr.bf16.mxu0 %v2635
    %2904 = vmatpush1.bf16.msra.mxu0 %v2634
    %2905 = vmatprep.subr.bf16.mxu0 %v2637
    %2906 = vmatpush1.bf16.msra.mxu0 %v2636
    %2907 = vmatprep.subr.bf16.mxu0 %v2639
    %2908 = vmatpush1.bf16.msra.mxu0 %v2638
    %2909 = vmatprep.subr.bf16.mxu0 %v2641
    %2910 = vmatpush1.bf16.msra.mxu0 %v2640
    %2911 = vmatprep.subr.bf16.mxu0 %v2643
    %2912 = vmatpush1.bf16.msra.mxu0 %v2642
    %2913 = vmatprep.subr.bf16.mxu0 %v2645
    %2914 = vmatpush1.bf16.msra.mxu0 %v2644
    %2915 = vmatprep.subr.bf16.mxu0 %v2647
    %2916 = vmatpush1.bf16.msra.mxu0 %v2646
    %2917 = vmatprep.subr.bf16.mxu0 %v2649
    %2918 = vmatpush1.bf16.msra.mxu0 %v2648
    %2919 = vmatprep.subr.bf16.mxu0 %v2651
    %2920 = vmatpush1.bf16.msra.mxu0 %v2650
    %2921 = vmatprep.subr.bf16.mxu0 %v2653
    %2922 = vmatpush1.bf16.msra.mxu0 %v2652
    %2923 = vmatprep.mubr.bf16.mxu0 %v358
    %2924 = vmatmul.mubr.bf16.gmra.mrb[0].mxu0 %v357
    %v2925 = vpop.f32.mrb[0].mxu0
    %v2926 = vpop.f32.mrb[0].mxu0
    %v2927 = vpop.f32.mrb[0].mxu0
    %v2928 = vpop.f32.mrb[0].mxu0
    %2929 = vmatprep.mubr.bf16.mxu0 %v364
    %2930 = vmatmul.mubr.bf16.gmra.mrb[0].mxu0 %v363
    %v2931 = vpop.f32.mrb[0].mxu0
    %v2932 = vadd.f32 %v2823, %v2931
    %v2933 = vpop.f32.mrb[0].mxu0
    %v2934 = vadd.f32 %v2825, %v2933
    %v2935 = vpop.f32.mrb[0].mxu0
    %v2936 = vadd.f32 %v2827, %v2935
    %v2937 = vpop.f32.mrb[0].mxu0
    %v2938 = vadd.f32 %v2829, %v2937
    %2939 = vmatprep.mubr.bf16.mxu0 %v370
    %2940 = vmatmul.mubr.bf16.gmra.mrb[0].mxu0 %v369
    %v2941 = vpop.f32.mrb[0].mxu0
    %v2942 = vadd.f32 %v2833, %v2941
    %v2943 = vpop.f32.mrb[0].mxu0
    %v2944 = vadd.f32 %v2835, %v2943
    %v2945 = vpop.f32.mrb[0].mxu0
    %v2946 = vadd.f32 %v2837, %v2945
    %v2947 = vpop.f32.mrb[0].mxu0
    %v2948 = vadd.f32 %v2839, %v2947
    %2949 = vmatprep.mubr.bf16.mxu0 %v376
    %2950 = vmatmul.mubr.bf16.gmra.mrb[0].mxu0 %v375
    %v2951 = vpop.f32.mrb[0].mxu0
    %v2952 = vadd.f32 %v2843, %v2951
    %v2953 = vpop.f32.mrb[0].mxu0
    %v2954 = vadd.f32 %v2845, %v2953
    %v2955 = vpop.f32.mrb[0].mxu0
    %v2956 = vadd.f32 %v2847, %v2955
    %v2957 = vpop.f32.mrb[0].mxu0
    %v2958 = vadd.f32 %v2849, %v2957
    %2959 = vmatprep.mubr.bf16.mxu0 %v382
    %2960 = vmatmul.mubr.bf16.gmra.mrb[0].mxu0 %v381
    %v2961 = vpop.f32.mrb[0].mxu0
    %v2962 = vadd.f32 %v2853, %v2961
    %v2963 = vpop.f32.mrb[0].mxu0
    %v2964 = vadd.f32 %v2855, %v2963
    %v2965 = vpop.f32.mrb[0].mxu0
    %v2966 = vadd.f32 %v2857, %v2965
    %v2967 = vpop.f32.mrb[0].mxu0
    %v2968 = vadd.f32 %v2859, %v2967
    %2969 = vmatprep.mubr.bf16.mxu0 %v388
    %2970 = vmatmul.mubr.bf16.gmra.mrb[0].mxu0 %v387
    %v2971 = vpop.f32.mrb[0].mxu0
    %v2972 = vadd.f32 %v2863, %v2971
    %v2973 = vpop.f32.mrb[0].mxu0
    %v2974 = vadd.f32 %v2865, %v2973
    %v2975 = vpop.f32.mrb[0].mxu0
    %v2976 = vadd.f32 %v2867, %v2975
    %v2977 = vpop.f32.mrb[0].mxu0
    %v2978 = vadd.f32 %v2869, %v2977
    %2979 = vmatprep.mubr.bf16.mxu0 %v394
    %2980 = vmatmul.mubr.bf16.gmra.mrb[0].mxu0 %v393
    %v2981 = vpop.f32.mrb[0].mxu0
    %v2982 = vadd.f32 %v2873, %v2981
    %v2983 = vpop.f32.mrb[0].mxu0
    %v2984 = vadd.f32 %v2875, %v2983
    %v2985 = vpop.f32.mrb[0].mxu0
    %v2986 = vadd.f32 %v2877, %v2985
    %v2987 = vpop.f32.mrb[0].mxu0
    %v2988 = vadd.f32 %v2879, %v2987
    %2989 = vmatprep.mubr.bf16.mxu0 %v400
    %2990 = vmatmul.mubr.bf16.gmra.mrb[0].mxu0 %v399
    %v2991 = vpop.f32.mrb[0].mxu0
    %v2992 = vadd.f32 %v2883, %v2991
    %v2993 = vpop.f32.mrb[0].mxu0
    %v2994 = vadd.f32 %v2885, %v2993
    %v2995 = vpop.f32.mrb[0].mxu0
    %v2996 = vadd.f32 %v2887, %v2995
    %v2997 = vpop.f32.mrb[0].mxu0
    %v2998 = vadd.f32 %v2889, %v2997
    %2999 = vdwg.mxu0
    %3000 = vmatprep.subr.bf16.mxu0 %v2655
    %3001 = vmatpush1.bf16.msra.mxu0 %v2654
    %3002 = vmatprep.subr.bf16.mxu0 %v2657
    %3003 = vmatpush1.bf16.msra.mxu0 %v2656
    %3004 = vmatprep.subr.bf16.mxu0 %v2659
    %3005 = vmatpush1.bf16.msra.mxu0 %v2658
    %3006 = vmatprep.subr.bf16.mxu0 %v2661
    %3007 = vmatpush1.bf16.msra.mxu0 %v2660
    %3008 = vmatprep.subr.bf16.mxu0 %v2663
    %3009 = vmatpush1.bf16.msra.mxu0 %v2662
    %3010 = vmatprep.subr.bf16.mxu0 %v2665
    %3011 = vmatpush1.bf16.msra.mxu0 %v2664
    %3012 = vmatprep.subr.bf16.mxu0 %v2667
    %3013 = vmatpush1.bf16.msra.mxu0 %v2666
    %3014 = vmatprep.subr.bf16.mxu0 %v2669
    %3015 = vmatpush1.bf16.msra.mxu0 %v2668
    %3016 = vmatprep.subr.bf16.mxu0 %v2671
    %3017 = vmatpush1.bf16.msra.mxu0 %v2670
    %3018 = vmatprep.subr.bf16.mxu0 %v2673
    %3019 = vmatpush1.bf16.msra.mxu0 %v2672
    %3020 = vmatprep.subr.bf16.mxu0 %v2675
    %3021 = vmatpush1.bf16.msra.mxu0 %v2674
    %3022 = vmatprep.subr.bf16.mxu0 %v2677
    %3023 = vmatpush1.bf16.msra.mxu0 %v2676
    %3024 = vmatprep.subr.bf16.mxu0 %v2679
    %3025 = vmatpush1.bf16.msra.mxu0 %v2678
    %3026 = vmatprep.subr.bf16.mxu0 %v2681
    %3027 = vmatpush1.bf16.msra.mxu0 %v2680
    %3028 = vmatprep.subr.bf16.mxu0 %v2683
    %3029 = vmatpush1.bf16.msra.mxu0 %v2682
    %3030 = vmatprep.subr.bf16.mxu0 %v2685
    %3031 = vmatpush1.bf16.msra.mxu0 %v2684
    %3032 = vmatprep.mubr.bf16.mxu0 %v360
    %3033 = vmatmul.mubr.bf16.gmra.mrb[0].mxu0 %v359
    %v3034 = vpop.f32.mrb[0].mxu0
    %v3035 = vpop.f32.mrb[0].mxu0
    %v3036 = vpop.f32.mrb[0].mxu0
    %v3037 = vpop.f32.mrb[0].mxu0
    %3038 = vmatprep.mubr.bf16.mxu0 %v366
    %3039 = vmatmul.mubr.bf16.gmra.mrb[0].mxu0 %v365
    %v3040 = vpop.f32.mrb[0].mxu0
    %v3041 = vadd.f32 %v2932, %v3040
    %v3042 = vpop.f32.mrb[0].mxu0
    %v3043 = vadd.f32 %v2934, %v3042
    %v3044 = vpop.f32.mrb[0].mxu0
    %v3045 = vadd.f32 %v2936, %v3044
    %v3046 = vpop.f32.mrb[0].mxu0
    %v3047 = vadd.f32 %v2938, %v3046
    %3048 = vmatprep.mubr.bf16.mxu0 %v372
    %3049 = vmatmul.mubr.bf16.gmra.mrb[0].mxu0 %v371
    %v3050 = vpop.f32.mrb[0].mxu0
    %v3051 = vadd.f32 %v2942, %v3050
    %v3052 = vpop.f32.mrb[0].mxu0
    %v3053 = vadd.f32 %v2944, %v3052
    %v3054 = vpop.f32.mrb[0].mxu0
    %v3055 = vadd.f32 %v2946, %v3054
    %v3056 = vpop.f32.mrb[0].mxu0
    %v3057 = vadd.f32 %v2948, %v3056
    %3058 = vmatprep.mubr.bf16.mxu0 %v378
    %3059 = vmatmul.mubr.bf16.gmra.mrb[0].mxu0 %v377
    %v3060 = vpop.f32.mrb[0].mxu0
    %v3061 = vadd.f32 %v2952, %v3060
    %v3062 = vpop.f32.mrb[0].mxu0
    %v3063 = vadd.f32 %v2954, %v3062
    %v3064 = vpop.f32.mrb[0].mxu0
    %v3065 = vadd.f32 %v2956, %v3064
    %v3066 = vpop.f32.mrb[0].mxu0
    %v3067 = vadd.f32 %v2958, %v3066
    %3068 = vmatprep.mubr.bf16.mxu0 %v384
    %3069 = vmatmul.mubr.bf16.gmra.mrb[0].mxu0 %v383
    %v3070 = vpop.f32.mrb[0].mxu0
    %v3071 = vadd.f32 %v2962, %v3070
    %v3072 = vpop.f32.mrb[0].mxu0
    %v3073 = vadd.f32 %v2964, %v3072
    %v3074 = vpop.f32.mrb[0].mxu0
    %v3075 = vadd.f32 %v2966, %v3074
    %v3076 = vpop.f32.mrb[0].mxu0
    %v3077 = vadd.f32 %v2968, %v3076
    %3078 = vmatprep.mubr.bf16.mxu0 %v390
    %3079 = vmatmul.mubr.bf16.gmra.mrb[0].mxu0 %v389
    %v3080 = vpop.f32.mrb[0].mxu0
    %v3081 = vadd.f32 %v2972, %v3080
    %v3082 = vpop.f32.mrb[0].mxu0
    %v3083 = vadd.f32 %v2974, %v3082
    %v3084 = vpop.f32.mrb[0].mxu0
    %v3085 = vadd.f32 %v2976, %v3084
    %v3086 = vpop.f32.mrb[0].mxu0
    %v3087 = vadd.f32 %v2978, %v3086
    %3088 = vmatprep.mubr.bf16.mxu0 %v396
    %3089 = vmatmul.mubr.bf16.gmra.mrb[0].mxu0 %v395
    %v3090 = vpop.f32.mrb[0].mxu0
    %v3091 = vadd.f32 %v2982, %v3090
    %v3092 = vpop.f32.mrb[0].mxu0
    %v3093 = vadd.f32 %v2984, %v3092
    %v3094 = vpop.f32.mrb[0].mxu0
    %v3095 = vadd.f32 %v2986, %v3094
    %v3096 = vpop.f32.mrb[0].mxu0
    %v3097 = vadd.f32 %v2988, %v3096
    %3098 = vmatprep.mubr.bf16.mxu0 %v402
    %3099 = vmatmul.mubr.bf16.gmra.mrb[0].mxu0 %v401
    %v3100 = vpop.f32.mrb[0].mxu0
    %v3101 = vadd.f32 %v2992, %v3100
    %v3102 = vpop.f32.mrb[0].mxu0
    %v3103 = vadd.f32 %v2994, %v3102
    %v3104 = vpop.f32.mrb[0].mxu0
    %v3105 = vadd.f32 %v2996, %v3104
    %v3106 = vpop.f32.mrb[0].mxu0
    %v3107 = vadd.f32 %v2998, %v3106
    %3108 = vdwg.mxu0
    %v3109 = vadd.f32 %v2173, %v3041
    %v3110 = vadd.f32 %v2174, %v3043
    %v3111 = vadd.f32 %v2175, %v3045
    %v3112 = vadd.f32 %v2176, %v3047
    %v3113 = vadd.f32 %v2177, %v3051
    %v3114 = vadd.f32 %v2178, %v3053
    %v3115 = vadd.f32 %v2179, %v3055
    %v3116 = vadd.f32 %v2180, %v3057
    %v3117 = vadd.f32 %v2181, %v3061
    %v3118 = vadd.f32 %v2182, %v3063
    %v3119 = vadd.f32 %v2183, %v3065
    %v3120 = vadd.f32 %v2184, %v3067
    %v3121 = vadd.f32 %v2185, %v3071
    %v3122 = vadd.f32 %v2186, %v3073
    %v3123 = vadd.f32 %v2187, %v3075
    %v3124 = vadd.f32 %v2188, %v3077
    %v3125 = vadd.f32 %v2189, %v3081
    %v3126 = vadd.f32 %v2190, %v3083
    %v3127 = vadd.f32 %v2191, %v3085
    %v3128 = vadd.f32 %v2192, %v3087
    %v3129 = vadd.f32 %v2193, %v3091
    %v3130 = vadd.f32 %v2194, %v3093
    %v3131 = vadd.f32 %v2195, %v3095
    %v3132 = vadd.f32 %v2196, %v3097
    %v3133 = vadd.f32 %v2197, %v3101
    %v3134 = vadd.f32 %v2198, %v3103
    %v3135 = vadd.f32 %v2199, %v3105
    %v3136 = vadd.f32 %v2200, %v3107
    %v3137 = vadd.f32 %v2201, 0.0
    %v3138 = vadd.f32 %v2202, 0.0
    %v3139 = vadd.f32 %v2203, 0.0
    %v3140 = vadd.f32 %v2204, 0.0
    %v3141 = vmax.f32 %v3109, 0.0
    %v3142 = vmax.f32 %v3110, 0.0
    %v3143 = vmax.f32 %v3111, 0.0
    %v3144 = vmax.f32 %v3112, 0.0
    %v3145 = vmax.f32 %v3113, 0.0
    %v3146 = vmax.f32 %v3114, 0.0
    %v3147 = vmax.f32 %v3115, 0.0
    %v3148 = vmax.f32 %v3116, 0.0
    %v3149 = vmax.f32 %v3117, 0.0
    %v3150 = vmax.f32 %v3118, 0.0
    %v3151 = vmax.f32 %v3119, 0.0
    %v3152 = vmax.f32 %v3120, 0.0
    %v3153 = vmax.f32 %v3121, 0.0
    %v3154 = vmax.f32 %v3122, 0.0
    %v3155 = vmax.f32 %v3123, 0.0
    %v3156 = vmax.f32 %v3124, 0.0
    %v3157 = vmax.f32 %v3125, 0.0
    %v3158 = vmax.f32 %v3126, 0.0
    %v3159 = vmax.f32 %v3127, 0.0
    %v3160 = vmax.f32 %v3128, 0.0
    %v3161 = vmax.f32 %v3129, 0.0
    %v3162 = vmax.f32 %v3130, 0.0
    %v3163 = vmax.f32 %v3131, 0.0
    %v3164 = vmax.f32 %v3132, 0.0
    %v3165 = vmax.f32 %v3133, 0.0
    %v3166 = vmax.f32 %v3134, 0.0
    %v3167 = vmax.f32 %v3135, 0.0
    %v3168 = vmax.f32 %v3136, 0.0
    %v3169 = vmax.f32 %v3137, 0.0
    %v3170 = vmax.f32 %v3138, 0.0
    %v3171 = vmax.f32 %v3139, 0.0
    %v3172 = vmax.f32 %v3140, 0.0
    %v3173 = vpack.c.bf16 %v3143, %v3141
    %v3174 = vpack.c.bf16 %v3144, %v3142
    %v3175 = vpack.c.bf16 %v3147, %v3145
    %v3176 = vpack.c.bf16 %v3148, %v3146
    %v3177 = vpack.c.bf16 %v3151, %v3149
    %v3178 = vpack.c.bf16 %v3152, %v3150
    %v3179 = vpack.c.bf16 %v3155, %v3153
    %v3180 = vpack.c.bf16 %v3156, %v3154
    %v3181 = vpack.c.bf16 %v3159, %v3157
    %v3182 = vpack.c.bf16 %v3160, %v3158
    %v3183 = vpack.c.bf16 %v3163, %v3161
    %v3184 = vpack.c.bf16 %v3164, %v3162
    %v3185 = vpack.c.bf16 %v3167, %v3165
    %v3186 = vpack.c.bf16 %v3168, %v3166
    %v3187 = vpack.c.bf16 %v3171, %v3169
    %v3188 = vpack.c.bf16 %v3172, %v3170
    %v3205 = vunpack.c.l.b16 %v3173
    %v3206 = vunpack.c.l.b16 %v3174
    %v3207 = vunpack.c.h.b16 %v3173
    %v3208 = vunpack.c.h.b16 %v3174
    %v3209 = vunpack.c.l.b16 %v3175
    %v3210 = vunpack.c.l.b16 %v3176
    %v3211 = vunpack.c.h.b16 %v3175
    %v3212 = vunpack.c.h.b16 %v3176
    %v3213 = vunpack.c.l.b16 %v3177
    %v3214 = vunpack.c.l.b16 %v3178
    %v3215 = vunpack.c.h.b16 %v3177
    %v3216 = vunpack.c.h.b16 %v3178
    %v3217 = vunpack.c.l.b16 %v3179
    %v3218 = vunpack.c.l.b16 %v3180
    %v3219 = vunpack.c.h.b16 %v3179
    %v3220 = vunpack.c.h.b16 %v3180
    %v3221 = vunpack.c.l.b16 %v3181
    %v3222 = vunpack.c.l.b16 %v3182
    %v3223 = vunpack.c.h.b16 %v3181
    %v3224 = vunpack.c.h.b16 %v3182
    %v3225 = vunpack.c.l.b16 %v3183
    %v3226 = vunpack.c.l.b16 %v3184
    %v3227 = vunpack.c.h.b16 %v3183
    %v3228 = vunpack.c.h.b16 %v3184
    %v3229 = vunpack.c.l.b16 %v3185
    %v3230 = vunpack.c.l.b16 %v3186
    %v3231 = vunpack.c.h.b16 %v3185
    %v3232 = vunpack.c.h.b16 %v3186
    %v3233 = vunpack.c.l.b16 %v3187
    %v3234 = vunpack.c.l.b16 %v3188
    %v3235 = vunpack.c.h.b16 %v3187
    %v3236 = vunpack.c.h.b16 %v3188
    %v3237 = vpack.c.b16 %v3206, %v3205
    %v3238 = vpack.c.b16 %v3208, %v3207
    %v3239 = vpack.c.b16 %v3210, %v3209
    %v3240 = vpack.c.b16 %v3212, %v3211
    %v3241 = vpack.c.b16 %v3214, %v3213
    %v3242 = vpack.c.b16 %v3216, %v3215
    %v3243 = vpack.c.b16 %v3218, %v3217
    %v3244 = vpack.c.b16 %v3220, %v3219
    %v3245 = vpack.c.b16 %v3222, %v3221
    %v3246 = vpack.c.b16 %v3224, %v3223
    %v3247 = vpack.c.b16 %v3226, %v3225
    %v3248 = vpack.c.b16 %v3228, %v3227
    %v3249 = vpack.c.b16 %v3230, %v3229
    %v3250 = vpack.c.b16 %v3232, %v3231
    %v3251 = vpack.c.b16 %v3234, %v3233
    %v3252 = vpack.c.b16 %v3236, %v3235
    %3269 = vst [vmem:[#allocation8] sm:$0xff] %v3237
    %3270 = vst [vmem:[#allocation8 + $0x8] sm:$0xff] %v3238
    %3271 = vst [vmem:[#allocation8 + $0x10] sm:$0xff] %v3239
    %3272 = vst [vmem:[#allocation8 + $0x18] sm:$0xff] %v3240
    %3273 = vst [vmem:[#allocation8 + $0x20] sm:$0xff] %v3241
    %3274 = vst [vmem:[#allocation8 + $0x28] sm:$0xff] %v3242
    %3275 = vst [vmem:[#allocation8 + $0x30] sm:$0xff] %v3243
    %3276 = vst [vmem:[#allocation8 + $0x38] sm:$0xff] %v3244
    %3277 = vst [vmem:[#allocation8 + $0x40] sm:$0xff] %v3245
    %3278 = vst [vmem:[#allocation8 + $0x48] sm:$0xff] %v3246
    %3279 = vst [vmem:[#allocation8 + $0x50] sm:$0xff] %v3247
    %3280 = vst [vmem:[#allocation8 + $0x58] sm:$0xff] %v3248
    %3281 = vst [vmem:[#allocation8 + $0x60] sm:$0xff] %v3249
    %3282 = vst [vmem:[#allocation8 + $0x68] sm:$0xff] %v3250
    %3283 = vst [vmem:[#allocation8 + $0x70] sm:$0xff] %v3251
    %3284 = vst [vmem:[#allocation8 + $0x78] sm:$0xff] %v3252
    // Predicated region
    $region26: #{sarcasm_forward.3} parent=1 // pred_check
      _
    $region27: #{sarcasm_forward.3} parent=1 // pred_check_branch
      %3286 = sbr.rel (0) target = $region29
    $region28: #{sarcasm_forward.3} parent=1 // pred_region
      %s3288 = ssub.s32 2048, 2048
      %3289 = vsyncadd [#allocation4], %s3288
      %s3290 = sshll.u32 [#allocation8], 4
      %s3291 = int_to_ptr.vmem [resolvable:$true] %s3290
      %3296 = dma.vmem_to_hbm [thread:$0]  %s3291, 2048, %s3, [#allocation4], 128, 128, 8
    $region29: #{sarcasm_forward.3} parent=1 // pred_fallthru
      _
    // Predicated region
    $region30: #{sarcasm_forward.3} parent=1 // pred_check
      _
    $region31: #{sarcasm_forward.3} parent=1 // pred_check_branch
      %3298 = sbr.rel (0) target = $region33
    $region32: #{sarcasm_forward.3} parent=1 // pred_region
      %3299 = dma.done [#allocation4], 2048
    $region33: #{sarcasm_forward.3} parent=1 // pred_fallthru
      _
    %3300 = vsyncpa [#allocation3], 1
    %3301 = vsyncpa [#allocation6], 1
    %3302 = vsyncpa [#allocation4], 1

</llo_original>
